<compile_context>
chip_gen: v6e
topology: v6e:2x2x1
jax: 0.10.0
libtpu: 0.0.40
codegen_flags: <defaults>
</compile_context>

<pallas_src>
import functools

import jax
import jax.numpy as jnp
from jax.experimental import pallas as pl
from jax.experimental.pallas import tpu as pltpu

EMB = 1024            # per-embedding feature size (classifier expects 4 * 1024)
FEAT = 4 * EMB
HID = (256, 64, 16, 8, 1)
DIMS = (FEAT,) + HID


def nli_kernel(c_ref, h_ref,
               w1a_ref, w1b_ref, w1c_ref, w1d_ref, b1_ref,
               w2_ref, b2_ref, w3_ref, b3_ref, w4_ref, b4_ref,
               w5t_ref, b5_ref,
               out_ref):
    cd = w1a_ref.dtype                    # MXU operand dtype (f32 or bf16)

    c = c_ref[...]                        # (tile_b, 1024), input dtype
    h = h_ref[...]

    # ---- Layer 1: 4096 -> 256 without materializing the (B, 4096) concat ----
    # feats = [c | h | |c-h| | c*h]  =>  W1 split into four 1024-row slabs.
    acc = jnp.dot(c.astype(cd), w1a_ref[...], preferred_element_type=jnp.float32)
    acc = acc + jnp.dot(h.astype(cd), w1b_ref[...],
                        preferred_element_type=jnp.float32)
    acc = acc + jnp.dot(jnp.abs(c - h).astype(cd), w1c_ref[...],
                        preferred_element_type=jnp.float32)
    acc = acc + jnp.dot((c * h).astype(cd), w1d_ref[...],
                        preferred_element_type=jnp.float32)
    x = jnp.tanh(acc + b1_ref[...])       # (tile_b, 256) f32

    # ---- Layers 2-4 (tanh); tiny matmuls, <1% of FLOPs ----
    x = jnp.tanh(jnp.dot(x.astype(cd), w2_ref[...],
                         preferred_element_type=jnp.float32) + b2_ref[...])
    x = jnp.tanh(jnp.dot(x.astype(cd), w3_ref[...],
                         preferred_element_type=jnp.float32) + b3_ref[...])
    x = jnp.tanh(jnp.dot(x.astype(cd), w4_ref[...],
                         preferred_element_type=jnp.float32) + b4_ref[...])

    # ---- Head (8 -> 1), emitted lane-dense as one (1, tile_b) row ----
    # w5t is stored (1, 8); contract its dim 1 with x's dim 1 -> (1, tile_b),
    # so the output store is a dense full-lane row instead of masked
    # single-lane stores.
    z = jax.lax.dot_general(w5t_ref[...], x.astype(cd),
                            dimension_numbers=(((1,), (1,)), ((), ())),
                            preferred_element_type=jnp.float32)
    out_ref[...] = (z + b5_ref[...]).astype(out_ref.dtype)


@functools.partial(
    jax.jit,
    static_argnames=("tile_b", "single_buffer_weights", "vmem_limit_bytes"))
def _nli_call(c_emb, h_emb, flat_params, tile_b, single_buffer_weights,
              vmem_limit_bytes):
    B_pad = c_emb.shape[0]
    n_tiles = B_pad // tile_b

    act_spec = pl.BlockSpec((tile_b, EMB), lambda i: (i, 0))
    # Lane-dense output: one (1, tile_b) row per grid step.
    out_spec = pl.BlockSpec((None, 1, tile_b), lambda i: (i, 0, 0))

    if single_buffer_weights:
        # Constant index_map => fetched once and kept resident; a second
        # pipeline buffer would only burn VMEM.
        weight_specs = [pl.BlockSpec(p.shape, lambda i: (0, 0),
                                     pipeline_mode=pl.Buffered(1))
                        for p in flat_params]
    else:
        weight_specs = [pl.BlockSpec(p.shape, lambda i: (0, 0))
                        for p in flat_params]

    # Advisory cost estimate so XLA can overlap the one-shot weight DMA with
    # neighboring ops when this call sits inside a larger jit region.
    flops = 2 * B_pad * sum(DIMS[i] * DIMS[i + 1] for i in range(len(DIMS) - 1))
    transcendentals = B_pad * sum(HID[:-1])                 # tanh count
    weight_bytes = sum(int(p.size) * p.dtype.itemsize for p in flat_params)
    bytes_accessed = (weight_bytes
                      + 2 * B_pad * EMB * c_emb.dtype.itemsize
                      + B_pad * 4)

    return pl.pallas_call(
        nli_kernel,
        out_shape=jax.ShapeDtypeStruct((n_tiles, 1, tile_b), jnp.float32),
        grid=(n_tiles,),
        in_specs=[act_spec, act_spec] + weight_specs,
        out_specs=out_spec,
        compiler_params=pltpu.CompilerParams(
            dimension_semantics=("parallel",),
            vmem_limit_bytes=int(vmem_limit_bytes)),
        cost_estimate=pl.CostEstimate(flops=flops,
                                      transcendentals=transcendentals,
                                      bytes_accessed=bytes_accessed),
    )(c_emb, h_emb, *flat_params)


def _round_up(x, m):
    return ((x + m - 1) // m) * m


def _device_kind():
    try:
        return jax.devices()[0].device_kind.lower()
    except Exception:
        return ""


def _auto_tile_b(B, kind, act_itemsize, weight_itemsize):
    """Per-generation batch-tile cap (rows per grid step)."""
    if "v7" in kind or "v6" in kind:
        # Larger tiles amortize grid-step overhead; 2048 only when both the
        # streamed activations and the MXU operands are bf16.
        cap = 2048 if (act_itemsize <= 2 and weight_itemsize <= 2) else 1024
    elif "v5 lite" in kind or "v5e" in kind or "v5lite" in kind:
        cap = 1024 if weight_itemsize <= 2 else 512     # 16 MiB default scope
    else:
        cap = 512                                       # conservative default
    tile = min(cap, _round_up(max(B, 8), 8))
    if "v7" in kind and B > 8:
        # Keep >= 2 grid steps so the parallel batch axis actually splits
        # across v7x's 2 TensorCores.
        tile = min(tile, _round_up(-(-B // 2), 8))
    return max(8, tile)


def nli_hypoths_forward(c_emb, h_emb, params, *, tile_b=None, weights_dtype=None):
    """NLI_HYPOTHS_Net forward pass via the Pallas kernel.

    params: list of (W, b) with W shaped (in_features, out_features), b (1, out).
    weights_dtype: optional cast for the weight matrices (e.g. jnp.bfloat16);
      biases and accumulation stay f32.
    c_emb / h_emb are consumed in the dtype they arrive in; have the upstream
    producer emit bf16 to halve the steady-state activation HBM traffic.
    """
    B, emb = c_emb.shape
    assert emb == EMB and h_emb.shape == (B, EMB)
    assert c_emb.dtype == h_emb.dtype

    (w1, b1), (w2, b2), (w3, b3), (w4, b4), (w5, b5) = params

    def cast_w(w):
        return w.astype(weights_dtype) if weights_dtype is not None else w

    w1 = cast_w(w1)
    # W1 split into the four 1024-row slabs multiplying c, h, |c-h|, c*h; the
    # head weight is stored transposed (1, 8) so the kernel emits a lane-dense
    # (1, tile_b) output row.  (In production, prepare these once, not per call.)
    flat_params = (
        w1[0 * EMB:1 * EMB], w1[1 * EMB:2 * EMB],
        w1[2 * EMB:3 * EMB], w1[3 * EMB:4 * EMB], b1.astype(jnp.float32),
        cast_w(w2), b2.astype(jnp.float32),
        cast_w(w3), b3.astype(jnp.float32),
        cast_w(w4), b4.astype(jnp.float32),
        cast_w(w5).T, b5.astype(jnp.float32),
    )

    kind = _device_kind()
    act_itemsize = c_emb.dtype.itemsize
    weight_itemsize = flat_params[0].dtype.itemsize

    if tile_b is None:
        tile_b = _auto_tile_b(B, kind, act_itemsize, weight_itemsize)
    else:
        tile_b = max(8, (int(tile_b) // 8) * 8)          # sublane multiple

    n_tiles = pl.cdiv(B, tile_b)
    B_pad = n_tiles * tile_b
    if B_pad != B:
        pad = B_pad - B
        c_emb = jnp.pad(c_emb, ((0, pad), (0, 0)))
        h_emb = jnp.pad(h_emb, ((0, pad), (0, 0)))

    # ---- VMEM budget: double-buffered c/h tiles, resident weights, the
    #      |c-h| / c*h temporaries, operand-cast copies, plus headroom. ----
    weight_bytes = sum(int(p.size) * p.dtype.itemsize for p in flat_params)
    cast_copies = (4 * tile_b * EMB * weight_itemsize
                   if flat_params[0].dtype != c_emb.dtype else 0)
    base_est = (2 * 2 * tile_b * EMB * act_itemsize      # c, h (double-buffered)
                + 2 * tile_b * EMB * act_itemsize        # |c-h|, c*h temporaries
                + cast_copies                            # bf16 MXU operand copies
                + 2 * tile_b * HID[0] * 4                # layer-1 acc + activations
                + 2 * 2 * tile_b * 4                     # output buffers
                + (8 << 20))                             # headroom / small layers
    vmem_cap = (56 << 20) if "v7" in kind else (100 << 20)

    def limit(n_weight_buffers):
        est = base_est + n_weight_buffers * weight_bytes
        return int(min(max(est, 16 << 20), vmem_cap))

    try:
        out = _nli_call(c_emb, h_emb, flat_params, tile_b=tile_b,
                        single_buffer_weights=True, vmem_limit_bytes=limit(1))
    except Exception:
        # Fallback if this jax/libtpu build rejects Buffered(1) weight specs:
        # default double-buffering with a correspondingly larger VMEM limit.
        out = _nli_call(c_emb, h_emb, flat_params, tile_b=tile_b,
                        single_buffer_weights=False, vmem_limit_bytes=limit(2))

    return out.reshape(B_pad, 1)[:B]


def init_params(key):
    """Deterministic synthetic parameters matching nn.Linear init/shapes."""
    params = []
    for i in range(len(DIMS) - 1):
        key, kw, kb = jax.random.split(key, 3)
        scale = 1.0 / jnp.sqrt(jnp.float32(DIMS[i]))
        w = jax.random.uniform(kw, (DIMS[i], DIMS[i + 1]),
                               minval=-scale, maxval=scale, dtype=jnp.float32)
        b = jax.random.uniform(kb, (1, DIMS[i + 1]),
                               minval=-scale, maxval=scale, dtype=jnp.float32)
        params.append((w, b))
    return params


def reference_forward(c_emb, h_emb, params):
    feats = jnp.concatenate(
        [c_emb, h_emb, jnp.abs(c_emb - h_emb), c_emb * h_emb], axis=1)
    x = feats
    for i, (w, b) in enumerate(params):
        x = x @ w + b
        if i < len(params) - 1:
            x = jnp.tanh(x)
    return x


if __name__ == "__main__":
    key = jax.random.PRNGKey(0)
    kc, kh, kp = jax.random.split(key, 3)

    B = 64
    c_emb = jax.random.normal(kc, (B, EMB), dtype=jnp.float32)
    h_emb = jax.random.normal(kh, (B, EMB), dtype=jnp.float32)
    params = init_params(kp)

    ref = reference_forward(c_emb, h_emb, params)

    # 1) f32 weights / f32 activations, auto tile (one grid step on v5e/v6e,
    #    two steps on v7x so both TensorCores get work).
    out_f32 = jax.block_until_ready(nli_hypoths_forward(c_emb, h_emb, params))
    assert out_f32.shape == (B, 1)
    assert jnp.allclose(out_f32, ref, atol=2e-4, rtol=2e-4), "f32 mismatch vs reference"

    # 2) bf16 weights (f32 accumulation / biases) — halves the W1 HBM traffic.
    out_wbf16 = jax.block_until_ready(
        nli_hypoths_forward(c_emb, h_emb, params, weights_dtype=jnp.bfloat16))
    assert jnp.allclose(out_wbf16, ref, atol=5e-2, rtol=5e-2), "bf16-weight mismatch"

    # 3) bf16 activations + bf16 weights (inputs cast by the "producer", not a
    #    wrapper-side pass) — halves the steady-state activation DMA as well.
    out_abf16 = jax.block_until_ready(
        nli_hypoths_forward(c_emb.astype(jnp.bfloat16), h_emb.astype(jnp.bfloat16),
                            params, weights_dtype=jnp.bfloat16))
    assert jnp.allclose(out_abf16, ref, atol=1e-1, rtol=1e-1), "bf16-activation mismatch"

    # 4) Non-multiple batch + tiny explicit tile exercises padding & multi-step grid.
    B2 = 20
    out_pad = jax.block_until_ready(
        nli_hypoths_forward(c_emb[:B2], h_emb[:B2], params, tile_b=8))
    assert out_pad.shape == (B2, 1)
    assert jnp.allclose(out_pad, ref[:B2], atol=2e-4, rtol=2e-4), "padded-batch mismatch"

    print("KERNEL_OK")
</pallas_src>

<mosaic_0001>
module attributes {stable_mosaic.version = 11 : i64} {
  func.func @nli_kernel(%arg0: i32, %arg1: memref<64x1024xf32, #tpu.memory_space<vmem>>, %arg2: memref<64x1024xf32, #tpu.memory_space<vmem>>, %arg3: memref<1024x256xf32, #tpu.memory_space<vmem>>, %arg4: memref<1024x256xf32, #tpu.memory_space<vmem>>, %arg5: memref<1024x256xf32, #tpu.memory_space<vmem>>, %arg6: memref<1024x256xf32, #tpu.memory_space<vmem>>, %arg7: memref<1x256xf32, #tpu.memory_space<vmem>>, %arg8: memref<256x64xf32, #tpu.memory_space<vmem>>, %arg9: memref<1x64xf32, #tpu.memory_space<vmem>>, %arg10: memref<64x16xf32, #tpu.memory_space<vmem>>, %arg11: memref<1x16xf32, #tpu.memory_space<vmem>>, %arg12: memref<16x8xf32, #tpu.memory_space<vmem>>, %arg13: memref<1x8xf32, #tpu.memory_space<vmem>>, %arg14: memref<1x8xf32, #tpu.memory_space<vmem>>, %arg15: memref<1x1xf32, #tpu.memory_space<vmem>>, %arg16: memref<1x1x64xf32, #tpu.memory_space<vmem>>) attributes {dimension_semantics = [#tpu.dimension_semantics<parallel>], iteration_bounds = array<i64: 1>, scalar_prefetch = 0 : i64, scratch_operands = 0 : i64, tpu.core_type = #tpu.core_type<tc>, window_params = [{transform_indices = @transform_0, window_bounds = array<i64: 64, 1024>}, {transform_indices = @transform_1, window_bounds = array<i64: 64, 1024>}, {pipeline_mode = #tpu.pipeline_mode<synchronous>, transform_indices = @transform_2, window_bounds = array<i64: 1024, 256>}, {pipeline_mode = #tpu.pipeline_mode<synchronous>, transform_indices = @transform_3, window_bounds = array<i64: 1024, 256>}, {pipeline_mode = #tpu.pipeline_mode<synchronous>, transform_indices = @transform_4, window_bounds = array<i64: 1024, 256>}, {pipeline_mode = #tpu.pipeline_mode<synchronous>, transform_indices = @transform_5, window_bounds = array<i64: 1024, 256>}, {pipeline_mode = #tpu.pipeline_mode<synchronous>, transform_indices = @transform_6, window_bounds = array<i64: 1, 256>}, {pipeline_mode = #tpu.pipeline_mode<synchronous>, transform_indices = @transform_7, window_bounds = array<i64: 256, 64>}, {pipeline_mode = #tpu.pipeline_mode<synchronous>, transform_indices = @transform_8, window_bounds = array<i64: 1, 64>}, {pipeline_mode = #tpu.pipeline_mode<synchronous>, transform_indices = @transform_9, window_bounds = array<i64: 64, 16>}, {pipeline_mode = #tpu.pipeline_mode<synchronous>, transform_indices = @transform_10, window_bounds = array<i64: 1, 16>}, {pipeline_mode = #tpu.pipeline_mode<synchronous>, transform_indices = @transform_11, window_bounds = array<i64: 16, 8>}, {pipeline_mode = #tpu.pipeline_mode<synchronous>, transform_indices = @transform_12, window_bounds = array<i64: 1, 8>}, {pipeline_mode = #tpu.pipeline_mode<synchronous>, transform_indices = @transform_13, window_bounds = array<i64: 1, 8>}, {pipeline_mode = #tpu.pipeline_mode<synchronous>, transform_indices = @transform_14, window_bounds = array<i64: 1, 1>}, {transform_indices = @transform_15, window_bounds = array<i64: 1, 1, 64>}]} {
    %c0 = arith.constant 0 : index
    %c0_0 = arith.constant 0 : index
    %0 = vector.load %arg1[%c0, %c0_0] : memref<64x1024xf32, #tpu.memory_space<vmem>>, vector<64x1024xf32>
    %c0_1 = arith.constant 0 : index
    %c0_2 = arith.constant 0 : index
    %1 = vector.load %arg2[%c0_1, %c0_2] : memref<64x1024xf32, #tpu.memory_space<vmem>>, vector<64x1024xf32>
    %c0_3 = arith.constant 0 : index
    %c0_4 = arith.constant 0 : index
    %2 = vector.load %arg3[%c0_3, %c0_4] : memref<1024x256xf32, #tpu.memory_space<vmem>>, vector<1024x256xf32>
    %cst = arith.constant dense<0.000000e+00> : vector<64x256xf32>
    %3 = tpu.matmul %0, %2, %cst {dimension_numbers = #tpu.dot_dimension_numbers<[1], [0], [0], [1], [0, 0, 1, 1], [], []>} : vector<64x1024xf32>, vector<1024x256xf32>, vector<64x256xf32> -> vector<64x256xf32>
    %c0_5 = arith.constant 0 : index
    %c0_6 = arith.constant 0 : index
    %4 = vector.load %arg4[%c0_5, %c0_6] : memref<1024x256xf32, #tpu.memory_space<vmem>>, vector<1024x256xf32>
    %cst_7 = arith.constant dense<0.000000e+00> : vector<64x256xf32>
    %5 = tpu.matmul %1, %4, %cst_7 {dimension_numbers = #tpu.dot_dimension_numbers<[1], [0], [0], [1], [0, 0, 1, 1], [], []>} : vector<64x1024xf32>, vector<1024x256xf32>, vector<64x256xf32> -> vector<64x256xf32>
    %6 = arith.addf %3, %5 : vector<64x256xf32>
    %7 = arith.subf %0, %1 : vector<64x1024xf32>
    %8 = math.absf %7 : vector<64x1024xf32>
    %c0_8 = arith.constant 0 : index
    %c0_9 = arith.constant 0 : index
    %9 = vector.load %arg5[%c0_8, %c0_9] : memref<1024x256xf32, #tpu.memory_space<vmem>>, vector<1024x256xf32>
    %cst_10 = arith.constant dense<0.000000e+00> : vector<64x256xf32>
    %10 = tpu.matmul %8, %9, %cst_10 {dimension_numbers = #tpu.dot_dimension_numbers<[1], [0], [0], [1], [0, 0, 1, 1], [], []>} : vector<64x1024xf32>, vector<1024x256xf32>, vector<64x256xf32> -> vector<64x256xf32>
    %11 = arith.addf %6, %10 : vector<64x256xf32>
    %12 = arith.mulf %0, %1 : vector<64x1024xf32>
    %c0_11 = arith.constant 0 : index
    %c0_12 = arith.constant 0 : index
    %13 = vector.load %arg6[%c0_11, %c0_12] : memref<1024x256xf32, #tpu.memory_space<vmem>>, vector<1024x256xf32>
    %cst_13 = arith.constant dense<0.000000e+00> : vector<64x256xf32>
    %14 = tpu.matmul %12, %13, %cst_13 {dimension_numbers = #tpu.dot_dimension_numbers<[1], [0], [0], [1], [0, 0, 1, 1], [], []>} : vector<64x1024xf32>, vector<1024x256xf32>, vector<64x256xf32> -> vector<64x256xf32>
    %15 = arith.addf %11, %14 : vector<64x256xf32>
    %c0_14 = arith.constant 0 : index
    %c0_15 = arith.constant 0 : index
    %16 = vector.load %arg7[%c0_14, %c0_15] : memref<1x256xf32, #tpu.memory_space<vmem>>, vector<1x256xf32>
    %17 = vector.broadcast %16 : vector<1x256xf32> to vector<64x256xf32>
    %18 = arith.addf %15, %17 : vector<64x256xf32>
    %19 = math.tanh %18 : vector<64x256xf32>
    %c0_16 = arith.constant 0 : index
    %c0_17 = arith.constant 0 : index
    %20 = vector.load %arg8[%c0_16, %c0_17] : memref<256x64xf32, #tpu.memory_space<vmem>>, vector<256x64xf32>
    %cst_18 = arith.constant dense<0.000000e+00> : vector<64x64xf32>
    %21 = tpu.matmul %19, %20, %cst_18 {dimension_numbers = #tpu.dot_dimension_numbers<[1], [0], [0], [1], [0, 0, 1, 1], [], []>} : vector<64x256xf32>, vector<256x64xf32>, vector<64x64xf32> -> vector<64x64xf32>
    %c0_19 = arith.constant 0 : index
    %c0_20 = arith.constant 0 : index
    %22 = vector.load %arg9[%c0_19, %c0_20] : memref<1x64xf32, #tpu.memory_space<vmem>>, vector<1x64xf32>
    %23 = vector.broadcast %22 : vector<1x64xf32> to vector<64x64xf32>
    %24 = arith.addf %21, %23 : vector<64x64xf32>
    %25 = math.tanh %24 : vector<64x64xf32>
    %c0_21 = arith.constant 0 : index
    %c0_22 = arith.constant 0 : index
    %26 = vector.load %arg10[%c0_21, %c0_22] : memref<64x16xf32, #tpu.memory_space<vmem>>, vector<64x16xf32>
    %cst_23 = arith.constant dense<0.000000e+00> : vector<64x16xf32>
    %27 = tpu.matmul %25, %26, %cst_23 {dimension_numbers = #tpu.dot_dimension_numbers<[1], [0], [0], [1], [0, 0, 1, 1], [], []>} : vector<64x64xf32>, vector<64x16xf32>, vector<64x16xf32> -> vector<64x16xf32>
    %c0_24 = arith.constant 0 : index
    %c0_25 = arith.constant 0 : index
    %28 = vector.load %arg11[%c0_24, %c0_25] : memref<1x16xf32, #tpu.memory_space<vmem>>, vector<1x16xf32>
    %29 = vector.broadcast %28 : vector<1x16xf32> to vector<64x16xf32>
    %30 = arith.addf %27, %29 : vector<64x16xf32>
    %31 = math.tanh %30 : vector<64x16xf32>
    %c0_26 = arith.constant 0 : index
    %c0_27 = arith.constant 0 : index
    %32 = vector.load %arg12[%c0_26, %c0_27] : memref<16x8xf32, #tpu.memory_space<vmem>>, vector<16x8xf32>
    %cst_28 = arith.constant dense<0.000000e+00> : vector<64x8xf32>
    %33 = tpu.matmul %31, %32, %cst_28 {dimension_numbers = #tpu.dot_dimension_numbers<[1], [0], [0], [1], [0, 0, 1, 1], [], []>} : vector<64x16xf32>, vector<16x8xf32>, vector<64x8xf32> -> vector<64x8xf32>
    %c0_29 = arith.constant 0 : index
    %c0_30 = arith.constant 0 : index
    %34 = vector.load %arg13[%c0_29, %c0_30] : memref<1x8xf32, #tpu.memory_space<vmem>>, vector<1x8xf32>
    %35 = vector.broadcast %34 : vector<1x8xf32> to vector<64x8xf32>
    %36 = arith.addf %33, %35 : vector<64x8xf32>
    %37 = math.tanh %36 : vector<64x8xf32>
    %c0_31 = arith.constant 0 : index
    %c0_32 = arith.constant 0 : index
    %38 = vector.load %arg14[%c0_31, %c0_32] : memref<1x8xf32, #tpu.memory_space<vmem>>, vector<1x8xf32>
    %cst_33 = arith.constant dense<0.000000e+00> : vector<1x64xf32>
    %39 = tpu.matmul %38, %37, %cst_33 {dimension_numbers = #tpu.dot_dimension_numbers<[1], [1], [0], [0], [0, 0, 1, 0], [], []>} : vector<1x8xf32>, vector<64x8xf32>, vector<1x64xf32> -> vector<1x64xf32>
    %c0_34 = arith.constant 0 : index
    %c0_35 = arith.constant 0 : index
    %40 = vector.load %arg15[%c0_34, %c0_35] : memref<1x1xf32, #tpu.memory_space<vmem>>, vector<1x1xf32>
    %41 = vector.broadcast %40 : vector<1x1xf32> to vector<1x64xf32>
    %42 = arith.addf %39, %41 : vector<1x64xf32>
    %c0_36 = arith.constant 0 : index
    %c0_37 = arith.constant 0 : index
    %c0_38 = arith.constant 0 : index
    %43 = vector.load %arg16[%c0_36, %c0_37, %c0_38] : memref<1x1x64xf32, #tpu.memory_space<vmem>>, vector<1x1x64xf32>
    %44 = vector.shape_cast %43 : vector<1x1x64xf32> to vector<1x64xf32>
    %45 = vector.shape_cast %42 : vector<1x64xf32> to vector<1x1x64xf32>
    tpu.vector_store %arg16[%c0_36, %c0_37, %c0_38], %45 {strides = array<i32>} : memref<1x1x64xf32, #tpu.memory_space<vmem>>, vector<1x1x64xf32>,
    return
  }
  func.func @transform_0(%arg0: i32) -> (i32, i32) {
    %c0_i32 = arith.constant 0 : i32
    %c0_i32_0 = arith.constant 0 : i32
    return %arg0, %c0_i32 : i32, i32
  }
  func.func @transform_1(%arg0: i32) -> (i32, i32) {
    %c0_i32 = arith.constant 0 : i32
    %c0_i32_0 = arith.constant 0 : i32
    return %arg0, %c0_i32 : i32, i32
  }
  func.func @transform_2(%arg0: i32) -> (i32, i32) {
    %c0_i32 = arith.constant 0 : i32
    %c0_i32_0 = arith.constant 0 : i32
    %c0_i32_1 = arith.constant 0 : i32
    return %c0_i32, %c0_i32_0 : i32, i32
  }
  func.func @transform_3(%arg0: i32) -> (i32, i32) {
    %c0_i32 = arith.constant 0 : i32
    %c0_i32_0 = arith.constant 0 : i32
    %c0_i32_1 = arith.constant 0 : i32
    return %c0_i32, %c0_i32_0 : i32, i32
  }
  func.func @transform_4(%arg0: i32) -> (i32, i32) {
    %c0_i32 = arith.constant 0 : i32
    %c0_i32_0 = arith.constant 0 : i32
    %c0_i32_1 = arith.constant 0 : i32
    return %c0_i32, %c0_i32_0 : i32, i32
  }
  func.func @transform_5(%arg0: i32) -> (i32, i32) {
    %c0_i32 = arith.constant 0 : i32
    %c0_i32_0 = arith.constant 0 : i32
    %c0_i32_1 = arith.constant 0 : i32
    return %c0_i32, %c0_i32_0 : i32, i32
  }
  func.func @transform_6(%arg0: i32) -> (i32, i32) {
    %c0_i32 = arith.constant 0 : i32
    %c0_i32_0 = arith.constant 0 : i32
    %c0_i32_1 = arith.constant 0 : i32
    return %c0_i32, %c0_i32_0 : i32, i32
  }
  func.func @transform_7(%arg0: i32) -> (i32, i32) {
    %c0_i32 = arith.constant 0 : i32
    %c0_i32_0 = arith.constant 0 : i32
    %c0_i32_1 = arith.constant 0 : i32
    return %c0_i32, %c0_i32_0 : i32, i32
  }
  func.func @transform_8(%arg0: i32) -> (i32, i32) {
    %c0_i32 = arith.constant 0 : i32
    %c0_i32_0 = arith.constant 0 : i32
    %c0_i32_1 = arith.constant 0 : i32
    return %c0_i32, %c0_i32_0 : i32, i32
  }
  func.func @transform_9(%arg0: i32) -> (i32, i32) {
    %c0_i32 = arith.constant 0 : i32
    %c0_i32_0 = arith.constant 0 : i32
    %c0_i32_1 = arith.constant 0 : i32
    return %c0_i32, %c0_i32_0 : i32, i32
  }
  func.func @transform_10(%arg0: i32) -> (i32, i32) {
    %c0_i32 = arith.constant 0 : i32
    %c0_i32_0 = arith.constant 0 : i32
    %c0_i32_1 = arith.constant 0 : i32
    return %c0_i32, %c0_i32_0 : i32, i32
  }
  func.func @transform_11(%arg0: i32) -> (i32, i32) {
    %c0_i32 = arith.constant 0 : i32
    %c0_i32_0 = arith.constant 0 : i32
    %c0_i32_1 = arith.constant 0 : i32
    return %c0_i32, %c0_i32_0 : i32, i32
  }
  func.func @transform_12(%arg0: i32) -> (i32, i32) {
    %c0_i32 = arith.constant 0 : i32
    %c0_i32_0 = arith.constant 0 : i32
    %c0_i32_1 = arith.constant 0 : i32
    return %c0_i32, %c0_i32_0 : i32, i32
  }
  func.func @transform_13(%arg0: i32) -> (i32, i32) {
    %c0_i32 = arith.constant 0 : i32
    %c0_i32_0 = arith.constant 0 : i32
    %c0_i32_1 = arith.constant 0 : i32
    return %c0_i32, %c0_i32_0 : i32, i32
  }
  func.func @transform_14(%arg0: i32) -> (i32, i32) {
    %c0_i32 = arith.constant 0 : i32
    %c0_i32_0 = arith.constant 0 : i32
    %c0_i32_1 = arith.constant 0 : i32
    return %c0_i32, %c0_i32_0 : i32, i32
  }
  func.func @transform_15(%arg0: i32) -> (i32, i32, i32) {
    %c0_i32 = arith.constant 0 : i32
    %c0_i32_0 = arith.constant 0 : i32
    %c0_i32_1 = arith.constant 0 : i32
    return %arg0, %c0_i32, %c0_i32_0 : i32, i32, i32
  }
}

module attributes {stable_mosaic.version = 11 : i64} {
  func.func @nli_kernel(%arg0: i32, %arg1: memref<64x1024xf32, #tpu.memory_space<vmem>>, %arg2: memref<64x1024xf32, #tpu.memory_space<vmem>>, %arg3: memref<1024x256xf32, #tpu.memory_space<vmem>>, %arg4: memref<1024x256xf32, #tpu.memory_space<vmem>>, %arg5: memref<1024x256xf32, #tpu.memory_space<vmem>>, %arg6: memref<1024x256xf32, #tpu.memory_space<vmem>>, %arg7: memref<1x256xf32, #tpu.memory_space<vmem>>, %arg8: memref<256x64xf32, #tpu.memory_space<vmem>>, %arg9: memref<1x64xf32, #tpu.memory_space<vmem>>, %arg10: memref<64x16xf32, #tpu.memory_space<vmem>>, %arg11: memref<1x16xf32, #tpu.memory_space<vmem>>, %arg12: memref<16x8xf32, #tpu.memory_space<vmem>>, %arg13: memref<1x8xf32, #tpu.memory_space<vmem>>, %arg14: memref<1x8xf32, #tpu.memory_space<vmem>>, %arg15: memref<1x1xf32, #tpu.memory_space<vmem>>, %arg16: memref<1x1x64xf32, #tpu.memory_space<vmem>>) attributes {dimension_semantics = [#tpu.dimension_semantics<parallel>], iteration_bounds = array<i64: 1>, scalar_prefetch = 0 : i64, scratch_operands = 0 : i64, tpu.core_type = #tpu.core_type<tc>, window_params = [{transform_indices = @transform_0, window_bounds = array<i64: 64, 1024>}, {transform_indices = @transform_1, window_bounds = array<i64: 64, 1024>}, {pipeline_mode = #tpu.pipeline_mode<synchronous>, transform_indices = @transform_2, window_bounds = array<i64: 1024, 256>}, {pipeline_mode = #tpu.pipeline_mode<synchronous>, transform_indices = @transform_3, window_bounds = array<i64: 1024, 256>}, {pipeline_mode = #tpu.pipeline_mode<synchronous>, transform_indices = @transform_4, window_bounds = array<i64: 1024, 256>}, {pipeline_mode = #tpu.pipeline_mode<synchronous>, transform_indices = @transform_5, window_bounds = array<i64: 1024, 256>}, {pipeline_mode = #tpu.pipeline_mode<synchronous>, transform_indices = @transform_6, window_bounds = array<i64: 1, 256>}, {pipeline_mode = #tpu.pipeline_mode<synchronous>, transform_indices = @transform_7, window_bounds = array<i64: 256, 64>}, {pipeline_mode = #tpu.pipeline_mode<synchronous>, transform_indices = @transform_8, window_bounds = array<i64: 1, 64>}, {pipeline_mode = #tpu.pipeline_mode<synchronous>, transform_indices = @transform_9, window_bounds = array<i64: 64, 16>}, {pipeline_mode = #tpu.pipeline_mode<synchronous>, transform_indices = @transform_10, window_bounds = array<i64: 1, 16>}, {pipeline_mode = #tpu.pipeline_mode<synchronous>, transform_indices = @transform_11, window_bounds = array<i64: 16, 8>}, {pipeline_mode = #tpu.pipeline_mode<synchronous>, transform_indices = @transform_12, window_bounds = array<i64: 1, 8>}, {pipeline_mode = #tpu.pipeline_mode<synchronous>, transform_indices = @transform_13, window_bounds = array<i64: 1, 8>}, {pipeline_mode = #tpu.pipeline_mode<synchronous>, transform_indices = @transform_14, window_bounds = array<i64: 1, 1>}, {transform_indices = @transform_15, window_bounds = array<i64: 1, 1, 64>}]} {
    %c0 = arith.constant 0 : index
    %c0_0 = arith.constant 0 : index
    %0 = vector.load %arg1[%c0, %c0_0] : memref<64x1024xf32, #tpu.memory_space<vmem>>, vector<64x1024xf32>
    %c0_1 = arith.constant 0 : index
    %c0_2 = arith.constant 0 : index
    %1 = vector.load %arg2[%c0_1, %c0_2] : memref<64x1024xf32, #tpu.memory_space<vmem>>, vector<64x1024xf32>
    %c0_3 = arith.constant 0 : index
    %c0_4 = arith.constant 0 : index
    %2 = vector.load %arg3[%c0_3, %c0_4] : memref<1024x256xf32, #tpu.memory_space<vmem>>, vector<1024x256xf32>
    %cst = arith.constant dense<0.000000e+00> : vector<64x256xf32>
    %3 = tpu.matmul %0, %2, %cst {dimension_numbers = #tpu.dot_dimension_numbers<[1], [0], [0], [1], [0, 0, 1, 1], [], []>} : vector<64x1024xf32>, vector<1024x256xf32>, vector<64x256xf32> -> vector<64x256xf32>
    %c0_5 = arith.constant 0 : index
    %c0_6 = arith.constant 0 : index
    %4 = vector.load %arg4[%c0_5, %c0_6] : memref<1024x256xf32, #tpu.memory_space<vmem>>, vector<1024x256xf32>
    %cst_7 = arith.constant dense<0.000000e+00> : vector<64x256xf32>
    %5 = tpu.matmul %1, %4, %cst_7 {dimension_numbers = #tpu.dot_dimension_numbers<[1], [0], [0], [1], [0, 0, 1, 1], [], []>} : vector<64x1024xf32>, vector<1024x256xf32>, vector<64x256xf32> -> vector<64x256xf32>
    %6 = arith.addf %3, %5 : vector<64x256xf32>
    %7 = arith.subf %0, %1 : vector<64x1024xf32>
    %8 = math.absf %7 : vector<64x1024xf32>
    %c0_8 = arith.constant 0 : index
    %c0_9 = arith.constant 0 : index
    %9 = vector.load %arg5[%c0_8, %c0_9] : memref<1024x256xf32, #tpu.memory_space<vmem>>, vector<1024x256xf32>
    %cst_10 = arith.constant dense<0.000000e+00> : vector<64x256xf32>
    %10 = tpu.matmul %8, %9, %cst_10 {dimension_numbers = #tpu.dot_dimension_numbers<[1], [0], [0], [1], [0, 0, 1, 1], [], []>} : vector<64x1024xf32>, vector<1024x256xf32>, vector<64x256xf32> -> vector<64x256xf32>
    %11 = arith.addf %6, %10 : vector<64x256xf32>
    %12 = arith.mulf %0, %1 : vector<64x1024xf32>
    %c0_11 = arith.constant 0 : index
    %c0_12 = arith.constant 0 : index
    %13 = vector.load %arg6[%c0_11, %c0_12] : memref<1024x256xf32, #tpu.memory_space<vmem>>, vector<1024x256xf32>
    %cst_13 = arith.constant dense<0.000000e+00> : vector<64x256xf32>
    %14 = tpu.matmul %12, %13, %cst_13 {dimension_numbers = #tpu.dot_dimension_numbers<[1], [0], [0], [1], [0, 0, 1, 1], [], []>} : vector<64x1024xf32>, vector<1024x256xf32>, vector<64x256xf32> -> vector<64x256xf32>
    %15 = arith.addf %11, %14 : vector<64x256xf32>
    %c0_14 = arith.constant 0 : index
    %c0_15 = arith.constant 0 : index
    %16 = vector.load %arg7[%c0_14, %c0_15] : memref<1x256xf32, #tpu.memory_space<vmem>>, vector<1x256xf32>
    %17 = vector.broadcast %16 : vector<1x256xf32> to vector<64x256xf32>
    %18 = arith.addf %15, %17 : vector<64x256xf32>
    %19 = math.tanh %18 : vector<64x256xf32>
    %c0_16 = arith.constant 0 : index
    %c0_17 = arith.constant 0 : index
    %20 = vector.load %arg8[%c0_16, %c0_17] : memref<256x64xf32, #tpu.memory_space<vmem>>, vector<256x64xf32>
    %cst_18 = arith.constant dense<0.000000e+00> : vector<64x64xf32>
    %21 = tpu.matmul %19, %20, %cst_18 {dimension_numbers = #tpu.dot_dimension_numbers<[1], [0], [0], [1], [0, 0, 1, 1], [], []>} : vector<64x256xf32>, vector<256x64xf32>, vector<64x64xf32> -> vector<64x64xf32>
    %c0_19 = arith.constant 0 : index
    %c0_20 = arith.constant 0 : index
    %22 = vector.load %arg9[%c0_19, %c0_20] : memref<1x64xf32, #tpu.memory_space<vmem>>, vector<1x64xf32>
    %23 = vector.broadcast %22 : vector<1x64xf32> to vector<64x64xf32>
    %24 = arith.addf %21, %23 : vector<64x64xf32>
    %25 = math.tanh %24 : vector<64x64xf32>
    %c0_21 = arith.constant 0 : index
    %c0_22 = arith.constant 0 : index
    %26 = vector.load %arg10[%c0_21, %c0_22] : memref<64x16xf32, #tpu.memory_space<vmem>>, vector<64x16xf32>
    %cst_23 = arith.constant dense<0.000000e+00> : vector<64x16xf32>
    %27 = tpu.matmul %25, %26, %cst_23 {dimension_numbers = #tpu.dot_dimension_numbers<[1], [0], [0], [1], [0, 0, 1, 1], [], []>} : vector<64x64xf32>, vector<64x16xf32>, vector<64x16xf32> -> vector<64x16xf32>
    %c0_24 = arith.constant 0 : index
    %c0_25 = arith.constant 0 : index
    %28 = vector.load %arg11[%c0_24, %c0_25] : memref<1x16xf32, #tpu.memory_space<vmem>>, vector<1x16xf32>
    %29 = vector.broadcast %28 : vector<1x16xf32> to vector<64x16xf32>
    %30 = arith.addf %27, %29 : vector<64x16xf32>
    %31 = math.tanh %30 : vector<64x16xf32>
    %c0_26 = arith.constant 0 : index
    %c0_27 = arith.constant 0 : index
    %32 = vector.load %arg12[%c0_26, %c0_27] : memref<16x8xf32, #tpu.memory_space<vmem>>, vector<16x8xf32>
    %cst_28 = arith.constant dense<0.000000e+00> : vector<64x8xf32>
    %33 = tpu.matmul %31, %32, %cst_28 {dimension_numbers = #tpu.dot_dimension_numbers<[1], [0], [0], [1], [0, 0, 1, 1], [], []>} : vector<64x16xf32>, vector<16x8xf32>, vector<64x8xf32> -> vector<64x8xf32>
    %c0_29 = arith.constant 0 : index
    %c0_30 = arith.constant 0 : index
    %34 = vector.load %arg13[%c0_29, %c0_30] : memref<1x8xf32, #tpu.memory_space<vmem>>, vector<1x8xf32>
    %35 = vector.broadcast %34 : vector<1x8xf32> to vector<64x8xf32>
    %36 = arith.addf %33, %35 : vector<64x8xf32>
    %37 = math.tanh %36 : vector<64x8xf32>
    %c0_31 = arith.constant 0 : index
    %c0_32 = arith.constant 0 : index
    %38 = vector.load %arg14[%c0_31, %c0_32] : memref<1x8xf32, #tpu.memory_space<vmem>>, vector<1x8xf32>
    %cst_33 = arith.constant dense<0.000000e+00> : vector<1x64xf32>
    %39 = tpu.matmul %38, %37, %cst_33 {dimension_numbers = #tpu.dot_dimension_numbers<[1], [1], [0], [0], [0, 0, 1, 0], [], []>} : vector<1x8xf32>, vector<64x8xf32>, vector<1x64xf32> -> vector<1x64xf32>
    %c0_34 = arith.constant 0 : index
    %c0_35 = arith.constant 0 : index
    %40 = vector.load %arg15[%c0_34, %c0_35] : memref<1x1xf32, #tpu.memory_space<vmem>>, vector<1x1xf32>
    %41 = vector.broadcast %40 : vector<1x1xf32> to vector<1x64xf32>
    %42 = arith.addf %39, %41 : vector<1x64xf32>
    %c0_36 = arith.constant 0 : index
    %c0_37 = arith.constant 0 : index
    %c0_38 = arith.constant 0 : index
    %43 = vector.load %arg16[%c0_36, %c0_37, %c0_38] : memref<1x1x64xf32, #tpu.memory_space<vmem>>, vector<1x1x64xf32>
    %44 = vector.shape_cast %43 : vector<1x1x64xf32> to vector<1x64xf32>
    %45 = vector.shape_cast %42 : vector<1x64xf32> to vector<1x1x64xf32>
    tpu.vector_store %arg16[%c0_36, %c0_37, %c0_38], %45 {strides = array<i32>} : memref<1x1x64xf32, #tpu.memory_space<vmem>>, vector<1x1x64xf32>,
    return
  }
  func.func @transform_0(%arg0: i32) -> (i32, i32) {
    %c0_i32 = arith.constant 0 : i32
    %c0_i32_0 = arith.constant 0 : i32
    return %arg0, %c0_i32 : i32, i32
  }
  func.func @transform_1(%arg0: i32) -> (i32, i32) {
    %c0_i32 = arith.constant 0 : i32
    %c0_i32_0 = arith.constant 0 : i32
    return %arg0, %c0_i32 : i32, i32
  }
  func.func @transform_2(%arg0: i32) -> (i32, i32) {
    %c0_i32 = arith.constant 0 : i32
    %c0_i32_0 = arith.constant 0 : i32
    %c0_i32_1 = arith.constant 0 : i32
    return %c0_i32, %c0_i32_0 : i32, i32
  }
  func.func @transform_3(%arg0: i32) -> (i32, i32) {
    %c0_i32 = arith.constant 0 : i32
    %c0_i32_0 = arith.constant 0 : i32
    %c0_i32_1 = arith.constant 0 : i32
    return %c0_i32, %c0_i32_0 : i32, i32
  }
  func.func @transform_4(%arg0: i32) -> (i32, i32) {
    %c0_i32 = arith.constant 0 : i32
    %c0_i32_0 = arith.constant 0 : i32
    %c0_i32_1 = arith.constant 0 : i32
    return %c0_i32, %c0_i32_0 : i32, i32
  }
  func.func @transform_5(%arg0: i32) -> (i32, i32) {
    %c0_i32 = arith.constant 0 : i32
    %c0_i32_0 = arith.constant 0 : i32
    %c0_i32_1 = arith.constant 0 : i32
    return %c0_i32, %c0_i32_0 : i32, i32
  }
  func.func @transform_6(%arg0: i32) -> (i32, i32) {
    %c0_i32 = arith.constant 0 : i32
    %c0_i32_0 = arith.constant 0 : i32
    %c0_i32_1 = arith.constant 0 : i32
    return %c0_i32, %c0_i32_0 : i32, i32
  }
  func.func @transform_7(%arg0: i32) -> (i32, i32) {
    %c0_i32 = arith.constant 0 : i32
    %c0_i32_0 = arith.constant 0 : i32
    %c0_i32_1 = arith.constant 0 : i32
    return %c0_i32, %c0_i32_0 : i32, i32
  }
  func.func @transform_8(%arg0: i32) -> (i32, i32) {
    %c0_i32 = arith.constant 0 : i32
    %c0_i32_0 = arith.constant 0 : i32
    %c0_i32_1 = arith.constant 0 : i32
    return %c0_i32, %c0_i32_0 : i32, i32
  }
  func.func @transform_9(%arg0: i32) -> (i32, i32) {
    %c0_i32 = arith.constant 0 : i32
    %c0_i32_0 = arith.constant 0 : i32
    %c0_i32_1 = arith.constant 0 : i32
    return %c0_i32, %c0_i32_0 : i32, i32
  }
  func.func @transform_10(%arg0: i32) -> (i32, i32) {
    %c0_i32 = arith.constant 0 : i32
    %c0_i32_0 = arith.constant 0 : i32
    %c0_i32_1 = arith.constant 0 : i32
    return %c0_i32, %c0_i32_0 : i32, i32
  }
  func.func @transform_11(%arg0: i32) -> (i32, i32) {
    %c0_i32 = arith.constant 0 : i32
    %c0_i32_0 = arith.constant 0 : i32
    %c0_i32_1 = arith.constant 0 : i32
    return %c0_i32, %c0_i32_0 : i32, i32
  }
  func.func @transform_12(%arg0: i32) -> (i32, i32) {
    %c0_i32 = arith.constant 0 : i32
    %c0_i32_0 = arith.constant 0 : i32
    %c0_i32_1 = arith.constant 0 : i32
    return %c0_i32, %c0_i32_0 : i32, i32
  }
  func.func @transform_13(%arg0: i32) -> (i32, i32) {
    %c0_i32 = arith.constant 0 : i32
    %c0_i32_0 = arith.constant 0 : i32
    %c0_i32_1 = arith.constant 0 : i32
    return %c0_i32, %c0_i32_0 : i32, i32
  }
  func.func @transform_14(%arg0: i32) -> (i32, i32) {
    %c0_i32 = arith.constant 0 : i32
    %c0_i32_0 = arith.constant 0 : i32
    %c0_i32_1 = arith.constant 0 : i32
    return %c0_i32, %c0_i32_0 : i32, i32
  }
  func.func @transform_15(%arg0: i32) -> (i32, i32, i32) {
    %c0_i32 = arith.constant 0 : i32
    %c0_i32_0 = arith.constant 0 : i32
    %c0_i32_1 = arith.constant 0 : i32
    return %arg0, %c0_i32, %c0_i32_0 : i32, i32, i32
  }
}

</mosaic_0001>

<llo_original>
// kernel: _nli_call.1
$region0: #{_nli_call.1}
  #allocation0 [shape = 'u32[]', space=smem, size = 0x4, offset = 0x4, fixed_abs, tag = 'smem constant byte address 0x4 - core index']
  #allocation1 [shape = 'u32[144,128]{1,0:T(1,128)}', space=vmem, size = 0x12000, scoped, tag = 'internal scratch']
  #allocation2 [shape = 'f32[1,1]{1,0:T(1,128)S(1)}', space=vmem, size = 0x200, scoped, tag = 'scoped memory for _nli_call.1']
  %s0 = inlined_call_operand.hbm [shape: f32[64,1024], index: 0, kind: input, shape index: {}]
  %s1 = inlined_call_operand.hbm [shape: f32[64,1024], index: 1, kind: input, shape index: {}]
  %s2 = inlined_call_operand.hbm [shape: f32[1024,256], index: 2, kind: input, shape index: {}]
  %s3 = inlined_call_operand.hbm [shape: f32[1024,256], index: 3, kind: input, shape index: {}]
  %s4 = inlined_call_operand.hbm [shape: f32[1024,256], index: 4, kind: input, shape index: {}]
  %s5 = inlined_call_operand.hbm [shape: f32[1024,256], index: 5, kind: input, shape index: {}]
  %s6 = inlined_call_operand.vmem [shape: f32[1,256], index: 6, kind: input, shape index: {}]
  %s7 = inlined_call_operand.vmem [shape: f32[256,64], index: 7, kind: input, shape index: {}]
  %s8 = inlined_call_operand.vmem [shape: f32[1,64], index: 8, kind: input, shape index: {}]
  %s9 = inlined_call_operand.vmem [shape: f32[64,16], index: 9, kind: input, shape index: {}]
  %s10 = inlined_call_operand.vmem [shape: f32[1,16], index: 10, kind: input, shape index: {}]
  %s11 = inlined_call_operand.vmem [shape: f32[16,8], index: 11, kind: input, shape index: {}]
  %s12 = inlined_call_operand.vmem [shape: f32[1,8], index: 12, kind: input, shape index: {}]
  %s13 = inlined_call_operand.vmem [shape: f32[1,8], index: 13, kind: input, shape index: {}]
  %s14 = inlined_call_operand.<no memory space> [shape: f32[1,1], index: 14, kind: input, shape index: {}]
  %s15 = inlined_call_operand.hbm [shape: f32[1,1,64], index: 15, kind: output, shape index: {}]
  %s16 = sld [smem:[#allocation0]]
  $region94: #{_nli_call.1} parent=0
    _
  %s18 = ssub.s32 1, %s16
  %s19 = scalar_select 0, %s18, %s16
  %v20 = vstv %s14
  %21 = vst [vmem:[#allocation2] sm:$0x1] %v20
  $region1: #{_nli_call.1} parent=0
    #allocation3 [shape = 'u8[262144]{0}', space=vmem, size = 0x40000, scoped, tag = 'input window, operand 0, single buffered']
    #allocation4 [shape = 's32[1]{0}', space=sflag, size = 0x4, scoped, tag = 'scoped memory for _nli_call.1']
    #allocation5 [shape = 's32[1]{0}', space=sflag, size = 0x4, scoped, tag = 'scoped memory for _nli_call.1']
    #allocation6 [shape = 'u8[262144]{0}', space=vmem, size = 0x40000, scoped, tag = 'input window, operand 1, single buffered']
    #allocation7 [shape = 's32[1]{0}', space=sflag, size = 0x4, scoped, tag = 'scoped memory for _nli_call.1']
    #allocation8 [shape = 'u8[1048576]{0}', space=vmem, size = 0x100000, scoped, tag = 'input window, operand 2, single buffered']
    #allocation9 [shape = 'u8[1048576]{0}', space=vmem, size = 0x100000, scoped, tag = 'input window, operand 3, single buffered']
    #allocation10 [shape = 's32[1]{0}', space=sflag, size = 0x4, scoped, tag = 'scoped memory for _nli_call.1']
    #allocation11 [shape = 'u8[1048576]{0}', space=vmem, size = 0x100000, scoped, tag = 'input window, operand 4, single buffered']
    #allocation12 [shape = 'u8[1048576]{0}', space=vmem, size = 0x100000, scoped, tag = 'input window, operand 5, single buffered']
    #allocation13 [shape = 's32[1]{0}', space=sflag, size = 0x4, scoped, tag = 'scoped memory for _nli_call.1']
    #allocation14 [shape = 'u8[512]{0}', space=vmem, size = 0x400, scoped, tag = 'output window, operand 0, single buffered']
    %22 = vsyncpa [#allocation4], 0
    %23 = vsyncpa [#allocation7], 0
    %24 = vsyncpa [#allocation10], 0
    %25 = vsyncpa [#allocation13], 0
    %26 = vsyncpa [#allocation5], 0
    // Predicated region
    $region2: #{_nli_call.1} parent=1 // pred_check
      _
    $region3: #{_nli_call.1} parent=1 // pred_check_branch
      %28 = sbr.rel (0) target = $region5
    $region4: #{_nli_call.1} parent=1 // pred_region
      %s30 = ssub.s32 8192, 8192
      %31 = vsyncadd [#allocation4], %s30
      %s32 = sshll.u32 [#allocation3], 4
      %s33 = int_to_ptr.vmem [resolvable:$true] %s32
      %38 = dma.hbm_to_vmem [thread:$0]  %s0, 8192, %s33, [#allocation4], 1024, 1024, 64
    $region5: #{_nli_call.1} parent=1 // pred_fallthru
      _
    // Predicated region
    $region6: #{_nli_call.1} parent=1 // pred_check
      _
    $region7: #{_nli_call.1} parent=1 // pred_check_branch
      %40 = sbr.rel (0) target = $region9
    $region8: #{_nli_call.1} parent=1 // pred_region
      %s42 = ssub.s32 8192, 8192
      %43 = vsyncadd [#allocation7], %s42
      %s44 = sshll.u32 [#allocation6], 4
      %s45 = int_to_ptr.vmem [resolvable:$true] %s44
      %50 = dma.hbm_to_vmem [thread:$0]  %s1, 8192, %s45, [#allocation7], 1024, 1024, 64
    $region9: #{_nli_call.1} parent=1 // pred_fallthru
      _
    // Predicated region
    $region10: #{_nli_call.1} parent=1 // pred_check
      _
    $region11: #{_nli_call.1} parent=1 // pred_check_branch
      %52 = sbr.rel (0) target = $region13
    $region12: #{_nli_call.1} parent=1 // pred_region
      %s54 = ssub.s32 32768, 32768
      %55 = vsyncadd [#allocation7], %s54
      %s56 = sshll.u32 [#allocation8], 4
      %s57 = int_to_ptr.vmem [resolvable:$true] %s56
      %62 = dma.hbm_to_vmem [thread:$0]  %s2, 32768, %s57, [#allocation7], 256, 256, 16
    $region13: #{_nli_call.1} parent=1 // pred_fallthru
      _
    // Predicated region
    $region14: #{_nli_call.1} parent=1 // pred_check
      _
    $region15: #{_nli_call.1} parent=1 // pred_check_branch
      %64 = sbr.rel (0) target = $region17
    $region16: #{_nli_call.1} parent=1 // pred_region
      %s66 = ssub.s32 32768, 32768
      %67 = vsyncadd [#allocation10], %s66
      %s68 = sshll.u32 [#allocation9], 4
      %s69 = int_to_ptr.vmem [resolvable:$true] %s68
      %74 = dma.hbm_to_vmem [thread:$0]  %s3, 32768, %s69, [#allocation10], 256, 256, 16
    $region17: #{_nli_call.1} parent=1 // pred_fallthru
      _
    // Predicated region
    $region18: #{_nli_call.1} parent=1 // pred_check
      _
    $region19: #{_nli_call.1} parent=1 // pred_check_branch
      %76 = sbr.rel (0) target = $region21
    $region20: #{_nli_call.1} parent=1 // pred_region
      %s78 = ssub.s32 32768, 32768
      %79 = vsyncadd [#allocation10], %s78
      %s80 = sshll.u32 [#allocation11], 4
      %s81 = int_to_ptr.vmem [resolvable:$true] %s80
      %86 = dma.hbm_to_vmem [thread:$0]  %s4, 32768, %s81, [#allocation10], 256, 256, 16
    $region21: #{_nli_call.1} parent=1 // pred_fallthru
      _
    // Predicated region
    $region22: #{_nli_call.1} parent=1 // pred_check
      _
    $region23: #{_nli_call.1} parent=1 // pred_check_branch
      %88 = sbr.rel (0) target = $region25
    $region24: #{_nli_call.1} parent=1 // pred_region
      %s90 = ssub.s32 32768, 32768
      %91 = vsyncadd [#allocation13], %s90
      %s92 = sshll.u32 [#allocation12], 4
      %s93 = int_to_ptr.vmem [resolvable:$true] %s92
      %98 = dma.hbm_to_vmem [thread:$0]  %s5, 32768, %s93, [#allocation13], 256, 256, 16
    $region25: #{_nli_call.1} parent=1 // pred_fallthru
      _
    // Predicated region
    $region26: #{_nli_call.1} parent=1 // pred_check
      _
    $region27: #{_nli_call.1} parent=1 // pred_check_branch
      %100 = sbr.rel (0) target = $region29
    $region28: #{_nli_call.1} parent=1 // pred_region
      _
    $region29: #{_nli_call.1} parent=1 // pred_fallthru
      _
    // Predicated region
    $region30: #{_nli_call.1} parent=1 // pred_check
      _
    $region31: #{_nli_call.1} parent=1 // pred_check_branch
      %102 = sbr.rel (0) target = $region33
    $region32: #{_nli_call.1} parent=1 // pred_region
      _
    $region33: #{_nli_call.1} parent=1 // pred_fallthru
      _
    // Predicated region
    $region34: #{_nli_call.1} parent=1 // pred_check
      _
    $region35: #{_nli_call.1} parent=1 // pred_check_branch
      %104 = sbr.rel (0) target = $region37
    $region36: #{_nli_call.1} parent=1 // pred_region
      _
    $region37: #{_nli_call.1} parent=1 // pred_fallthru
      _
    // Predicated region
    $region38: #{_nli_call.1} parent=1 // pred_check
      _
    $region39: #{_nli_call.1} parent=1 // pred_check_branch
      %106 = sbr.rel (0) target = $region41
    $region40: #{_nli_call.1} parent=1 // pred_region
      _
    $region41: #{_nli_call.1} parent=1 // pred_fallthru
      _
    // Predicated region
    $region42: #{_nli_call.1} parent=1 // pred_check
      _
    $region43: #{_nli_call.1} parent=1 // pred_check_branch
      %108 = sbr.rel (0) target = $region45
    $region44: #{_nli_call.1} parent=1 // pred_region
      _
    $region45: #{_nli_call.1} parent=1 // pred_fallthru
      _
    // Predicated region
    $region46: #{_nli_call.1} parent=1 // pred_check
      _
    $region47: #{_nli_call.1} parent=1 // pred_check_branch
      %110 = sbr.rel (0) target = $region49
    $region48: #{_nli_call.1} parent=1 // pred_region
      _
    $region49: #{_nli_call.1} parent=1 // pred_fallthru
      _
    // Predicated region
    $region50: #{_nli_call.1} parent=1 // pred_check
      _
    $region51: #{_nli_call.1} parent=1 // pred_check_branch
      %112 = sbr.rel (0) target = $region53
    $region52: #{_nli_call.1} parent=1 // pred_region
      _
    $region53: #{_nli_call.1} parent=1 // pred_fallthru
      _
    // Predicated region
    $region54: #{_nli_call.1} parent=1 // pred_check
      _
    $region55: #{_nli_call.1} parent=1 // pred_check_branch
      %114 = sbr.rel (0) target = $region57
    $region56: #{_nli_call.1} parent=1 // pred_region
      _
    $region57: #{_nli_call.1} parent=1 // pred_fallthru
      _
    // Predicated region
    $region58: #{_nli_call.1} parent=1 // pred_check
      _
    $region59: #{_nli_call.1} parent=1 // pred_check_branch
      %116 = sbr.rel (0) target = $region61
    $region60: #{_nli_call.1} parent=1 // pred_region
      _
    $region61: #{_nli_call.1} parent=1 // pred_fallthru
      _
    // Predicated region
    $region62: #{_nli_call.1} parent=1 // pred_check
      _
    $region63: #{_nli_call.1} parent=1 // pred_check_branch
      %118 = sbr.rel (0) target = $region65
    $region64: #{_nli_call.1} parent=1 // pred_region
      %119 = dma.done [#allocation4], 8192
    $region65: #{_nli_call.1} parent=1 // pred_fallthru
      _
    // Predicated region
    $region66: #{_nli_call.1} parent=1 // pred_check
      _
    $region67: #{_nli_call.1} parent=1 // pred_check_branch
      %121 = sbr.rel (0) target = $region69
    $region68: #{_nli_call.1} parent=1 // pred_region
      %122 = dma.done [#allocation7], 8192
    $region69: #{_nli_call.1} parent=1 // pred_fallthru
      _
    // Predicated region
    $region70: #{_nli_call.1} parent=1 // pred_check
      _
    $region71: #{_nli_call.1} parent=1 // pred_check_branch
      %124 = sbr.rel (0) target = $region73
    $region72: #{_nli_call.1} parent=1 // pred_region
      %125 = dma.done [#allocation7], 32768
    $region73: #{_nli_call.1} parent=1 // pred_fallthru
      _
    // Predicated region
    $region74: #{_nli_call.1} parent=1 // pred_check
      _
    $region75: #{_nli_call.1} parent=1 // pred_check_branch
      %127 = sbr.rel (0) target = $region77
    $region76: #{_nli_call.1} parent=1 // pred_region
      %128 = dma.done [#allocation10], 32768
    $region77: #{_nli_call.1} parent=1 // pred_fallthru
      _
    // Predicated region
    $region78: #{_nli_call.1} parent=1 // pred_check
      _
    $region79: #{_nli_call.1} parent=1 // pred_check_branch
      %130 = sbr.rel (0) target = $region81
    $region80: #{_nli_call.1} parent=1 // pred_region
      %131 = dma.done [#allocation10], 32768
    $region81: #{_nli_call.1} parent=1 // pred_fallthru
      _
    // Predicated region
    $region82: #{_nli_call.1} parent=1 // pred_check
      _
    $region83: #{_nli_call.1} parent=1 // pred_check_branch
      %133 = sbr.rel (0) target = $region85
    $region84: #{_nli_call.1} parent=1 // pred_region
      %134 = dma.done [#allocation13], 32768
    $region85: #{_nli_call.1} parent=1 // pred_fallthru
      _
    %v135 = vld [vmem:[#allocation3] sm:$0xff]
    %v136 = vld [vmem:[#allocation3 + $0x8] sm:$0xff]
    %v137 = vld [vmem:[#allocation3 + $0x10] sm:$0xff]
    %v138 = vld [vmem:[#allocation3 + $0x18] sm:$0xff]
    %v139 = vld [vmem:[#allocation3 + $0x20] sm:$0xff]
    %v140 = vld [vmem:[#allocation3 + $0x28] sm:$0xff]
    %v141 = vld [vmem:[#allocation3 + $0x30] sm:$0xff]
    %v142 = vld [vmem:[#allocation3 + $0x38] sm:$0xff]
    %v143 = vld [vmem:[#allocation3 + $0x40] sm:$0xff]
    %v144 = vld [vmem:[#allocation3 + $0x48] sm:$0xff]
    %v145 = vld [vmem:[#allocation3 + $0x50] sm:$0xff]
    %v146 = vld [vmem:[#allocation3 + $0x58] sm:$0xff]
    %v147 = vld [vmem:[#allocation3 + $0x60] sm:$0xff]
    %v148 = vld [vmem:[#allocation3 + $0x68] sm:$0xff]
    %v149 = vld [vmem:[#allocation3 + $0x70] sm:$0xff]
    %v150 = vld [vmem:[#allocation3 + $0x78] sm:$0xff]
    %v151 = vld [vmem:[#allocation3 + $0x80] sm:$0xff]
    %v152 = vld [vmem:[#allocation3 + $0x88] sm:$0xff]
    %v153 = vld [vmem:[#allocation3 + $0x90] sm:$0xff]
    %v154 = vld [vmem:[#allocation3 + $0x98] sm:$0xff]
    %v155 = vld [vmem:[#allocation3 + $0xa0] sm:$0xff]
    %v156 = vld [vmem:[#allocation3 + $0xa8] sm:$0xff]
    %v157 = vld [vmem:[#allocation3 + $0xb0] sm:$0xff]
    %v158 = vld [vmem:[#allocation3 + $0xb8] sm:$0xff]
    %v159 = vld [vmem:[#allocation3 + $0xc0] sm:$0xff]
    %v160 = vld [vmem:[#allocation3 + $0xc8] sm:$0xff]
    %v161 = vld [vmem:[#allocation3 + $0xd0] sm:$0xff]
    %v162 = vld [vmem:[#allocation3 + $0xd8] sm:$0xff]
    %v163 = vld [vmem:[#allocation3 + $0xe0] sm:$0xff]
    %v164 = vld [vmem:[#allocation3 + $0xe8] sm:$0xff]
    %v165 = vld [vmem:[#allocation3 + $0xf0] sm:$0xff]
    %v166 = vld [vmem:[#allocation3 + $0xf8] sm:$0xff]
    %v167 = vld [vmem:[#allocation3 + $0x100] sm:$0xff]
    %v168 = vld [vmem:[#allocation3 + $0x108] sm:$0xff]
    %v169 = vld [vmem:[#allocation3 + $0x110] sm:$0xff]
    %v170 = vld [vmem:[#allocation3 + $0x118] sm:$0xff]
    %v171 = vld [vmem:[#allocation3 + $0x120] sm:$0xff]
    %v172 = vld [vmem:[#allocation3 + $0x128] sm:$0xff]
    %v173 = vld [vmem:[#allocation3 + $0x130] sm:$0xff]
    %v174 = vld [vmem:[#allocation3 + $0x138] sm:$0xff]
    %v175 = vld [vmem:[#allocation3 + $0x140] sm:$0xff]
    %v176 = vld [vmem:[#allocation3 + $0x148] sm:$0xff]
    %v177 = vld [vmem:[#allocation3 + $0x150] sm:$0xff]
    %v178 = vld [vmem:[#allocation3 + $0x158] sm:$0xff]
    %v179 = vld [vmem:[#allocation3 + $0x160] sm:$0xff]
    %v180 = vld [vmem:[#allocation3 + $0x168] sm:$0xff]
    %v181 = vld [vmem:[#allocation3 + $0x170] sm:$0xff]
    %v182 = vld [vmem:[#allocation3 + $0x178] sm:$0xff]
    %v183 = vld [vmem:[#allocation3 + $0x180] sm:$0xff]
    %v184 = vld [vmem:[#allocation3 + $0x188] sm:$0xff]
    %v185 = vld [vmem:[#allocation3 + $0x190] sm:$0xff]
    %v186 = vld [vmem:[#allocation3 + $0x198] sm:$0xff]
    %v187 = vld [vmem:[#allocation3 + $0x1a0] sm:$0xff]
    %v188 = vld [vmem:[#allocation3 + $0x1a8] sm:$0xff]
    %v189 = vld [vmem:[#allocation3 + $0x1b0] sm:$0xff]
    %v190 = vld [vmem:[#allocation3 + $0x1b8] sm:$0xff]
    %v191 = vld [vmem:[#allocation3 + $0x1c0] sm:$0xff]
    %v192 = vld [vmem:[#allocation3 + $0x1c8] sm:$0xff]
    %v193 = vld [vmem:[#allocation3 + $0x1d0] sm:$0xff]
    %v194 = vld [vmem:[#allocation3 + $0x1d8] sm:$0xff]
    %v195 = vld [vmem:[#allocation3 + $0x1e0] sm:$0xff]
    %v196 = vld [vmem:[#allocation3 + $0x1e8] sm:$0xff]
    %v197 = vld [vmem:[#allocation3 + $0x1f0] sm:$0xff]
    %v198 = vld [vmem:[#allocation3 + $0x1f8] sm:$0xff]
    %v199 = vld [vmem:[#allocation6] sm:$0xff]
    %v200 = vld [vmem:[#allocation6 + $0x8] sm:$0xff]
    %v201 = vld [vmem:[#allocation6 + $0x10] sm:$0xff]
    %v202 = vld [vmem:[#allocation6 + $0x18] sm:$0xff]
    %v203 = vld [vmem:[#allocation6 + $0x20] sm:$0xff]
    %v204 = vld [vmem:[#allocation6 + $0x28] sm:$0xff]
    %v205 = vld [vmem:[#allocation6 + $0x30] sm:$0xff]
    %v206 = vld [vmem:[#allocation6 + $0x38] sm:$0xff]
    %v207 = vld [vmem:[#allocation6 + $0x40] sm:$0xff]
    %v208 = vld [vmem:[#allocation6 + $0x48] sm:$0xff]
    %v209 = vld [vmem:[#allocation6 + $0x50] sm:$0xff]
    %v210 = vld [vmem:[#allocation6 + $0x58] sm:$0xff]
    %v211 = vld [vmem:[#allocation6 + $0x60] sm:$0xff]
    %v212 = vld [vmem:[#allocation6 + $0x68] sm:$0xff]
    %v213 = vld [vmem:[#allocation6 + $0x70] sm:$0xff]
    %v214 = vld [vmem:[#allocation6 + $0x78] sm:$0xff]
    %v215 = vld [vmem:[#allocation6 + $0x80] sm:$0xff]
    %v216 = vld [vmem:[#allocation6 + $0x88] sm:$0xff]
    %v217 = vld [vmem:[#allocation6 + $0x90] sm:$0xff]
    %v218 = vld [vmem:[#allocation6 + $0x98] sm:$0xff]
    %v219 = vld [vmem:[#allocation6 + $0xa0] sm:$0xff]
    %v220 = vld [vmem:[#allocation6 + $0xa8] sm:$0xff]
    %v221 = vld [vmem:[#allocation6 + $0xb0] sm:$0xff]
    %v222 = vld [vmem:[#allocation6 + $0xb8] sm:$0xff]
    %v223 = vld [vmem:[#allocation6 + $0xc0] sm:$0xff]
    %v224 = vld [vmem:[#allocation6 + $0xc8] sm:$0xff]
    %v225 = vld [vmem:[#allocation6 + $0xd0] sm:$0xff]
    %v226 = vld [vmem:[#allocation6 + $0xd8] sm:$0xff]
    %v227 = vld [vmem:[#allocation6 + $0xe0] sm:$0xff]
    %v228 = vld [vmem:[#allocation6 + $0xe8] sm:$0xff]
    %v229 = vld [vmem:[#allocation6 + $0xf0] sm:$0xff]
    %v230 = vld [vmem:[#allocation6 + $0xf8] sm:$0xff]
    %v231 = vld [vmem:[#allocation6 + $0x100] sm:$0xff]
    %v232 = vld [vmem:[#allocation6 + $0x108] sm:$0xff]
    %v233 = vld [vmem:[#allocation6 + $0x110] sm:$0xff]
    %v234 = vld [vmem:[#allocation6 + $0x118] sm:$0xff]
    %v235 = vld [vmem:[#allocation6 + $0x120] sm:$0xff]
    %v236 = vld [vmem:[#allocation6 + $0x128] sm:$0xff]
    %v237 = vld [vmem:[#allocation6 + $0x130] sm:$0xff]
    %v238 = vld [vmem:[#allocation6 + $0x138] sm:$0xff]
    %v239 = vld [vmem:[#allocation6 + $0x140] sm:$0xff]
    %v240 = vld [vmem:[#allocation6 + $0x148] sm:$0xff]
    %v241 = vld [vmem:[#allocation6 + $0x150] sm:$0xff]
    %v242 = vld [vmem:[#allocation6 + $0x158] sm:$0xff]
    %v243 = vld [vmem:[#allocation6 + $0x160] sm:$0xff]
    %v244 = vld [vmem:[#allocation6 + $0x168] sm:$0xff]
    %v245 = vld [vmem:[#allocation6 + $0x170] sm:$0xff]
    %v246 = vld [vmem:[#allocation6 + $0x178] sm:$0xff]
    %v247 = vld [vmem:[#allocation6 + $0x180] sm:$0xff]
    %v248 = vld [vmem:[#allocation6 + $0x188] sm:$0xff]
    %v249 = vld [vmem:[#allocation6 + $0x190] sm:$0xff]
    %v250 = vld [vmem:[#allocation6 + $0x198] sm:$0xff]
    %v251 = vld [vmem:[#allocation6 + $0x1a0] sm:$0xff]
    %v252 = vld [vmem:[#allocation6 + $0x1a8] sm:$0xff]
    %v253 = vld [vmem:[#allocation6 + $0x1b0] sm:$0xff]
    %v254 = vld [vmem:[#allocation6 + $0x1b8] sm:$0xff]
    %v255 = vld [vmem:[#allocation6 + $0x1c0] sm:$0xff]
    %v256 = vld [vmem:[#allocation6 + $0x1c8] sm:$0xff]
    %v257 = vld [vmem:[#allocation6 + $0x1d0] sm:$0xff]
    %v258 = vld [vmem:[#allocation6 + $0x1d8] sm:$0xff]
    %v259 = vld [vmem:[#allocation6 + $0x1e0] sm:$0xff]
    %v260 = vld [vmem:[#allocation6 + $0x1e8] sm:$0xff]
    %v261 = vld [vmem:[#allocation6 + $0x1f0] sm:$0xff]
    %v262 = vld [vmem:[#allocation6 + $0x1f8] sm:$0xff]
    %v263 = vld [vmem:[#allocation8] sm:$0xff]
    %v264 = vld [vmem:[#allocation8 + $0x8] sm:$0xff]
    %v265 = vld [vmem:[#allocation8 + $0x10] sm:$0xff]
    %v266 = vld [vmem:[#allocation8 + $0x18] sm:$0xff]
    %v267 = vld [vmem:[#allocation8 + $0x20] sm:$0xff]
    %v268 = vld [vmem:[#allocation8 + $0x28] sm:$0xff]
    %v269 = vld [vmem:[#allocation8 + $0x30] sm:$0xff]
    %v270 = vld [vmem:[#allocation8 + $0x38] sm:$0xff]
    %v271 = vld [vmem:[#allocation8 + $0x40] sm:$0xff]
    %v272 = vld [vmem:[#allocation8 + $0x48] sm:$0xff]
    %v273 = vld [vmem:[#allocation8 + $0x50] sm:$0xff]
    %v274 = vld [vmem:[#allocation8 + $0x58] sm:$0xff]
    %v275 = vld [vmem:[#allocation8 + $0x60] sm:$0xff]
    %v276 = vld [vmem:[#allocation8 + $0x68] sm:$0xff]
    %v277 = vld [vmem:[#allocation8 + $0x70] sm:$0xff]
    %v278 = vld [vmem:[#allocation8 + $0x78] sm:$0xff]
    %v279 = vld [vmem:[#allocation8 + $0x80] sm:$0xff]
    %v280 = vld [vmem:[#allocation8 + $0x88] sm:$0xff]
    %v281 = vld [vmem:[#allocation8 + $0x90] sm:$0xff]
    %v282 = vld [vmem:[#allocation8 + $0x98] sm:$0xff]
    %v283 = vld [vmem:[#allocation8 + $0xa0] sm:$0xff]
    %v284 = vld [vmem:[#allocation8 + $0xa8] sm:$0xff]
    %v285 = vld [vmem:[#allocation8 + $0xb0] sm:$0xff]
    %v286 = vld [vmem:[#allocation8 + $0xb8] sm:$0xff]
    %v287 = vld [vmem:[#allocation8 + $0xc0] sm:$0xff]
    %v288 = vld [vmem:[#allocation8 + $0xc8] sm:$0xff]
    %v289 = vld [vmem:[#allocation8 + $0xd0] sm:$0xff]
    %v290 = vld [vmem:[#allocation8 + $0xd8] sm:$0xff]
    %v291 = vld [vmem:[#allocation8 + $0xe0] sm:$0xff]
    %v292 = vld [vmem:[#allocation8 + $0xe8] sm:$0xff]
    %v293 = vld [vmem:[#allocation8 + $0xf0] sm:$0xff]
    %v294 = vld [vmem:[#allocation8 + $0xf8] sm:$0xff]
    %v295 = vld [vmem:[#allocation8 + $0x100] sm:$0xff]
    %v296 = vld [vmem:[#allocation8 + $0x108] sm:$0xff]
    %v297 = vld [vmem:[#allocation8 + $0x110] sm:$0xff]
    %v298 = vld [vmem:[#allocation8 + $0x118] sm:$0xff]
    %v299 = vld [vmem:[#allocation8 + $0x120] sm:$0xff]
    %v300 = vld [vmem:[#allocation8 + $0x128] sm:$0xff]
    %v301 = vld [vmem:[#allocation8 + $0x130] sm:$0xff]
    %v302 = vld [vmem:[#allocation8 + $0x138] sm:$0xff]
    %v303 = vld [vmem:[#allocation8 + $0x140] sm:$0xff]
    %v304 = vld [vmem:[#allocation8 + $0x148] sm:$0xff]
    %v305 = vld [vmem:[#allocation8 + $0x150] sm:$0xff]
    %v306 = vld [vmem:[#allocation8 + $0x158] sm:$0xff]
    %v307 = vld [vmem:[#allocation8 + $0x160] sm:$0xff]
    %v308 = vld [vmem:[#allocation8 + $0x168] sm:$0xff]
    %v309 = vld [vmem:[#allocation8 + $0x170] sm:$0xff]
    %v310 = vld [vmem:[#allocation8 + $0x178] sm:$0xff]
    %v311 = vld [vmem:[#allocation8 + $0x180] sm:$0xff]
    %v312 = vld [vmem:[#allocation8 + $0x188] sm:$0xff]
    %v313 = vld [vmem:[#allocation8 + $0x190] sm:$0xff]
    %v314 = vld [vmem:[#allocation8 + $0x198] sm:$0xff]
    %v315 = vld [vmem:[#allocation8 + $0x1a0] sm:$0xff]
    %v316 = vld [vmem:[#allocation8 + $0x1a8] sm:$0xff]
    %v317 = vld [vmem:[#allocation8 + $0x1b0] sm:$0xff]
    %v318 = vld [vmem:[#allocation8 + $0x1b8] sm:$0xff]
    %v319 = vld [vmem:[#allocation8 + $0x1c0] sm:$0xff]
    %v320 = vld [vmem:[#allocation8 + $0x1c8] sm:$0xff]
    %v321 = vld [vmem:[#allocation8 + $0x1d0] sm:$0xff]
    %v322 = vld [vmem:[#allocation8 + $0x1d8] sm:$0xff]
    %v323 = vld [vmem:[#allocation8 + $0x1e0] sm:$0xff]
    %v324 = vld [vmem:[#allocation8 + $0x1e8] sm:$0xff]
    %v325 = vld [vmem:[#allocation8 + $0x1f0] sm:$0xff]
    %v326 = vld [vmem:[#allocation8 + $0x1f8] sm:$0xff]
    %v327 = vld [vmem:[#allocation8 + $0x200] sm:$0xff]
    %v328 = vld [vmem:[#allocation8 + $0x208] sm:$0xff]
    %v329 = vld [vmem:[#allocation8 + $0x210] sm:$0xff]
    %v330 = vld [vmem:[#allocation8 + $0x218] sm:$0xff]
    %v331 = vld [vmem:[#allocation8 + $0x220] sm:$0xff]
    %v332 = vld [vmem:[#allocation8 + $0x228] sm:$0xff]
    %v333 = vld [vmem:[#allocation8 + $0x230] sm:$0xff]
    %v334 = vld [vmem:[#allocation8 + $0x238] sm:$0xff]
    %v335 = vld [vmem:[#allocation8 + $0x240] sm:$0xff]
    %v336 = vld [vmem:[#allocation8 + $0x248] sm:$0xff]
    %v337 = vld [vmem:[#allocation8 + $0x250] sm:$0xff]
    %v338 = vld [vmem:[#allocation8 + $0x258] sm:$0xff]
    %v339 = vld [vmem:[#allocation8 + $0x260] sm:$0xff]
    %v340 = vld [vmem:[#allocation8 + $0x268] sm:$0xff]
    %v341 = vld [vmem:[#allocation8 + $0x270] sm:$0xff]
    %v342 = vld [vmem:[#allocation8 + $0x278] sm:$0xff]
    %v343 = vld [vmem:[#allocation8 + $0x280] sm:$0xff]
    %v344 = vld [vmem:[#allocation8 + $0x288] sm:$0xff]
    %v345 = vld [vmem:[#allocation8 + $0x290] sm:$0xff]
    %v346 = vld [vmem:[#allocation8 + $0x298] sm:$0xff]
    %v347 = vld [vmem:[#allocation8 + $0x2a0] sm:$0xff]
    %v348 = vld [vmem:[#allocation8 + $0x2a8] sm:$0xff]
    %v349 = vld [vmem:[#allocation8 + $0x2b0] sm:$0xff]
    %v350 = vld [vmem:[#allocation8 + $0x2b8] sm:$0xff]
    %v351 = vld [vmem:[#allocation8 + $0x2c0] sm:$0xff]
    %v352 = vld [vmem:[#allocation8 + $0x2c8] sm:$0xff]
    %v353 = vld [vmem:[#allocation8 + $0x2d0] sm:$0xff]
    %v354 = vld [vmem:[#allocation8 + $0x2d8] sm:$0xff]
    %v355 = vld [vmem:[#allocation8 + $0x2e0] sm:$0xff]
    %v356 = vld [vmem:[#allocation8 + $0x2e8] sm:$0xff]
    %v357 = vld [vmem:[#allocation8 + $0x2f0] sm:$0xff]
    %v358 = vld [vmem:[#allocation8 + $0x2f8] sm:$0xff]
    %v359 = vld [vmem:[#allocation8 + $0x300] sm:$0xff]
    %v360 = vld [vmem:[#allocation8 + $0x308] sm:$0xff]
    %v361 = vld [vmem:[#allocation8 + $0x310] sm:$0xff]
    %v362 = vld [vmem:[#allocation8 + $0x318] sm:$0xff]
    %v363 = vld [vmem:[#allocation8 + $0x320] sm:$0xff]
    %v364 = vld [vmem:[#allocation8 + $0x328] sm:$0xff]
    %v365 = vld [vmem:[#allocation8 + $0x330] sm:$0xff]
    %v366 = vld [vmem:[#allocation8 + $0x338] sm:$0xff]
    %v367 = vld [vmem:[#allocation8 + $0x340] sm:$0xff]
    %v368 = vld [vmem:[#allocation8 + $0x348] sm:$0xff]
    %v369 = vld [vmem:[#allocation8 + $0x350] sm:$0xff]
    %v370 = vld [vmem:[#allocation8 + $0x358] sm:$0xff]
    %v371 = vld [vmem:[#allocation8 + $0x360] sm:$0xff]
    %v372 = vld [vmem:[#allocation8 + $0x368] sm:$0xff]
    %v373 = vld [vmem:[#allocation8 + $0x370] sm:$0xff]
    %v374 = vld [vmem:[#allocation8 + $0x378] sm:$0xff]
    %v375 = vld [vmem:[#allocation8 + $0x380] sm:$0xff]
    %v376 = vld [vmem:[#allocation8 + $0x388] sm:$0xff]
    %v377 = vld [vmem:[#allocation8 + $0x390] sm:$0xff]
    %v378 = vld [vmem:[#allocation8 + $0x398] sm:$0xff]
    %v379 = vld [vmem:[#allocation8 + $0x3a0] sm:$0xff]
    %v380 = vld [vmem:[#allocation8 + $0x3a8] sm:$0xff]
    %v381 = vld [vmem:[#allocation8 + $0x3b0] sm:$0xff]
    %v382 = vld [vmem:[#allocation8 + $0x3b8] sm:$0xff]
    %v383 = vld [vmem:[#allocation8 + $0x3c0] sm:$0xff]
    %v384 = vld [vmem:[#allocation8 + $0x3c8] sm:$0xff]
    %v385 = vld [vmem:[#allocation8 + $0x3d0] sm:$0xff]
    %v386 = vld [vmem:[#allocation8 + $0x3d8] sm:$0xff]
    %v387 = vld [vmem:[#allocation8 + $0x3e0] sm:$0xff]
    %v388 = vld [vmem:[#allocation8 + $0x3e8] sm:$0xff]
    %v389 = vld [vmem:[#allocation8 + $0x3f0] sm:$0xff]
    %v390 = vld [vmem:[#allocation8 + $0x3f8] sm:$0xff]
    %v391 = vld [vmem:[#allocation8 + $0x400] sm:$0xff]
    %v392 = vld [vmem:[#allocation8 + $0x408] sm:$0xff]
    %v393 = vld [vmem:[#allocation8 + $0x410] sm:$0xff]
    %v394 = vld [vmem:[#allocation8 + $0x418] sm:$0xff]
    %v395 = vld [vmem:[#allocation8 + $0x420] sm:$0xff]
    %v396 = vld [vmem:[#allocation8 + $0x428] sm:$0xff]
    %v397 = vld [vmem:[#allocation8 + $0x430] sm:$0xff]
    %v398 = vld [vmem:[#allocation8 + $0x438] sm:$0xff]
    %v399 = vld [vmem:[#allocation8 + $0x440] sm:$0xff]
    %v400 = vld [vmem:[#allocation8 + $0x448] sm:$0xff]
    %v401 = vld [vmem:[#allocation8 + $0x450] sm:$0xff]
    %v402 = vld [vmem:[#allocation8 + $0x458] sm:$0xff]
    %v403 = vld [vmem:[#allocation8 + $0x460] sm:$0xff]
    %v404 = vld [vmem:[#allocation8 + $0x468] sm:$0xff]
    %v405 = vld [vmem:[#allocation8 + $0x470] sm:$0xff]
    %v406 = vld [vmem:[#allocation8 + $0x478] sm:$0xff]
    %v407 = vld [vmem:[#allocation8 + $0x480] sm:$0xff]
    %v408 = vld [vmem:[#allocation8 + $0x488] sm:$0xff]
    %v409 = vld [vmem:[#allocation8 + $0x490] sm:$0xff]
    %v410 = vld [vmem:[#allocation8 + $0x498] sm:$0xff]
    %v411 = vld [vmem:[#allocation8 + $0x4a0] sm:$0xff]
    %v412 = vld [vmem:[#allocation8 + $0x4a8] sm:$0xff]
    %v413 = vld [vmem:[#allocation8 + $0x4b0] sm:$0xff]
    %v414 = vld [vmem:[#allocation8 + $0x4b8] sm:$0xff]
    %v415 = vld [vmem:[#allocation8 + $0x4c0] sm:$0xff]
    %v416 = vld [vmem:[#allocation8 + $0x4c8] sm:$0xff]
    %v417 = vld [vmem:[#allocation8 + $0x4d0] sm:$0xff]
    %v418 = vld [vmem:[#allocation8 + $0x4d8] sm:$0xff]
    %v419 = vld [vmem:[#allocation8 + $0x4e0] sm:$0xff]
    %v420 = vld [vmem:[#allocation8 + $0x4e8] sm:$0xff]
    %v421 = vld [vmem:[#allocation8 + $0x4f0] sm:$0xff]
    %v422 = vld [vmem:[#allocation8 + $0x4f8] sm:$0xff]
    %v423 = vld [vmem:[#allocation8 + $0x500] sm:$0xff]
    %v424 = vld [vmem:[#allocation8 + $0x508] sm:$0xff]
    %v425 = vld [vmem:[#allocation8 + $0x510] sm:$0xff]
    %v426 = vld [vmem:[#allocation8 + $0x518] sm:$0xff]
    %v427 = vld [vmem:[#allocation8 + $0x520] sm:$0xff]
    %v428 = vld [vmem:[#allocation8 + $0x528] sm:$0xff]
    %v429 = vld [vmem:[#allocation8 + $0x530] sm:$0xff]
    %v430 = vld [vmem:[#allocation8 + $0x538] sm:$0xff]
    %v431 = vld [vmem:[#allocation8 + $0x540] sm:$0xff]
    %v432 = vld [vmem:[#allocation8 + $0x548] sm:$0xff]
    %v433 = vld [vmem:[#allocation8 + $0x550] sm:$0xff]
    %v434 = vld [vmem:[#allocation8 + $0x558] sm:$0xff]
    %v435 = vld [vmem:[#allocation8 + $0x560] sm:$0xff]
    %v436 = vld [vmem:[#allocation8 + $0x568] sm:$0xff]
    %v437 = vld [vmem:[#allocation8 + $0x570] sm:$0xff]
    %v438 = vld [vmem:[#allocation8 + $0x578] sm:$0xff]
    %v439 = vld [vmem:[#allocation8 + $0x580] sm:$0xff]
    %v440 = vld [vmem:[#allocation8 + $0x588] sm:$0xff]
    %v441 = vld [vmem:[#allocation8 + $0x590] sm:$0xff]
    %v442 = vld [vmem:[#allocation8 + $0x598] sm:$0xff]
    %v443 = vld [vmem:[#allocation8 + $0x5a0] sm:$0xff]
    %v444 = vld [vmem:[#allocation8 + $0x5a8] sm:$0xff]
    %v445 = vld [vmem:[#allocation8 + $0x5b0] sm:$0xff]
    %v446 = vld [vmem:[#allocation8 + $0x5b8] sm:$0xff]
    %v447 = vld [vmem:[#allocation8 + $0x5c0] sm:$0xff]
    %v448 = vld [vmem:[#allocation8 + $0x5c8] sm:$0xff]
    %v449 = vld [vmem:[#allocation8 + $0x5d0] sm:$0xff]
    %v450 = vld [vmem:[#allocation8 + $0x5d8] sm:$0xff]
    %v451 = vld [vmem:[#allocation8 + $0x5e0] sm:$0xff]
    %v452 = vld [vmem:[#allocation8 + $0x5e8] sm:$0xff]
    %v453 = vld [vmem:[#allocation8 + $0x5f0] sm:$0xff]
    %v454 = vld [vmem:[#allocation8 + $0x5f8] sm:$0xff]
    %v455 = vld [vmem:[#allocation8 + $0x600] sm:$0xff]
    %v456 = vld [vmem:[#allocation8 + $0x608] sm:$0xff]
    %v457 = vld [vmem:[#allocation8 + $0x610] sm:$0xff]
    %v458 = vld [vmem:[#allocation8 + $0x618] sm:$0xff]
    %v459 = vld [vmem:[#allocation8 + $0x620] sm:$0xff]
    %v460 = vld [vmem:[#allocation8 + $0x628] sm:$0xff]
    %v461 = vld [vmem:[#allocation8 + $0x630] sm:$0xff]
    %v462 = vld [vmem:[#allocation8 + $0x638] sm:$0xff]
    %v463 = vld [vmem:[#allocation8 + $0x640] sm:$0xff]
    %v464 = vld [vmem:[#allocation8 + $0x648] sm:$0xff]
    %v465 = vld [vmem:[#allocation8 + $0x650] sm:$0xff]
    %v466 = vld [vmem:[#allocation8 + $0x658] sm:$0xff]
    %v467 = vld [vmem:[#allocation8 + $0x660] sm:$0xff]
    %v468 = vld [vmem:[#allocation8 + $0x668] sm:$0xff]
    %v469 = vld [vmem:[#allocation8 + $0x670] sm:$0xff]
    %v470 = vld [vmem:[#allocation8 + $0x678] sm:$0xff]
    %v471 = vld [vmem:[#allocation8 + $0x680] sm:$0xff]
    %v472 = vld [vmem:[#allocation8 + $0x688] sm:$0xff]
    %v473 = vld [vmem:[#allocation8 + $0x690] sm:$0xff]
    %v474 = vld [vmem:[#allocation8 + $0x698] sm:$0xff]
    %v475 = vld [vmem:[#allocation8 + $0x6a0] sm:$0xff]
    %v476 = vld [vmem:[#allocation8 + $0x6a8] sm:$0xff]
    %v477 = vld [vmem:[#allocation8 + $0x6b0] sm:$0xff]
    %v478 = vld [vmem:[#allocation8 + $0x6b8] sm:$0xff]
    %v479 = vld [vmem:[#allocation8 + $0x6c0] sm:$0xff]
    %v480 = vld [vmem:[#allocation8 + $0x6c8] sm:$0xff]
    %v481 = vld [vmem:[#allocation8 + $0x6d0] sm:$0xff]
    %v482 = vld [vmem:[#allocation8 + $0x6d8] sm:$0xff]
    %v483 = vld [vmem:[#allocation8 + $0x6e0] sm:$0xff]
    %v484 = vld [vmem:[#allocation8 + $0x6e8] sm:$0xff]
    %v485 = vld [vmem:[#allocation8 + $0x6f0] sm:$0xff]
    %v486 = vld [vmem:[#allocation8 + $0x6f8] sm:$0xff]
    %v487 = vld [vmem:[#allocation8 + $0x700] sm:$0xff]
    %v488 = vld [vmem:[#allocation8 + $0x708] sm:$0xff]
    %v489 = vld [vmem:[#allocation8 + $0x710] sm:$0xff]
    %v490 = vld [vmem:[#allocation8 + $0x718] sm:$0xff]
    %v491 = vld [vmem:[#allocation8 + $0x720] sm:$0xff]
    %v492 = vld [vmem:[#allocation8 + $0x728] sm:$0xff]
    %v493 = vld [vmem:[#allocation8 + $0x730] sm:$0xff]
    %v494 = vld [vmem:[#allocation8 + $0x738] sm:$0xff]
    %v495 = vld [vmem:[#allocation8 + $0x740] sm:$0xff]
    %v496 = vld [vmem:[#allocation8 + $0x748] sm:$0xff]
    %v497 = vld [vmem:[#allocation8 + $0x750] sm:$0xff]
    %v498 = vld [vmem:[#allocation8 + $0x758] sm:$0xff]
    %v499 = vld [vmem:[#allocation8 + $0x760] sm:$0xff]
    %v500 = vld [vmem:[#allocation8 + $0x768] sm:$0xff]
    %v501 = vld [vmem:[#allocation8 + $0x770] sm:$0xff]
    %v502 = vld [vmem:[#allocation8 + $0x778] sm:$0xff]
    %v503 = vld [vmem:[#allocation8 + $0x780] sm:$0xff]
    %v504 = vld [vmem:[#allocation8 + $0x788] sm:$0xff]
    %v505 = vld [vmem:[#allocation8 + $0x790] sm:$0xff]
    %v506 = vld [vmem:[#allocation8 + $0x798] sm:$0xff]
    %v507 = vld [vmem:[#allocation8 + $0x7a0] sm:$0xff]
    %v508 = vld [vmem:[#allocation8 + $0x7a8] sm:$0xff]
    %v509 = vld [vmem:[#allocation8 + $0x7b0] sm:$0xff]
    %v510 = vld [vmem:[#allocation8 + $0x7b8] sm:$0xff]
    %v511 = vld [vmem:[#allocation8 + $0x7c0] sm:$0xff]
    %v512 = vld [vmem:[#allocation8 + $0x7c8] sm:$0xff]
    %v513 = vld [vmem:[#allocation8 + $0x7d0] sm:$0xff]
    %v514 = vld [vmem:[#allocation8 + $0x7d8] sm:$0xff]
    %v515 = vld [vmem:[#allocation8 + $0x7e0] sm:$0xff]
    %v516 = vld [vmem:[#allocation8 + $0x7e8] sm:$0xff]
    %v517 = vld [vmem:[#allocation8 + $0x7f0] sm:$0xff]
    %v518 = vld [vmem:[#allocation8 + $0x7f8] sm:$0xff]
    %v519 = vld [vmem:[#allocation9] sm:$0xff]
    %v520 = vld [vmem:[#allocation9 + $0x8] sm:$0xff]
    %v521 = vld [vmem:[#allocation9 + $0x10] sm:$0xff]
    %v522 = vld [vmem:[#allocation9 + $0x18] sm:$0xff]
    %v523 = vld [vmem:[#allocation9 + $0x20] sm:$0xff]
    %v524 = vld [vmem:[#allocation9 + $0x28] sm:$0xff]
    %v525 = vld [vmem:[#allocation9 + $0x30] sm:$0xff]
    %v526 = vld [vmem:[#allocation9 + $0x38] sm:$0xff]
    %v527 = vld [vmem:[#allocation9 + $0x40] sm:$0xff]
    %v528 = vld [vmem:[#allocation9 + $0x48] sm:$0xff]
    %v529 = vld [vmem:[#allocation9 + $0x50] sm:$0xff]
    %v530 = vld [vmem:[#allocation9 + $0x58] sm:$0xff]
    %v531 = vld [vmem:[#allocation9 + $0x60] sm:$0xff]
    %v532 = vld [vmem:[#allocation9 + $0x68] sm:$0xff]
    %v533 = vld [vmem:[#allocation9 + $0x70] sm:$0xff]
    %v534 = vld [vmem:[#allocation9 + $0x78] sm:$0xff]
    %v535 = vld [vmem:[#allocation9 + $0x80] sm:$0xff]
    %v536 = vld [vmem:[#allocation9 + $0x88] sm:$0xff]
    %v537 = vld [vmem:[#allocation9 + $0x90] sm:$0xff]
    %v538 = vld [vmem:[#allocation9 + $0x98] sm:$0xff]
    %v539 = vld [vmem:[#allocation9 + $0xa0] sm:$0xff]
    %v540 = vld [vmem:[#allocation9 + $0xa8] sm:$0xff]
    %v541 = vld [vmem:[#allocation9 + $0xb0] sm:$0xff]
    %v542 = vld [vmem:[#allocation9 + $0xb8] sm:$0xff]
    %v543 = vld [vmem:[#allocation9 + $0xc0] sm:$0xff]
    %v544 = vld [vmem:[#allocation9 + $0xc8] sm:$0xff]
    %v545 = vld [vmem:[#allocation9 + $0xd0] sm:$0xff]
    %v546 = vld [vmem:[#allocation9 + $0xd8] sm:$0xff]
    %v547 = vld [vmem:[#allocation9 + $0xe0] sm:$0xff]
    %v548 = vld [vmem:[#allocation9 + $0xe8] sm:$0xff]
    %v549 = vld [vmem:[#allocation9 + $0xf0] sm:$0xff]
    %v550 = vld [vmem:[#allocation9 + $0xf8] sm:$0xff]
    %v551 = vld [vmem:[#allocation9 + $0x100] sm:$0xff]
    %v552 = vld [vmem:[#allocation9 + $0x108] sm:$0xff]
    %v553 = vld [vmem:[#allocation9 + $0x110] sm:$0xff]
    %v554 = vld [vmem:[#allocation9 + $0x118] sm:$0xff]
    %v555 = vld [vmem:[#allocation9 + $0x120] sm:$0xff]
    %v556 = vld [vmem:[#allocation9 + $0x128] sm:$0xff]
    %v557 = vld [vmem:[#allocation9 + $0x130] sm:$0xff]
    %v558 = vld [vmem:[#allocation9 + $0x138] sm:$0xff]
    %v559 = vld [vmem:[#allocation9 + $0x140] sm:$0xff]
    %v560 = vld [vmem:[#allocation9 + $0x148] sm:$0xff]
    %v561 = vld [vmem:[#allocation9 + $0x150] sm:$0xff]
    %v562 = vld [vmem:[#allocation9 + $0x158] sm:$0xff]
    %v563 = vld [vmem:[#allocation9 + $0x160] sm:$0xff]
    %v564 = vld [vmem:[#allocation9 + $0x168] sm:$0xff]
    %v565 = vld [vmem:[#allocation9 + $0x170] sm:$0xff]
    %v566 = vld [vmem:[#allocation9 + $0x178] sm:$0xff]
    %v567 = vld [vmem:[#allocation9 + $0x180] sm:$0xff]
    %v568 = vld [vmem:[#allocation9 + $0x188] sm:$0xff]
    %v569 = vld [vmem:[#allocation9 + $0x190] sm:$0xff]
    %v570 = vld [vmem:[#allocation9 + $0x198] sm:$0xff]
    %v571 = vld [vmem:[#allocation9 + $0x1a0] sm:$0xff]
    %v572 = vld [vmem:[#allocation9 + $0x1a8] sm:$0xff]
    %v573 = vld [vmem:[#allocation9 + $0x1b0] sm:$0xff]
    %v574 = vld [vmem:[#allocation9 + $0x1b8] sm:$0xff]
    %v575 = vld [vmem:[#allocation9 + $0x1c0] sm:$0xff]
    %v576 = vld [vmem:[#allocation9 + $0x1c8] sm:$0xff]
    %v577 = vld [vmem:[#allocation9 + $0x1d0] sm:$0xff]
    %v578 = vld [vmem:[#allocation9 + $0x1d8] sm:$0xff]
    %v579 = vld [vmem:[#allocation9 + $0x1e0] sm:$0xff]
    %v580 = vld [vmem:[#allocation9 + $0x1e8] sm:$0xff]
    %v581 = vld [vmem:[#allocation9 + $0x1f0] sm:$0xff]
    %v582 = vld [vmem:[#allocation9 + $0x1f8] sm:$0xff]
    %v583 = vld [vmem:[#allocation9 + $0x200] sm:$0xff]
    %v584 = vld [vmem:[#allocation9 + $0x208] sm:$0xff]
    %v585 = vld [vmem:[#allocation9 + $0x210] sm:$0xff]
    %v586 = vld [vmem:[#allocation9 + $0x218] sm:$0xff]
    %v587 = vld [vmem:[#allocation9 + $0x220] sm:$0xff]
    %v588 = vld [vmem:[#allocation9 + $0x228] sm:$0xff]
    %v589 = vld [vmem:[#allocation9 + $0x230] sm:$0xff]
    %v590 = vld [vmem:[#allocation9 + $0x238] sm:$0xff]
    %v591 = vld [vmem:[#allocation9 + $0x240] sm:$0xff]
    %v592 = vld [vmem:[#allocation9 + $0x248] sm:$0xff]
    %v593 = vld [vmem:[#allocation9 + $0x250] sm:$0xff]
    %v594 = vld [vmem:[#allocation9 + $0x258] sm:$0xff]
    %v595 = vld [vmem:[#allocation9 + $0x260] sm:$0xff]
    %v596 = vld [vmem:[#allocation9 + $0x268] sm:$0xff]
    %v597 = vld [vmem:[#allocation9 + $0x270] sm:$0xff]
    %v598 = vld [vmem:[#allocation9 + $0x278] sm:$0xff]
    %v599 = vld [vmem:[#allocation9 + $0x280] sm:$0xff]
    %v600 = vld [vmem:[#allocation9 + $0x288] sm:$0xff]
    %v601 = vld [vmem:[#allocation9 + $0x290] sm:$0xff]
    %v602 = vld [vmem:[#allocation9 + $0x298] sm:$0xff]
    %v603 = vld [vmem:[#allocation9 + $0x2a0] sm:$0xff]
    %v604 = vld [vmem:[#allocation9 + $0x2a8] sm:$0xff]
    %v605 = vld [vmem:[#allocation9 + $0x2b0] sm:$0xff]
    %v606 = vld [vmem:[#allocation9 + $0x2b8] sm:$0xff]
    %v607 = vld [vmem:[#allocation9 + $0x2c0] sm:$0xff]
    %v608 = vld [vmem:[#allocation9 + $0x2c8] sm:$0xff]
    %v609 = vld [vmem:[#allocation9 + $0x2d0] sm:$0xff]
    %v610 = vld [vmem:[#allocation9 + $0x2d8] sm:$0xff]
    %v611 = vld [vmem:[#allocation9 + $0x2e0] sm:$0xff]
    %v612 = vld [vmem:[#allocation9 + $0x2e8] sm:$0xff]
    %v613 = vld [vmem:[#allocation9 + $0x2f0] sm:$0xff]
    %v614 = vld [vmem:[#allocation9 + $0x2f8] sm:$0xff]
    %v615 = vld [vmem:[#allocation9 + $0x300] sm:$0xff]
    %v616 = vld [vmem:[#allocation9 + $0x308] sm:$0xff]
    %v617 = vld [vmem:[#allocation9 + $0x310] sm:$0xff]
    %v618 = vld [vmem:[#allocation9 + $0x318] sm:$0xff]
    %v619 = vld [vmem:[#allocation9 + $0x320] sm:$0xff]
    %v620 = vld [vmem:[#allocation9 + $0x328] sm:$0xff]
    %v621 = vld [vmem:[#allocation9 + $0x330] sm:$0xff]
    %v622 = vld [vmem:[#allocation9 + $0x338] sm:$0xff]
    %v623 = vld [vmem:[#allocation9 + $0x340] sm:$0xff]
    %v624 = vld [vmem:[#allocation9 + $0x348] sm:$0xff]
    %v625 = vld [vmem:[#allocation9 + $0x350] sm:$0xff]
    %v626 = vld [vmem:[#allocation9 + $0x358] sm:$0xff]
    %v627 = vld [vmem:[#allocation9 + $0x360] sm:$0xff]
    %v628 = vld [vmem:[#allocation9 + $0x368] sm:$0xff]
    %v629 = vld [vmem:[#allocation9 + $0x370] sm:$0xff]
    %v630 = vld [vmem:[#allocation9 + $0x378] sm:$0xff]
    %v631 = vld [vmem:[#allocation9 + $0x380] sm:$0xff]
    %v632 = vld [vmem:[#allocation9 + $0x388] sm:$0xff]
    %v633 = vld [vmem:[#allocation9 + $0x390] sm:$0xff]
    %v634 = vld [vmem:[#allocation9 + $0x398] sm:$0xff]
    %v635 = vld [vmem:[#allocation9 + $0x3a0] sm:$0xff]
    %v636 = vld [vmem:[#allocation9 + $0x3a8] sm:$0xff]
    %v637 = vld [vmem:[#allocation9 + $0x3b0] sm:$0xff]
    %v638 = vld [vmem:[#allocation9 + $0x3b8] sm:$0xff]
    %v639 = vld [vmem:[#allocation9 + $0x3c0] sm:$0xff]
    %v640 = vld [vmem:[#allocation9 + $0x3c8] sm:$0xff]
    %v641 = vld [vmem:[#allocation9 + $0x3d0] sm:$0xff]
    %v642 = vld [vmem:[#allocation9 + $0x3d8] sm:$0xff]
    %v643 = vld [vmem:[#allocation9 + $0x3e0] sm:$0xff]
    %v644 = vld [vmem:[#allocation9 + $0x3e8] sm:$0xff]
    %v645 = vld [vmem:[#allocation9 + $0x3f0] sm:$0xff]
    %v646 = vld [vmem:[#allocation9 + $0x3f8] sm:$0xff]
    %v647 = vld [vmem:[#allocation9 + $0x400] sm:$0xff]
    %v648 = vld [vmem:[#allocation9 + $0x408] sm:$0xff]
    %v649 = vld [vmem:[#allocation9 + $0x410] sm:$0xff]
    %v650 = vld [vmem:[#allocation9 + $0x418] sm:$0xff]
    %v651 = vld [vmem:[#allocation9 + $0x420] sm:$0xff]
    %v652 = vld [vmem:[#allocation9 + $0x428] sm:$0xff]
    %v653 = vld [vmem:[#allocation9 + $0x430] sm:$0xff]
    %v654 = vld [vmem:[#allocation9 + $0x438] sm:$0xff]
    %v655 = vld [vmem:[#allocation9 + $0x440] sm:$0xff]
    %v656 = vld [vmem:[#allocation9 + $0x448] sm:$0xff]
    %v657 = vld [vmem:[#allocation9 + $0x450] sm:$0xff]
    %v658 = vld [vmem:[#allocation9 + $0x458] sm:$0xff]
    %v659 = vld [vmem:[#allocation9 + $0x460] sm:$0xff]
    %v660 = vld [vmem:[#allocation9 + $0x468] sm:$0xff]
    %v661 = vld [vmem:[#allocation9 + $0x470] sm:$0xff]
    %v662 = vld [vmem:[#allocation9 + $0x478] sm:$0xff]
    %v663 = vld [vmem:[#allocation9 + $0x480] sm:$0xff]
    %v664 = vld [vmem:[#allocation9 + $0x488] sm:$0xff]
    %v665 = vld [vmem:[#allocation9 + $0x490] sm:$0xff]
    %v666 = vld [vmem:[#allocation9 + $0x498] sm:$0xff]
    %v667 = vld [vmem:[#allocation9 + $0x4a0] sm:$0xff]
    %v668 = vld [vmem:[#allocation9 + $0x4a8] sm:$0xff]
    %v669 = vld [vmem:[#allocation9 + $0x4b0] sm:$0xff]
    %v670 = vld [vmem:[#allocation9 + $0x4b8] sm:$0xff]
    %v671 = vld [vmem:[#allocation9 + $0x4c0] sm:$0xff]
    %v672 = vld [vmem:[#allocation9 + $0x4c8] sm:$0xff]
    %v673 = vld [vmem:[#allocation9 + $0x4d0] sm:$0xff]
    %v674 = vld [vmem:[#allocation9 + $0x4d8] sm:$0xff]
    %v675 = vld [vmem:[#allocation9 + $0x4e0] sm:$0xff]
    %v676 = vld [vmem:[#allocation9 + $0x4e8] sm:$0xff]
    %v677 = vld [vmem:[#allocation9 + $0x4f0] sm:$0xff]
    %v678 = vld [vmem:[#allocation9 + $0x4f8] sm:$0xff]
    %v679 = vld [vmem:[#allocation9 + $0x500] sm:$0xff]
    %v680 = vld [vmem:[#allocation9 + $0x508] sm:$0xff]
    %v681 = vld [vmem:[#allocation9 + $0x510] sm:$0xff]
    %v682 = vld [vmem:[#allocation9 + $0x518] sm:$0xff]
    %v683 = vld [vmem:[#allocation9 + $0x520] sm:$0xff]
    %v684 = vld [vmem:[#allocation9 + $0x528] sm:$0xff]
    %v685 = vld [vmem:[#allocation9 + $0x530] sm:$0xff]
    %v686 = vld [vmem:[#allocation9 + $0x538] sm:$0xff]
    %v687 = vld [vmem:[#allocation9 + $0x540] sm:$0xff]
    %v688 = vld [vmem:[#allocation9 + $0x548] sm:$0xff]
    %v689 = vld [vmem:[#allocation9 + $0x550] sm:$0xff]
    %v690 = vld [vmem:[#allocation9 + $0x558] sm:$0xff]
    %v691 = vld [vmem:[#allocation9 + $0x560] sm:$0xff]
    %v692 = vld [vmem:[#allocation9 + $0x568] sm:$0xff]
    %v693 = vld [vmem:[#allocation9 + $0x570] sm:$0xff]
    %v694 = vld [vmem:[#allocation9 + $0x578] sm:$0xff]
    %v695 = vld [vmem:[#allocation9 + $0x580] sm:$0xff]
    %v696 = vld [vmem:[#allocation9 + $0x588] sm:$0xff]
    %v697 = vld [vmem:[#allocation9 + $0x590] sm:$0xff]
    %v698 = vld [vmem:[#allocation9 + $0x598] sm:$0xff]
    %v699 = vld [vmem:[#allocation9 + $0x5a0] sm:$0xff]
    %v700 = vld [vmem:[#allocation9 + $0x5a8] sm:$0xff]
    %v701 = vld [vmem:[#allocation9 + $0x5b0] sm:$0xff]
    %v702 = vld [vmem:[#allocation9 + $0x5b8] sm:$0xff]
    %v703 = vld [vmem:[#allocation9 + $0x5c0] sm:$0xff]
    %v704 = vld [vmem:[#allocation9 + $0x5c8] sm:$0xff]
    %v705 = vld [vmem:[#allocation9 + $0x5d0] sm:$0xff]
    %v706 = vld [vmem:[#allocation9 + $0x5d8] sm:$0xff]
    %v707 = vld [vmem:[#allocation9 + $0x5e0] sm:$0xff]
    %v708 = vld [vmem:[#allocation9 + $0x5e8] sm:$0xff]
    %v709 = vld [vmem:[#allocation9 + $0x5f0] sm:$0xff]
    %v710 = vld [vmem:[#allocation9 + $0x5f8] sm:$0xff]
    %v711 = vld [vmem:[#allocation9 + $0x600] sm:$0xff]
    %v712 = vld [vmem:[#allocation9 + $0x608] sm:$0xff]
    %v713 = vld [vmem:[#allocation9 + $0x610] sm:$0xff]
    %v714 = vld [vmem:[#allocation9 + $0x618] sm:$0xff]
    %v715 = vld [vmem:[#allocation9 + $0x620] sm:$0xff]
    %v716 = vld [vmem:[#allocation9 + $0x628] sm:$0xff]
    %v717 = vld [vmem:[#allocation9 + $0x630] sm:$0xff]
    %v718 = vld [vmem:[#allocation9 + $0x638] sm:$0xff]
    %v719 = vld [vmem:[#allocation9 + $0x640] sm:$0xff]
    %v720 = vld [vmem:[#allocation9 + $0x648] sm:$0xff]
    %v721 = vld [vmem:[#allocation9 + $0x650] sm:$0xff]
    %v722 = vld [vmem:[#allocation9 + $0x658] sm:$0xff]
    %v723 = vld [vmem:[#allocation9 + $0x660] sm:$0xff]
    %v724 = vld [vmem:[#allocation9 + $0x668] sm:$0xff]
    %v725 = vld [vmem:[#allocation9 + $0x670] sm:$0xff]
    %v726 = vld [vmem:[#allocation9 + $0x678] sm:$0xff]
    %v727 = vld [vmem:[#allocation9 + $0x680] sm:$0xff]
    %v728 = vld [vmem:[#allocation9 + $0x688] sm:$0xff]
    %v729 = vld [vmem:[#allocation9 + $0x690] sm:$0xff]
    %v730 = vld [vmem:[#allocation9 + $0x698] sm:$0xff]
    %v731 = vld [vmem:[#allocation9 + $0x6a0] sm:$0xff]
    %v732 = vld [vmem:[#allocation9 + $0x6a8] sm:$0xff]
    %v733 = vld [vmem:[#allocation9 + $0x6b0] sm:$0xff]
    %v734 = vld [vmem:[#allocation9 + $0x6b8] sm:$0xff]
    %v735 = vld [vmem:[#allocation9 + $0x6c0] sm:$0xff]
    %v736 = vld [vmem:[#allocation9 + $0x6c8] sm:$0xff]
    %v737 = vld [vmem:[#allocation9 + $0x6d0] sm:$0xff]
    %v738 = vld [vmem:[#allocation9 + $0x6d8] sm:$0xff]
    %v739 = vld [vmem:[#allocation9 + $0x6e0] sm:$0xff]
    %v740 = vld [vmem:[#allocation9 + $0x6e8] sm:$0xff]
    %v741 = vld [vmem:[#allocation9 + $0x6f0] sm:$0xff]
    %v742 = vld [vmem:[#allocation9 + $0x6f8] sm:$0xff]
    %v743 = vld [vmem:[#allocation9 + $0x700] sm:$0xff]
    %v744 = vld [vmem:[#allocation9 + $0x708] sm:$0xff]
    %v745 = vld [vmem:[#allocation9 + $0x710] sm:$0xff]
    %v746 = vld [vmem:[#allocation9 + $0x718] sm:$0xff]
    %v747 = vld [vmem:[#allocation9 + $0x720] sm:$0xff]
    %v748 = vld [vmem:[#allocation9 + $0x728] sm:$0xff]
    %v749 = vld [vmem:[#allocation9 + $0x730] sm:$0xff]
    %v750 = vld [vmem:[#allocation9 + $0x738] sm:$0xff]
    %v751 = vld [vmem:[#allocation9 + $0x740] sm:$0xff]
    %v752 = vld [vmem:[#allocation9 + $0x748] sm:$0xff]
    %v753 = vld [vmem:[#allocation9 + $0x750] sm:$0xff]
    %v754 = vld [vmem:[#allocation9 + $0x758] sm:$0xff]
    %v755 = vld [vmem:[#allocation9 + $0x760] sm:$0xff]
    %v756 = vld [vmem:[#allocation9 + $0x768] sm:$0xff]
    %v757 = vld [vmem:[#allocation9 + $0x770] sm:$0xff]
    %v758 = vld [vmem:[#allocation9 + $0x778] sm:$0xff]
    %v759 = vld [vmem:[#allocation9 + $0x780] sm:$0xff]
    %v760 = vld [vmem:[#allocation9 + $0x788] sm:$0xff]
    %v761 = vld [vmem:[#allocation9 + $0x790] sm:$0xff]
    %v762 = vld [vmem:[#allocation9 + $0x798] sm:$0xff]
    %v763 = vld [vmem:[#allocation9 + $0x7a0] sm:$0xff]
    %v764 = vld [vmem:[#allocation9 + $0x7a8] sm:$0xff]
    %v765 = vld [vmem:[#allocation9 + $0x7b0] sm:$0xff]
    %v766 = vld [vmem:[#allocation9 + $0x7b8] sm:$0xff]
    %v767 = vld [vmem:[#allocation9 + $0x7c0] sm:$0xff]
    %v768 = vld [vmem:[#allocation9 + $0x7c8] sm:$0xff]
    %v769 = vld [vmem:[#allocation9 + $0x7d0] sm:$0xff]
    %v770 = vld [vmem:[#allocation9 + $0x7d8] sm:$0xff]
    %v771 = vld [vmem:[#allocation9 + $0x7e0] sm:$0xff]
    %v772 = vld [vmem:[#allocation9 + $0x7e8] sm:$0xff]
    %v773 = vld [vmem:[#allocation9 + $0x7f0] sm:$0xff]
    %v774 = vld [vmem:[#allocation9 + $0x7f8] sm:$0xff]
    %775 = vmatprep.subr.mxu0 %v550
    %776 = vmatpush1.msra.mxu0 %v549
    %777 = vmatprep.subr.mxu0 %v548
    %778 = vmatpush1.msra.mxu0 %v547
    %779 = vmatprep.subr.mxu0 %v546
    %780 = vmatpush1.msra.mxu0 %v545
    %781 = vmatprep.subr.mxu0 %v544
    %782 = vmatpush1.msra.mxu0 %v543
    %783 = vmatprep.subr.mxu0 %v542
    %784 = vmatpush1.msra.mxu0 %v541
    %785 = vmatprep.subr.mxu0 %v540
    %786 = vmatpush1.msra.mxu0 %v539
    %787 = vmatprep.subr.mxu0 %v538
    %788 = vmatpush1.msra.mxu0 %v537
    %789 = vmatprep.subr.mxu0 %v536
    %790 = vmatpush1.msra.mxu0 %v535
    %791 = vmatprep.subr.mxu0 %v534
    %792 = vmatpush1.msra.mxu0 %v533
    %793 = vmatprep.subr.mxu0 %v532
    %794 = vmatpush1.msra.mxu0 %v531
    %795 = vmatprep.subr.mxu0 %v530
    %796 = vmatpush1.msra.mxu0 %v529
    %797 = vmatprep.subr.mxu0 %v528
    %798 = vmatpush1.msra.mxu0 %v527
    %799 = vmatprep.subr.mxu0 %v526
    %800 = vmatpush1.msra.mxu0 %v525
    %801 = vmatprep.subr.mxu0 %v524
    %802 = vmatpush1.msra.mxu0 %v523
    %803 = vmatprep.subr.mxu0 %v522
    %804 = vmatpush1.msra.mxu0 %v521
    %805 = vmatprep.subr.mxu0 %v520
    %806 = vmatpush1.msra.mxu0 %v519
    %807 = vmatprep.subr.mxu0 %v582
    %808 = vmatpush2.msra.mxu0 %v581
    %809 = vmatprep.subr.mxu0 %v580
    %810 = vmatpush2.msra.mxu0 %v579
    %811 = vmatprep.subr.mxu0 %v578
    %812 = vmatpush2.msra.mxu0 %v577
    %813 = vmatprep.subr.mxu0 %v576
    %814 = vmatpush2.msra.mxu0 %v575
    %815 = vmatprep.subr.mxu0 %v574
    %816 = vmatpush2.msra.mxu0 %v573
    %817 = vmatprep.subr.mxu0 %v572
    %818 = vmatpush2.msra.mxu0 %v571
    %819 = vmatprep.subr.mxu0 %v570
    %820 = vmatpush2.msra.mxu0 %v569
    %821 = vmatprep.subr.mxu0 %v568
    %822 = vmatpush2.msra.mxu0 %v567
    %823 = vmatprep.subr.mxu0 %v566
    %824 = vmatpush2.msra.mxu0 %v565
    %825 = vmatprep.subr.mxu0 %v564
    %826 = vmatpush2.msra.mxu0 %v563
    %827 = vmatprep.subr.mxu0 %v562
    %828 = vmatpush2.msra.mxu0 %v561
    %829 = vmatprep.subr.mxu0 %v560
    %830 = vmatpush2.msra.mxu0 %v559
    %831 = vmatprep.subr.mxu0 %v558
    %832 = vmatpush2.msra.mxu0 %v557
    %833 = vmatprep.subr.mxu0 %v556
    %834 = vmatpush2.msra.mxu0 %v555
    %835 = vmatprep.subr.mxu0 %v554
    %836 = vmatpush2.msra.mxu0 %v553
    %837 = vmatprep.subr.mxu0 %v552
    %838 = vmatpush2.msra.mxu0 %v551
    %839 = vmatprep.mubr.f32.mxu0 %v200
    %840 = vmatmul.mubr.f32.gmra.mxu0 %v199
    %v841 = vpop.f32.mrf.mxu0
    %v842 = vadd.f32 0.0, %v841
    %v843 = vpop.f32.mrf.mxu0
    %v844 = vadd.f32 0.0, %v843
    %845 = vmatprep.mubr.f32.mxu0 %v208
    %846 = vmatmul.mubr.f32.gmra.mxu0 %v207
    %v847 = vpop.f32.mrf.mxu0
    %v848 = vadd.f32 0.0, %v847
    %v849 = vpop.f32.mrf.mxu0
    %v850 = vadd.f32 0.0, %v849
    %851 = vmatprep.mubr.f32.mxu0 %v216
    %852 = vmatmul.mubr.f32.gmra.mxu0 %v215
    %v853 = vpop.f32.mrf.mxu0
    %v854 = vadd.f32 0.0, %v853
    %v855 = vpop.f32.mrf.mxu0
    %v856 = vadd.f32 0.0, %v855
    %857 = vmatprep.mubr.f32.mxu0 %v224
    %858 = vmatmul.mubr.f32.gmra.mxu0 %v223
    %v859 = vpop.f32.mrf.mxu0
    %v860 = vadd.f32 0.0, %v859
    %v861 = vpop.f32.mrf.mxu0
    %v862 = vadd.f32 0.0, %v861
    %863 = vmatprep.mubr.f32.mxu0 %v232
    %864 = vmatmul.mubr.f32.gmra.mxu0 %v231
    %v865 = vpop.f32.mrf.mxu0
    %v866 = vadd.f32 0.0, %v865
    %v867 = vpop.f32.mrf.mxu0
    %v868 = vadd.f32 0.0, %v867
    %869 = vmatprep.mubr.f32.mxu0 %v240
    %870 = vmatmul.mubr.f32.gmra.mxu0 %v239
    %v871 = vpop.f32.mrf.mxu0
    %v872 = vadd.f32 0.0, %v871
    %v873 = vpop.f32.mrf.mxu0
    %v874 = vadd.f32 0.0, %v873
    %875 = vmatprep.mubr.f32.mxu0 %v248
    %876 = vmatmul.mubr.f32.gmra.mxu0 %v247
    %v877 = vpop.f32.mrf.mxu0
    %v878 = vadd.f32 0.0, %v877
    %v879 = vpop.f32.mrf.mxu0
    %v880 = vadd.f32 0.0, %v879
    %881 = vmatprep.mubr.f32.mxu0 %v256
    %882 = vmatmul.mubr.f32.gmra.mxu0 %v255
    %v883 = vpop.f32.mrf.mxu0
    %v884 = vadd.f32 0.0, %v883
    %v885 = vpop.f32.mrf.mxu0
    %v886 = vadd.f32 0.0, %v885
    %887 = vdwg.mxu0
    %888 = vmatprep.subr.mxu0 %v614
    %889 = vmatpush1.msra.mxu0 %v613
    %890 = vmatprep.subr.mxu0 %v612
    %891 = vmatpush1.msra.mxu0 %v611
    %892 = vmatprep.subr.mxu0 %v610
    %893 = vmatpush1.msra.mxu0 %v609
    %894 = vmatprep.subr.mxu0 %v608
    %895 = vmatpush1.msra.mxu0 %v607
    %896 = vmatprep.subr.mxu0 %v606
    %897 = vmatpush1.msra.mxu0 %v605
    %898 = vmatprep.subr.mxu0 %v604
    %899 = vmatpush1.msra.mxu0 %v603
    %900 = vmatprep.subr.mxu0 %v602
    %901 = vmatpush1.msra.mxu0 %v601
    %902 = vmatprep.subr.mxu0 %v600
    %903 = vmatpush1.msra.mxu0 %v599
    %904 = vmatprep.subr.mxu0 %v598
    %905 = vmatpush1.msra.mxu0 %v597
    %906 = vmatprep.subr.mxu0 %v596
    %907 = vmatpush1.msra.mxu0 %v595
    %908 = vmatprep.subr.mxu0 %v594
    %909 = vmatpush1.msra.mxu0 %v593
    %910 = vmatprep.subr.mxu0 %v592
    %911 = vmatpush1.msra.mxu0 %v591
    %912 = vmatprep.subr.mxu0 %v590
    %913 = vmatpush1.msra.mxu0 %v589
    %914 = vmatprep.subr.mxu0 %v588
    %915 = vmatpush1.msra.mxu0 %v587
    %916 = vmatprep.subr.mxu0 %v586
    %917 = vmatpush1.msra.mxu0 %v585
    %918 = vmatprep.subr.mxu0 %v584
    %919 = vmatpush1.msra.mxu0 %v583
    %920 = vmatprep.subr.mxu0 %v646
    %921 = vmatpush2.msra.mxu0 %v645
    %922 = vmatprep.subr.mxu0 %v644
    %923 = vmatpush2.msra.mxu0 %v643
    %924 = vmatprep.subr.mxu0 %v642
    %925 = vmatpush2.msra.mxu0 %v641
    %926 = vmatprep.subr.mxu0 %v640
    %927 = vmatpush2.msra.mxu0 %v639
    %928 = vmatprep.subr.mxu0 %v638
    %929 = vmatpush2.msra.mxu0 %v637
    %930 = vmatprep.subr.mxu0 %v636
    %931 = vmatpush2.msra.mxu0 %v635
    %932 = vmatprep.subr.mxu0 %v634
    %933 = vmatpush2.msra.mxu0 %v633
    %934 = vmatprep.subr.mxu0 %v632
    %935 = vmatpush2.msra.mxu0 %v631
    %936 = vmatprep.subr.mxu0 %v630
    %937 = vmatpush2.msra.mxu0 %v629
    %938 = vmatprep.subr.mxu0 %v628
    %939 = vmatpush2.msra.mxu0 %v627
    %940 = vmatprep.subr.mxu0 %v626
    %941 = vmatpush2.msra.mxu0 %v625
    %942 = vmatprep.subr.mxu0 %v624
    %943 = vmatpush2.msra.mxu0 %v623
    %944 = vmatprep.subr.mxu0 %v622
    %945 = vmatpush2.msra.mxu0 %v621
    %946 = vmatprep.subr.mxu0 %v620
    %947 = vmatpush2.msra.mxu0 %v619
    %948 = vmatprep.subr.mxu0 %v618
    %949 = vmatpush2.msra.mxu0 %v617
    %950 = vmatprep.subr.mxu0 %v616
    %951 = vmatpush2.msra.mxu0 %v615
    %952 = vmatprep.mubr.f32.mxu0 %v202
    %953 = vmatmul.mubr.f32.gmra.mxu0 %v201
    %v954 = vpop.f32.mrf.mxu0
    %v955 = vadd.f32 %v842, %v954
    %v956 = vpop.f32.mrf.mxu0
    %v957 = vadd.f32 %v844, %v956
    %958 = vmatprep.mubr.f32.mxu0 %v210
    %959 = vmatmul.mubr.f32.gmra.mxu0 %v209
    %v960 = vpop.f32.mrf.mxu0
    %v961 = vadd.f32 %v848, %v960
    %v962 = vpop.f32.mrf.mxu0
    %v963 = vadd.f32 %v850, %v962
    %964 = vmatprep.mubr.f32.mxu0 %v218
    %965 = vmatmul.mubr.f32.gmra.mxu0 %v217
    %v966 = vpop.f32.mrf.mxu0
    %v967 = vadd.f32 %v854, %v966
    %v968 = vpop.f32.mrf.mxu0
    %v969 = vadd.f32 %v856, %v968
    %970 = vmatprep.mubr.f32.mxu0 %v226
    %971 = vmatmul.mubr.f32.gmra.mxu0 %v225
    %v972 = vpop.f32.mrf.mxu0
    %v973 = vadd.f32 %v860, %v972
    %v974 = vpop.f32.mrf.mxu0
    %v975 = vadd.f32 %v862, %v974
    %976 = vmatprep.mubr.f32.mxu0 %v234
    %977 = vmatmul.mubr.f32.gmra.mxu0 %v233
    %v978 = vpop.f32.mrf.mxu0
    %v979 = vadd.f32 %v866, %v978
    %v980 = vpop.f32.mrf.mxu0
    %v981 = vadd.f32 %v868, %v980
    %982 = vmatprep.mubr.f32.mxu0 %v242
    %983 = vmatmul.mubr.f32.gmra.mxu0 %v241
    %v984 = vpop.f32.mrf.mxu0
    %v985 = vadd.f32 %v872, %v984
    %v986 = vpop.f32.mrf.mxu0
    %v987 = vadd.f32 %v874, %v986
    %988 = vmatprep.mubr.f32.mxu0 %v250
    %989 = vmatmul.mubr.f32.gmra.mxu0 %v249
    %v990 = vpop.f32.mrf.mxu0
    %v991 = vadd.f32 %v878, %v990
    %v992 = vpop.f32.mrf.mxu0
    %v993 = vadd.f32 %v880, %v992
    %994 = vmatprep.mubr.f32.mxu0 %v258
    %995 = vmatmul.mubr.f32.gmra.mxu0 %v257
    %v996 = vpop.f32.mrf.mxu0
    %v997 = vadd.f32 %v884, %v996
    %v998 = vpop.f32.mrf.mxu0
    %v999 = vadd.f32 %v886, %v998
    %1000 = vdwg.mxu0
    %1001 = vmatprep.subr.mxu0 %v678
    %1002 = vmatpush1.msra.mxu0 %v677
    %1003 = vmatprep.subr.mxu0 %v676
    %1004 = vmatpush1.msra.mxu0 %v675
    %1005 = vmatprep.subr.mxu0 %v674
    %1006 = vmatpush1.msra.mxu0 %v673
    %1007 = vmatprep.subr.mxu0 %v672
    %1008 = vmatpush1.msra.mxu0 %v671
    %1009 = vmatprep.subr.mxu0 %v670
    %1010 = vmatpush1.msra.mxu0 %v669
    %1011 = vmatprep.subr.mxu0 %v668
    %1012 = vmatpush1.msra.mxu0 %v667
    %1013 = vmatprep.subr.mxu0 %v666
    %1014 = vmatpush1.msra.mxu0 %v665
    %1015 = vmatprep.subr.mxu0 %v664
    %1016 = vmatpush1.msra.mxu0 %v663
    %1017 = vmatprep.subr.mxu0 %v662
    %1018 = vmatpush1.msra.mxu0 %v661
    %1019 = vmatprep.subr.mxu0 %v660
    %1020 = vmatpush1.msra.mxu0 %v659
    %1021 = vmatprep.subr.mxu0 %v658
    %1022 = vmatpush1.msra.mxu0 %v657
    %1023 = vmatprep.subr.mxu0 %v656
    %1024 = vmatpush1.msra.mxu0 %v655
    %1025 = vmatprep.subr.mxu0 %v654
    %1026 = vmatpush1.msra.mxu0 %v653
    %1027 = vmatprep.subr.mxu0 %v652
    %1028 = vmatpush1.msra.mxu0 %v651
    %1029 = vmatprep.subr.mxu0 %v650
    %1030 = vmatpush1.msra.mxu0 %v649
    %1031 = vmatprep.subr.mxu0 %v648
    %1032 = vmatpush1.msra.mxu0 %v647
    %1033 = vmatprep.subr.mxu0 %v710
    %1034 = vmatpush2.msra.mxu0 %v709
    %1035 = vmatprep.subr.mxu0 %v708
    %1036 = vmatpush2.msra.mxu0 %v707
    %1037 = vmatprep.subr.mxu0 %v706
    %1038 = vmatpush2.msra.mxu0 %v705
    %1039 = vmatprep.subr.mxu0 %v704
    %1040 = vmatpush2.msra.mxu0 %v703
    %1041 = vmatprep.subr.mxu0 %v702
    %1042 = vmatpush2.msra.mxu0 %v701
    %1043 = vmatprep.subr.mxu0 %v700
    %1044 = vmatpush2.msra.mxu0 %v699
    %1045 = vmatprep.subr.mxu0 %v698
    %1046 = vmatpush2.msra.mxu0 %v697
    %1047 = vmatprep.subr.mxu0 %v696
    %1048 = vmatpush2.msra.mxu0 %v695
    %1049 = vmatprep.subr.mxu0 %v694
    %1050 = vmatpush2.msra.mxu0 %v693
    %1051 = vmatprep.subr.mxu0 %v692
    %1052 = vmatpush2.msra.mxu0 %v691
    %1053 = vmatprep.subr.mxu0 %v690
    %1054 = vmatpush2.msra.mxu0 %v689
    %1055 = vmatprep.subr.mxu0 %v688
    %1056 = vmatpush2.msra.mxu0 %v687
    %1057 = vmatprep.subr.mxu0 %v686
    %1058 = vmatpush2.msra.mxu0 %v685
    %1059 = vmatprep.subr.mxu0 %v684
    %1060 = vmatpush2.msra.mxu0 %v683
    %1061 = vmatprep.subr.mxu0 %v682
    %1062 = vmatpush2.msra.mxu0 %v681
    %1063 = vmatprep.subr.mxu0 %v680
    %1064 = vmatpush2.msra.mxu0 %v679
    %1065 = vmatprep.mubr.f32.mxu0 %v204
    %1066 = vmatmul.mubr.f32.gmra.mxu0 %v203
    %v1067 = vpop.f32.mrf.mxu0
    %v1068 = vadd.f32 %v955, %v1067
    %v1069 = vpop.f32.mrf.mxu0
    %v1070 = vadd.f32 %v957, %v1069
    %1071 = vmatprep.mubr.f32.mxu0 %v212
    %1072 = vmatmul.mubr.f32.gmra.mxu0 %v211
    %v1073 = vpop.f32.mrf.mxu0
    %v1074 = vadd.f32 %v961, %v1073
    %v1075 = vpop.f32.mrf.mxu0
    %v1076 = vadd.f32 %v963, %v1075
    %1077 = vmatprep.mubr.f32.mxu0 %v220
    %1078 = vmatmul.mubr.f32.gmra.mxu0 %v219
    %v1079 = vpop.f32.mrf.mxu0
    %v1080 = vadd.f32 %v967, %v1079
    %v1081 = vpop.f32.mrf.mxu0
    %v1082 = vadd.f32 %v969, %v1081
    %1083 = vmatprep.mubr.f32.mxu0 %v228
    %1084 = vmatmul.mubr.f32.gmra.mxu0 %v227
    %v1085 = vpop.f32.mrf.mxu0
    %v1086 = vadd.f32 %v973, %v1085
    %v1087 = vpop.f32.mrf.mxu0
    %v1088 = vadd.f32 %v975, %v1087
    %1089 = vmatprep.mubr.f32.mxu0 %v236
    %1090 = vmatmul.mubr.f32.gmra.mxu0 %v235
    %v1091 = vpop.f32.mrf.mxu0
    %v1092 = vadd.f32 %v979, %v1091
    %v1093 = vpop.f32.mrf.mxu0
    %v1094 = vadd.f32 %v981, %v1093
    %1095 = vmatprep.mubr.f32.mxu0 %v244
    %1096 = vmatmul.mubr.f32.gmra.mxu0 %v243
    %v1097 = vpop.f32.mrf.mxu0
    %v1098 = vadd.f32 %v985, %v1097
    %v1099 = vpop.f32.mrf.mxu0
    %v1100 = vadd.f32 %v987, %v1099
    %1101 = vmatprep.mubr.f32.mxu0 %v252
    %1102 = vmatmul.mubr.f32.gmra.mxu0 %v251
    %v1103 = vpop.f32.mrf.mxu0
    %v1104 = vadd.f32 %v991, %v1103
    %v1105 = vpop.f32.mrf.mxu0
    %v1106 = vadd.f32 %v993, %v1105
    %1107 = vmatprep.mubr.f32.mxu0 %v260
    %1108 = vmatmul.mubr.f32.gmra.mxu0 %v259
    %v1109 = vpop.f32.mrf.mxu0
    %v1110 = vadd.f32 %v997, %v1109
    %v1111 = vpop.f32.mrf.mxu0
    %v1112 = vadd.f32 %v999, %v1111
    %1113 = vdwg.mxu0
    %1114 = vmatprep.subr.mxu0 %v742
    %1115 = vmatpush1.msra.mxu0 %v741
    %1116 = vmatprep.subr.mxu0 %v740
    %1117 = vmatpush1.msra.mxu0 %v739
    %1118 = vmatprep.subr.mxu0 %v738
    %1119 = vmatpush1.msra.mxu0 %v737
    %1120 = vmatprep.subr.mxu0 %v736
    %1121 = vmatpush1.msra.mxu0 %v735
    %1122 = vmatprep.subr.mxu0 %v734
    %1123 = vmatpush1.msra.mxu0 %v733
    %1124 = vmatprep.subr.mxu0 %v732
    %1125 = vmatpush1.msra.mxu0 %v731
    %1126 = vmatprep.subr.mxu0 %v730
    %1127 = vmatpush1.msra.mxu0 %v729
    %1128 = vmatprep.subr.mxu0 %v728
    %1129 = vmatpush1.msra.mxu0 %v727
    %1130 = vmatprep.subr.mxu0 %v726
    %1131 = vmatpush1.msra.mxu0 %v725
    %1132 = vmatprep.subr.mxu0 %v724
    %1133 = vmatpush1.msra.mxu0 %v723
    %1134 = vmatprep.subr.mxu0 %v722
    %1135 = vmatpush1.msra.mxu0 %v721
    %1136 = vmatprep.subr.mxu0 %v720
    %1137 = vmatpush1.msra.mxu0 %v719
    %1138 = vmatprep.subr.mxu0 %v718
    %1139 = vmatpush1.msra.mxu0 %v717
    %1140 = vmatprep.subr.mxu0 %v716
    %1141 = vmatpush1.msra.mxu0 %v715
    %1142 = vmatprep.subr.mxu0 %v714
    %1143 = vmatpush1.msra.mxu0 %v713
    %1144 = vmatprep.subr.mxu0 %v712
    %1145 = vmatpush1.msra.mxu0 %v711
    %1146 = vmatprep.subr.mxu0 %v774
    %1147 = vmatpush2.msra.mxu0 %v773
    %1148 = vmatprep.subr.mxu0 %v772
    %1149 = vmatpush2.msra.mxu0 %v771
    %1150 = vmatprep.subr.mxu0 %v770
    %1151 = vmatpush2.msra.mxu0 %v769
    %1152 = vmatprep.subr.mxu0 %v768
    %1153 = vmatpush2.msra.mxu0 %v767
    %1154 = vmatprep.subr.mxu0 %v766
    %1155 = vmatpush2.msra.mxu0 %v765
    %1156 = vmatprep.subr.mxu0 %v764
    %1157 = vmatpush2.msra.mxu0 %v763
    %1158 = vmatprep.subr.mxu0 %v762
    %1159 = vmatpush2.msra.mxu0 %v761
    %1160 = vmatprep.subr.mxu0 %v760
    %1161 = vmatpush2.msra.mxu0 %v759
    %1162 = vmatprep.subr.mxu0 %v758
    %1163 = vmatpush2.msra.mxu0 %v757
    %1164 = vmatprep.subr.mxu0 %v756
    %1165 = vmatpush2.msra.mxu0 %v755
    %1166 = vmatprep.subr.mxu0 %v754
    %1167 = vmatpush2.msra.mxu0 %v753
    %1168 = vmatprep.subr.mxu0 %v752
    %1169 = vmatpush2.msra.mxu0 %v751
    %1170 = vmatprep.subr.mxu0 %v750
    %1171 = vmatpush2.msra.mxu0 %v749
    %1172 = vmatprep.subr.mxu0 %v748
    %1173 = vmatpush2.msra.mxu0 %v747
    %1174 = vmatprep.subr.mxu0 %v746
    %1175 = vmatpush2.msra.mxu0 %v745
    %1176 = vmatprep.subr.mxu0 %v744
    %1177 = vmatpush2.msra.mxu0 %v743
    %1178 = vmatprep.mubr.f32.mxu0 %v206
    %1179 = vmatmul.mubr.f32.gmra.mxu0 %v205
    %v1180 = vpop.f32.mrf.mxu0
    %v1181 = vadd.f32 %v1068, %v1180
    %v1182 = vpop.f32.mrf.mxu0
    %v1183 = vadd.f32 %v1070, %v1182
    %1184 = vmatprep.mubr.f32.mxu0 %v214
    %1185 = vmatmul.mubr.f32.gmra.mxu0 %v213
    %v1186 = vpop.f32.mrf.mxu0
    %v1187 = vadd.f32 %v1074, %v1186
    %v1188 = vpop.f32.mrf.mxu0
    %v1189 = vadd.f32 %v1076, %v1188
    %1190 = vmatprep.mubr.f32.mxu0 %v222
    %1191 = vmatmul.mubr.f32.gmra.mxu0 %v221
    %v1192 = vpop.f32.mrf.mxu0
    %v1193 = vadd.f32 %v1080, %v1192
    %v1194 = vpop.f32.mrf.mxu0
    %v1195 = vadd.f32 %v1082, %v1194
    %1196 = vmatprep.mubr.f32.mxu0 %v230
    %1197 = vmatmul.mubr.f32.gmra.mxu0 %v229
    %v1198 = vpop.f32.mrf.mxu0
    %v1199 = vadd.f32 %v1086, %v1198
    %v1200 = vpop.f32.mrf.mxu0
    %v1201 = vadd.f32 %v1088, %v1200
    %1202 = vmatprep.mubr.f32.mxu0 %v238
    %1203 = vmatmul.mubr.f32.gmra.mxu0 %v237
    %v1204 = vpop.f32.mrf.mxu0
    %v1205 = vadd.f32 %v1092, %v1204
    %v1206 = vpop.f32.mrf.mxu0
    %v1207 = vadd.f32 %v1094, %v1206
    %1208 = vmatprep.mubr.f32.mxu0 %v246
    %1209 = vmatmul.mubr.f32.gmra.mxu0 %v245
    %v1210 = vpop.f32.mrf.mxu0
    %v1211 = vadd.f32 %v1098, %v1210
    %v1212 = vpop.f32.mrf.mxu0
    %v1213 = vadd.f32 %v1100, %v1212
    %1214 = vmatprep.mubr.f32.mxu0 %v254
    %1215 = vmatmul.mubr.f32.gmra.mxu0 %v253
    %v1216 = vpop.f32.mrf.mxu0
    %v1217 = vadd.f32 %v1104, %v1216
    %v1218 = vpop.f32.mrf.mxu0
    %v1219 = vadd.f32 %v1106, %v1218
    %1220 = vmatprep.mubr.f32.mxu0 %v262
    %1221 = vmatmul.mubr.f32.gmra.mxu0 %v261
    %v1222 = vpop.f32.mrf.mxu0
    %v1223 = vadd.f32 %v1110, %v1222
    %v1224 = vpop.f32.mrf.mxu0
    %v1225 = vadd.f32 %v1112, %v1224
    %1226 = vdwg.mxu0
    %1227 = vmatprep.subr.mxu0 %v294
    %1228 = vmatpush1.msra.mxu0 %v293
    %1229 = vmatprep.subr.mxu0 %v292
    %1230 = vmatpush1.msra.mxu0 %v291
    %1231 = vmatprep.subr.mxu0 %v290
    %1232 = vmatpush1.msra.mxu0 %v289
    %1233 = vmatprep.subr.mxu0 %v288
    %1234 = vmatpush1.msra.mxu0 %v287
    %1235 = vmatprep.subr.mxu0 %v286
    %1236 = vmatpush1.msra.mxu0 %v285
    %1237 = vmatprep.subr.mxu0 %v284
    %1238 = vmatpush1.msra.mxu0 %v283
    %1239 = vmatprep.subr.mxu0 %v282
    %1240 = vmatpush1.msra.mxu0 %v281
    %1241 = vmatprep.subr.mxu0 %v280
    %1242 = vmatpush1.msra.mxu0 %v279
    %1243 = vmatprep.subr.mxu0 %v278
    %1244 = vmatpush1.msra.mxu0 %v277
    %1245 = vmatprep.subr.mxu0 %v276
    %1246 = vmatpush1.msra.mxu0 %v275
    %1247 = vmatprep.subr.mxu0 %v274
    %1248 = vmatpush1.msra.mxu0 %v273
    %1249 = vmatprep.subr.mxu0 %v272
    %1250 = vmatpush1.msra.mxu0 %v271
    %1251 = vmatprep.subr.mxu0 %v270
    %1252 = vmatpush1.msra.mxu0 %v269
    %1253 = vmatprep.subr.mxu0 %v268
    %1254 = vmatpush1.msra.mxu0 %v267
    %1255 = vmatprep.subr.mxu0 %v266
    %1256 = vmatpush1.msra.mxu0 %v265
    %1257 = vmatprep.subr.mxu0 %v264
    %1258 = vmatpush1.msra.mxu0 %v263
    %1259 = vmatprep.subr.mxu0 %v326
    %1260 = vmatpush2.msra.mxu0 %v325
    %1261 = vmatprep.subr.mxu0 %v324
    %1262 = vmatpush2.msra.mxu0 %v323
    %1263 = vmatprep.subr.mxu0 %v322
    %1264 = vmatpush2.msra.mxu0 %v321
    %1265 = vmatprep.subr.mxu0 %v320
    %1266 = vmatpush2.msra.mxu0 %v319
    %1267 = vmatprep.subr.mxu0 %v318
    %1268 = vmatpush2.msra.mxu0 %v317
    %1269 = vmatprep.subr.mxu0 %v316
    %1270 = vmatpush2.msra.mxu0 %v315
    %1271 = vmatprep.subr.mxu0 %v314
    %1272 = vmatpush2.msra.mxu0 %v313
    %1273 = vmatprep.subr.mxu0 %v312
    %1274 = vmatpush2.msra.mxu0 %v311
    %1275 = vmatprep.subr.mxu0 %v310
    %1276 = vmatpush2.msra.mxu0 %v309
    %1277 = vmatprep.subr.mxu0 %v308
    %1278 = vmatpush2.msra.mxu0 %v307
    %1279 = vmatprep.subr.mxu0 %v306
    %1280 = vmatpush2.msra.mxu0 %v305
    %1281 = vmatprep.subr.mxu0 %v304
    %1282 = vmatpush2.msra.mxu0 %v303
    %1283 = vmatprep.subr.mxu0 %v302
    %1284 = vmatpush2.msra.mxu0 %v301
    %1285 = vmatprep.subr.mxu0 %v300
    %1286 = vmatpush2.msra.mxu0 %v299
    %1287 = vmatprep.subr.mxu0 %v298
    %1288 = vmatpush2.msra.mxu0 %v297
    %1289 = vmatprep.subr.mxu0 %v296
    %1290 = vmatpush2.msra.mxu0 %v295
    %1291 = vmatprep.mubr.f32.mxu0 %v136
    %1292 = vmatmul.mubr.f32.gmra.mxu0 %v135
    %v1293 = vpop.f32.mrf.mxu0
    %v1294 = vadd.f32 %v1181, %v1293
    %v1295 = vpop.f32.mrf.mxu0
    %v1296 = vadd.f32 %v1183, %v1295
    %1297 = vmatprep.mubr.f32.mxu0 %v144
    %1298 = vmatmul.mubr.f32.gmra.mxu0 %v143
    %v1299 = vpop.f32.mrf.mxu0
    %v1300 = vadd.f32 %v1187, %v1299
    %v1301 = vpop.f32.mrf.mxu0
    %v1302 = vadd.f32 %v1189, %v1301
    %1303 = vmatprep.mubr.f32.mxu0 %v152
    %1304 = vmatmul.mubr.f32.gmra.mxu0 %v151
    %v1305 = vpop.f32.mrf.mxu0
    %v1306 = vadd.f32 %v1193, %v1305
    %v1307 = vpop.f32.mrf.mxu0
    %v1308 = vadd.f32 %v1195, %v1307
    %1309 = vmatprep.mubr.f32.mxu0 %v160
    %1310 = vmatmul.mubr.f32.gmra.mxu0 %v159
    %v1311 = vpop.f32.mrf.mxu0
    %v1312 = vadd.f32 %v1199, %v1311
    %v1313 = vpop.f32.mrf.mxu0
    %v1314 = vadd.f32 %v1201, %v1313
    %1315 = vmatprep.mubr.f32.mxu0 %v168
    %1316 = vmatmul.mubr.f32.gmra.mxu0 %v167
    %v1317 = vpop.f32.mrf.mxu0
    %v1318 = vadd.f32 %v1205, %v1317
    %v1319 = vpop.f32.mrf.mxu0
    %v1320 = vadd.f32 %v1207, %v1319
    %1321 = vmatprep.mubr.f32.mxu0 %v176
    %1322 = vmatmul.mubr.f32.gmra.mxu0 %v175
    %v1323 = vpop.f32.mrf.mxu0
    %v1324 = vadd.f32 %v1211, %v1323
    %v1325 = vpop.f32.mrf.mxu0
    %v1326 = vadd.f32 %v1213, %v1325
    %1327 = vmatprep.mubr.f32.mxu0 %v184
    %1328 = vmatmul.mubr.f32.gmra.mxu0 %v183
    %v1329 = vpop.f32.mrf.mxu0
    %v1330 = vadd.f32 %v1217, %v1329
    %v1331 = vpop.f32.mrf.mxu0
    %v1332 = vadd.f32 %v1219, %v1331
    %1333 = vmatprep.mubr.f32.mxu0 %v192
    %1334 = vmatmul.mubr.f32.gmra.mxu0 %v191
    %v1335 = vpop.f32.mrf.mxu0
    %v1336 = vadd.f32 %v1223, %v1335
    %v1337 = vpop.f32.mrf.mxu0
    %v1338 = vadd.f32 %v1225, %v1337
    %1339 = vdwg.mxu0
    %1340 = vmatprep.subr.mxu0 %v358
    %1341 = vmatpush1.msra.mxu0 %v357
    %1342 = vmatprep.subr.mxu0 %v356
    %1343 = vmatpush1.msra.mxu0 %v355
    %1344 = vmatprep.subr.mxu0 %v354
    %1345 = vmatpush1.msra.mxu0 %v353
    %1346 = vmatprep.subr.mxu0 %v352
    %1347 = vmatpush1.msra.mxu0 %v351
    %1348 = vmatprep.subr.mxu0 %v350
    %1349 = vmatpush1.msra.mxu0 %v349
    %1350 = vmatprep.subr.mxu0 %v348
    %1351 = vmatpush1.msra.mxu0 %v347
    %1352 = vmatprep.subr.mxu0 %v346
    %1353 = vmatpush1.msra.mxu0 %v345
    %1354 = vmatprep.subr.mxu0 %v344
    %1355 = vmatpush1.msra.mxu0 %v343
    %1356 = vmatprep.subr.mxu0 %v342
    %1357 = vmatpush1.msra.mxu0 %v341
    %1358 = vmatprep.subr.mxu0 %v340
    %1359 = vmatpush1.msra.mxu0 %v339
    %1360 = vmatprep.subr.mxu0 %v338
    %1361 = vmatpush1.msra.mxu0 %v337
    %1362 = vmatprep.subr.mxu0 %v336
    %1363 = vmatpush1.msra.mxu0 %v335
    %1364 = vmatprep.subr.mxu0 %v334
    %1365 = vmatpush1.msra.mxu0 %v333
    %1366 = vmatprep.subr.mxu0 %v332
    %1367 = vmatpush1.msra.mxu0 %v331
    %1368 = vmatprep.subr.mxu0 %v330
    %1369 = vmatpush1.msra.mxu0 %v329
    %1370 = vmatprep.subr.mxu0 %v328
    %1371 = vmatpush1.msra.mxu0 %v327
    %1372 = vmatprep.subr.mxu0 %v390
    %1373 = vmatpush2.msra.mxu0 %v389
    %1374 = vmatprep.subr.mxu0 %v388
    %1375 = vmatpush2.msra.mxu0 %v387
    %1376 = vmatprep.subr.mxu0 %v386
    %1377 = vmatpush2.msra.mxu0 %v385
    %1378 = vmatprep.subr.mxu0 %v384
    %1379 = vmatpush2.msra.mxu0 %v383
    %1380 = vmatprep.subr.mxu0 %v382
    %1381 = vmatpush2.msra.mxu0 %v381
    %1382 = vmatprep.subr.mxu0 %v380
    %1383 = vmatpush2.msra.mxu0 %v379
    %1384 = vmatprep.subr.mxu0 %v378
    %1385 = vmatpush2.msra.mxu0 %v377
    %1386 = vmatprep.subr.mxu0 %v376
    %1387 = vmatpush2.msra.mxu0 %v375
    %1388 = vmatprep.subr.mxu0 %v374
    %1389 = vmatpush2.msra.mxu0 %v373
    %1390 = vmatprep.subr.mxu0 %v372
    %1391 = vmatpush2.msra.mxu0 %v371
    %1392 = vmatprep.subr.mxu0 %v370
    %1393 = vmatpush2.msra.mxu0 %v369
    %1394 = vmatprep.subr.mxu0 %v368
    %1395 = vmatpush2.msra.mxu0 %v367
    %1396 = vmatprep.subr.mxu0 %v366
    %1397 = vmatpush2.msra.mxu0 %v365
    %1398 = vmatprep.subr.mxu0 %v364
    %1399 = vmatpush2.msra.mxu0 %v363
    %1400 = vmatprep.subr.mxu0 %v362
    %1401 = vmatpush2.msra.mxu0 %v361
    %1402 = vmatprep.subr.mxu0 %v360
    %1403 = vmatpush2.msra.mxu0 %v359
    %1404 = vmatprep.mubr.f32.mxu0 %v138
    %1405 = vmatmul.mubr.f32.gmra.mxu0 %v137
    %v1406 = vpop.f32.mrf.mxu0
    %v1407 = vadd.f32 %v1294, %v1406
    %v1408 = vpop.f32.mrf.mxu0
    %v1409 = vadd.f32 %v1296, %v1408
    %1410 = vmatprep.mubr.f32.mxu0 %v146
    %1411 = vmatmul.mubr.f32.gmra.mxu0 %v145
    %v1412 = vpop.f32.mrf.mxu0
    %v1413 = vadd.f32 %v1300, %v1412
    %v1414 = vpop.f32.mrf.mxu0
    %v1415 = vadd.f32 %v1302, %v1414
    %1416 = vmatprep.mubr.f32.mxu0 %v154
    %1417 = vmatmul.mubr.f32.gmra.mxu0 %v153
    %v1418 = vpop.f32.mrf.mxu0
    %v1419 = vadd.f32 %v1306, %v1418
    %v1420 = vpop.f32.mrf.mxu0
    %v1421 = vadd.f32 %v1308, %v1420
    %1422 = vmatprep.mubr.f32.mxu0 %v162
    %1423 = vmatmul.mubr.f32.gmra.mxu0 %v161
    %v1424 = vpop.f32.mrf.mxu0
    %v1425 = vadd.f32 %v1312, %v1424
    %v1426 = vpop.f32.mrf.mxu0
    %v1427 = vadd.f32 %v1314, %v1426
    %1428 = vmatprep.mubr.f32.mxu0 %v170
    %1429 = vmatmul.mubr.f32.gmra.mxu0 %v169
    %v1430 = vpop.f32.mrf.mxu0
    %v1431 = vadd.f32 %v1318, %v1430
    %v1432 = vpop.f32.mrf.mxu0
    %v1433 = vadd.f32 %v1320, %v1432
    %1434 = vmatprep.mubr.f32.mxu0 %v178
    %1435 = vmatmul.mubr.f32.gmra.mxu0 %v177
    %v1436 = vpop.f32.mrf.mxu0
    %v1437 = vadd.f32 %v1324, %v1436
    %v1438 = vpop.f32.mrf.mxu0
    %v1439 = vadd.f32 %v1326, %v1438
    %1440 = vmatprep.mubr.f32.mxu0 %v186
    %1441 = vmatmul.mubr.f32.gmra.mxu0 %v185
    %v1442 = vpop.f32.mrf.mxu0
    %v1443 = vadd.f32 %v1330, %v1442
    %v1444 = vpop.f32.mrf.mxu0
    %v1445 = vadd.f32 %v1332, %v1444
    %1446 = vmatprep.mubr.f32.mxu0 %v194
    %1447 = vmatmul.mubr.f32.gmra.mxu0 %v193
    %v1448 = vpop.f32.mrf.mxu0
    %v1449 = vadd.f32 %v1336, %v1448
    %v1450 = vpop.f32.mrf.mxu0
    %v1451 = vadd.f32 %v1338, %v1450
    %1452 = vdwg.mxu0
    %1453 = vmatprep.subr.mxu0 %v422
    %1454 = vmatpush1.msra.mxu0 %v421
    %1455 = vmatprep.subr.mxu0 %v420
    %1456 = vmatpush1.msra.mxu0 %v419
    %1457 = vmatprep.subr.mxu0 %v418
    %1458 = vmatpush1.msra.mxu0 %v417
    %1459 = vmatprep.subr.mxu0 %v416
    %1460 = vmatpush1.msra.mxu0 %v415
    %1461 = vmatprep.subr.mxu0 %v414
    %1462 = vmatpush1.msra.mxu0 %v413
    %1463 = vmatprep.subr.mxu0 %v412
    %1464 = vmatpush1.msra.mxu0 %v411
    %1465 = vmatprep.subr.mxu0 %v410
    %1466 = vmatpush1.msra.mxu0 %v409
    %1467 = vmatprep.subr.mxu0 %v408
    %1468 = vmatpush1.msra.mxu0 %v407
    %1469 = vmatprep.subr.mxu0 %v406
    %1470 = vmatpush1.msra.mxu0 %v405
    %1471 = vmatprep.subr.mxu0 %v404
    %1472 = vmatpush1.msra.mxu0 %v403
    %1473 = vmatprep.subr.mxu0 %v402
    %1474 = vmatpush1.msra.mxu0 %v401
    %1475 = vmatprep.subr.mxu0 %v400
    %1476 = vmatpush1.msra.mxu0 %v399
    %1477 = vmatprep.subr.mxu0 %v398
    %1478 = vmatpush1.msra.mxu0 %v397
    %1479 = vmatprep.subr.mxu0 %v396
    %1480 = vmatpush1.msra.mxu0 %v395
    %1481 = vmatprep.subr.mxu0 %v394
    %1482 = vmatpush1.msra.mxu0 %v393
    %1483 = vmatprep.subr.mxu0 %v392
    %1484 = vmatpush1.msra.mxu0 %v391
    %1485 = vmatprep.subr.mxu0 %v454
    %1486 = vmatpush2.msra.mxu0 %v453
    %1487 = vmatprep.subr.mxu0 %v452
    %1488 = vmatpush2.msra.mxu0 %v451
    %1489 = vmatprep.subr.mxu0 %v450
    %1490 = vmatpush2.msra.mxu0 %v449
    %1491 = vmatprep.subr.mxu0 %v448
    %1492 = vmatpush2.msra.mxu0 %v447
    %1493 = vmatprep.subr.mxu0 %v446
    %1494 = vmatpush2.msra.mxu0 %v445
    %1495 = vmatprep.subr.mxu0 %v444
    %1496 = vmatpush2.msra.mxu0 %v443
    %1497 = vmatprep.subr.mxu0 %v442
    %1498 = vmatpush2.msra.mxu0 %v441
    %1499 = vmatprep.subr.mxu0 %v440
    %1500 = vmatpush2.msra.mxu0 %v439
    %1501 = vmatprep.subr.mxu0 %v438
    %1502 = vmatpush2.msra.mxu0 %v437
    %1503 = vmatprep.subr.mxu0 %v436
    %1504 = vmatpush2.msra.mxu0 %v435
    %1505 = vmatprep.subr.mxu0 %v434
    %1506 = vmatpush2.msra.mxu0 %v433
    %1507 = vmatprep.subr.mxu0 %v432
    %1508 = vmatpush2.msra.mxu0 %v431
    %1509 = vmatprep.subr.mxu0 %v430
    %1510 = vmatpush2.msra.mxu0 %v429
    %1511 = vmatprep.subr.mxu0 %v428
    %1512 = vmatpush2.msra.mxu0 %v427
    %1513 = vmatprep.subr.mxu0 %v426
    %1514 = vmatpush2.msra.mxu0 %v425
    %1515 = vmatprep.subr.mxu0 %v424
    %1516 = vmatpush2.msra.mxu0 %v423
    %1517 = vmatprep.mubr.f32.mxu0 %v140
    %1518 = vmatmul.mubr.f32.gmra.mxu0 %v139
    %v1519 = vpop.f32.mrf.mxu0
    %v1520 = vadd.f32 %v1407, %v1519
    %v1521 = vpop.f32.mrf.mxu0
    %v1522 = vadd.f32 %v1409, %v1521
    %1523 = vmatprep.mubr.f32.mxu0 %v148
    %1524 = vmatmul.mubr.f32.gmra.mxu0 %v147
    %v1525 = vpop.f32.mrf.mxu0
    %v1526 = vadd.f32 %v1413, %v1525
    %v1527 = vpop.f32.mrf.mxu0
    %v1528 = vadd.f32 %v1415, %v1527
    %1529 = vmatprep.mubr.f32.mxu0 %v156
    %1530 = vmatmul.mubr.f32.gmra.mxu0 %v155
    %v1531 = vpop.f32.mrf.mxu0
    %v1532 = vadd.f32 %v1419, %v1531
    %v1533 = vpop.f32.mrf.mxu0
    %v1534 = vadd.f32 %v1421, %v1533
    %1535 = vmatprep.mubr.f32.mxu0 %v164
    %1536 = vmatmul.mubr.f32.gmra.mxu0 %v163
    %v1537 = vpop.f32.mrf.mxu0
    %v1538 = vadd.f32 %v1425, %v1537
    %v1539 = vpop.f32.mrf.mxu0
    %v1540 = vadd.f32 %v1427, %v1539
    %1541 = vmatprep.mubr.f32.mxu0 %v172
    %1542 = vmatmul.mubr.f32.gmra.mxu0 %v171
    %v1543 = vpop.f32.mrf.mxu0
    %v1544 = vadd.f32 %v1431, %v1543
    %v1545 = vpop.f32.mrf.mxu0
    %v1546 = vadd.f32 %v1433, %v1545
    %1547 = vmatprep.mubr.f32.mxu0 %v180
    %1548 = vmatmul.mubr.f32.gmra.mxu0 %v179
    %v1549 = vpop.f32.mrf.mxu0
    %v1550 = vadd.f32 %v1437, %v1549
    %v1551 = vpop.f32.mrf.mxu0
    %v1552 = vadd.f32 %v1439, %v1551
    %1553 = vmatprep.mubr.f32.mxu0 %v188
    %1554 = vmatmul.mubr.f32.gmra.mxu0 %v187
    %v1555 = vpop.f32.mrf.mxu0
    %v1556 = vadd.f32 %v1443, %v1555
    %v1557 = vpop.f32.mrf.mxu0
    %v1558 = vadd.f32 %v1445, %v1557
    %1559 = vmatprep.mubr.f32.mxu0 %v196
    %1560 = vmatmul.mubr.f32.gmra.mxu0 %v195
    %v1561 = vpop.f32.mrf.mxu0
    %v1562 = vadd.f32 %v1449, %v1561
    %v1563 = vpop.f32.mrf.mxu0
    %v1564 = vadd.f32 %v1451, %v1563
    %1565 = vdwg.mxu0
    %1566 = vmatprep.subr.mxu0 %v486
    %1567 = vmatpush1.msra.mxu0 %v485
    %1568 = vmatprep.subr.mxu0 %v484
    %1569 = vmatpush1.msra.mxu0 %v483
    %1570 = vmatprep.subr.mxu0 %v482
    %1571 = vmatpush1.msra.mxu0 %v481
    %1572 = vmatprep.subr.mxu0 %v480
    %1573 = vmatpush1.msra.mxu0 %v479
    %1574 = vmatprep.subr.mxu0 %v478
    %1575 = vmatpush1.msra.mxu0 %v477
    %1576 = vmatprep.subr.mxu0 %v476
    %1577 = vmatpush1.msra.mxu0 %v475
    %1578 = vmatprep.subr.mxu0 %v474
    %1579 = vmatpush1.msra.mxu0 %v473
    %1580 = vmatprep.subr.mxu0 %v472
    %1581 = vmatpush1.msra.mxu0 %v471
    %1582 = vmatprep.subr.mxu0 %v470
    %1583 = vmatpush1.msra.mxu0 %v469
    %1584 = vmatprep.subr.mxu0 %v468
    %1585 = vmatpush1.msra.mxu0 %v467
    %1586 = vmatprep.subr.mxu0 %v466
    %1587 = vmatpush1.msra.mxu0 %v465
    %1588 = vmatprep.subr.mxu0 %v464
    %1589 = vmatpush1.msra.mxu0 %v463
    %1590 = vmatprep.subr.mxu0 %v462
    %1591 = vmatpush1.msra.mxu0 %v461
    %1592 = vmatprep.subr.mxu0 %v460
    %1593 = vmatpush1.msra.mxu0 %v459
    %1594 = vmatprep.subr.mxu0 %v458
    %1595 = vmatpush1.msra.mxu0 %v457
    %1596 = vmatprep.subr.mxu0 %v456
    %1597 = vmatpush1.msra.mxu0 %v455
    %1598 = vmatprep.subr.mxu0 %v518
    %1599 = vmatpush2.msra.mxu0 %v517
    %1600 = vmatprep.subr.mxu0 %v516
    %1601 = vmatpush2.msra.mxu0 %v515
    %1602 = vmatprep.subr.mxu0 %v514
    %1603 = vmatpush2.msra.mxu0 %v513
    %1604 = vmatprep.subr.mxu0 %v512
    %1605 = vmatpush2.msra.mxu0 %v511
    %1606 = vmatprep.subr.mxu0 %v510
    %1607 = vmatpush2.msra.mxu0 %v509
    %1608 = vmatprep.subr.mxu0 %v508
    %1609 = vmatpush2.msra.mxu0 %v507
    %1610 = vmatprep.subr.mxu0 %v506
    %1611 = vmatpush2.msra.mxu0 %v505
    %1612 = vmatprep.subr.mxu0 %v504
    %1613 = vmatpush2.msra.mxu0 %v503
    %1614 = vmatprep.subr.mxu0 %v502
    %1615 = vmatpush2.msra.mxu0 %v501
    %1616 = vmatprep.subr.mxu0 %v500
    %1617 = vmatpush2.msra.mxu0 %v499
    %1618 = vmatprep.subr.mxu0 %v498
    %1619 = vmatpush2.msra.mxu0 %v497
    %1620 = vmatprep.subr.mxu0 %v496
    %1621 = vmatpush2.msra.mxu0 %v495
    %1622 = vmatprep.subr.mxu0 %v494
    %1623 = vmatpush2.msra.mxu0 %v493
    %1624 = vmatprep.subr.mxu0 %v492
    %1625 = vmatpush2.msra.mxu0 %v491
    %1626 = vmatprep.subr.mxu0 %v490
    %1627 = vmatpush2.msra.mxu0 %v489
    %1628 = vmatprep.subr.mxu0 %v488
    %1629 = vmatpush2.msra.mxu0 %v487
    %1630 = vmatprep.mubr.f32.mxu0 %v142
    %1631 = vmatmul.mubr.f32.gmra.mxu0 %v141
    %v1632 = vpop.f32.mrf.mxu0
    %v1633 = vadd.f32 %v1520, %v1632
    %v1634 = vpop.f32.mrf.mxu0
    %v1635 = vadd.f32 %v1522, %v1634
    %1636 = vmatprep.mubr.f32.mxu0 %v150
    %1637 = vmatmul.mubr.f32.gmra.mxu0 %v149
    %v1638 = vpop.f32.mrf.mxu0
    %v1639 = vadd.f32 %v1526, %v1638
    %v1640 = vpop.f32.mrf.mxu0
    %v1641 = vadd.f32 %v1528, %v1640
    %1642 = vmatprep.mubr.f32.mxu0 %v158
    %1643 = vmatmul.mubr.f32.gmra.mxu0 %v157
    %v1644 = vpop.f32.mrf.mxu0
    %v1645 = vadd.f32 %v1532, %v1644
    %v1646 = vpop.f32.mrf.mxu0
    %v1647 = vadd.f32 %v1534, %v1646
    %1648 = vmatprep.mubr.f32.mxu0 %v166
    %1649 = vmatmul.mubr.f32.gmra.mxu0 %v165
    %v1650 = vpop.f32.mrf.mxu0
    %v1651 = vadd.f32 %v1538, %v1650
    %v1652 = vpop.f32.mrf.mxu0
    %v1653 = vadd.f32 %v1540, %v1652
    %1654 = vmatprep.mubr.f32.mxu0 %v174
    %1655 = vmatmul.mubr.f32.gmra.mxu0 %v173
    %v1656 = vpop.f32.mrf.mxu0
    %v1657 = vadd.f32 %v1544, %v1656
    %v1658 = vpop.f32.mrf.mxu0
    %v1659 = vadd.f32 %v1546, %v1658
    %1660 = vmatprep.mubr.f32.mxu0 %v182
    %1661 = vmatmul.mubr.f32.gmra.mxu0 %v181
    %v1662 = vpop.f32.mrf.mxu0
    %v1663 = vadd.f32 %v1550, %v1662
    %v1664 = vpop.f32.mrf.mxu0
    %v1665 = vadd.f32 %v1552, %v1664
    %1666 = vmatprep.mubr.f32.mxu0 %v190
    %1667 = vmatmul.mubr.f32.gmra.mxu0 %v189
    %v1668 = vpop.f32.mrf.mxu0
    %v1669 = vadd.f32 %v1556, %v1668
    %v1670 = vpop.f32.mrf.mxu0
    %v1671 = vadd.f32 %v1558, %v1670
    %1672 = vmatprep.mubr.f32.mxu0 %v198
    %1673 = vmatmul.mubr.f32.gmra.mxu0 %v197
    %v1674 = vpop.f32.mrf.mxu0
    %v1675 = vadd.f32 %v1562, %v1674
    %v1676 = vpop.f32.mrf.mxu0
    %v1677 = vadd.f32 %v1564, %v1676
    %1678 = vdwg.mxu0
    %v1679 = vsub.f32 %v135, %v199
    %v1680 = vsub.f32 %v136, %v200
    %v1681 = vsub.f32 %v137, %v201
    %v1682 = vsub.f32 %v138, %v202
    %v1683 = vsub.f32 %v139, %v203
    %v1684 = vsub.f32 %v140, %v204
    %v1685 = vsub.f32 %v141, %v205
    %v1686 = vsub.f32 %v142, %v206
    %v1687 = vsub.f32 %v143, %v207
    %v1688 = vsub.f32 %v144, %v208
    %v1689 = vsub.f32 %v145, %v209
    %v1690 = vsub.f32 %v146, %v210
    %v1691 = vsub.f32 %v147, %v211
    %v1692 = vsub.f32 %v148, %v212
    %v1693 = vsub.f32 %v149, %v213
    %v1694 = vsub.f32 %v150, %v214
    %v1695 = vsub.f32 %v151, %v215
    %v1696 = vsub.f32 %v152, %v216
    %v1697 = vsub.f32 %v153, %v217
    %v1698 = vsub.f32 %v154, %v218
    %v1699 = vsub.f32 %v155, %v219
    %v1700 = vsub.f32 %v156, %v220
    %v1701 = vsub.f32 %v157, %v221
    %v1702 = vsub.f32 %v158, %v222
    %v1703 = vsub.f32 %v159, %v223
    %v1704 = vsub.f32 %v160, %v224
    %v1705 = vsub.f32 %v161, %v225
    %v1706 = vsub.f32 %v162, %v226
    %v1707 = vsub.f32 %v163, %v227
    %v1708 = vsub.f32 %v164, %v228
    %v1709 = vsub.f32 %v165, %v229
    %v1710 = vsub.f32 %v166, %v230
    %v1711 = vsub.f32 %v167, %v231
    %v1712 = vsub.f32 %v168, %v232
    %v1713 = vsub.f32 %v169, %v233
    %v1714 = vsub.f32 %v170, %v234
    %v1715 = vsub.f32 %v171, %v235
    %v1716 = vsub.f32 %v172, %v236
    %v1717 = vsub.f32 %v173, %v237
    %v1718 = vsub.f32 %v174, %v238
    %v1719 = vsub.f32 %v175, %v239
    %v1720 = vsub.f32 %v176, %v240
    %v1721 = vsub.f32 %v177, %v241
    %v1722 = vsub.f32 %v178, %v242
    %v1723 = vsub.f32 %v179, %v243
    %v1724 = vsub.f32 %v180, %v244
    %v1725 = vsub.f32 %v181, %v245
    %v1726 = vsub.f32 %v182, %v246
    %v1727 = vsub.f32 %v183, %v247
    %v1728 = vsub.f32 %v184, %v248
    %v1729 = vsub.f32 %v185, %v249
    %v1730 = vsub.f32 %v186, %v250
    %v1731 = vsub.f32 %v187, %v251
    %v1732 = vsub.f32 %v188, %v252
    %v1733 = vsub.f32 %v189, %v253
    %v1734 = vsub.f32 %v190, %v254
    %v1735 = vsub.f32 %v191, %v255
    %v1736 = vsub.f32 %v192, %v256
    %v1737 = vsub.f32 %v193, %v257
    %v1738 = vsub.f32 %v194, %v258
    %v1739 = vsub.f32 %v195, %v259
    %v1740 = vsub.f32 %v196, %v260
    %v1741 = vsub.f32 %v197, %v261
    %v1742 = vsub.f32 %v198, %v262
    %v1743 = vand.u32 2147483647, %v1679
    %v1744 = vand.u32 2147483647, %v1680
    %v1745 = vand.u32 2147483647, %v1681
    %v1746 = vand.u32 2147483647, %v1682
    %v1747 = vand.u32 2147483647, %v1683
    %v1748 = vand.u32 2147483647, %v1684
    %v1749 = vand.u32 2147483647, %v1685
    %v1750 = vand.u32 2147483647, %v1686
    %v1751 = vand.u32 2147483647, %v1687
    %v1752 = vand.u32 2147483647, %v1688
    %v1753 = vand.u32 2147483647, %v1689
    %v1754 = vand.u32 2147483647, %v1690
    %v1755 = vand.u32 2147483647, %v1691
    %v1756 = vand.u32 2147483647, %v1692
    %v1757 = vand.u32 2147483647, %v1693
    %v1758 = vand.u32 2147483647, %v1694
    %v1759 = vand.u32 2147483647, %v1695
    %v1760 = vand.u32 2147483647, %v1696
    %v1761 = vand.u32 2147483647, %v1697
    %v1762 = vand.u32 2147483647, %v1698
    %v1763 = vand.u32 2147483647, %v1699
    %v1764 = vand.u32 2147483647, %v1700
    %v1765 = vand.u32 2147483647, %v1701
    %v1766 = vand.u32 2147483647, %v1702
    %v1767 = vand.u32 2147483647, %v1703
    %v1768 = vand.u32 2147483647, %v1704
    %v1769 = vand.u32 2147483647, %v1705
    %v1770 = vand.u32 2147483647, %v1706
    %v1771 = vand.u32 2147483647, %v1707
    %v1772 = vand.u32 2147483647, %v1708
    %v1773 = vand.u32 2147483647, %v1709
    %v1774 = vand.u32 2147483647, %v1710
    %v1775 = vand.u32 2147483647, %v1711
    %v1776 = vand.u32 2147483647, %v1712
    %v1777 = vand.u32 2147483647, %v1713
    %v1778 = vand.u32 2147483647, %v1714
    %v1779 = vand.u32 2147483647, %v1715
    %v1780 = vand.u32 2147483647, %v1716
    %v1781 = vand.u32 2147483647, %v1717
    %v1782 = vand.u32 2147483647, %v1718
    %v1783 = vand.u32 2147483647, %v1719
    %v1784 = vand.u32 2147483647, %v1720
    %v1785 = vand.u32 2147483647, %v1721
    %v1786 = vand.u32 2147483647, %v1722
    %v1787 = vand.u32 2147483647, %v1723
    %v1788 = vand.u32 2147483647, %v1724
    %v1789 = vand.u32 2147483647, %v1725
    %v1790 = vand.u32 2147483647, %v1726
    %v1791 = vand.u32 2147483647, %v1727
    %v1792 = vand.u32 2147483647, %v1728
    %v1793 = vand.u32 2147483647, %v1729
    %v1794 = vand.u32 2147483647, %v1730
    %v1795 = vand.u32 2147483647, %v1731
    %v1796 = vand.u32 2147483647, %v1732
    %v1797 = vand.u32 2147483647, %v1733
    %v1798 = vand.u32 2147483647, %v1734
    %v1799 = vand.u32 2147483647, %v1735
    %v1800 = vand.u32 2147483647, %v1736
    %v1801 = vand.u32 2147483647, %v1737
    %v1802 = vand.u32 2147483647, %v1738
    %v1803 = vand.u32 2147483647, %v1739
    %v1804 = vand.u32 2147483647, %v1740
    %v1805 = vand.u32 2147483647, %v1741
    %v1806 = vand.u32 2147483647, %v1742
    %v1807 = vld [vmem:[#allocation11] sm:$0xff]
    %v1808 = vld [vmem:[#allocation11 + $0x8] sm:$0xff]
    %v1809 = vld [vmem:[#allocation11 + $0x10] sm:$0xff]
    %v1810 = vld [vmem:[#allocation11 + $0x18] sm:$0xff]
    %v1811 = vld [vmem:[#allocation11 + $0x20] sm:$0xff]
    %v1812 = vld [vmem:[#allocation11 + $0x28] sm:$0xff]
    %v1813 = vld [vmem:[#allocation11 + $0x30] sm:$0xff]
    %v1814 = vld [vmem:[#allocation11 + $0x38] sm:$0xff]
    %v1815 = vld [vmem:[#allocation11 + $0x40] sm:$0xff]
    %v1816 = vld [vmem:[#allocation11 + $0x48] sm:$0xff]
    %v1817 = vld [vmem:[#allocation11 + $0x50] sm:$0xff]
    %v1818 = vld [vmem:[#allocation11 + $0x58] sm:$0xff]
    %v1819 = vld [vmem:[#allocation11 + $0x60] sm:$0xff]
    %v1820 = vld [vmem:[#allocation11 + $0x68] sm:$0xff]
    %v1821 = vld [vmem:[#allocation11 + $0x70] sm:$0xff]
    %v1822 = vld [vmem:[#allocation11 + $0x78] sm:$0xff]
    %v1823 = vld [vmem:[#allocation11 + $0x80] sm:$0xff]
    %v1824 = vld [vmem:[#allocation11 + $0x88] sm:$0xff]
    %v1825 = vld [vmem:[#allocation11 + $0x90] sm:$0xff]
    %v1826 = vld [vmem:[#allocation11 + $0x98] sm:$0xff]
    %v1827 = vld [vmem:[#allocation11 + $0xa0] sm:$0xff]
    %v1828 = vld [vmem:[#allocation11 + $0xa8] sm:$0xff]
    %v1829 = vld [vmem:[#allocation11 + $0xb0] sm:$0xff]
    %v1830 = vld [vmem:[#allocation11 + $0xb8] sm:$0xff]
    %v1831 = vld [vmem:[#allocation11 + $0xc0] sm:$0xff]
    %v1832 = vld [vmem:[#allocation11 + $0xc8] sm:$0xff]
    %v1833 = vld [vmem:[#allocation11 + $0xd0] sm:$0xff]
    %v1834 = vld [vmem:[#allocation11 + $0xd8] sm:$0xff]
    %v1835 = vld [vmem:[#allocation11 + $0xe0] sm:$0xff]
    %v1836 = vld [vmem:[#allocation11 + $0xe8] sm:$0xff]
    %v1837 = vld [vmem:[#allocation11 + $0xf0] sm:$0xff]
    %v1838 = vld [vmem:[#allocation11 + $0xf8] sm:$0xff]
    %v1839 = vld [vmem:[#allocation11 + $0x100] sm:$0xff]
    %v1840 = vld [vmem:[#allocation11 + $0x108] sm:$0xff]
    %v1841 = vld [vmem:[#allocation11 + $0x110] sm:$0xff]
    %v1842 = vld [vmem:[#allocation11 + $0x118] sm:$0xff]
    %v1843 = vld [vmem:[#allocation11 + $0x120] sm:$0xff]
    %v1844 = vld [vmem:[#allocation11 + $0x128] sm:$0xff]
    %v1845 = vld [vmem:[#allocation11 + $0x130] sm:$0xff]
    %v1846 = vld [vmem:[#allocation11 + $0x138] sm:$0xff]
    %v1847 = vld [vmem:[#allocation11 + $0x140] sm:$0xff]
    %v1848 = vld [vmem:[#allocation11 + $0x148] sm:$0xff]
    %v1849 = vld [vmem:[#allocation11 + $0x150] sm:$0xff]
    %v1850 = vld [vmem:[#allocation11 + $0x158] sm:$0xff]
    %v1851 = vld [vmem:[#allocation11 + $0x160] sm:$0xff]
    %v1852 = vld [vmem:[#allocation11 + $0x168] sm:$0xff]
    %v1853 = vld [vmem:[#allocation11 + $0x170] sm:$0xff]
    %v1854 = vld [vmem:[#allocation11 + $0x178] sm:$0xff]
    %v1855 = vld [vmem:[#allocation11 + $0x180] sm:$0xff]
    %v1856 = vld [vmem:[#allocation11 + $0x188] sm:$0xff]
    %v1857 = vld [vmem:[#allocation11 + $0x190] sm:$0xff]
    %v1858 = vld [vmem:[#allocation11 + $0x198] sm:$0xff]
    %v1859 = vld [vmem:[#allocation11 + $0x1a0] sm:$0xff]
    %v1860 = vld [vmem:[#allocation11 + $0x1a8] sm:$0xff]
    %v1861 = vld [vmem:[#allocation11 + $0x1b0] sm:$0xff]
    %v1862 = vld [vmem:[#allocation11 + $0x1b8] sm:$0xff]
    %v1863 = vld [vmem:[#allocation11 + $0x1c0] sm:$0xff]
    %v1864 = vld [vmem:[#allocation11 + $0x1c8] sm:$0xff]
    %v1865 = vld [vmem:[#allocation11 + $0x1d0] sm:$0xff]
    %v1866 = vld [vmem:[#allocation11 + $0x1d8] sm:$0xff]
    %v1867 = vld [vmem:[#allocation11 + $0x1e0] sm:$0xff]
    %v1868 = vld [vmem:[#allocation11 + $0x1e8] sm:$0xff]
    %v1869 = vld [vmem:[#allocation11 + $0x1f0] sm:$0xff]
    %v1870 = vld [vmem:[#allocation11 + $0x1f8] sm:$0xff]
    %v1871 = vld [vmem:[#allocation11 + $0x200] sm:$0xff]
    %v1872 = vld [vmem:[#allocation11 + $0x208] sm:$0xff]
    %v1873 = vld [vmem:[#allocation11 + $0x210] sm:$0xff]
    %v1874 = vld [vmem:[#allocation11 + $0x218] sm:$0xff]
    %v1875 = vld [vmem:[#allocation11 + $0x220] sm:$0xff]
    %v1876 = vld [vmem:[#allocation11 + $0x228] sm:$0xff]
    %v1877 = vld [vmem:[#allocation11 + $0x230] sm:$0xff]
    %v1878 = vld [vmem:[#allocation11 + $0x238] sm:$0xff]
    %v1879 = vld [vmem:[#allocation11 + $0x240] sm:$0xff]
    %v1880 = vld [vmem:[#allocation11 + $0x248] sm:$0xff]
    %v1881 = vld [vmem:[#allocation11 + $0x250] sm:$0xff]
    %v1882 = vld [vmem:[#allocation11 + $0x258] sm:$0xff]
    %v1883 = vld [vmem:[#allocation11 + $0x260] sm:$0xff]
    %v1884 = vld [vmem:[#allocation11 + $0x268] sm:$0xff]
    %v1885 = vld [vmem:[#allocation11 + $0x270] sm:$0xff]
    %v1886 = vld [vmem:[#allocation11 + $0x278] sm:$0xff]
    %v1887 = vld [vmem:[#allocation11 + $0x280] sm:$0xff]
    %v1888 = vld [vmem:[#allocation11 + $0x288] sm:$0xff]
    %v1889 = vld [vmem:[#allocation11 + $0x290] sm:$0xff]
    %v1890 = vld [vmem:[#allocation11 + $0x298] sm:$0xff]
    %v1891 = vld [vmem:[#allocation11 + $0x2a0] sm:$0xff]
    %v1892 = vld [vmem:[#allocation11 + $0x2a8] sm:$0xff]
    %v1893 = vld [vmem:[#allocation11 + $0x2b0] sm:$0xff]
    %v1894 = vld [vmem:[#allocation11 + $0x2b8] sm:$0xff]
    %v1895 = vld [vmem:[#allocation11 + $0x2c0] sm:$0xff]
    %v1896 = vld [vmem:[#allocation11 + $0x2c8] sm:$0xff]
    %v1897 = vld [vmem:[#allocation11 + $0x2d0] sm:$0xff]
    %v1898 = vld [vmem:[#allocation11 + $0x2d8] sm:$0xff]
    %v1899 = vld [vmem:[#allocation11 + $0x2e0] sm:$0xff]
    %v1900 = vld [vmem:[#allocation11 + $0x2e8] sm:$0xff]
    %v1901 = vld [vmem:[#allocation11 + $0x2f0] sm:$0xff]
    %v1902 = vld [vmem:[#allocation11 + $0x2f8] sm:$0xff]
    %v1903 = vld [vmem:[#allocation11 + $0x300] sm:$0xff]
    %v1904 = vld [vmem:[#allocation11 + $0x308] sm:$0xff]
    %v1905 = vld [vmem:[#allocation11 + $0x310] sm:$0xff]
    %v1906 = vld [vmem:[#allocation11 + $0x318] sm:$0xff]
    %v1907 = vld [vmem:[#allocation11 + $0x320] sm:$0xff]
    %v1908 = vld [vmem:[#allocation11 + $0x328] sm:$0xff]
    %v1909 = vld [vmem:[#allocation11 + $0x330] sm:$0xff]
    %v1910 = vld [vmem:[#allocation11 + $0x338] sm:$0xff]
    %v1911 = vld [vmem:[#allocation11 + $0x340] sm:$0xff]
    %v1912 = vld [vmem:[#allocation11 + $0x348] sm:$0xff]
    %v1913 = vld [vmem:[#allocation11 + $0x350] sm:$0xff]
    %v1914 = vld [vmem:[#allocation11 + $0x358] sm:$0xff]
    %v1915 = vld [vmem:[#allocation11 + $0x360] sm:$0xff]
    %v1916 = vld [vmem:[#allocation11 + $0x368] sm:$0xff]
    %v1917 = vld [vmem:[#allocation11 + $0x370] sm:$0xff]
    %v1918 = vld [vmem:[#allocation11 + $0x378] sm:$0xff]
    %v1919 = vld [vmem:[#allocation11 + $0x380] sm:$0xff]
    %v1920 = vld [vmem:[#allocation11 + $0x388] sm:$0xff]
    %v1921 = vld [vmem:[#allocation11 + $0x390] sm:$0xff]
    %v1922 = vld [vmem:[#allocation11 + $0x398] sm:$0xff]
    %v1923 = vld [vmem:[#allocation11 + $0x3a0] sm:$0xff]
    %v1924 = vld [vmem:[#allocation11 + $0x3a8] sm:$0xff]
    %v1925 = vld [vmem:[#allocation11 + $0x3b0] sm:$0xff]
    %v1926 = vld [vmem:[#allocation11 + $0x3b8] sm:$0xff]
    %v1927 = vld [vmem:[#allocation11 + $0x3c0] sm:$0xff]
    %v1928 = vld [vmem:[#allocation11 + $0x3c8] sm:$0xff]
    %v1929 = vld [vmem:[#allocation11 + $0x3d0] sm:$0xff]
    %v1930 = vld [vmem:[#allocation11 + $0x3d8] sm:$0xff]
    %v1931 = vld [vmem:[#allocation11 + $0x3e0] sm:$0xff]
    %v1932 = vld [vmem:[#allocation11 + $0x3e8] sm:$0xff]
    %v1933 = vld [vmem:[#allocation11 + $0x3f0] sm:$0xff]
    %v1934 = vld [vmem:[#allocation11 + $0x3f8] sm:$0xff]
    %v1935 = vld [vmem:[#allocation11 + $0x400] sm:$0xff]
    %v1936 = vld [vmem:[#allocation11 + $0x408] sm:$0xff]
    %v1937 = vld [vmem:[#allocation11 + $0x410] sm:$0xff]
    %v1938 = vld [vmem:[#allocation11 + $0x418] sm:$0xff]
    %v1939 = vld [vmem:[#allocation11 + $0x420] sm:$0xff]
    %v1940 = vld [vmem:[#allocation11 + $0x428] sm:$0xff]
    %v1941 = vld [vmem:[#allocation11 + $0x430] sm:$0xff]
    %v1942 = vld [vmem:[#allocation11 + $0x438] sm:$0xff]
    %v1943 = vld [vmem:[#allocation11 + $0x440] sm:$0xff]
    %v1944 = vld [vmem:[#allocation11 + $0x448] sm:$0xff]
    %v1945 = vld [vmem:[#allocation11 + $0x450] sm:$0xff]
    %v1946 = vld [vmem:[#allocation11 + $0x458] sm:$0xff]
    %v1947 = vld [vmem:[#allocation11 + $0x460] sm:$0xff]
    %v1948 = vld [vmem:[#allocation11 + $0x468] sm:$0xff]
    %v1949 = vld [vmem:[#allocation11 + $0x470] sm:$0xff]
    %v1950 = vld [vmem:[#allocation11 + $0x478] sm:$0xff]
    %v1951 = vld [vmem:[#allocation11 + $0x480] sm:$0xff]
    %v1952 = vld [vmem:[#allocation11 + $0x488] sm:$0xff]
    %v1953 = vld [vmem:[#allocation11 + $0x490] sm:$0xff]
    %v1954 = vld [vmem:[#allocation11 + $0x498] sm:$0xff]
    %v1955 = vld [vmem:[#allocation11 + $0x4a0] sm:$0xff]
    %v1956 = vld [vmem:[#allocation11 + $0x4a8] sm:$0xff]
    %v1957 = vld [vmem:[#allocation11 + $0x4b0] sm:$0xff]
    %v1958 = vld [vmem:[#allocation11 + $0x4b8] sm:$0xff]
    %v1959 = vld [vmem:[#allocation11 + $0x4c0] sm:$0xff]
    %v1960 = vld [vmem:[#allocation11 + $0x4c8] sm:$0xff]
    %v1961 = vld [vmem:[#allocation11 + $0x4d0] sm:$0xff]
    %v1962 = vld [vmem:[#allocation11 + $0x4d8] sm:$0xff]
    %v1963 = vld [vmem:[#allocation11 + $0x4e0] sm:$0xff]
    %v1964 = vld [vmem:[#allocation11 + $0x4e8] sm:$0xff]
    %v1965 = vld [vmem:[#allocation11 + $0x4f0] sm:$0xff]
    %v1966 = vld [vmem:[#allocation11 + $0x4f8] sm:$0xff]
    %v1967 = vld [vmem:[#allocation11 + $0x500] sm:$0xff]
    %v1968 = vld [vmem:[#allocation11 + $0x508] sm:$0xff]
    %v1969 = vld [vmem:[#allocation11 + $0x510] sm:$0xff]
    %v1970 = vld [vmem:[#allocation11 + $0x518] sm:$0xff]
    %v1971 = vld [vmem:[#allocation11 + $0x520] sm:$0xff]
    %v1972 = vld [vmem:[#allocation11 + $0x528] sm:$0xff]
    %v1973 = vld [vmem:[#allocation11 + $0x530] sm:$0xff]
    %v1974 = vld [vmem:[#allocation11 + $0x538] sm:$0xff]
    %v1975 = vld [vmem:[#allocation11 + $0x540] sm:$0xff]
    %v1976 = vld [vmem:[#allocation11 + $0x548] sm:$0xff]
    %v1977 = vld [vmem:[#allocation11 + $0x550] sm:$0xff]
    %v1978 = vld [vmem:[#allocation11 + $0x558] sm:$0xff]
    %v1979 = vld [vmem:[#allocation11 + $0x560] sm:$0xff]
    %v1980 = vld [vmem:[#allocation11 + $0x568] sm:$0xff]
    %v1981 = vld [vmem:[#allocation11 + $0x570] sm:$0xff]
    %v1982 = vld [vmem:[#allocation11 + $0x578] sm:$0xff]
    %v1983 = vld [vmem:[#allocation11 + $0x580] sm:$0xff]
    %v1984 = vld [vmem:[#allocation11 + $0x588] sm:$0xff]
    %v1985 = vld [vmem:[#allocation11 + $0x590] sm:$0xff]
    %v1986 = vld [vmem:[#allocation11 + $0x598] sm:$0xff]
    %v1987 = vld [vmem:[#allocation11 + $0x5a0] sm:$0xff]
    %v1988 = vld [vmem:[#allocation11 + $0x5a8] sm:$0xff]
    %v1989 = vld [vmem:[#allocation11 + $0x5b0] sm:$0xff]
    %v1990 = vld [vmem:[#allocation11 + $0x5b8] sm:$0xff]
    %v1991 = vld [vmem:[#allocation11 + $0x5c0] sm:$0xff]
    %v1992 = vld [vmem:[#allocation11 + $0x5c8] sm:$0xff]
    %v1993 = vld [vmem:[#allocation11 + $0x5d0] sm:$0xff]
    %v1994 = vld [vmem:[#allocation11 + $0x5d8] sm:$0xff]
    %v1995 = vld [vmem:[#allocation11 + $0x5e0] sm:$0xff]
    %v1996 = vld [vmem:[#allocation11 + $0x5e8] sm:$0xff]
    %v1997 = vld [vmem:[#allocation11 + $0x5f0] sm:$0xff]
    %v1998 = vld [vmem:[#allocation11 + $0x5f8] sm:$0xff]
    %v1999 = vld [vmem:[#allocation11 + $0x600] sm:$0xff]
    %v2000 = vld [vmem:[#allocation11 + $0x608] sm:$0xff]
    %v2001 = vld [vmem:[#allocation11 + $0x610] sm:$0xff]
    %v2002 = vld [vmem:[#allocation11 + $0x618] sm:$0xff]
    %v2003 = vld [vmem:[#allocation11 + $0x620] sm:$0xff]
    %v2004 = vld [vmem:[#allocation11 + $0x628] sm:$0xff]
    %v2005 = vld [vmem:[#allocation11 + $0x630] sm:$0xff]
    %v2006 = vld [vmem:[#allocation11 + $0x638] sm:$0xff]
    %v2007 = vld [vmem:[#allocation11 + $0x640] sm:$0xff]
    %v2008 = vld [vmem:[#allocation11 + $0x648] sm:$0xff]
    %v2009 = vld [vmem:[#allocation11 + $0x650] sm:$0xff]
    %v2010 = vld [vmem:[#allocation11 + $0x658] sm:$0xff]
    %v2011 = vld [vmem:[#allocation11 + $0x660] sm:$0xff]
    %v2012 = vld [vmem:[#allocation11 + $0x668] sm:$0xff]
    %v2013 = vld [vmem:[#allocation11 + $0x670] sm:$0xff]
    %v2014 = vld [vmem:[#allocation11 + $0x678] sm:$0xff]
    %v2015 = vld [vmem:[#allocation11 + $0x680] sm:$0xff]
    %v2016 = vld [vmem:[#allocation11 + $0x688] sm:$0xff]
    %v2017 = vld [vmem:[#allocation11 + $0x690] sm:$0xff]
    %v2018 = vld [vmem:[#allocation11 + $0x698] sm:$0xff]
    %v2019 = vld [vmem:[#allocation11 + $0x6a0] sm:$0xff]
    %v2020 = vld [vmem:[#allocation11 + $0x6a8] sm:$0xff]
    %v2021 = vld [vmem:[#allocation11 + $0x6b0] sm:$0xff]
    %v2022 = vld [vmem:[#allocation11 + $0x6b8] sm:$0xff]
    %v2023 = vld [vmem:[#allocation11 + $0x6c0] sm:$0xff]
    %v2024 = vld [vmem:[#allocation11 + $0x6c8] sm:$0xff]
    %v2025 = vld [vmem:[#allocation11 + $0x6d0] sm:$0xff]
    %v2026 = vld [vmem:[#allocation11 + $0x6d8] sm:$0xff]
    %v2027 = vld [vmem:[#allocation11 + $0x6e0] sm:$0xff]
    %v2028 = vld [vmem:[#allocation11 + $0x6e8] sm:$0xff]
    %v2029 = vld [vmem:[#allocation11 + $0x6f0] sm:$0xff]
    %v2030 = vld [vmem:[#allocation11 + $0x6f8] sm:$0xff]
    %v2031 = vld [vmem:[#allocation11 + $0x700] sm:$0xff]
    %v2032 = vld [vmem:[#allocation11 + $0x708] sm:$0xff]
    %v2033 = vld [vmem:[#allocation11 + $0x710] sm:$0xff]
    %v2034 = vld [vmem:[#allocation11 + $0x718] sm:$0xff]
    %v2035 = vld [vmem:[#allocation11 + $0x720] sm:$0xff]
    %v2036 = vld [vmem:[#allocation11 + $0x728] sm:$0xff]
    %v2037 = vld [vmem:[#allocation11 + $0x730] sm:$0xff]
    %v2038 = vld [vmem:[#allocation11 + $0x738] sm:$0xff]
    %v2039 = vld [vmem:[#allocation11 + $0x740] sm:$0xff]
    %v2040 = vld [vmem:[#allocation11 + $0x748] sm:$0xff]
    %v2041 = vld [vmem:[#allocation11 + $0x750] sm:$0xff]
    %v2042 = vld [vmem:[#allocation11 + $0x758] sm:$0xff]
    %v2043 = vld [vmem:[#allocation11 + $0x760] sm:$0xff]
    %v2044 = vld [vmem:[#allocation11 + $0x768] sm:$0xff]
    %v2045 = vld [vmem:[#allocation11 + $0x770] sm:$0xff]
    %v2046 = vld [vmem:[#allocation11 + $0x778] sm:$0xff]
    %v2047 = vld [vmem:[#allocation11 + $0x780] sm:$0xff]
    %v2048 = vld [vmem:[#allocation11 + $0x788] sm:$0xff]
    %v2049 = vld [vmem:[#allocation11 + $0x790] sm:$0xff]
    %v2050 = vld [vmem:[#allocation11 + $0x798] sm:$0xff]
    %v2051 = vld [vmem:[#allocation11 + $0x7a0] sm:$0xff]
    %v2052 = vld [vmem:[#allocation11 + $0x7a8] sm:$0xff]
    %v2053 = vld [vmem:[#allocation11 + $0x7b0] sm:$0xff]
    %v2054 = vld [vmem:[#allocation11 + $0x7b8] sm:$0xff]
    %v2055 = vld [vmem:[#allocation11 + $0x7c0] sm:$0xff]
    %v2056 = vld [vmem:[#allocation11 + $0x7c8] sm:$0xff]
    %v2057 = vld [vmem:[#allocation11 + $0x7d0] sm:$0xff]
    %v2058 = vld [vmem:[#allocation11 + $0x7d8] sm:$0xff]
    %v2059 = vld [vmem:[#allocation11 + $0x7e0] sm:$0xff]
    %v2060 = vld [vmem:[#allocation11 + $0x7e8] sm:$0xff]
    %v2061 = vld [vmem:[#allocation11 + $0x7f0] sm:$0xff]
    %v2062 = vld [vmem:[#allocation11 + $0x7f8] sm:$0xff]
    %2063 = vmatprep.subr.mxu0 %v1838
    %2064 = vmatpush1.msra.mxu0 %v1837
    %2065 = vmatprep.subr.mxu0 %v1836
    %2066 = vmatpush1.msra.mxu0 %v1835
    %2067 = vmatprep.subr.mxu0 %v1834
    %2068 = vmatpush1.msra.mxu0 %v1833
    %2069 = vmatprep.subr.mxu0 %v1832
    %2070 = vmatpush1.msra.mxu0 %v1831
    %2071 = vmatprep.subr.mxu0 %v1830
    %2072 = vmatpush1.msra.mxu0 %v1829
    %2073 = vmatprep.subr.mxu0 %v1828
    %2074 = vmatpush1.msra.mxu0 %v1827
    %2075 = vmatprep.subr.mxu0 %v1826
    %2076 = vmatpush1.msra.mxu0 %v1825
    %2077 = vmatprep.subr.mxu0 %v1824
    %2078 = vmatpush1.msra.mxu0 %v1823
    %2079 = vmatprep.subr.mxu0 %v1822
    %2080 = vmatpush1.msra.mxu0 %v1821
    %2081 = vmatprep.subr.mxu0 %v1820
    %2082 = vmatpush1.msra.mxu0 %v1819
    %2083 = vmatprep.subr.mxu0 %v1818
    %2084 = vmatpush1.msra.mxu0 %v1817
    %2085 = vmatprep.subr.mxu0 %v1816
    %2086 = vmatpush1.msra.mxu0 %v1815
    %2087 = vmatprep.subr.mxu0 %v1814
    %2088 = vmatpush1.msra.mxu0 %v1813
    %2089 = vmatprep.subr.mxu0 %v1812
    %2090 = vmatpush1.msra.mxu0 %v1811
    %2091 = vmatprep.subr.mxu0 %v1810
    %2092 = vmatpush1.msra.mxu0 %v1809
    %2093 = vmatprep.subr.mxu0 %v1808
    %2094 = vmatpush1.msra.mxu0 %v1807
    %2095 = vmatprep.subr.mxu0 %v1870
    %2096 = vmatpush2.msra.mxu0 %v1869
    %2097 = vmatprep.subr.mxu0 %v1868
    %2098 = vmatpush2.msra.mxu0 %v1867
    %2099 = vmatprep.subr.mxu0 %v1866
    %2100 = vmatpush2.msra.mxu0 %v1865
    %2101 = vmatprep.subr.mxu0 %v1864
    %2102 = vmatpush2.msra.mxu0 %v1863
    %2103 = vmatprep.subr.mxu0 %v1862
    %2104 = vmatpush2.msra.mxu0 %v1861
    %2105 = vmatprep.subr.mxu0 %v1860
    %2106 = vmatpush2.msra.mxu0 %v1859
    %2107 = vmatprep.subr.mxu0 %v1858
    %2108 = vmatpush2.msra.mxu0 %v1857
    %2109 = vmatprep.subr.mxu0 %v1856
    %2110 = vmatpush2.msra.mxu0 %v1855
    %2111 = vmatprep.subr.mxu0 %v1854
    %2112 = vmatpush2.msra.mxu0 %v1853
    %2113 = vmatprep.subr.mxu0 %v1852
    %2114 = vmatpush2.msra.mxu0 %v1851
    %2115 = vmatprep.subr.mxu0 %v1850
    %2116 = vmatpush2.msra.mxu0 %v1849
    %2117 = vmatprep.subr.mxu0 %v1848
    %2118 = vmatpush2.msra.mxu0 %v1847
    %2119 = vmatprep.subr.mxu0 %v1846
    %2120 = vmatpush2.msra.mxu0 %v1845
    %2121 = vmatprep.subr.mxu0 %v1844
    %2122 = vmatpush2.msra.mxu0 %v1843
    %2123 = vmatprep.subr.mxu0 %v1842
    %2124 = vmatpush2.msra.mxu0 %v1841
    %2125 = vmatprep.subr.mxu0 %v1840
    %2126 = vmatpush2.msra.mxu0 %v1839
    %2127 = vmatprep.mubr.f32.mxu0 %v1744
    %2128 = vmatmul.mubr.f32.gmra.mxu0 %v1743
    %v2129 = vpop.f32.mrf.mxu0
    %v2130 = vadd.f32 0.0, %v2129
    %v2131 = vpop.f32.mrf.mxu0
    %v2132 = vadd.f32 0.0, %v2131
    %2133 = vmatprep.mubr.f32.mxu0 %v1752
    %2134 = vmatmul.mubr.f32.gmra.mxu0 %v1751
    %v2135 = vpop.f32.mrf.mxu0
    %v2136 = vadd.f32 0.0, %v2135
    %v2137 = vpop.f32.mrf.mxu0
    %v2138 = vadd.f32 0.0, %v2137
    %2139 = vmatprep.mubr.f32.mxu0 %v1760
    %2140 = vmatmul.mubr.f32.gmra.mxu0 %v1759
    %v2141 = vpop.f32.mrf.mxu0
    %v2142 = vadd.f32 0.0, %v2141
    %v2143 = vpop.f32.mrf.mxu0
    %v2144 = vadd.f32 0.0, %v2143
    %2145 = vmatprep.mubr.f32.mxu0 %v1768
    %2146 = vmatmul.mubr.f32.gmra.mxu0 %v1767
    %v2147 = vpop.f32.mrf.mxu0
    %v2148 = vadd.f32 0.0, %v2147
    %v2149 = vpop.f32.mrf.mxu0
    %v2150 = vadd.f32 0.0, %v2149
    %2151 = vmatprep.mubr.f32.mxu0 %v1776
    %2152 = vmatmul.mubr.f32.gmra.mxu0 %v1775
    %v2153 = vpop.f32.mrf.mxu0
    %v2154 = vadd.f32 0.0, %v2153
    %v2155 = vpop.f32.mrf.mxu0
    %v2156 = vadd.f32 0.0, %v2155
    %2157 = vmatprep.mubr.f32.mxu0 %v1784
    %2158 = vmatmul.mubr.f32.gmra.mxu0 %v1783
    %v2159 = vpop.f32.mrf.mxu0
    %v2160 = vadd.f32 0.0, %v2159
    %v2161 = vpop.f32.mrf.mxu0
    %v2162 = vadd.f32 0.0, %v2161
    %2163 = vmatprep.mubr.f32.mxu0 %v1792
    %2164 = vmatmul.mubr.f32.gmra.mxu0 %v1791
    %v2165 = vpop.f32.mrf.mxu0
    %v2166 = vadd.f32 0.0, %v2165
    %v2167 = vpop.f32.mrf.mxu0
    %v2168 = vadd.f32 0.0, %v2167
    %2169 = vmatprep.mubr.f32.mxu0 %v1800
    %2170 = vmatmul.mubr.f32.gmra.mxu0 %v1799
    %v2171 = vpop.f32.mrf.mxu0
    %v2172 = vadd.f32 0.0, %v2171
    %v2173 = vpop.f32.mrf.mxu0
    %v2174 = vadd.f32 0.0, %v2173
    %2175 = vdwg.mxu0
    %2176 = vmatprep.subr.mxu0 %v1902
    %2177 = vmatpush1.msra.mxu0 %v1901
    %2178 = vmatprep.subr.mxu0 %v1900
    %2179 = vmatpush1.msra.mxu0 %v1899
    %2180 = vmatprep.subr.mxu0 %v1898
    %2181 = vmatpush1.msra.mxu0 %v1897
    %2182 = vmatprep.subr.mxu0 %v1896
    %2183 = vmatpush1.msra.mxu0 %v1895
    %2184 = vmatprep.subr.mxu0 %v1894
    %2185 = vmatpush1.msra.mxu0 %v1893
    %2186 = vmatprep.subr.mxu0 %v1892
    %2187 = vmatpush1.msra.mxu0 %v1891
    %2188 = vmatprep.subr.mxu0 %v1890
    %2189 = vmatpush1.msra.mxu0 %v1889
    %2190 = vmatprep.subr.mxu0 %v1888
    %2191 = vmatpush1.msra.mxu0 %v1887
    %2192 = vmatprep.subr.mxu0 %v1886
    %2193 = vmatpush1.msra.mxu0 %v1885
    %2194 = vmatprep.subr.mxu0 %v1884
    %2195 = vmatpush1.msra.mxu0 %v1883
    %2196 = vmatprep.subr.mxu0 %v1882
    %2197 = vmatpush1.msra.mxu0 %v1881
    %2198 = vmatprep.subr.mxu0 %v1880
    %2199 = vmatpush1.msra.mxu0 %v1879
    %2200 = vmatprep.subr.mxu0 %v1878
    %2201 = vmatpush1.msra.mxu0 %v1877
    %2202 = vmatprep.subr.mxu0 %v1876
    %2203 = vmatpush1.msra.mxu0 %v1875
    %2204 = vmatprep.subr.mxu0 %v1874
    %2205 = vmatpush1.msra.mxu0 %v1873
    %2206 = vmatprep.subr.mxu0 %v1872
    %2207 = vmatpush1.msra.mxu0 %v1871
    %2208 = vmatprep.subr.mxu0 %v1934
    %2209 = vmatpush2.msra.mxu0 %v1933
    %2210 = vmatprep.subr.mxu0 %v1932
    %2211 = vmatpush2.msra.mxu0 %v1931
    %2212 = vmatprep.subr.mxu0 %v1930
    %2213 = vmatpush2.msra.mxu0 %v1929
    %2214 = vmatprep.subr.mxu0 %v1928
    %2215 = vmatpush2.msra.mxu0 %v1927
    %2216 = vmatprep.subr.mxu0 %v1926
    %2217 = vmatpush2.msra.mxu0 %v1925
    %2218 = vmatprep.subr.mxu0 %v1924
    %2219 = vmatpush2.msra.mxu0 %v1923
    %2220 = vmatprep.subr.mxu0 %v1922
    %2221 = vmatpush2.msra.mxu0 %v1921
    %2222 = vmatprep.subr.mxu0 %v1920
    %2223 = vmatpush2.msra.mxu0 %v1919
    %2224 = vmatprep.subr.mxu0 %v1918
    %2225 = vmatpush2.msra.mxu0 %v1917
    %2226 = vmatprep.subr.mxu0 %v1916
    %2227 = vmatpush2.msra.mxu0 %v1915
    %2228 = vmatprep.subr.mxu0 %v1914
    %2229 = vmatpush2.msra.mxu0 %v1913
    %2230 = vmatprep.subr.mxu0 %v1912
    %2231 = vmatpush2.msra.mxu0 %v1911
    %2232 = vmatprep.subr.mxu0 %v1910
    %2233 = vmatpush2.msra.mxu0 %v1909
    %2234 = vmatprep.subr.mxu0 %v1908
    %2235 = vmatpush2.msra.mxu0 %v1907
    %2236 = vmatprep.subr.mxu0 %v1906
    %2237 = vmatpush2.msra.mxu0 %v1905
    %2238 = vmatprep.subr.mxu0 %v1904
    %2239 = vmatpush2.msra.mxu0 %v1903
    %2240 = vmatprep.mubr.f32.mxu0 %v1746
    %2241 = vmatmul.mubr.f32.gmra.mxu0 %v1745
    %v2242 = vpop.f32.mrf.mxu0
    %v2243 = vadd.f32 %v2130, %v2242
    %v2244 = vpop.f32.mrf.mxu0
    %v2245 = vadd.f32 %v2132, %v2244
    %2246 = vmatprep.mubr.f32.mxu0 %v1754
    %2247 = vmatmul.mubr.f32.gmra.mxu0 %v1753
    %v2248 = vpop.f32.mrf.mxu0
    %v2249 = vadd.f32 %v2136, %v2248
    %v2250 = vpop.f32.mrf.mxu0
    %v2251 = vadd.f32 %v2138, %v2250
    %2252 = vmatprep.mubr.f32.mxu0 %v1762
    %2253 = vmatmul.mubr.f32.gmra.mxu0 %v1761
    %v2254 = vpop.f32.mrf.mxu0
    %v2255 = vadd.f32 %v2142, %v2254
    %v2256 = vpop.f32.mrf.mxu0
    %v2257 = vadd.f32 %v2144, %v2256
    %2258 = vmatprep.mubr.f32.mxu0 %v1770
    %2259 = vmatmul.mubr.f32.gmra.mxu0 %v1769
    %v2260 = vpop.f32.mrf.mxu0
    %v2261 = vadd.f32 %v2148, %v2260
    %v2262 = vpop.f32.mrf.mxu0
    %v2263 = vadd.f32 %v2150, %v2262
    %2264 = vmatprep.mubr.f32.mxu0 %v1778
    %2265 = vmatmul.mubr.f32.gmra.mxu0 %v1777
    %v2266 = vpop.f32.mrf.mxu0
    %v2267 = vadd.f32 %v2154, %v2266
    %v2268 = vpop.f32.mrf.mxu0
    %v2269 = vadd.f32 %v2156, %v2268
    %2270 = vmatprep.mubr.f32.mxu0 %v1786
    %2271 = vmatmul.mubr.f32.gmra.mxu0 %v1785
    %v2272 = vpop.f32.mrf.mxu0
    %v2273 = vadd.f32 %v2160, %v2272
    %v2274 = vpop.f32.mrf.mxu0
    %v2275 = vadd.f32 %v2162, %v2274
    %2276 = vmatprep.mubr.f32.mxu0 %v1794
    %2277 = vmatmul.mubr.f32.gmra.mxu0 %v1793
    %v2278 = vpop.f32.mrf.mxu0
    %v2279 = vadd.f32 %v2166, %v2278
    %v2280 = vpop.f32.mrf.mxu0
    %v2281 = vadd.f32 %v2168, %v2280
    %2282 = vmatprep.mubr.f32.mxu0 %v1802
    %2283 = vmatmul.mubr.f32.gmra.mxu0 %v1801
    %v2284 = vpop.f32.mrf.mxu0
    %v2285 = vadd.f32 %v2172, %v2284
    %v2286 = vpop.f32.mrf.mxu0
    %v2287 = vadd.f32 %v2174, %v2286
    %2288 = vdwg.mxu0
    %2289 = vmatprep.subr.mxu0 %v1966
    %2290 = vmatpush1.msra.mxu0 %v1965
    %2291 = vmatprep.subr.mxu0 %v1964
    %2292 = vmatpush1.msra.mxu0 %v1963
    %2293 = vmatprep.subr.mxu0 %v1962
    %2294 = vmatpush1.msra.mxu0 %v1961
    %2295 = vmatprep.subr.mxu0 %v1960
    %2296 = vmatpush1.msra.mxu0 %v1959
    %2297 = vmatprep.subr.mxu0 %v1958
    %2298 = vmatpush1.msra.mxu0 %v1957
    %2299 = vmatprep.subr.mxu0 %v1956
    %2300 = vmatpush1.msra.mxu0 %v1955
    %2301 = vmatprep.subr.mxu0 %v1954
    %2302 = vmatpush1.msra.mxu0 %v1953
    %2303 = vmatprep.subr.mxu0 %v1952
    %2304 = vmatpush1.msra.mxu0 %v1951
    %2305 = vmatprep.subr.mxu0 %v1950
    %2306 = vmatpush1.msra.mxu0 %v1949
    %2307 = vmatprep.subr.mxu0 %v1948
    %2308 = vmatpush1.msra.mxu0 %v1947
    %2309 = vmatprep.subr.mxu0 %v1946
    %2310 = vmatpush1.msra.mxu0 %v1945
    %2311 = vmatprep.subr.mxu0 %v1944
    %2312 = vmatpush1.msra.mxu0 %v1943
    %2313 = vmatprep.subr.mxu0 %v1942
    %2314 = vmatpush1.msra.mxu0 %v1941
    %2315 = vmatprep.subr.mxu0 %v1940
    %2316 = vmatpush1.msra.mxu0 %v1939
    %2317 = vmatprep.subr.mxu0 %v1938
    %2318 = vmatpush1.msra.mxu0 %v1937
    %2319 = vmatprep.subr.mxu0 %v1936
    %2320 = vmatpush1.msra.mxu0 %v1935
    %2321 = vmatprep.subr.mxu0 %v1998
    %2322 = vmatpush2.msra.mxu0 %v1997
    %2323 = vmatprep.subr.mxu0 %v1996
    %2324 = vmatpush2.msra.mxu0 %v1995
    %2325 = vmatprep.subr.mxu0 %v1994
    %2326 = vmatpush2.msra.mxu0 %v1993
    %2327 = vmatprep.subr.mxu0 %v1992
    %2328 = vmatpush2.msra.mxu0 %v1991
    %2329 = vmatprep.subr.mxu0 %v1990
    %2330 = vmatpush2.msra.mxu0 %v1989
    %2331 = vmatprep.subr.mxu0 %v1988
    %2332 = vmatpush2.msra.mxu0 %v1987
    %2333 = vmatprep.subr.mxu0 %v1986
    %2334 = vmatpush2.msra.mxu0 %v1985
    %2335 = vmatprep.subr.mxu0 %v1984
    %2336 = vmatpush2.msra.mxu0 %v1983
    %2337 = vmatprep.subr.mxu0 %v1982
    %2338 = vmatpush2.msra.mxu0 %v1981
    %2339 = vmatprep.subr.mxu0 %v1980
    %2340 = vmatpush2.msra.mxu0 %v1979
    %2341 = vmatprep.subr.mxu0 %v1978
    %2342 = vmatpush2.msra.mxu0 %v1977
    %2343 = vmatprep.subr.mxu0 %v1976
    %2344 = vmatpush2.msra.mxu0 %v1975
    %2345 = vmatprep.subr.mxu0 %v1974
    %2346 = vmatpush2.msra.mxu0 %v1973
    %2347 = vmatprep.subr.mxu0 %v1972
    %2348 = vmatpush2.msra.mxu0 %v1971
    %2349 = vmatprep.subr.mxu0 %v1970
    %2350 = vmatpush2.msra.mxu0 %v1969
    %2351 = vmatprep.subr.mxu0 %v1968
    %2352 = vmatpush2.msra.mxu0 %v1967
    %2353 = vmatprep.mubr.f32.mxu0 %v1748
    %2354 = vmatmul.mubr.f32.gmra.mxu0 %v1747
    %v2355 = vpop.f32.mrf.mxu0
    %v2356 = vadd.f32 %v2243, %v2355
    %v2357 = vpop.f32.mrf.mxu0
    %v2358 = vadd.f32 %v2245, %v2357
    %2359 = vmatprep.mubr.f32.mxu0 %v1756
    %2360 = vmatmul.mubr.f32.gmra.mxu0 %v1755
    %v2361 = vpop.f32.mrf.mxu0
    %v2362 = vadd.f32 %v2249, %v2361
    %v2363 = vpop.f32.mrf.mxu0
    %v2364 = vadd.f32 %v2251, %v2363
    %2365 = vmatprep.mubr.f32.mxu0 %v1764
    %2366 = vmatmul.mubr.f32.gmra.mxu0 %v1763
    %v2367 = vpop.f32.mrf.mxu0
    %v2368 = vadd.f32 %v2255, %v2367
    %v2369 = vpop.f32.mrf.mxu0
    %v2370 = vadd.f32 %v2257, %v2369
    %2371 = vmatprep.mubr.f32.mxu0 %v1772
    %2372 = vmatmul.mubr.f32.gmra.mxu0 %v1771
    %v2373 = vpop.f32.mrf.mxu0
    %v2374 = vadd.f32 %v2261, %v2373
    %v2375 = vpop.f32.mrf.mxu0
    %v2376 = vadd.f32 %v2263, %v2375
    %2377 = vmatprep.mubr.f32.mxu0 %v1780
    %2378 = vmatmul.mubr.f32.gmra.mxu0 %v1779
    %v2379 = vpop.f32.mrf.mxu0
    %v2380 = vadd.f32 %v2267, %v2379
    %v2381 = vpop.f32.mrf.mxu0
    %v2382 = vadd.f32 %v2269, %v2381
    %2383 = vmatprep.mubr.f32.mxu0 %v1788
    %2384 = vmatmul.mubr.f32.gmra.mxu0 %v1787
    %v2385 = vpop.f32.mrf.mxu0
    %v2386 = vadd.f32 %v2273, %v2385
    %v2387 = vpop.f32.mrf.mxu0
    %v2388 = vadd.f32 %v2275, %v2387
    %2389 = vmatprep.mubr.f32.mxu0 %v1796
    %2390 = vmatmul.mubr.f32.gmra.mxu0 %v1795
    %v2391 = vpop.f32.mrf.mxu0
    %v2392 = vadd.f32 %v2279, %v2391
    %v2393 = vpop.f32.mrf.mxu0
    %v2394 = vadd.f32 %v2281, %v2393
    %2395 = vmatprep.mubr.f32.mxu0 %v1804
    %2396 = vmatmul.mubr.f32.gmra.mxu0 %v1803
    %v2397 = vpop.f32.mrf.mxu0
    %v2398 = vadd.f32 %v2285, %v2397
    %v2399 = vpop.f32.mrf.mxu0
    %v2400 = vadd.f32 %v2287, %v2399
    %2401 = vdwg.mxu0
    %2402 = vmatprep.subr.mxu0 %v2030
    %2403 = vmatpush1.msra.mxu0 %v2029
    %2404 = vmatprep.subr.mxu0 %v2028
    %2405 = vmatpush1.msra.mxu0 %v2027
    %2406 = vmatprep.subr.mxu0 %v2026
    %2407 = vmatpush1.msra.mxu0 %v2025
    %2408 = vmatprep.subr.mxu0 %v2024
    %2409 = vmatpush1.msra.mxu0 %v2023
    %2410 = vmatprep.subr.mxu0 %v2022
    %2411 = vmatpush1.msra.mxu0 %v2021
    %2412 = vmatprep.subr.mxu0 %v2020
    %2413 = vmatpush1.msra.mxu0 %v2019
    %2414 = vmatprep.subr.mxu0 %v2018
    %2415 = vmatpush1.msra.mxu0 %v2017
    %2416 = vmatprep.subr.mxu0 %v2016
    %2417 = vmatpush1.msra.mxu0 %v2015
    %2418 = vmatprep.subr.mxu0 %v2014
    %2419 = vmatpush1.msra.mxu0 %v2013
    %2420 = vmatprep.subr.mxu0 %v2012
    %2421 = vmatpush1.msra.mxu0 %v2011
    %2422 = vmatprep.subr.mxu0 %v2010
    %2423 = vmatpush1.msra.mxu0 %v2009
    %2424 = vmatprep.subr.mxu0 %v2008
    %2425 = vmatpush1.msra.mxu0 %v2007
    %2426 = vmatprep.subr.mxu0 %v2006
    %2427 = vmatpush1.msra.mxu0 %v2005
    %2428 = vmatprep.subr.mxu0 %v2004
    %2429 = vmatpush1.msra.mxu0 %v2003
    %2430 = vmatprep.subr.mxu0 %v2002
    %2431 = vmatpush1.msra.mxu0 %v2001
    %2432 = vmatprep.subr.mxu0 %v2000
    %2433 = vmatpush1.msra.mxu0 %v1999
    %2434 = vmatprep.subr.mxu0 %v2062
    %2435 = vmatpush2.msra.mxu0 %v2061
    %2436 = vmatprep.subr.mxu0 %v2060
    %2437 = vmatpush2.msra.mxu0 %v2059
    %2438 = vmatprep.subr.mxu0 %v2058
    %2439 = vmatpush2.msra.mxu0 %v2057
    %2440 = vmatprep.subr.mxu0 %v2056
    %2441 = vmatpush2.msra.mxu0 %v2055
    %2442 = vmatprep.subr.mxu0 %v2054
    %2443 = vmatpush2.msra.mxu0 %v2053
    %2444 = vmatprep.subr.mxu0 %v2052
    %2445 = vmatpush2.msra.mxu0 %v2051
    %2446 = vmatprep.subr.mxu0 %v2050
    %2447 = vmatpush2.msra.mxu0 %v2049
    %2448 = vmatprep.subr.mxu0 %v2048
    %2449 = vmatpush2.msra.mxu0 %v2047
    %2450 = vmatprep.subr.mxu0 %v2046
    %2451 = vmatpush2.msra.mxu0 %v2045
    %2452 = vmatprep.subr.mxu0 %v2044
    %2453 = vmatpush2.msra.mxu0 %v2043
    %2454 = vmatprep.subr.mxu0 %v2042
    %2455 = vmatpush2.msra.mxu0 %v2041
    %2456 = vmatprep.subr.mxu0 %v2040
    %2457 = vmatpush2.msra.mxu0 %v2039
    %2458 = vmatprep.subr.mxu0 %v2038
    %2459 = vmatpush2.msra.mxu0 %v2037
    %2460 = vmatprep.subr.mxu0 %v2036
    %2461 = vmatpush2.msra.mxu0 %v2035
    %2462 = vmatprep.subr.mxu0 %v2034
    %2463 = vmatpush2.msra.mxu0 %v2033
    %2464 = vmatprep.subr.mxu0 %v2032
    %2465 = vmatpush2.msra.mxu0 %v2031
    %2466 = vmatprep.mubr.f32.mxu0 %v1750
    %2467 = vmatmul.mubr.f32.gmra.mxu0 %v1749
    %v2468 = vpop.f32.mrf.mxu0
    %v2469 = vadd.f32 %v2356, %v2468
    %v2470 = vpop.f32.mrf.mxu0
    %v2471 = vadd.f32 %v2358, %v2470
    %2472 = vmatprep.mubr.f32.mxu0 %v1758
    %2473 = vmatmul.mubr.f32.gmra.mxu0 %v1757
    %v2474 = vpop.f32.mrf.mxu0
    %v2475 = vadd.f32 %v2362, %v2474
    %v2476 = vpop.f32.mrf.mxu0
    %v2477 = vadd.f32 %v2364, %v2476
    %2478 = vmatprep.mubr.f32.mxu0 %v1766
    %2479 = vmatmul.mubr.f32.gmra.mxu0 %v1765
    %v2480 = vpop.f32.mrf.mxu0
    %v2481 = vadd.f32 %v2368, %v2480
    %v2482 = vpop.f32.mrf.mxu0
    %v2483 = vadd.f32 %v2370, %v2482
    %2484 = vmatprep.mubr.f32.mxu0 %v1774
    %2485 = vmatmul.mubr.f32.gmra.mxu0 %v1773
    %v2486 = vpop.f32.mrf.mxu0
    %v2487 = vadd.f32 %v2374, %v2486
    %v2488 = vpop.f32.mrf.mxu0
    %v2489 = vadd.f32 %v2376, %v2488
    %2490 = vmatprep.mubr.f32.mxu0 %v1782
    %2491 = vmatmul.mubr.f32.gmra.mxu0 %v1781
    %v2492 = vpop.f32.mrf.mxu0
    %v2493 = vadd.f32 %v2380, %v2492
    %v2494 = vpop.f32.mrf.mxu0
    %v2495 = vadd.f32 %v2382, %v2494
    %2496 = vmatprep.mubr.f32.mxu0 %v1790
    %2497 = vmatmul.mubr.f32.gmra.mxu0 %v1789
    %v2498 = vpop.f32.mrf.mxu0
    %v2499 = vadd.f32 %v2386, %v2498
    %v2500 = vpop.f32.mrf.mxu0
    %v2501 = vadd.f32 %v2388, %v2500
    %2502 = vmatprep.mubr.f32.mxu0 %v1798
    %2503 = vmatmul.mubr.f32.gmra.mxu0 %v1797
    %v2504 = vpop.f32.mrf.mxu0
    %v2505 = vadd.f32 %v2392, %v2504
    %v2506 = vpop.f32.mrf.mxu0
    %v2507 = vadd.f32 %v2394, %v2506
    %2508 = vmatprep.mubr.f32.mxu0 %v1806
    %2509 = vmatmul.mubr.f32.gmra.mxu0 %v1805
    %v2510 = vpop.f32.mrf.mxu0
    %v2511 = vadd.f32 %v2398, %v2510
    %v2512 = vpop.f32.mrf.mxu0
    %v2513 = vadd.f32 %v2400, %v2512
    %2514 = vdwg.mxu0
    %v2515 = vadd.f32 %v1633, %v2469
    %v2516 = vadd.f32 %v1635, %v2471
    %v2517 = vadd.f32 %v1639, %v2475
    %v2518 = vadd.f32 %v1641, %v2477
    %v2519 = vadd.f32 %v1645, %v2481
    %v2520 = vadd.f32 %v1647, %v2483
    %v2521 = vadd.f32 %v1651, %v2487
    %v2522 = vadd.f32 %v1653, %v2489
    %v2523 = vadd.f32 %v1657, %v2493
    %v2524 = vadd.f32 %v1659, %v2495
    %v2525 = vadd.f32 %v1663, %v2499
    %v2526 = vadd.f32 %v1665, %v2501
    %v2527 = vadd.f32 %v1669, %v2505
    %v2528 = vadd.f32 %v1671, %v2507
    %v2529 = vadd.f32 %v1675, %v2511
    %v2530 = vadd.f32 %v1677, %v2513
    %v2531 = vmul.f32 %v135, %v199
    %v2532 = vmul.f32 %v136, %v200
    %v2533 = vmul.f32 %v137, %v201
    %v2534 = vmul.f32 %v138, %v202
    %v2535 = vmul.f32 %v139, %v203
    %v2536 = vmul.f32 %v140, %v204
    %v2537 = vmul.f32 %v141, %v205
    %v2538 = vmul.f32 %v142, %v206
    %v2539 = vmul.f32 %v143, %v207
    %v2540 = vmul.f32 %v144, %v208
    %v2541 = vmul.f32 %v145, %v209
    %v2542 = vmul.f32 %v146, %v210
    %v2543 = vmul.f32 %v147, %v211
    %v2544 = vmul.f32 %v148, %v212
    %v2545 = vmul.f32 %v149, %v213
    %v2546 = vmul.f32 %v150, %v214
    %v2547 = vmul.f32 %v151, %v215
    %v2548 = vmul.f32 %v152, %v216
    %v2549 = vmul.f32 %v153, %v217
    %v2550 = vmul.f32 %v154, %v218
    %v2551 = vmul.f32 %v155, %v219
    %v2552 = vmul.f32 %v156, %v220
    %v2553 = vmul.f32 %v157, %v221
    %v2554 = vmul.f32 %v158, %v222
    %v2555 = vmul.f32 %v159, %v223
    %v2556 = vmul.f32 %v160, %v224
    %v2557 = vmul.f32 %v161, %v225
    %v2558 = vmul.f32 %v162, %v226
    %v2559 = vmul.f32 %v163, %v227
    %v2560 = vmul.f32 %v164, %v228
    %v2561 = vmul.f32 %v165, %v229
    %v2562 = vmul.f32 %v166, %v230
    %v2563 = vmul.f32 %v167, %v231
    %v2564 = vmul.f32 %v168, %v232
    %v2565 = vmul.f32 %v169, %v233
    %v2566 = vmul.f32 %v170, %v234
    %v2567 = vmul.f32 %v171, %v235
    %v2568 = vmul.f32 %v172, %v236
    %v2569 = vmul.f32 %v173, %v237
    %v2570 = vmul.f32 %v174, %v238
    %v2571 = vmul.f32 %v175, %v239
    %v2572 = vmul.f32 %v176, %v240
    %v2573 = vmul.f32 %v177, %v241
    %v2574 = vmul.f32 %v178, %v242
    %v2575 = vmul.f32 %v179, %v243
    %v2576 = vmul.f32 %v180, %v244
    %v2577 = vmul.f32 %v181, %v245
    %v2578 = vmul.f32 %v182, %v246
    %v2579 = vmul.f32 %v183, %v247
    %v2580 = vmul.f32 %v184, %v248
    %v2581 = vmul.f32 %v185, %v249
    %v2582 = vmul.f32 %v186, %v250
    %v2583 = vmul.f32 %v187, %v251
    %v2584 = vmul.f32 %v188, %v252
    %v2585 = vmul.f32 %v189, %v253
    %v2586 = vmul.f32 %v190, %v254
    %v2587 = vmul.f32 %v191, %v255
    %v2588 = vmul.f32 %v192, %v256
    %v2589 = vmul.f32 %v193, %v257
    %v2590 = vmul.f32 %v194, %v258
    %v2591 = vmul.f32 %v195, %v259
    %v2592 = vmul.f32 %v196, %v260
    %v2593 = vmul.f32 %v197, %v261
    %v2594 = vmul.f32 %v198, %v262
    %v2595 = vld [vmem:[#allocation12] sm:$0xff]
    %v2596 = vld [vmem:[#allocation12 + $0x8] sm:$0xff]
    %v2597 = vld [vmem:[#allocation12 + $0x10] sm:$0xff]
    %v2598 = vld [vmem:[#allocation12 + $0x18] sm:$0xff]
    %v2599 = vld [vmem:[#allocation12 + $0x20] sm:$0xff]
    %v2600 = vld [vmem:[#allocation12 + $0x28] sm:$0xff]
    %v2601 = vld [vmem:[#allocation12 + $0x30] sm:$0xff]
    %v2602 = vld [vmem:[#allocation12 + $0x38] sm:$0xff]
    %v2603 = vld [vmem:[#allocation12 + $0x40] sm:$0xff]
    %v2604 = vld [vmem:[#allocation12 + $0x48] sm:$0xff]
    %v2605 = vld [vmem:[#allocation12 + $0x50] sm:$0xff]
    %v2606 = vld [vmem:[#allocation12 + $0x58] sm:$0xff]
    %v2607 = vld [vmem:[#allocation12 + $0x60] sm:$0xff]
    %v2608 = vld [vmem:[#allocation12 + $0x68] sm:$0xff]
    %v2609 = vld [vmem:[#allocation12 + $0x70] sm:$0xff]
    %v2610 = vld [vmem:[#allocation12 + $0x78] sm:$0xff]
    %v2611 = vld [vmem:[#allocation12 + $0x80] sm:$0xff]
    %v2612 = vld [vmem:[#allocation12 + $0x88] sm:$0xff]
    %v2613 = vld [vmem:[#allocation12 + $0x90] sm:$0xff]
    %v2614 = vld [vmem:[#allocation12 + $0x98] sm:$0xff]
    %v2615 = vld [vmem:[#allocation12 + $0xa0] sm:$0xff]
    %v2616 = vld [vmem:[#allocation12 + $0xa8] sm:$0xff]
    %v2617 = vld [vmem:[#allocation12 + $0xb0] sm:$0xff]
    %v2618 = vld [vmem:[#allocation12 + $0xb8] sm:$0xff]
    %v2619 = vld [vmem:[#allocation12 + $0xc0] sm:$0xff]
    %v2620 = vld [vmem:[#allocation12 + $0xc8] sm:$0xff]
    %v2621 = vld [vmem:[#allocation12 + $0xd0] sm:$0xff]
    %v2622 = vld [vmem:[#allocation12 + $0xd8] sm:$0xff]
    %v2623 = vld [vmem:[#allocation12 + $0xe0] sm:$0xff]
    %v2624 = vld [vmem:[#allocation12 + $0xe8] sm:$0xff]
    %v2625 = vld [vmem:[#allocation12 + $0xf0] sm:$0xff]
    %v2626 = vld [vmem:[#allocation12 + $0xf8] sm:$0xff]
    %v2627 = vld [vmem:[#allocation12 + $0x100] sm:$0xff]
    %v2628 = vld [vmem:[#allocation12 + $0x108] sm:$0xff]
    %v2629 = vld [vmem:[#allocation12 + $0x110] sm:$0xff]
    %v2630 = vld [vmem:[#allocation12 + $0x118] sm:$0xff]
    %v2631 = vld [vmem:[#allocation12 + $0x120] sm:$0xff]
    %v2632 = vld [vmem:[#allocation12 + $0x128] sm:$0xff]
    %v2633 = vld [vmem:[#allocation12 + $0x130] sm:$0xff]
    %v2634 = vld [vmem:[#allocation12 + $0x138] sm:$0xff]
    %v2635 = vld [vmem:[#allocation12 + $0x140] sm:$0xff]
    %v2636 = vld [vmem:[#allocation12 + $0x148] sm:$0xff]
    %v2637 = vld [vmem:[#allocation12 + $0x150] sm:$0xff]
    %v2638 = vld [vmem:[#allocation12 + $0x158] sm:$0xff]
    %v2639 = vld [vmem:[#allocation12 + $0x160] sm:$0xff]
    %v2640 = vld [vmem:[#allocation12 + $0x168] sm:$0xff]
    %v2641 = vld [vmem:[#allocation12 + $0x170] sm:$0xff]
    %v2642 = vld [vmem:[#allocation12 + $0x178] sm:$0xff]
    %v2643 = vld [vmem:[#allocation12 + $0x180] sm:$0xff]
    %v2644 = vld [vmem:[#allocation12 + $0x188] sm:$0xff]
    %v2645 = vld [vmem:[#allocation12 + $0x190] sm:$0xff]
    %v2646 = vld [vmem:[#allocation12 + $0x198] sm:$0xff]
    %v2647 = vld [vmem:[#allocation12 + $0x1a0] sm:$0xff]
    %v2648 = vld [vmem:[#allocation12 + $0x1a8] sm:$0xff]
    %v2649 = vld [vmem:[#allocation12 + $0x1b0] sm:$0xff]
    %v2650 = vld [vmem:[#allocation12 + $0x1b8] sm:$0xff]
    %v2651 = vld [vmem:[#allocation12 + $0x1c0] sm:$0xff]
    %v2652 = vld [vmem:[#allocation12 + $0x1c8] sm:$0xff]
    %v2653 = vld [vmem:[#allocation12 + $0x1d0] sm:$0xff]
    %v2654 = vld [vmem:[#allocation12 + $0x1d8] sm:$0xff]
    %v2655 = vld [vmem:[#allocation12 + $0x1e0] sm:$0xff]
    %v2656 = vld [vmem:[#allocation12 + $0x1e8] sm:$0xff]
    %v2657 = vld [vmem:[#allocation12 + $0x1f0] sm:$0xff]
    %v2658 = vld [vmem:[#allocation12 + $0x1f8] sm:$0xff]
    %v2659 = vld [vmem:[#allocation12 + $0x200] sm:$0xff]
    %v2660 = vld [vmem:[#allocation12 + $0x208] sm:$0xff]
    %v2661 = vld [vmem:[#allocation12 + $0x210] sm:$0xff]
    %v2662 = vld [vmem:[#allocation12 + $0x218] sm:$0xff]
    %v2663 = vld [vmem:[#allocation12 + $0x220] sm:$0xff]
    %v2664 = vld [vmem:[#allocation12 + $0x228] sm:$0xff]
    %v2665 = vld [vmem:[#allocation12 + $0x230] sm:$0xff]
    %v2666 = vld [vmem:[#allocation12 + $0x238] sm:$0xff]
    %v2667 = vld [vmem:[#allocation12 + $0x240] sm:$0xff]
    %v2668 = vld [vmem:[#allocation12 + $0x248] sm:$0xff]
    %v2669 = vld [vmem:[#allocation12 + $0x250] sm:$0xff]
    %v2670 = vld [vmem:[#allocation12 + $0x258] sm:$0xff]
    %v2671 = vld [vmem:[#allocation12 + $0x260] sm:$0xff]
    %v2672 = vld [vmem:[#allocation12 + $0x268] sm:$0xff]
    %v2673 = vld [vmem:[#allocation12 + $0x270] sm:$0xff]
    %v2674 = vld [vmem:[#allocation12 + $0x278] sm:$0xff]
    %v2675 = vld [vmem:[#allocation12 + $0x280] sm:$0xff]
    %v2676 = vld [vmem:[#allocation12 + $0x288] sm:$0xff]
    %v2677 = vld [vmem:[#allocation12 + $0x290] sm:$0xff]
    %v2678 = vld [vmem:[#allocation12 + $0x298] sm:$0xff]
    %v2679 = vld [vmem:[#allocation12 + $0x2a0] sm:$0xff]
    %v2680 = vld [vmem:[#allocation12 + $0x2a8] sm:$0xff]
    %v2681 = vld [vmem:[#allocation12 + $0x2b0] sm:$0xff]
    %v2682 = vld [vmem:[#allocation12 + $0x2b8] sm:$0xff]
    %v2683 = vld [vmem:[#allocation12 + $0x2c0] sm:$0xff]
    %v2684 = vld [vmem:[#allocation12 + $0x2c8] sm:$0xff]
    %v2685 = vld [vmem:[#allocation12 + $0x2d0] sm:$0xff]
    %v2686 = vld [vmem:[#allocation12 + $0x2d8] sm:$0xff]
    %v2687 = vld [vmem:[#allocation12 + $0x2e0] sm:$0xff]
    %v2688 = vld [vmem:[#allocation12 + $0x2e8] sm:$0xff]
    %v2689 = vld [vmem:[#allocation12 + $0x2f0] sm:$0xff]
    %v2690 = vld [vmem:[#allocation12 + $0x2f8] sm:$0xff]
    %v2691 = vld [vmem:[#allocation12 + $0x300] sm:$0xff]
    %v2692 = vld [vmem:[#allocation12 + $0x308] sm:$0xff]
    %v2693 = vld [vmem:[#allocation12 + $0x310] sm:$0xff]
    %v2694 = vld [vmem:[#allocation12 + $0x318] sm:$0xff]
    %v2695 = vld [vmem:[#allocation12 + $0x320] sm:$0xff]
    %v2696 = vld [vmem:[#allocation12 + $0x328] sm:$0xff]
    %v2697 = vld [vmem:[#allocation12 + $0x330] sm:$0xff]
    %v2698 = vld [vmem:[#allocation12 + $0x338] sm:$0xff]
    %v2699 = vld [vmem:[#allocation12 + $0x340] sm:$0xff]
    %v2700 = vld [vmem:[#allocation12 + $0x348] sm:$0xff]
    %v2701 = vld [vmem:[#allocation12 + $0x350] sm:$0xff]
    %v2702 = vld [vmem:[#allocation12 + $0x358] sm:$0xff]
    %v2703 = vld [vmem:[#allocation12 + $0x360] sm:$0xff]
    %v2704 = vld [vmem:[#allocation12 + $0x368] sm:$0xff]
    %v2705 = vld [vmem:[#allocation12 + $0x370] sm:$0xff]
    %v2706 = vld [vmem:[#allocation12 + $0x378] sm:$0xff]
    %v2707 = vld [vmem:[#allocation12 + $0x380] sm:$0xff]
    %v2708 = vld [vmem:[#allocation12 + $0x388] sm:$0xff]
    %v2709 = vld [vmem:[#allocation12 + $0x390] sm:$0xff]
    %v2710 = vld [vmem:[#allocation12 + $0x398] sm:$0xff]
    %v2711 = vld [vmem:[#allocation12 + $0x3a0] sm:$0xff]
    %v2712 = vld [vmem:[#allocation12 + $0x3a8] sm:$0xff]
    %v2713 = vld [vmem:[#allocation12 + $0x3b0] sm:$0xff]
    %v2714 = vld [vmem:[#allocation12 + $0x3b8] sm:$0xff]
    %v2715 = vld [vmem:[#allocation12 + $0x3c0] sm:$0xff]
    %v2716 = vld [vmem:[#allocation12 + $0x3c8] sm:$0xff]
    %v2717 = vld [vmem:[#allocation12 + $0x3d0] sm:$0xff]
    %v2718 = vld [vmem:[#allocation12 + $0x3d8] sm:$0xff]
    %v2719 = vld [vmem:[#allocation12 + $0x3e0] sm:$0xff]
    %v2720 = vld [vmem:[#allocation12 + $0x3e8] sm:$0xff]
    %v2721 = vld [vmem:[#allocation12 + $0x3f0] sm:$0xff]
    %v2722 = vld [vmem:[#allocation12 + $0x3f8] sm:$0xff]
    %v2723 = vld [vmem:[#allocation12 + $0x400] sm:$0xff]
    %v2724 = vld [vmem:[#allocation12 + $0x408] sm:$0xff]
    %v2725 = vld [vmem:[#allocation12 + $0x410] sm:$0xff]
    %v2726 = vld [vmem:[#allocation12 + $0x418] sm:$0xff]
    %v2727 = vld [vmem:[#allocation12 + $0x420] sm:$0xff]
    %v2728 = vld [vmem:[#allocation12 + $0x428] sm:$0xff]
    %v2729 = vld [vmem:[#allocation12 + $0x430] sm:$0xff]
    %v2730 = vld [vmem:[#allocation12 + $0x438] sm:$0xff]
    %v2731 = vld [vmem:[#allocation12 + $0x440] sm:$0xff]
    %v2732 = vld [vmem:[#allocation12 + $0x448] sm:$0xff]
    %v2733 = vld [vmem:[#allocation12 + $0x450] sm:$0xff]
    %v2734 = vld [vmem:[#allocation12 + $0x458] sm:$0xff]
    %v2735 = vld [vmem:[#allocation12 + $0x460] sm:$0xff]
    %v2736 = vld [vmem:[#allocation12 + $0x468] sm:$0xff]
    %v2737 = vld [vmem:[#allocation12 + $0x470] sm:$0xff]
    %v2738 = vld [vmem:[#allocation12 + $0x478] sm:$0xff]
    %v2739 = vld [vmem:[#allocation12 + $0x480] sm:$0xff]
    %v2740 = vld [vmem:[#allocation12 + $0x488] sm:$0xff]
    %v2741 = vld [vmem:[#allocation12 + $0x490] sm:$0xff]
    %v2742 = vld [vmem:[#allocation12 + $0x498] sm:$0xff]
    %v2743 = vld [vmem:[#allocation12 + $0x4a0] sm:$0xff]
    %v2744 = vld [vmem:[#allocation12 + $0x4a8] sm:$0xff]
    %v2745 = vld [vmem:[#allocation12 + $0x4b0] sm:$0xff]
    %v2746 = vld [vmem:[#allocation12 + $0x4b8] sm:$0xff]
    %v2747 = vld [vmem:[#allocation12 + $0x4c0] sm:$0xff]
    %v2748 = vld [vmem:[#allocation12 + $0x4c8] sm:$0xff]
    %v2749 = vld [vmem:[#allocation12 + $0x4d0] sm:$0xff]
    %v2750 = vld [vmem:[#allocation12 + $0x4d8] sm:$0xff]
    %v2751 = vld [vmem:[#allocation12 + $0x4e0] sm:$0xff]
    %v2752 = vld [vmem:[#allocation12 + $0x4e8] sm:$0xff]
    %v2753 = vld [vmem:[#allocation12 + $0x4f0] sm:$0xff]
    %v2754 = vld [vmem:[#allocation12 + $0x4f8] sm:$0xff]
    %v2755 = vld [vmem:[#allocation12 + $0x500] sm:$0xff]
    %v2756 = vld [vmem:[#allocation12 + $0x508] sm:$0xff]
    %v2757 = vld [vmem:[#allocation12 + $0x510] sm:$0xff]
    %v2758 = vld [vmem:[#allocation12 + $0x518] sm:$0xff]
    %v2759 = vld [vmem:[#allocation12 + $0x520] sm:$0xff]
    %v2760 = vld [vmem:[#allocation12 + $0x528] sm:$0xff]
    %v2761 = vld [vmem:[#allocation12 + $0x530] sm:$0xff]
    %v2762 = vld [vmem:[#allocation12 + $0x538] sm:$0xff]
    %v2763 = vld [vmem:[#allocation12 + $0x540] sm:$0xff]
    %v2764 = vld [vmem:[#allocation12 + $0x548] sm:$0xff]
    %v2765 = vld [vmem:[#allocation12 + $0x550] sm:$0xff]
    %v2766 = vld [vmem:[#allocation12 + $0x558] sm:$0xff]
    %v2767 = vld [vmem:[#allocation12 + $0x560] sm:$0xff]
    %v2768 = vld [vmem:[#allocation12 + $0x568] sm:$0xff]
    %v2769 = vld [vmem:[#allocation12 + $0x570] sm:$0xff]
    %v2770 = vld [vmem:[#allocation12 + $0x578] sm:$0xff]
    %v2771 = vld [vmem:[#allocation12 + $0x580] sm:$0xff]
    %v2772 = vld [vmem:[#allocation12 + $0x588] sm:$0xff]
    %v2773 = vld [vmem:[#allocation12 + $0x590] sm:$0xff]
    %v2774 = vld [vmem:[#allocation12 + $0x598] sm:$0xff]
    %v2775 = vld [vmem:[#allocation12 + $0x5a0] sm:$0xff]
    %v2776 = vld [vmem:[#allocation12 + $0x5a8] sm:$0xff]
    %v2777 = vld [vmem:[#allocation12 + $0x5b0] sm:$0xff]
    %v2778 = vld [vmem:[#allocation12 + $0x5b8] sm:$0xff]
    %v2779 = vld [vmem:[#allocation12 + $0x5c0] sm:$0xff]
    %v2780 = vld [vmem:[#allocation12 + $0x5c8] sm:$0xff]
    %v2781 = vld [vmem:[#allocation12 + $0x5d0] sm:$0xff]
    %v2782 = vld [vmem:[#allocation12 + $0x5d8] sm:$0xff]
    %v2783 = vld [vmem:[#allocation12 + $0x5e0] sm:$0xff]
    %v2784 = vld [vmem:[#allocation12 + $0x5e8] sm:$0xff]
    %v2785 = vld [vmem:[#allocation12 + $0x5f0] sm:$0xff]
    %v2786 = vld [vmem:[#allocation12 + $0x5f8] sm:$0xff]
    %v2787 = vld [vmem:[#allocation12 + $0x600] sm:$0xff]
    %v2788 = vld [vmem:[#allocation12 + $0x608] sm:$0xff]
    %v2789 = vld [vmem:[#allocation12 + $0x610] sm:$0xff]
    %v2790 = vld [vmem:[#allocation12 + $0x618] sm:$0xff]
    %v2791 = vld [vmem:[#allocation12 + $0x620] sm:$0xff]
    %v2792 = vld [vmem:[#allocation12 + $0x628] sm:$0xff]
    %v2793 = vld [vmem:[#allocation12 + $0x630] sm:$0xff]
    %v2794 = vld [vmem:[#allocation12 + $0x638] sm:$0xff]
    %v2795 = vld [vmem:[#allocation12 + $0x640] sm:$0xff]
    %v2796 = vld [vmem:[#allocation12 + $0x648] sm:$0xff]
    %v2797 = vld [vmem:[#allocation12 + $0x650] sm:$0xff]
    %v2798 = vld [vmem:[#allocation12 + $0x658] sm:$0xff]
    %v2799 = vld [vmem:[#allocation12 + $0x660] sm:$0xff]
    %v2800 = vld [vmem:[#allocation12 + $0x668] sm:$0xff]
    %v2801 = vld [vmem:[#allocation12 + $0x670] sm:$0xff]
    %v2802 = vld [vmem:[#allocation12 + $0x678] sm:$0xff]
    %v2803 = vld [vmem:[#allocation12 + $0x680] sm:$0xff]
    %v2804 = vld [vmem:[#allocation12 + $0x688] sm:$0xff]
    %v2805 = vld [vmem:[#allocation12 + $0x690] sm:$0xff]
    %v2806 = vld [vmem:[#allocation12 + $0x698] sm:$0xff]
    %v2807 = vld [vmem:[#allocation12 + $0x6a0] sm:$0xff]
    %v2808 = vld [vmem:[#allocation12 + $0x6a8] sm:$0xff]
    %v2809 = vld [vmem:[#allocation12 + $0x6b0] sm:$0xff]
    %v2810 = vld [vmem:[#allocation12 + $0x6b8] sm:$0xff]
    %v2811 = vld [vmem:[#allocation12 + $0x6c0] sm:$0xff]
    %v2812 = vld [vmem:[#allocation12 + $0x6c8] sm:$0xff]
    %v2813 = vld [vmem:[#allocation12 + $0x6d0] sm:$0xff]
    %v2814 = vld [vmem:[#allocation12 + $0x6d8] sm:$0xff]
    %v2815 = vld [vmem:[#allocation12 + $0x6e0] sm:$0xff]
    %v2816 = vld [vmem:[#allocation12 + $0x6e8] sm:$0xff]
    %v2817 = vld [vmem:[#allocation12 + $0x6f0] sm:$0xff]
    %v2818 = vld [vmem:[#allocation12 + $0x6f8] sm:$0xff]
    %v2819 = vld [vmem:[#allocation12 + $0x700] sm:$0xff]
    %v2820 = vld [vmem:[#allocation12 + $0x708] sm:$0xff]
    %v2821 = vld [vmem:[#allocation12 + $0x710] sm:$0xff]
    %v2822 = vld [vmem:[#allocation12 + $0x718] sm:$0xff]
    %v2823 = vld [vmem:[#allocation12 + $0x720] sm:$0xff]
    %v2824 = vld [vmem:[#allocation12 + $0x728] sm:$0xff]
    %v2825 = vld [vmem:[#allocation12 + $0x730] sm:$0xff]
    %v2826 = vld [vmem:[#allocation12 + $0x738] sm:$0xff]
    %v2827 = vld [vmem:[#allocation12 + $0x740] sm:$0xff]
    %v2828 = vld [vmem:[#allocation12 + $0x748] sm:$0xff]
    %v2829 = vld [vmem:[#allocation12 + $0x750] sm:$0xff]
    %v2830 = vld [vmem:[#allocation12 + $0x758] sm:$0xff]
    %v2831 = vld [vmem:[#allocation12 + $0x760] sm:$0xff]
    %v2832 = vld [vmem:[#allocation12 + $0x768] sm:$0xff]
    %v2833 = vld [vmem:[#allocation12 + $0x770] sm:$0xff]
    %v2834 = vld [vmem:[#allocation12 + $0x778] sm:$0xff]
    %v2835 = vld [vmem:[#allocation12 + $0x780] sm:$0xff]
    %v2836 = vld [vmem:[#allocation12 + $0x788] sm:$0xff]
    %v2837 = vld [vmem:[#allocation12 + $0x790] sm:$0xff]
    %v2838 = vld [vmem:[#allocation12 + $0x798] sm:$0xff]
    %v2839 = vld [vmem:[#allocation12 + $0x7a0] sm:$0xff]
    %v2840 = vld [vmem:[#allocation12 + $0x7a8] sm:$0xff]
    %v2841 = vld [vmem:[#allocation12 + $0x7b0] sm:$0xff]
    %v2842 = vld [vmem:[#allocation12 + $0x7b8] sm:$0xff]
    %v2843 = vld [vmem:[#allocation12 + $0x7c0] sm:$0xff]
    %v2844 = vld [vmem:[#allocation12 + $0x7c8] sm:$0xff]
    %v2845 = vld [vmem:[#allocation12 + $0x7d0] sm:$0xff]
    %v2846 = vld [vmem:[#allocation12 + $0x7d8] sm:$0xff]
    %v2847 = vld [vmem:[#allocation12 + $0x7e0] sm:$0xff]
    %v2848 = vld [vmem:[#allocation12 + $0x7e8] sm:$0xff]
    %v2849 = vld [vmem:[#allocation12 + $0x7f0] sm:$0xff]
    %v2850 = vld [vmem:[#allocation12 + $0x7f8] sm:$0xff]
    %2851 = vmatprep.subr.mxu0 %v2626
    %2852 = vmatpush1.msra.mxu0 %v2625
    %2853 = vmatprep.subr.mxu0 %v2624
    %2854 = vmatpush1.msra.mxu0 %v2623
    %2855 = vmatprep.subr.mxu0 %v2622
    %2856 = vmatpush1.msra.mxu0 %v2621
    %2857 = vmatprep.subr.mxu0 %v2620
    %2858 = vmatpush1.msra.mxu0 %v2619
    %2859 = vmatprep.subr.mxu0 %v2618
    %2860 = vmatpush1.msra.mxu0 %v2617
    %2861 = vmatprep.subr.mxu0 %v2616
    %2862 = vmatpush1.msra.mxu0 %v2615
    %2863 = vmatprep.subr.mxu0 %v2614
    %2864 = vmatpush1.msra.mxu0 %v2613
    %2865 = vmatprep.subr.mxu0 %v2612
    %2866 = vmatpush1.msra.mxu0 %v2611
    %2867 = vmatprep.subr.mxu0 %v2610
    %2868 = vmatpush1.msra.mxu0 %v2609
    %2869 = vmatprep.subr.mxu0 %v2608
    %2870 = vmatpush1.msra.mxu0 %v2607
    %2871 = vmatprep.subr.mxu0 %v2606
    %2872 = vmatpush1.msra.mxu0 %v2605
    %2873 = vmatprep.subr.mxu0 %v2604
    %2874 = vmatpush1.msra.mxu0 %v2603
    %2875 = vmatprep.subr.mxu0 %v2602
    %2876 = vmatpush1.msra.mxu0 %v2601
    %2877 = vmatprep.subr.mxu0 %v2600
    %2878 = vmatpush1.msra.mxu0 %v2599
    %2879 = vmatprep.subr.mxu0 %v2598
    %2880 = vmatpush1.msra.mxu0 %v2597
    %2881 = vmatprep.subr.mxu0 %v2596
    %2882 = vmatpush1.msra.mxu0 %v2595
    %2883 = vmatprep.subr.mxu0 %v2658
    %2884 = vmatpush2.msra.mxu0 %v2657
    %2885 = vmatprep.subr.mxu0 %v2656
    %2886 = vmatpush2.msra.mxu0 %v2655
    %2887 = vmatprep.subr.mxu0 %v2654
    %2888 = vmatpush2.msra.mxu0 %v2653
    %2889 = vmatprep.subr.mxu0 %v2652
    %2890 = vmatpush2.msra.mxu0 %v2651
    %2891 = vmatprep.subr.mxu0 %v2650
    %2892 = vmatpush2.msra.mxu0 %v2649
    %2893 = vmatprep.subr.mxu0 %v2648
    %2894 = vmatpush2.msra.mxu0 %v2647
    %2895 = vmatprep.subr.mxu0 %v2646
    %2896 = vmatpush2.msra.mxu0 %v2645
    %2897 = vmatprep.subr.mxu0 %v2644
    %2898 = vmatpush2.msra.mxu0 %v2643
    %2899 = vmatprep.subr.mxu0 %v2642
    %2900 = vmatpush2.msra.mxu0 %v2641
    %2901 = vmatprep.subr.mxu0 %v2640
    %2902 = vmatpush2.msra.mxu0 %v2639
    %2903 = vmatprep.subr.mxu0 %v2638
    %2904 = vmatpush2.msra.mxu0 %v2637
    %2905 = vmatprep.subr.mxu0 %v2636
    %2906 = vmatpush2.msra.mxu0 %v2635
    %2907 = vmatprep.subr.mxu0 %v2634
    %2908 = vmatpush2.msra.mxu0 %v2633
    %2909 = vmatprep.subr.mxu0 %v2632
    %2910 = vmatpush2.msra.mxu0 %v2631
    %2911 = vmatprep.subr.mxu0 %v2630
    %2912 = vmatpush2.msra.mxu0 %v2629
    %2913 = vmatprep.subr.mxu0 %v2628
    %2914 = vmatpush2.msra.mxu0 %v2627
    %2915 = vmatprep.mubr.f32.mxu0 %v2532
    %2916 = vmatmul.mubr.f32.gmra.mxu0 %v2531
    %v2917 = vpop.f32.mrf.mxu0
    %v2918 = vadd.f32 0.0, %v2917
    %v2919 = vpop.f32.mrf.mxu0
    %v2920 = vadd.f32 0.0, %v2919
    %2921 = vmatprep.mubr.f32.mxu0 %v2540
    %2922 = vmatmul.mubr.f32.gmra.mxu0 %v2539
    %v2923 = vpop.f32.mrf.mxu0
    %v2924 = vadd.f32 0.0, %v2923
    %v2925 = vpop.f32.mrf.mxu0
    %v2926 = vadd.f32 0.0, %v2925
    %2927 = vmatprep.mubr.f32.mxu0 %v2548
    %2928 = vmatmul.mubr.f32.gmra.mxu0 %v2547
    %v2929 = vpop.f32.mrf.mxu0
    %v2930 = vadd.f32 0.0, %v2929
    %v2931 = vpop.f32.mrf.mxu0
    %v2932 = vadd.f32 0.0, %v2931
    %2933 = vmatprep.mubr.f32.mxu0 %v2556
    %2934 = vmatmul.mubr.f32.gmra.mxu0 %v2555
    %v2935 = vpop.f32.mrf.mxu0
    %v2936 = vadd.f32 0.0, %v2935
    %v2937 = vpop.f32.mrf.mxu0
    %v2938 = vadd.f32 0.0, %v2937
    %2939 = vmatprep.mubr.f32.mxu0 %v2564
    %2940 = vmatmul.mubr.f32.gmra.mxu0 %v2563
    %v2941 = vpop.f32.mrf.mxu0
    %v2942 = vadd.f32 0.0, %v2941
    %v2943 = vpop.f32.mrf.mxu0
    %v2944 = vadd.f32 0.0, %v2943
    %2945 = vmatprep.mubr.f32.mxu0 %v2572
    %2946 = vmatmul.mubr.f32.gmra.mxu0 %v2571
    %v2947 = vpop.f32.mrf.mxu0
    %v2948 = vadd.f32 0.0, %v2947
    %v2949 = vpop.f32.mrf.mxu0
    %v2950 = vadd.f32 0.0, %v2949
    %2951 = vmatprep.mubr.f32.mxu0 %v2580
    %2952 = vmatmul.mubr.f32.gmra.mxu0 %v2579
    %v2953 = vpop.f32.mrf.mxu0
    %v2954 = vadd.f32 0.0, %v2953
    %v2955 = vpop.f32.mrf.mxu0
    %v2956 = vadd.f32 0.0, %v2955
    %2957 = vmatprep.mubr.f32.mxu0 %v2588
    %2958 = vmatmul.mubr.f32.gmra.mxu0 %v2587
    %v2959 = vpop.f32.mrf.mxu0
    %v2960 = vadd.f32 0.0, %v2959
    %v2961 = vpop.f32.mrf.mxu0
    %v2962 = vadd.f32 0.0, %v2961
    %2963 = vdwg.mxu0
    %2964 = vmatprep.subr.mxu0 %v2690
    %2965 = vmatpush1.msra.mxu0 %v2689
    %2966 = vmatprep.subr.mxu0 %v2688
    %2967 = vmatpush1.msra.mxu0 %v2687
    %2968 = vmatprep.subr.mxu0 %v2686
    %2969 = vmatpush1.msra.mxu0 %v2685
    %2970 = vmatprep.subr.mxu0 %v2684
    %2971 = vmatpush1.msra.mxu0 %v2683
    %2972 = vmatprep.subr.mxu0 %v2682
    %2973 = vmatpush1.msra.mxu0 %v2681
    %2974 = vmatprep.subr.mxu0 %v2680
    %2975 = vmatpush1.msra.mxu0 %v2679
    %2976 = vmatprep.subr.mxu0 %v2678
    %2977 = vmatpush1.msra.mxu0 %v2677
    %2978 = vmatprep.subr.mxu0 %v2676
    %2979 = vmatpush1.msra.mxu0 %v2675
    %2980 = vmatprep.subr.mxu0 %v2674
    %2981 = vmatpush1.msra.mxu0 %v2673
    %2982 = vmatprep.subr.mxu0 %v2672
    %2983 = vmatpush1.msra.mxu0 %v2671
    %2984 = vmatprep.subr.mxu0 %v2670
    %2985 = vmatpush1.msra.mxu0 %v2669
    %2986 = vmatprep.subr.mxu0 %v2668
    %2987 = vmatpush1.msra.mxu0 %v2667
    %2988 = vmatprep.subr.mxu0 %v2666
    %2989 = vmatpush1.msra.mxu0 %v2665
    %2990 = vmatprep.subr.mxu0 %v2664
    %2991 = vmatpush1.msra.mxu0 %v2663
    %2992 = vmatprep.subr.mxu0 %v2662
    %2993 = vmatpush1.msra.mxu0 %v2661
    %2994 = vmatprep.subr.mxu0 %v2660
    %2995 = vmatpush1.msra.mxu0 %v2659
    %2996 = vmatprep.subr.mxu0 %v2722
    %2997 = vmatpush2.msra.mxu0 %v2721
    %2998 = vmatprep.subr.mxu0 %v2720
    %2999 = vmatpush2.msra.mxu0 %v2719
    %3000 = vmatprep.subr.mxu0 %v2718
    %3001 = vmatpush2.msra.mxu0 %v2717
    %3002 = vmatprep.subr.mxu0 %v2716
    %3003 = vmatpush2.msra.mxu0 %v2715
    %3004 = vmatprep.subr.mxu0 %v2714
    %3005 = vmatpush2.msra.mxu0 %v2713
    %3006 = vmatprep.subr.mxu0 %v2712
    %3007 = vmatpush2.msra.mxu0 %v2711
    %3008 = vmatprep.subr.mxu0 %v2710
    %3009 = vmatpush2.msra.mxu0 %v2709
    %3010 = vmatprep.subr.mxu0 %v2708
    %3011 = vmatpush2.msra.mxu0 %v2707
    %3012 = vmatprep.subr.mxu0 %v2706
    %3013 = vmatpush2.msra.mxu0 %v2705
    %3014 = vmatprep.subr.mxu0 %v2704
    %3015 = vmatpush2.msra.mxu0 %v2703
    %3016 = vmatprep.subr.mxu0 %v2702
    %3017 = vmatpush2.msra.mxu0 %v2701
    %3018 = vmatprep.subr.mxu0 %v2700
    %3019 = vmatpush2.msra.mxu0 %v2699
    %3020 = vmatprep.subr.mxu0 %v2698
    %3021 = vmatpush2.msra.mxu0 %v2697
    %3022 = vmatprep.subr.mxu0 %v2696
    %3023 = vmatpush2.msra.mxu0 %v2695
    %3024 = vmatprep.subr.mxu0 %v2694
    %3025 = vmatpush2.msra.mxu0 %v2693
    %3026 = vmatprep.subr.mxu0 %v2692
    %3027 = vmatpush2.msra.mxu0 %v2691
    %3028 = vmatprep.mubr.f32.mxu0 %v2534
    %3029 = vmatmul.mubr.f32.gmra.mxu0 %v2533
    %v3030 = vpop.f32.mrf.mxu0
    %v3031 = vadd.f32 %v2918, %v3030
    %v3032 = vpop.f32.mrf.mxu0
    %v3033 = vadd.f32 %v2920, %v3032
    %3034 = vmatprep.mubr.f32.mxu0 %v2542
    %3035 = vmatmul.mubr.f32.gmra.mxu0 %v2541
    %v3036 = vpop.f32.mrf.mxu0
    %v3037 = vadd.f32 %v2924, %v3036
    %v3038 = vpop.f32.mrf.mxu0
    %v3039 = vadd.f32 %v2926, %v3038
    %3040 = vmatprep.mubr.f32.mxu0 %v2550
    %3041 = vmatmul.mubr.f32.gmra.mxu0 %v2549
    %v3042 = vpop.f32.mrf.mxu0
    %v3043 = vadd.f32 %v2930, %v3042
    %v3044 = vpop.f32.mrf.mxu0
    %v3045 = vadd.f32 %v2932, %v3044
    %3046 = vmatprep.mubr.f32.mxu0 %v2558
    %3047 = vmatmul.mubr.f32.gmra.mxu0 %v2557
    %v3048 = vpop.f32.mrf.mxu0
    %v3049 = vadd.f32 %v2936, %v3048
    %v3050 = vpop.f32.mrf.mxu0
    %v3051 = vadd.f32 %v2938, %v3050
    %3052 = vmatprep.mubr.f32.mxu0 %v2566
    %3053 = vmatmul.mubr.f32.gmra.mxu0 %v2565
    %v3054 = vpop.f32.mrf.mxu0
    %v3055 = vadd.f32 %v2942, %v3054
    %v3056 = vpop.f32.mrf.mxu0
    %v3057 = vadd.f32 %v2944, %v3056
    %3058 = vmatprep.mubr.f32.mxu0 %v2574
    %3059 = vmatmul.mubr.f32.gmra.mxu0 %v2573
    %v3060 = vpop.f32.mrf.mxu0
    %v3061 = vadd.f32 %v2948, %v3060
    %v3062 = vpop.f32.mrf.mxu0
    %v3063 = vadd.f32 %v2950, %v3062
    %3064 = vmatprep.mubr.f32.mxu0 %v2582
    %3065 = vmatmul.mubr.f32.gmra.mxu0 %v2581
    %v3066 = vpop.f32.mrf.mxu0
    %v3067 = vadd.f32 %v2954, %v3066
    %v3068 = vpop.f32.mrf.mxu0
    %v3069 = vadd.f32 %v2956, %v3068
    %3070 = vmatprep.mubr.f32.mxu0 %v2590
    %3071 = vmatmul.mubr.f32.gmra.mxu0 %v2589
    %v3072 = vpop.f32.mrf.mxu0
    %v3073 = vadd.f32 %v2960, %v3072
    %v3074 = vpop.f32.mrf.mxu0
    %v3075 = vadd.f32 %v2962, %v3074
    %3076 = vdwg.mxu0
    %3077 = vmatprep.subr.mxu0 %v2754
    %3078 = vmatpush1.msra.mxu0 %v2753
    %3079 = vmatprep.subr.mxu0 %v2752
    %3080 = vmatpush1.msra.mxu0 %v2751
    %3081 = vmatprep.subr.mxu0 %v2750
    %3082 = vmatpush1.msra.mxu0 %v2749
    %3083 = vmatprep.subr.mxu0 %v2748
    %3084 = vmatpush1.msra.mxu0 %v2747
    %3085 = vmatprep.subr.mxu0 %v2746
    %3086 = vmatpush1.msra.mxu0 %v2745
    %3087 = vmatprep.subr.mxu0 %v2744
    %3088 = vmatpush1.msra.mxu0 %v2743
    %3089 = vmatprep.subr.mxu0 %v2742
    %3090 = vmatpush1.msra.mxu0 %v2741
    %3091 = vmatprep.subr.mxu0 %v2740
    %3092 = vmatpush1.msra.mxu0 %v2739
    %3093 = vmatprep.subr.mxu0 %v2738
    %3094 = vmatpush1.msra.mxu0 %v2737
    %3095 = vmatprep.subr.mxu0 %v2736
    %3096 = vmatpush1.msra.mxu0 %v2735
    %3097 = vmatprep.subr.mxu0 %v2734
    %3098 = vmatpush1.msra.mxu0 %v2733
    %3099 = vmatprep.subr.mxu0 %v2732
    %3100 = vmatpush1.msra.mxu0 %v2731
    %3101 = vmatprep.subr.mxu0 %v2730
    %3102 = vmatpush1.msra.mxu0 %v2729
    %3103 = vmatprep.subr.mxu0 %v2728
    %3104 = vmatpush1.msra.mxu0 %v2727
    %3105 = vmatprep.subr.mxu0 %v2726
    %3106 = vmatpush1.msra.mxu0 %v2725
    %3107 = vmatprep.subr.mxu0 %v2724
    %3108 = vmatpush1.msra.mxu0 %v2723
    %3109 = vmatprep.subr.mxu0 %v2786
    %3110 = vmatpush2.msra.mxu0 %v2785
    %3111 = vmatprep.subr.mxu0 %v2784
    %3112 = vmatpush2.msra.mxu0 %v2783
    %3113 = vmatprep.subr.mxu0 %v2782
    %3114 = vmatpush2.msra.mxu0 %v2781
    %3115 = vmatprep.subr.mxu0 %v2780
    %3116 = vmatpush2.msra.mxu0 %v2779
    %3117 = vmatprep.subr.mxu0 %v2778
    %3118 = vmatpush2.msra.mxu0 %v2777
    %3119 = vmatprep.subr.mxu0 %v2776
    %3120 = vmatpush2.msra.mxu0 %v2775
    %3121 = vmatprep.subr.mxu0 %v2774
    %3122 = vmatpush2.msra.mxu0 %v2773
    %3123 = vmatprep.subr.mxu0 %v2772
    %3124 = vmatpush2.msra.mxu0 %v2771
    %3125 = vmatprep.subr.mxu0 %v2770
    %3126 = vmatpush2.msra.mxu0 %v2769
    %3127 = vmatprep.subr.mxu0 %v2768
    %3128 = vmatpush2.msra.mxu0 %v2767
    %3129 = vmatprep.subr.mxu0 %v2766
    %3130 = vmatpush2.msra.mxu0 %v2765
    %3131 = vmatprep.subr.mxu0 %v2764
    %3132 = vmatpush2.msra.mxu0 %v2763
    %3133 = vmatprep.subr.mxu0 %v2762
    %3134 = vmatpush2.msra.mxu0 %v2761
    %3135 = vmatprep.subr.mxu0 %v2760
    %3136 = vmatpush2.msra.mxu0 %v2759
    %3137 = vmatprep.subr.mxu0 %v2758
    %3138 = vmatpush2.msra.mxu0 %v2757
    %3139 = vmatprep.subr.mxu0 %v2756
    %3140 = vmatpush2.msra.mxu0 %v2755
    %3141 = vmatprep.mubr.f32.mxu0 %v2536
    %3142 = vmatmul.mubr.f32.gmra.mxu0 %v2535
    %v3143 = vpop.f32.mrf.mxu0
    %v3144 = vadd.f32 %v3031, %v3143
    %v3145 = vpop.f32.mrf.mxu0
    %v3146 = vadd.f32 %v3033, %v3145
    %3147 = vmatprep.mubr.f32.mxu0 %v2544
    %3148 = vmatmul.mubr.f32.gmra.mxu0 %v2543
    %v3149 = vpop.f32.mrf.mxu0
    %v3150 = vadd.f32 %v3037, %v3149
    %v3151 = vpop.f32.mrf.mxu0
    %v3152 = vadd.f32 %v3039, %v3151
    %3153 = vmatprep.mubr.f32.mxu0 %v2552
    %3154 = vmatmul.mubr.f32.gmra.mxu0 %v2551
    %v3155 = vpop.f32.mrf.mxu0
    %v3156 = vadd.f32 %v3043, %v3155
    %v3157 = vpop.f32.mrf.mxu0
    %v3158 = vadd.f32 %v3045, %v3157
    %3159 = vmatprep.mubr.f32.mxu0 %v2560
    %3160 = vmatmul.mubr.f32.gmra.mxu0 %v2559
    %v3161 = vpop.f32.mrf.mxu0
    %v3162 = vadd.f32 %v3049, %v3161
    %v3163 = vpop.f32.mrf.mxu0
    %v3164 = vadd.f32 %v3051, %v3163
    %3165 = vmatprep.mubr.f32.mxu0 %v2568
    %3166 = vmatmul.mubr.f32.gmra.mxu0 %v2567
    %v3167 = vpop.f32.mrf.mxu0
    %v3168 = vadd.f32 %v3055, %v3167
    %v3169 = vpop.f32.mrf.mxu0
    %v3170 = vadd.f32 %v3057, %v3169
    %3171 = vmatprep.mubr.f32.mxu0 %v2576
    %3172 = vmatmul.mubr.f32.gmra.mxu0 %v2575
    %v3173 = vpop.f32.mrf.mxu0
    %v3174 = vadd.f32 %v3061, %v3173
    %v3175 = vpop.f32.mrf.mxu0
    %v3176 = vadd.f32 %v3063, %v3175
    %3177 = vmatprep.mubr.f32.mxu0 %v2584
    %3178 = vmatmul.mubr.f32.gmra.mxu0 %v2583
    %v3179 = vpop.f32.mrf.mxu0
    %v3180 = vadd.f32 %v3067, %v3179
    %v3181 = vpop.f32.mrf.mxu0
    %v3182 = vadd.f32 %v3069, %v3181
    %3183 = vmatprep.mubr.f32.mxu0 %v2592
    %3184 = vmatmul.mubr.f32.gmra.mxu0 %v2591
    %v3185 = vpop.f32.mrf.mxu0
    %v3186 = vadd.f32 %v3073, %v3185
    %v3187 = vpop.f32.mrf.mxu0
    %v3188 = vadd.f32 %v3075, %v3187
    %3189 = vdwg.mxu0
    %3190 = vmatprep.subr.mxu0 %v2818
    %3191 = vmatpush1.msra.mxu0 %v2817
    %3192 = vmatprep.subr.mxu0 %v2816
    %3193 = vmatpush1.msra.mxu0 %v2815
    %3194 = vmatprep.subr.mxu0 %v2814
    %3195 = vmatpush1.msra.mxu0 %v2813
    %3196 = vmatprep.subr.mxu0 %v2812
    %3197 = vmatpush1.msra.mxu0 %v2811
    %3198 = vmatprep.subr.mxu0 %v2810
    %3199 = vmatpush1.msra.mxu0 %v2809
    %3200 = vmatprep.subr.mxu0 %v2808
    %3201 = vmatpush1.msra.mxu0 %v2807
    %3202 = vmatprep.subr.mxu0 %v2806
    %3203 = vmatpush1.msra.mxu0 %v2805
    %3204 = vmatprep.subr.mxu0 %v2804
    %3205 = vmatpush1.msra.mxu0 %v2803
    %3206 = vmatprep.subr.mxu0 %v2802
    %3207 = vmatpush1.msra.mxu0 %v2801
    %3208 = vmatprep.subr.mxu0 %v2800
    %3209 = vmatpush1.msra.mxu0 %v2799
    %3210 = vmatprep.subr.mxu0 %v2798
    %3211 = vmatpush1.msra.mxu0 %v2797
    %3212 = vmatprep.subr.mxu0 %v2796
    %3213 = vmatpush1.msra.mxu0 %v2795
    %3214 = vmatprep.subr.mxu0 %v2794
    %3215 = vmatpush1.msra.mxu0 %v2793
    %3216 = vmatprep.subr.mxu0 %v2792
    %3217 = vmatpush1.msra.mxu0 %v2791
    %3218 = vmatprep.subr.mxu0 %v2790
    %3219 = vmatpush1.msra.mxu0 %v2789
    %3220 = vmatprep.subr.mxu0 %v2788
    %3221 = vmatpush1.msra.mxu0 %v2787
    %3222 = vmatprep.subr.mxu0 %v2850
    %3223 = vmatpush2.msra.mxu0 %v2849
    %3224 = vmatprep.subr.mxu0 %v2848
    %3225 = vmatpush2.msra.mxu0 %v2847
    %3226 = vmatprep.subr.mxu0 %v2846
    %3227 = vmatpush2.msra.mxu0 %v2845
    %3228 = vmatprep.subr.mxu0 %v2844
    %3229 = vmatpush2.msra.mxu0 %v2843
    %3230 = vmatprep.subr.mxu0 %v2842
    %3231 = vmatpush2.msra.mxu0 %v2841
    %3232 = vmatprep.subr.mxu0 %v2840
    %3233 = vmatpush2.msra.mxu0 %v2839
    %3234 = vmatprep.subr.mxu0 %v2838
    %3235 = vmatpush2.msra.mxu0 %v2837
    %3236 = vmatprep.subr.mxu0 %v2836
    %3237 = vmatpush2.msra.mxu0 %v2835
    %3238 = vmatprep.subr.mxu0 %v2834
    %3239 = vmatpush2.msra.mxu0 %v2833
    %3240 = vmatprep.subr.mxu0 %v2832
    %3241 = vmatpush2.msra.mxu0 %v2831
    %3242 = vmatprep.subr.mxu0 %v2830
    %3243 = vmatpush2.msra.mxu0 %v2829
    %3244 = vmatprep.subr.mxu0 %v2828
    %3245 = vmatpush2.msra.mxu0 %v2827
    %3246 = vmatprep.subr.mxu0 %v2826
    %3247 = vmatpush2.msra.mxu0 %v2825
    %3248 = vmatprep.subr.mxu0 %v2824
    %3249 = vmatpush2.msra.mxu0 %v2823
    %3250 = vmatprep.subr.mxu0 %v2822
    %3251 = vmatpush2.msra.mxu0 %v2821
    %3252 = vmatprep.subr.mxu0 %v2820
    %3253 = vmatpush2.msra.mxu0 %v2819
    %3254 = vmatprep.mubr.f32.mxu0 %v2538
    %3255 = vmatmul.mubr.f32.gmra.mxu0 %v2537
    %v3256 = vpop.f32.mrf.mxu0
    %v3257 = vadd.f32 %v3144, %v3256
    %v3258 = vpop.f32.mrf.mxu0
    %v3259 = vadd.f32 %v3146, %v3258
    %3260 = vmatprep.mubr.f32.mxu0 %v2546
    %3261 = vmatmul.mubr.f32.gmra.mxu0 %v2545
    %v3262 = vpop.f32.mrf.mxu0
    %v3263 = vadd.f32 %v3150, %v3262
    %v3264 = vpop.f32.mrf.mxu0
    %v3265 = vadd.f32 %v3152, %v3264
    %3266 = vmatprep.mubr.f32.mxu0 %v2554
    %3267 = vmatmul.mubr.f32.gmra.mxu0 %v2553
    %v3268 = vpop.f32.mrf.mxu0
    %v3269 = vadd.f32 %v3156, %v3268
    %v3270 = vpop.f32.mrf.mxu0
    %v3271 = vadd.f32 %v3158, %v3270
    %3272 = vmatprep.mubr.f32.mxu0 %v2562
    %3273 = vmatmul.mubr.f32.gmra.mxu0 %v2561
    %v3274 = vpop.f32.mrf.mxu0
    %v3275 = vadd.f32 %v3162, %v3274
    %v3276 = vpop.f32.mrf.mxu0
    %v3277 = vadd.f32 %v3164, %v3276
    %3278 = vmatprep.mubr.f32.mxu0 %v2570
    %3279 = vmatmul.mubr.f32.gmra.mxu0 %v2569
    %v3280 = vpop.f32.mrf.mxu0
    %v3281 = vadd.f32 %v3168, %v3280
    %v3282 = vpop.f32.mrf.mxu0
    %v3283 = vadd.f32 %v3170, %v3282
    %3284 = vmatprep.mubr.f32.mxu0 %v2578
    %3285 = vmatmul.mubr.f32.gmra.mxu0 %v2577
    %v3286 = vpop.f32.mrf.mxu0
    %v3287 = vadd.f32 %v3174, %v3286
    %v3288 = vpop.f32.mrf.mxu0
    %v3289 = vadd.f32 %v3176, %v3288
    %3290 = vmatprep.mubr.f32.mxu0 %v2586
    %3291 = vmatmul.mubr.f32.gmra.mxu0 %v2585
    %v3292 = vpop.f32.mrf.mxu0
    %v3293 = vadd.f32 %v3180, %v3292
    %v3294 = vpop.f32.mrf.mxu0
    %v3295 = vadd.f32 %v3182, %v3294
    %3296 = vmatprep.mubr.f32.mxu0 %v2594
    %3297 = vmatmul.mubr.f32.gmra.mxu0 %v2593
    %v3298 = vpop.f32.mrf.mxu0
    %v3299 = vadd.f32 %v3186, %v3298
    %v3300 = vpop.f32.mrf.mxu0
    %v3301 = vadd.f32 %v3188, %v3300
    %3302 = vdwg.mxu0
    %v3303 = vadd.f32 %v2515, %v3257
    %v3304 = vadd.f32 %v2516, %v3259
    %v3305 = vadd.f32 %v2517, %v3263
    %v3306 = vadd.f32 %v2518, %v3265
    %v3307 = vadd.f32 %v2519, %v3269
    %v3308 = vadd.f32 %v2520, %v3271
    %v3309 = vadd.f32 %v2521, %v3275
    %v3310 = vadd.f32 %v2522, %v3277
    %v3311 = vadd.f32 %v2523, %v3281
    %v3312 = vadd.f32 %v2524, %v3283
    %v3313 = vadd.f32 %v2525, %v3287
    %v3314 = vadd.f32 %v2526, %v3289
    %v3315 = vadd.f32 %v2527, %v3293
    %v3316 = vadd.f32 %v2528, %v3295
    %v3317 = vadd.f32 %v2529, %v3299
    %v3318 = vadd.f32 %v2530, %v3301
    %v3319 = vld [vmem:[%s6] sm:$0x3]
    %v3321 = vlaneseq
    %v3322 = vshrl.u32 %v3321, 7
    %v3323 = vsub.s32 0, %v3322
    %v3324 = vrot.slane %v3319, %v3323
    %v3325 = vlaneseq
    %v3326 = vshrl.u32 %v3325, 7
    %v3327 = vsub.s32 1, %v3326
    %v3328 = vrot.slane %v3319, %v3327
    %v3331 = vadd.f32 %v3303, %v3324
    %v3332 = vadd.f32 %v3304, %v3328
    %v3333 = vadd.f32 %v3305, %v3324
    %v3334 = vadd.f32 %v3306, %v3328
    %v3335 = vadd.f32 %v3307, %v3324
    %v3336 = vadd.f32 %v3308, %v3328
    %v3337 = vadd.f32 %v3309, %v3324
    %v3338 = vadd.f32 %v3310, %v3328
    %v3339 = vadd.f32 %v3311, %v3324
    %v3340 = vadd.f32 %v3312, %v3328
    %v3341 = vadd.f32 %v3313, %v3324
    %v3342 = vadd.f32 %v3314, %v3328
    %v3343 = vadd.f32 %v3315, %v3324
    %v3344 = vadd.f32 %v3316, %v3328
    %v3345 = vadd.f32 %v3317, %v3324
    %v3346 = vadd.f32 %v3318, %v3328
    %v3347 = vtanh.pop %v3331
    %v3348 = vtanh.pop %v3332
    %v3349 = vtanh.pop %v3333
    %v3350 = vtanh.pop %v3334
    %v3351 = vtanh.pop %v3335
    %v3352 = vtanh.pop %v3336
    %v3353 = vtanh.pop %v3337
    %v3354 = vtanh.pop %v3338
    %v3355 = vtanh.pop %v3339
    %v3356 = vtanh.pop %v3340
    %v3357 = vtanh.pop %v3341
    %v3358 = vtanh.pop %v3342
    %v3359 = vtanh.pop %v3343
    %v3360 = vtanh.pop %v3344
    %v3361 = vtanh.pop %v3345
    %v3362 = vtanh.pop %v3346
    %v3363 = vld [vmem:[%s7] sm:$0xff]
    %v3364 = vld [vmem:[%s7 + $0x8] sm:$0xff]
    %v3365 = vld [vmem:[%s7 + $0x10] sm:$0xff]
    %v3366 = vld [vmem:[%s7 + $0x18] sm:$0xff]
    %v3367 = vld [vmem:[%s7 + $0x20] sm:$0xff]
    %v3368 = vld [vmem:[%s7 + $0x28] sm:$0xff]
    %v3369 = vld [vmem:[%s7 + $0x30] sm:$0xff]
    %v3370 = vld [vmem:[%s7 + $0x38] sm:$0xff]
    %v3371 = vld [vmem:[%s7 + $0x40] sm:$0xff]
    %v3372 = vld [vmem:[%s7 + $0x48] sm:$0xff]
    %v3373 = vld [vmem:[%s7 + $0x50] sm:$0xff]
    %v3374 = vld [vmem:[%s7 + $0x58] sm:$0xff]
    %v3375 = vld [vmem:[%s7 + $0x60] sm:$0xff]
    %v3376 = vld [vmem:[%s7 + $0x68] sm:$0xff]
    %v3377 = vld [vmem:[%s7 + $0x70] sm:$0xff]
    %v3378 = vld [vmem:[%s7 + $0x78] sm:$0xff]
    %v3379 = vld [vmem:[%s7 + $0x80] sm:$0xff]
    %v3380 = vld [vmem:[%s7 + $0x88] sm:$0xff]
    %v3381 = vld [vmem:[%s7 + $0x90] sm:$0xff]
    %v3382 = vld [vmem:[%s7 + $0x98] sm:$0xff]
    %v3383 = vld [vmem:[%s7 + $0xa0] sm:$0xff]
    %v3384 = vld [vmem:[%s7 + $0xa8] sm:$0xff]
    %v3385 = vld [vmem:[%s7 + $0xb0] sm:$0xff]
    %v3386 = vld [vmem:[%s7 + $0xb8] sm:$0xff]
    %v3387 = vld [vmem:[%s7 + $0xc0] sm:$0xff]
    %v3388 = vld [vmem:[%s7 + $0xc8] sm:$0xff]
    %v3389 = vld [vmem:[%s7 + $0xd0] sm:$0xff]
    %v3390 = vld [vmem:[%s7 + $0xd8] sm:$0xff]
    %v3391 = vld [vmem:[%s7 + $0xe0] sm:$0xff]
    %v3392 = vld [vmem:[%s7 + $0xe8] sm:$0xff]
    %v3393 = vld [vmem:[%s7 + $0xf0] sm:$0xff]
    %v3394 = vld [vmem:[%s7 + $0xf8] sm:$0xff]
    %v3395 = vld [vmem:[%s8] sm:$0x1]
    %v3397 = vlaneseq
    %v3398 = vshrl.u32 %v3397, 7
    %v3399 = vsub.s32 0, %v3398
    %v3400 = vrot.slane %v3395, %v3399
    %3402 = vmatprep.subr.mxu0 0.0
    %3403 = vmatpush1.msra.mxu0 %v3378
    %3404 = vmatprep.subr.mxu0 0.0
    %3405 = vmatpush1.msra.mxu0 %v3377
    %3406 = vmatprep.subr.mxu0 0.0
    %3407 = vmatpush1.msra.mxu0 %v3376
    %3408 = vmatprep.subr.mxu0 0.0
    %3409 = vmatpush1.msra.mxu0 %v3375
    %3410 = vmatprep.subr.mxu0 0.0
    %3411 = vmatpush1.msra.mxu0 %v3374
    %3412 = vmatprep.subr.mxu0 0.0
    %3413 = vmatpush1.msra.mxu0 %v3373
    %3414 = vmatprep.subr.mxu0 0.0
    %3415 = vmatpush1.msra.mxu0 %v3372
    %3416 = vmatprep.subr.mxu0 0.0
    %3417 = vmatpush1.msra.mxu0 %v3371
    %3418 = vmatprep.subr.mxu0 0.0
    %3419 = vmatpush1.msra.mxu0 %v3370
    %3420 = vmatprep.subr.mxu0 0.0
    %3421 = vmatpush1.msra.mxu0 %v3369
    %3422 = vmatprep.subr.mxu0 0.0
    %3423 = vmatpush1.msra.mxu0 %v3368
    %3424 = vmatprep.subr.mxu0 0.0
    %3425 = vmatpush1.msra.mxu0 %v3367
    %3426 = vmatprep.subr.mxu0 0.0
    %3427 = vmatpush1.msra.mxu0 %v3366
    %3428 = vmatprep.subr.mxu0 0.0
    %3429 = vmatpush1.msra.mxu0 %v3365
    %3430 = vmatprep.subr.mxu0 0.0
    %3431 = vmatpush1.msra.mxu0 %v3364
    %3432 = vmatprep.subr.mxu0 0.0
    %3433 = vmatpush1.msra.mxu0 %v3363
    %3434 = vmatprep.subr.mxu0 0.0
    %3435 = vmatpush2.msra.mxu0 %v3394
    %3436 = vmatprep.subr.mxu0 0.0
    %3437 = vmatpush2.msra.mxu0 %v3393
    %3438 = vmatprep.subr.mxu0 0.0
    %3439 = vmatpush2.msra.mxu0 %v3392
    %3440 = vmatprep.subr.mxu0 0.0
    %3441 = vmatpush2.msra.mxu0 %v3391
    %3442 = vmatprep.subr.mxu0 0.0
    %3443 = vmatpush2.msra.mxu0 %v3390
    %3444 = vmatprep.subr.mxu0 0.0
    %3445 = vmatpush2.msra.mxu0 %v3389
    %3446 = vmatprep.subr.mxu0 0.0
    %3447 = vmatpush2.msra.mxu0 %v3388
    %3448 = vmatprep.subr.mxu0 0.0
    %3449 = vmatpush2.msra.mxu0 %v3387
    %3450 = vmatprep.subr.mxu0 0.0
    %3451 = vmatpush2.msra.mxu0 %v3386
    %3452 = vmatprep.subr.mxu0 0.0
    %3453 = vmatpush2.msra.mxu0 %v3385
    %3454 = vmatprep.subr.mxu0 0.0
    %3455 = vmatpush2.msra.mxu0 %v3384
    %3456 = vmatprep.subr.mxu0 0.0
    %3457 = vmatpush2.msra.mxu0 %v3383
    %3458 = vmatprep.subr.mxu0 0.0
    %3459 = vmatpush2.msra.mxu0 %v3382
    %3460 = vmatprep.subr.mxu0 0.0
    %3461 = vmatpush2.msra.mxu0 %v3381
    %3462 = vmatprep.subr.mxu0 0.0
    %3463 = vmatpush2.msra.mxu0 %v3380
    %3464 = vmatprep.subr.mxu0 0.0
    %3465 = vmatpush2.msra.mxu0 %v3379
    %3466 = vmatprep.mubr.f32.mxu0 %v3348
    %3467 = vmatmul.mubr.f32.gmra.mxu0 %v3347
    %v3468 = vpop.f32.mrf.mxu0
    %v3469 = vadd.f32 %v3400, %v3468
    %v3470 = vpop.f32.mrf.mxu0
    %3471 = vmatprep.mubr.f32.mxu0 %v3350
    %3472 = vmatmul.mubr.f32.gmra.mxu0 %v3349
    %v3473 = vpop.f32.mrf.mxu0
    %v3474 = vadd.f32 %v3400, %v3473
    %v3475 = vpop.f32.mrf.mxu0
    %3476 = vmatprep.mubr.f32.mxu0 %v3352
    %3477 = vmatmul.mubr.f32.gmra.mxu0 %v3351
    %v3478 = vpop.f32.mrf.mxu0
    %v3479 = vadd.f32 %v3400, %v3478
    %v3480 = vpop.f32.mrf.mxu0
    %3481 = vmatprep.mubr.f32.mxu0 %v3354
    %3482 = vmatmul.mubr.f32.gmra.mxu0 %v3353
    %v3483 = vpop.f32.mrf.mxu0
    %v3484 = vadd.f32 %v3400, %v3483
    %v3485 = vpop.f32.mrf.mxu0
    %3486 = vmatprep.mubr.f32.mxu0 %v3356
    %3487 = vmatmul.mubr.f32.gmra.mxu0 %v3355
    %v3488 = vpop.f32.mrf.mxu0
    %v3489 = vadd.f32 %v3400, %v3488
    %v3490 = vpop.f32.mrf.mxu0
    %3491 = vmatprep.mubr.f32.mxu0 %v3358
    %3492 = vmatmul.mubr.f32.gmra.mxu0 %v3357
    %v3493 = vpop.f32.mrf.mxu0
    %v3494 = vadd.f32 %v3400, %v3493
    %v3495 = vpop.f32.mrf.mxu0
    %3496 = vmatprep.mubr.f32.mxu0 %v3360
    %3497 = vmatmul.mubr.f32.gmra.mxu0 %v3359
    %v3498 = vpop.f32.mrf.mxu0
    %v3499 = vadd.f32 %v3400, %v3498
    %v3500 = vpop.f32.mrf.mxu0
    %3501 = vmatprep.mubr.f32.mxu0 %v3362
    %3502 = vmatmul.mubr.f32.gmra.mxu0 %v3361
    %v3503 = vpop.f32.mrf.mxu0
    %v3504 = vadd.f32 %v3400, %v3503
    %v3505 = vpop.f32.mrf.mxu0
    %3506 = vdwg.mxu0
    %v3507 = vtanh.pop %v3469
    %v3508 = vtanh.pop %v3474
    %v3509 = vtanh.pop %v3479
    %v3510 = vtanh.pop %v3484
    %v3511 = vtanh.pop %v3489
    %v3512 = vtanh.pop %v3494
    %v3513 = vtanh.pop %v3499
    %v3514 = vtanh.pop %v3504
    %v3515 = vld [vmem:[%s9] sm:$0xff]
    %v3516 = vld [vmem:[%s9 + $0x8] sm:$0xff]
    %v3517 = vld [vmem:[%s9 + $0x10] sm:$0xff]
    %v3518 = vld [vmem:[%s9 + $0x18] sm:$0xff]
    %v3519 = vld [vmem:[%s9 + $0x20] sm:$0xff]
    %v3520 = vld [vmem:[%s9 + $0x28] sm:$0xff]
    %v3521 = vld [vmem:[%s9 + $0x30] sm:$0xff]
    %v3522 = vld [vmem:[%s9 + $0x38] sm:$0xff]
    %v3523 = vld [vmem:[%s10] sm:$0x1]
    %v3525 = vlaneseq
    %v3526 = vshrl.u32 %v3525, 7
    %v3527 = vsub.s32 0, %v3526
    %v3528 = vrot.slane %v3523, %v3527
    %vm3530 = vcmask 523264
    %v3532 = vsel %vm3530, %v3507, 0
    %v3535 = vsel %vm3530, %v3508, 0
    %v3538 = vsel %vm3530, %v3509, 0
    %v3541 = vsel %vm3530, %v3510, 0
    %v3544 = vsel %vm3530, %v3511, 0
    %v3547 = vsel %vm3530, %v3512, 0
    %v3550 = vsel %vm3530, %v3513, 0
    %v3553 = vsel %vm3530, %v3514, 0
    %3555 = vmatprep.subr.mxu0 0.0
    %3556 = vmatpush1.msra.mxu0 0.0
    %3557 = vmatprep.subr.mxu0 0.0
    %3558 = vmatpush1.msra.mxu0 0.0
    %3559 = vmatprep.subr.mxu0 0.0
    %3560 = vmatpush1.msra.mxu0 0.0
    %3561 = vmatprep.subr.mxu0 0.0
    %3562 = vmatpush1.msra.mxu0 0.0
    %3563 = vmatprep.subr.mxu0 0.0
    %3564 = vmatpush1.msra.mxu0 0.0
    %3565 = vmatprep.subr.mxu0 0.0
    %3566 = vmatpush1.msra.mxu0 0.0
    %3567 = vmatprep.subr.mxu0 0.0
    %3568 = vmatpush1.msra.mxu0 0.0
    %3569 = vmatprep.subr.mxu0 0.0
    %3570 = vmatpush1.msra.mxu0 0.0
    %3571 = vmatprep.subr.mxu0 0.0
    %3572 = vmatpush1.msra.mxu0 %v3522
    %3573 = vmatprep.subr.mxu0 0.0
    %3574 = vmatpush1.msra.mxu0 %v3521
    %3575 = vmatprep.subr.mxu0 0.0
    %3576 = vmatpush1.msra.mxu0 %v3520
    %3577 = vmatprep.subr.mxu0 0.0
    %3578 = vmatpush1.msra.mxu0 %v3519
    %3579 = vmatprep.subr.mxu0 0.0
    %3580 = vmatpush1.msra.mxu0 %v3518
    %3581 = vmatprep.subr.mxu0 0.0
    %3582 = vmatpush1.msra.mxu0 %v3517
    %3583 = vmatprep.subr.mxu0 0.0
    %3584 = vmatpush1.msra.mxu0 %v3516
    %3585 = vmatprep.subr.mxu0 0.0
    %3586 = vmatpush1.msra.mxu0 %v3515
    %3587 = vmatprep.subr.mxu0 0.0
    %3588 = vmatpush2.msra.mxu0 0.0
    %3589 = vmatprep.subr.mxu0 0.0
    %3590 = vmatpush2.msra.mxu0 0.0
    %3591 = vmatprep.subr.mxu0 0.0
    %3592 = vmatpush2.msra.mxu0 0.0
    %3593 = vmatprep.subr.mxu0 0.0
    %3594 = vmatpush2.msra.mxu0 0.0
    %3595 = vmatprep.subr.mxu0 0.0
    %3596 = vmatpush2.msra.mxu0 0.0
    %3597 = vmatprep.subr.mxu0 0.0
    %3598 = vmatpush2.msra.mxu0 0.0
    %3599 = vmatprep.subr.mxu0 0.0
    %3600 = vmatpush2.msra.mxu0 0.0
    %3601 = vmatprep.subr.mxu0 0.0
    %3602 = vmatpush2.msra.mxu0 0.0
    %3603 = vmatprep.subr.mxu0 0.0
    %3604 = vmatpush2.msra.mxu0 0.0
    %3605 = vmatprep.subr.mxu0 0.0
    %3606 = vmatpush2.msra.mxu0 0.0
    %3607 = vmatprep.subr.mxu0 0.0
    %3608 = vmatpush2.msra.mxu0 0.0
    %3609 = vmatprep.subr.mxu0 0.0
    %3610 = vmatpush2.msra.mxu0 0.0
    %3611 = vmatprep.subr.mxu0 0.0
    %3612 = vmatpush2.msra.mxu0 0.0
    %3613 = vmatprep.subr.mxu0 0.0
    %3614 = vmatpush2.msra.mxu0 0.0
    %3615 = vmatprep.subr.mxu0 0.0
    %3616 = vmatpush2.msra.mxu0 0.0
    %3617 = vmatprep.subr.mxu0 0.0
    %3618 = vmatpush2.msra.mxu0 0.0
    %3619 = vmatprep.mubr.f32.mxu0 0.0
    %3620 = vmatmul.mubr.f32.gmra.mxu0 %v3532
    %v3621 = vpop.f32.mrf.mxu0
    %v3622 = vadd.f32 %v3528, %v3621
    %v3623 = vpop.f32.mrf.mxu0
    %3624 = vmatprep.mubr.f32.mxu0 0.0
    %3625 = vmatmul.mubr.f32.gmra.mxu0 %v3535
    %v3626 = vpop.f32.mrf.mxu0
    %v3627 = vadd.f32 %v3528, %v3626
    %v3628 = vpop.f32.mrf.mxu0
    %3629 = vmatprep.mubr.f32.mxu0 0.0
    %3630 = vmatmul.mubr.f32.gmra.mxu0 %v3538
    %v3631 = vpop.f32.mrf.mxu0
    %v3632 = vadd.f32 %v3528, %v3631
    %v3633 = vpop.f32.mrf.mxu0
    %3634 = vmatprep.mubr.f32.mxu0 0.0
    %3635 = vmatmul.mubr.f32.gmra.mxu0 %v3541
    %v3636 = vpop.f32.mrf.mxu0
    %v3637 = vadd.f32 %v3528, %v3636
    %v3638 = vpop.f32.mrf.mxu0
    %3639 = vmatprep.mubr.f32.mxu0 0.0
    %3640 = vmatmul.mubr.f32.gmra.mxu0 %v3544
    %v3641 = vpop.f32.mrf.mxu0
    %v3642 = vadd.f32 %v3528, %v3641
    %v3643 = vpop.f32.mrf.mxu0
    %3644 = vmatprep.mubr.f32.mxu0 0.0
    %3645 = vmatmul.mubr.f32.gmra.mxu0 %v3547
    %v3646 = vpop.f32.mrf.mxu0
    %v3647 = vadd.f32 %v3528, %v3646
    %v3648 = vpop.f32.mrf.mxu0
    %3649 = vmatprep.mubr.f32.mxu0 0.0
    %3650 = vmatmul.mubr.f32.gmra.mxu0 %v3550
    %v3651 = vpop.f32.mrf.mxu0
    %v3652 = vadd.f32 %v3528, %v3651
    %v3653 = vpop.f32.mrf.mxu0
    %3654 = vmatprep.mubr.f32.mxu0 0.0
    %3655 = vmatmul.mubr.f32.gmra.mxu0 %v3553
    %v3656 = vpop.f32.mrf.mxu0
    %v3657 = vadd.f32 %v3528, %v3656
    %v3658 = vpop.f32.mrf.mxu0
    %3659 = vdwg.mxu0
    %v3660 = vtanh.pop %v3622
    %v3661 = vtanh.pop %v3627
    %v3662 = vtanh.pop %v3632
    %v3663 = vtanh.pop %v3637
    %v3664 = vtanh.pop %v3642
    %v3665 = vtanh.pop %v3647
    %v3666 = vtanh.pop %v3652
    %v3667 = vtanh.pop %v3657
    %v3668 = vld [vmem:[%s11] sm:$0xff]
    %v3669 = vld [vmem:[%s11 + $0x8] sm:$0xff]
    %v3670 = vld [vmem:[%s12] sm:$0x1]
    %v3672 = vlaneseq
    %v3673 = vshrl.u32 %v3672, 7
    %v3674 = vsub.s32 0, %v3673
    %v3675 = vrot.slane %v3670, %v3674
    %vm3677 = vcmask 130048
    %v3679 = vsel %vm3677, %v3660, 0
    %v3682 = vsel %vm3677, %v3661, 0
    %v3685 = vsel %vm3677, %v3662, 0
    %v3688 = vsel %vm3677, %v3663, 0
    %v3691 = vsel %vm3677, %v3664, 0
    %v3694 = vsel %vm3677, %v3665, 0
    %v3697 = vsel %vm3677, %v3666, 0
    %v3700 = vsel %vm3677, %v3667, 0
    %3702 = vmatprep.subr.mxu0 0.0
    %3703 = vmatpush1.msra.mxu0 0.0
    %3704 = vmatprep.subr.mxu0 0.0
    %3705 = vmatpush1.msra.mxu0 0.0
    %3706 = vmatprep.subr.mxu0 0.0
    %3707 = vmatpush1.msra.mxu0 0.0
    %3708 = vmatprep.subr.mxu0 0.0
    %3709 = vmatpush1.msra.mxu0 0.0
    %3710 = vmatprep.subr.mxu0 0.0
    %3711 = vmatpush1.msra.mxu0 0.0
    %3712 = vmatprep.subr.mxu0 0.0
    %3713 = vmatpush1.msra.mxu0 0.0
    %3714 = vmatprep.subr.mxu0 0.0
    %3715 = vmatpush1.msra.mxu0 0.0
    %3716 = vmatprep.subr.mxu0 0.0
    %3717 = vmatpush1.msra.mxu0 0.0
    %3718 = vmatprep.subr.mxu0 0.0
    %3719 = vmatpush1.msra.mxu0 0.0
    %3720 = vmatprep.subr.mxu0 0.0
    %3721 = vmatpush1.msra.mxu0 0.0
    %3722 = vmatprep.subr.mxu0 0.0
    %3723 = vmatpush1.msra.mxu0 0.0
    %3724 = vmatprep.subr.mxu0 0.0
    %3725 = vmatpush1.msra.mxu0 0.0
    %3726 = vmatprep.subr.mxu0 0.0
    %3727 = vmatpush1.msra.mxu0 0.0
    %3728 = vmatprep.subr.mxu0 0.0
    %3729 = vmatpush1.msra.mxu0 0.0
    %3730 = vmatprep.subr.mxu0 0.0
    %3731 = vmatpush1.msra.mxu0 %v3669
    %3732 = vmatprep.subr.mxu0 0.0
    %3733 = vmatpush1.msra.mxu0 %v3668
    %3734 = vmatprep.subr.mxu0 0.0
    %3735 = vmatpush2.msra.mxu0 0.0
    %3736 = vmatprep.subr.mxu0 0.0
    %3737 = vmatpush2.msra.mxu0 0.0
    %3738 = vmatprep.subr.mxu0 0.0
    %3739 = vmatpush2.msra.mxu0 0.0
    %3740 = vmatprep.subr.mxu0 0.0
    %3741 = vmatpush2.msra.mxu0 0.0
    %3742 = vmatprep.subr.mxu0 0.0
    %3743 = vmatpush2.msra.mxu0 0.0
    %3744 = vmatprep.subr.mxu0 0.0
    %3745 = vmatpush2.msra.mxu0 0.0
    %3746 = vmatprep.subr.mxu0 0.0
    %3747 = vmatpush2.msra.mxu0 0.0
    %3748 = vmatprep.subr.mxu0 0.0
    %3749 = vmatpush2.msra.mxu0 0.0
    %3750 = vmatprep.subr.mxu0 0.0
    %3751 = vmatpush2.msra.mxu0 0.0
    %3752 = vmatprep.subr.mxu0 0.0
    %3753 = vmatpush2.msra.mxu0 0.0
    %3754 = vmatprep.subr.mxu0 0.0
    %3755 = vmatpush2.msra.mxu0 0.0
    %3756 = vmatprep.subr.mxu0 0.0
    %3757 = vmatpush2.msra.mxu0 0.0
    %3758 = vmatprep.subr.mxu0 0.0
    %3759 = vmatpush2.msra.mxu0 0.0
    %3760 = vmatprep.subr.mxu0 0.0
    %3761 = vmatpush2.msra.mxu0 0.0
    %3762 = vmatprep.subr.mxu0 0.0
    %3763 = vmatpush2.msra.mxu0 0.0
    %3764 = vmatprep.subr.mxu0 0.0
    %3765 = vmatpush2.msra.mxu0 0.0
    %3766 = vmatprep.mubr.f32.mxu0 0.0
    %3767 = vmatmul.mubr.f32.gmra.mxu0 %v3679
    %v3768 = vpop.f32.mrf.mxu0
    %v3769 = vadd.f32 %v3675, %v3768
    %v3770 = vpop.f32.mrf.mxu0
    %3771 = vmatprep.mubr.f32.mxu0 0.0
    %3772 = vmatmul.mubr.f32.gmra.mxu0 %v3682
    %v3773 = vpop.f32.mrf.mxu0
    %v3774 = vadd.f32 %v3675, %v3773
    %v3775 = vpop.f32.mrf.mxu0
    %3776 = vmatprep.mubr.f32.mxu0 0.0
    %3777 = vmatmul.mubr.f32.gmra.mxu0 %v3685
    %v3778 = vpop.f32.mrf.mxu0
    %v3779 = vadd.f32 %v3675, %v3778
    %v3780 = vpop.f32.mrf.mxu0
    %3781 = vmatprep.mubr.f32.mxu0 0.0
    %3782 = vmatmul.mubr.f32.gmra.mxu0 %v3688
    %v3783 = vpop.f32.mrf.mxu0
    %v3784 = vadd.f32 %v3675, %v3783
    %v3785 = vpop.f32.mrf.mxu0
    %3786 = vmatprep.mubr.f32.mxu0 0.0
    %3787 = vmatmul.mubr.f32.gmra.mxu0 %v3691
    %v3788 = vpop.f32.mrf.mxu0
    %v3789 = vadd.f32 %v3675, %v3788
    %v3790 = vpop.f32.mrf.mxu0
    %3791 = vmatprep.mubr.f32.mxu0 0.0
    %3792 = vmatmul.mubr.f32.gmra.mxu0 %v3694
    %v3793 = vpop.f32.mrf.mxu0
    %v3794 = vadd.f32 %v3675, %v3793
    %v3795 = vpop.f32.mrf.mxu0
    %3796 = vmatprep.mubr.f32.mxu0 0.0
    %3797 = vmatmul.mubr.f32.gmra.mxu0 %v3697
    %v3798 = vpop.f32.mrf.mxu0
    %v3799 = vadd.f32 %v3675, %v3798
    %v3800 = vpop.f32.mrf.mxu0
    %3801 = vmatprep.mubr.f32.mxu0 0.0
    %3802 = vmatmul.mubr.f32.gmra.mxu0 %v3700
    %v3803 = vpop.f32.mrf.mxu0
    %v3804 = vadd.f32 %v3675, %v3803
    %v3805 = vpop.f32.mrf.mxu0
    %3806 = vdwg.mxu0
    %v3807 = vtanh.pop %v3769
    %v3808 = vtanh.pop %v3774
    %v3809 = vtanh.pop %v3779
    %v3810 = vtanh.pop %v3784
    %v3811 = vtanh.pop %v3789
    %v3812 = vtanh.pop %v3794
    %v3813 = vtanh.pop %v3799
    %v3814 = vtanh.pop %v3804
    %v3815 = vld [vmem:[%s13] sm:$0x1]
    %v3816 = vld [vmem:[#allocation2] sm:$0x1]
    %3818 = vset.pattern.permute.xlu0 0
    %3819 = vperm.xlu0 %3818, %v3816
    %v3820 = vpop.permute.xlu0 %3819
    %v3822 = vlaneseq
    %v3823 = vshrl.u32 %v3822, 7
    %v3824 = vsub.s32 0, %v3823
    %v3825 = vrot.slane %v3820, %v3824
    %vm3826 = vcmask 64512
    %v3828 = vsel %vm3826, %v3815, 0
    %v3831 = vsel %vm3826, %v3807, 0
    %v3834 = vsel %vm3826, %v3808, 0
    %v3837 = vsel %vm3826, %v3809, 0
    %v3840 = vsel %vm3826, %v3810, 0
    %v3843 = vsel %vm3826, %v3811, 0
    %v3846 = vsel %vm3826, %v3812, 0
    %v3849 = vsel %vm3826, %v3813, 0
    %v3852 = vsel %vm3826, %v3814, 0
    %3854 = vmatprep.subr.mxu0 0.0
    %3855 = vmatpush1.xpose.msra.mxu0 0.0
    %3856 = vmatprep.subr.mxu0 0.0
    %3857 = vmatpush1.xpose.msra.mxu0 0.0
    %3858 = vmatprep.subr.mxu0 0.0
    %3859 = vmatpush1.xpose.msra.mxu0 0.0
    %3860 = vmatprep.subr.mxu0 0.0
    %3861 = vmatpush1.xpose.msra.mxu0 0.0
    %3862 = vmatprep.subr.mxu0 0.0
    %3863 = vmatpush1.xpose.msra.mxu0 0.0
    %3864 = vmatprep.subr.mxu0 0.0
    %3865 = vmatpush1.xpose.msra.mxu0 0.0
    %3866 = vmatprep.subr.mxu0 0.0
    %3867 = vmatpush1.xpose.msra.mxu0 0.0
    %3868 = vmatprep.subr.mxu0 0.0
    %3869 = vmatpush1.xpose.msra.mxu0 0.0
    %3870 = vmatprep.subr.mxu0 0.0
    %3871 = vmatpush1.xpose.msra.mxu0 %v3852
    %3872 = vmatprep.subr.mxu0 0.0
    %3873 = vmatpush1.xpose.msra.mxu0 %v3849
    %3874 = vmatprep.subr.mxu0 0.0
    %3875 = vmatpush1.xpose.msra.mxu0 %v3846
    %3876 = vmatprep.subr.mxu0 0.0
    %3877 = vmatpush1.xpose.msra.mxu0 %v3843
    %3878 = vmatprep.subr.mxu0 0.0
    %3879 = vmatpush1.xpose.msra.mxu0 %v3840
    %3880 = vmatprep.subr.mxu0 0.0
    %3881 = vmatpush1.xpose.msra.mxu0 %v3837
    %3882 = vmatprep.subr.mxu0 0.0
    %3883 = vmatpush1.xpose.msra.mxu0 %v3834
    %3884 = vmatprep.subr.mxu0 0.0
    %3885 = vmatpush1.xpose.msra.mxu0 %v3831
    %3886 = vmatprep.subr.mxu0 0.0
    %3887 = vmatpush2.xpose.msra.mxu0 0.0
    %3888 = vmatprep.subr.mxu0 0.0
    %3889 = vmatpush2.xpose.msra.mxu0 0.0
    %3890 = vmatprep.subr.mxu0 0.0
    %3891 = vmatpush2.xpose.msra.mxu0 0.0
    %3892 = vmatprep.subr.mxu0 0.0
    %3893 = vmatpush2.xpose.msra.mxu0 0.0
    %3894 = vmatprep.subr.mxu0 0.0
    %3895 = vmatpush2.xpose.msra.mxu0 0.0
    %3896 = vmatprep.subr.mxu0 0.0
    %3897 = vmatpush2.xpose.msra.mxu0 0.0
    %3898 = vmatprep.subr.mxu0 0.0
    %3899 = vmatpush2.xpose.msra.mxu0 0.0
    %3900 = vmatprep.subr.mxu0 0.0
    %3901 = vmatpush2.xpose.msra.mxu0 0.0
    %3902 = vmatprep.subr.mxu0 0.0
    %3903 = vmatpush2.xpose.msra.mxu0 0.0
    %3904 = vmatprep.subr.mxu0 0.0
    %3905 = vmatpush2.xpose.msra.mxu0 0.0
    %3906 = vmatprep.subr.mxu0 0.0
    %3907 = vmatpush2.xpose.msra.mxu0 0.0
    %3908 = vmatprep.subr.mxu0 0.0
    %3909 = vmatpush2.xpose.msra.mxu0 0.0
    %3910 = vmatprep.subr.mxu0 0.0
    %3911 = vmatpush2.xpose.msra.mxu0 0.0
    %3912 = vmatprep.subr.mxu0 0.0
    %3913 = vmatpush2.xpose.msra.mxu0 0.0
    %3914 = vmatprep.subr.mxu0 0.0
    %3915 = vmatpush2.xpose.msra.mxu0 0.0
    %3916 = vmatprep.subr.mxu0 0.0
    %3917 = vmatpush2.xpose.msra.mxu0 0.0
    %3918 = vmatprep.mubr.f32.mxu0 0.0
    %3919 = vmatmul.mubr.f32.gmra.mxu0 %v3828
    %v3920 = vpop.f32.mrf.mxu0
    %v3921 = vadd.f32 %v3825, %v3920
    %v3922 = vpop.f32.mrf.mxu0
    %3923 = vdwg.mxu0
    %vm3924 = vcmask 516096
    %3925 = vst.msk [vmem:[#allocation14] sm:$0x1] %vm3924, %v3921
    // Predicated region
    $region86: #{_nli_call.1} parent=1 // pred_check
      _
    $region87: #{_nli_call.1} parent=1 // pred_check_branch
      %3927 = sbr.rel (0) target = $region89
    $region88: #{_nli_call.1} parent=1 // pred_region
      %s3929 = ssub.s32 16, 16
      %3930 = vsyncadd [#allocation5], %s3929
      %s3932 = sshll.u32 [#allocation14], 4
      %s3933 = int_to_ptr.vmem [resolvable:$true] %s3932
      %3935 = dma.vmem_to_hbm [thread:$0]  %s3933, 16, %s15, [#allocation5]
    $region89: #{_nli_call.1} parent=1 // pred_fallthru
      _
    // Predicated region
    $region90: #{_nli_call.1} parent=1 // pred_check
      _
    $region91: #{_nli_call.1} parent=1 // pred_check_branch
      %3937 = sbr.rel (0) target = $region93
    $region92: #{_nli_call.1} parent=1 // pred_region
      %3938 = dma.done [#allocation5], 16
    $region93: #{_nli_call.1} parent=1 // pred_fallthru
      _
    %3939 = vsyncpa [#allocation4], 1
    %3940 = vsyncpa [#allocation7], 1
    %3941 = vsyncpa [#allocation10], 1
    %3942 = vsyncpa [#allocation13], 1
    %3943 = vsyncpa [#allocation5], 1

// kernel: _nli_call.1
$region0: #{_nli_call.1}
  #allocation0 [shape = 'u32[]', space=smem, size = 0x4, offset = 0x4, fixed_abs, tag = 'smem constant byte address 0x4 - core index']
  #allocation1 [shape = 'u32[144,128]{1,0:T(1,128)}', space=vmem, size = 0x12000, scoped, tag = 'internal scratch']
  #allocation2 [shape = 'f32[1,1]{1,0:T(1,128)S(1)}', space=vmem, size = 0x200, scoped, tag = 'scoped memory for _nli_call.1']
  %s0 = inlined_call_operand.hbm [shape: f32[64,1024], index: 0, kind: input, shape index: {}]
  %s1 = inlined_call_operand.hbm [shape: f32[64,1024], index: 1, kind: input, shape index: {}]
  %s2 = inlined_call_operand.hbm [shape: f32[1024,256], index: 2, kind: input, shape index: {}]
  %s3 = inlined_call_operand.hbm [shape: f32[1024,256], index: 3, kind: input, shape index: {}]
  %s4 = inlined_call_operand.hbm [shape: f32[1024,256], index: 4, kind: input, shape index: {}]
  %s5 = inlined_call_operand.hbm [shape: f32[1024,256], index: 5, kind: input, shape index: {}]
  %s6 = inlined_call_operand.vmem [shape: f32[1,256], index: 6, kind: input, shape index: {}]
  %s7 = inlined_call_operand.vmem [shape: f32[256,64], index: 7, kind: input, shape index: {}]
  %s8 = inlined_call_operand.vmem [shape: f32[1,64], index: 8, kind: input, shape index: {}]
  %s9 = inlined_call_operand.vmem [shape: f32[64,16], index: 9, kind: input, shape index: {}]
  %s10 = inlined_call_operand.vmem [shape: f32[1,16], index: 10, kind: input, shape index: {}]
  %s11 = inlined_call_operand.vmem [shape: f32[16,8], index: 11, kind: input, shape index: {}]
  %s12 = inlined_call_operand.vmem [shape: f32[1,8], index: 12, kind: input, shape index: {}]
  %s13 = inlined_call_operand.vmem [shape: f32[1,8], index: 13, kind: input, shape index: {}]
  %s14 = inlined_call_operand.<no memory space> [shape: f32[1,1], index: 14, kind: input, shape index: {}]
  %s15 = inlined_call_operand.hbm [shape: f32[1,1,64], index: 15, kind: output, shape index: {}]
  %s16 = sld [smem:[#allocation0]]
  $region94: #{_nli_call.1} parent=0
    _
  %s18 = ssub.s32 1, %s16
  %s19 = scalar_select 0, %s18, %s16
  %v20 = vstv %s14
  %21 = vst [vmem:[#allocation2] sm:$0x1] %v20
  $region1: #{_nli_call.1} parent=0
    #allocation3 [shape = 'u8[262144]{0}', space=vmem, size = 0x40000, scoped, tag = 'input window, operand 0, single buffered']
    #allocation4 [shape = 's32[1]{0}', space=sflag, size = 0x4, scoped, tag = 'scoped memory for _nli_call.1']
    #allocation5 [shape = 's32[1]{0}', space=sflag, size = 0x4, scoped, tag = 'scoped memory for _nli_call.1']
    #allocation6 [shape = 'u8[262144]{0}', space=vmem, size = 0x40000, scoped, tag = 'input window, operand 1, single buffered']
    #allocation7 [shape = 's32[1]{0}', space=sflag, size = 0x4, scoped, tag = 'scoped memory for _nli_call.1']
    #allocation8 [shape = 'u8[1048576]{0}', space=vmem, size = 0x100000, scoped, tag = 'input window, operand 2, single buffered']
    #allocation9 [shape = 'u8[1048576]{0}', space=vmem, size = 0x100000, scoped, tag = 'input window, operand 3, single buffered']
    #allocation10 [shape = 's32[1]{0}', space=sflag, size = 0x4, scoped, tag = 'scoped memory for _nli_call.1']
    #allocation11 [shape = 'u8[1048576]{0}', space=vmem, size = 0x100000, scoped, tag = 'input window, operand 4, single buffered']
    #allocation12 [shape = 'u8[1048576]{0}', space=vmem, size = 0x100000, scoped, tag = 'input window, operand 5, single buffered']
    #allocation13 [shape = 's32[1]{0}', space=sflag, size = 0x4, scoped, tag = 'scoped memory for _nli_call.1']
    #allocation14 [shape = 'u8[512]{0}', space=vmem, size = 0x400, scoped, tag = 'output window, operand 0, single buffered']
    %22 = vsyncpa [#allocation4], 0
    %23 = vsyncpa [#allocation7], 0
    %24 = vsyncpa [#allocation10], 0
    %25 = vsyncpa [#allocation13], 0
    %26 = vsyncpa [#allocation5], 0
    // Predicated region
    $region2: #{_nli_call.1} parent=1 // pred_check
      _
    $region3: #{_nli_call.1} parent=1 // pred_check_branch
      %28 = sbr.rel (0) target = $region5
    $region4: #{_nli_call.1} parent=1 // pred_region
      %s30 = ssub.s32 8192, 8192
      %31 = vsyncadd [#allocation4], %s30
      %s32 = sshll.u32 [#allocation3], 4
      %s33 = int_to_ptr.vmem [resolvable:$true] %s32
      %38 = dma.hbm_to_vmem [thread:$0]  %s0, 8192, %s33, [#allocation4], 1024, 1024, 64
    $region5: #{_nli_call.1} parent=1 // pred_fallthru
      _
    // Predicated region
    $region6: #{_nli_call.1} parent=1 // pred_check
      _
    $region7: #{_nli_call.1} parent=1 // pred_check_branch
      %40 = sbr.rel (0) target = $region9
    $region8: #{_nli_call.1} parent=1 // pred_region
      %s42 = ssub.s32 8192, 8192
      %43 = vsyncadd [#allocation7], %s42
      %s44 = sshll.u32 [#allocation6], 4
      %s45 = int_to_ptr.vmem [resolvable:$true] %s44
      %50 = dma.hbm_to_vmem [thread:$0]  %s1, 8192, %s45, [#allocation7], 1024, 1024, 64
    $region9: #{_nli_call.1} parent=1 // pred_fallthru
      _
    // Predicated region
    $region10: #{_nli_call.1} parent=1 // pred_check
      _
    $region11: #{_nli_call.1} parent=1 // pred_check_branch
      %52 = sbr.rel (0) target = $region13
    $region12: #{_nli_call.1} parent=1 // pred_region
      %s54 = ssub.s32 32768, 32768
      %55 = vsyncadd [#allocation7], %s54
      %s56 = sshll.u32 [#allocation8], 4
      %s57 = int_to_ptr.vmem [resolvable:$true] %s56
      %62 = dma.hbm_to_vmem [thread:$0]  %s2, 32768, %s57, [#allocation7], 256, 256, 16
    $region13: #{_nli_call.1} parent=1 // pred_fallthru
      _
    // Predicated region
    $region14: #{_nli_call.1} parent=1 // pred_check
      _
    $region15: #{_nli_call.1} parent=1 // pred_check_branch
      %64 = sbr.rel (0) target = $region17
    $region16: #{_nli_call.1} parent=1 // pred_region
      %s66 = ssub.s32 32768, 32768
      %67 = vsyncadd [#allocation10], %s66
      %s68 = sshll.u32 [#allocation9], 4
      %s69 = int_to_ptr.vmem [resolvable:$true] %s68
      %74 = dma.hbm_to_vmem [thread:$0]  %s3, 32768, %s69, [#allocation10], 256, 256, 16
    $region17: #{_nli_call.1} parent=1 // pred_fallthru
      _
    // Predicated region
    $region18: #{_nli_call.1} parent=1 // pred_check
      _
    $region19: #{_nli_call.1} parent=1 // pred_check_branch
      %76 = sbr.rel (0) target = $region21
    $region20: #{_nli_call.1} parent=1 // pred_region
      %s78 = ssub.s32 32768, 32768
      %79 = vsyncadd [#allocation10], %s78
      %s80 = sshll.u32 [#allocation11], 4
      %s81 = int_to_ptr.vmem [resolvable:$true] %s80
      %86 = dma.hbm_to_vmem [thread:$0]  %s4, 32768, %s81, [#allocation10], 256, 256, 16
    $region21: #{_nli_call.1} parent=1 // pred_fallthru
      _
    // Predicated region
    $region22: #{_nli_call.1} parent=1 // pred_check
      _
    $region23: #{_nli_call.1} parent=1 // pred_check_branch
      %88 = sbr.rel (0) target = $region25
    $region24: #{_nli_call.1} parent=1 // pred_region
      %s90 = ssub.s32 32768, 32768
      %91 = vsyncadd [#allocation13], %s90
      %s92 = sshll.u32 [#allocation12], 4
      %s93 = int_to_ptr.vmem [resolvable:$true] %s92
      %98 = dma.hbm_to_vmem [thread:$0]  %s5, 32768, %s93, [#allocation13], 256, 256, 16
    $region25: #{_nli_call.1} parent=1 // pred_fallthru
      _
    // Predicated region
    $region26: #{_nli_call.1} parent=1 // pred_check
      _
    $region27: #{_nli_call.1} parent=1 // pred_check_branch
      %100 = sbr.rel (0) target = $region29
    $region28: #{_nli_call.1} parent=1 // pred_region
      _
    $region29: #{_nli_call.1} parent=1 // pred_fallthru
      _
    // Predicated region
    $region30: #{_nli_call.1} parent=1 // pred_check
      _
    $region31: #{_nli_call.1} parent=1 // pred_check_branch
      %102 = sbr.rel (0) target = $region33
    $region32: #{_nli_call.1} parent=1 // pred_region
      _
    $region33: #{_nli_call.1} parent=1 // pred_fallthru
      _
    // Predicated region
    $region34: #{_nli_call.1} parent=1 // pred_check
      _
    $region35: #{_nli_call.1} parent=1 // pred_check_branch
      %104 = sbr.rel (0) target = $region37
    $region36: #{_nli_call.1} parent=1 // pred_region
      _
    $region37: #{_nli_call.1} parent=1 // pred_fallthru
      _
    // Predicated region
    $region38: #{_nli_call.1} parent=1 // pred_check
      _
    $region39: #{_nli_call.1} parent=1 // pred_check_branch
      %106 = sbr.rel (0) target = $region41
    $region40: #{_nli_call.1} parent=1 // pred_region
      _
    $region41: #{_nli_call.1} parent=1 // pred_fallthru
      _
    // Predicated region
    $region42: #{_nli_call.1} parent=1 // pred_check
      _
    $region43: #{_nli_call.1} parent=1 // pred_check_branch
      %108 = sbr.rel (0) target = $region45
    $region44: #{_nli_call.1} parent=1 // pred_region
      _
    $region45: #{_nli_call.1} parent=1 // pred_fallthru
      _
    // Predicated region
    $region46: #{_nli_call.1} parent=1 // pred_check
      _
    $region47: #{_nli_call.1} parent=1 // pred_check_branch
      %110 = sbr.rel (0) target = $region49
    $region48: #{_nli_call.1} parent=1 // pred_region
      _
    $region49: #{_nli_call.1} parent=1 // pred_fallthru
      _
    // Predicated region
    $region50: #{_nli_call.1} parent=1 // pred_check
      _
    $region51: #{_nli_call.1} parent=1 // pred_check_branch
      %112 = sbr.rel (0) target = $region53
    $region52: #{_nli_call.1} parent=1 // pred_region
      _
    $region53: #{_nli_call.1} parent=1 // pred_fallthru
      _
    // Predicated region
    $region54: #{_nli_call.1} parent=1 // pred_check
      _
    $region55: #{_nli_call.1} parent=1 // pred_check_branch
      %114 = sbr.rel (0) target = $region57
    $region56: #{_nli_call.1} parent=1 // pred_region
      _
    $region57: #{_nli_call.1} parent=1 // pred_fallthru
      _
    // Predicated region
    $region58: #{_nli_call.1} parent=1 // pred_check
      _
    $region59: #{_nli_call.1} parent=1 // pred_check_branch
      %116 = sbr.rel (0) target = $region61
    $region60: #{_nli_call.1} parent=1 // pred_region
      _
    $region61: #{_nli_call.1} parent=1 // pred_fallthru
      _
    // Predicated region
    $region62: #{_nli_call.1} parent=1 // pred_check
      _
    $region63: #{_nli_call.1} parent=1 // pred_check_branch
      %118 = sbr.rel (0) target = $region65
    $region64: #{_nli_call.1} parent=1 // pred_region
      %119 = dma.done [#allocation4], 8192
    $region65: #{_nli_call.1} parent=1 // pred_fallthru
      _
    // Predicated region
    $region66: #{_nli_call.1} parent=1 // pred_check
      _
    $region67: #{_nli_call.1} parent=1 // pred_check_branch
      %121 = sbr.rel (0) target = $region69
    $region68: #{_nli_call.1} parent=1 // pred_region
      %122 = dma.done [#allocation7], 8192
    $region69: #{_nli_call.1} parent=1 // pred_fallthru
      _
    // Predicated region
    $region70: #{_nli_call.1} parent=1 // pred_check
      _
    $region71: #{_nli_call.1} parent=1 // pred_check_branch
      %124 = sbr.rel (0) target = $region73
    $region72: #{_nli_call.1} parent=1 // pred_region
      %125 = dma.done [#allocation7], 32768
    $region73: #{_nli_call.1} parent=1 // pred_fallthru
      _
    // Predicated region
    $region74: #{_nli_call.1} parent=1 // pred_check
      _
    $region75: #{_nli_call.1} parent=1 // pred_check_branch
      %127 = sbr.rel (0) target = $region77
    $region76: #{_nli_call.1} parent=1 // pred_region
      %128 = dma.done [#allocation10], 32768
    $region77: #{_nli_call.1} parent=1 // pred_fallthru
      _
    // Predicated region
    $region78: #{_nli_call.1} parent=1 // pred_check
      _
    $region79: #{_nli_call.1} parent=1 // pred_check_branch
      %130 = sbr.rel (0) target = $region81
    $region80: #{_nli_call.1} parent=1 // pred_region
      %131 = dma.done [#allocation10], 32768
    $region81: #{_nli_call.1} parent=1 // pred_fallthru
      _
    // Predicated region
    $region82: #{_nli_call.1} parent=1 // pred_check
      _
    $region83: #{_nli_call.1} parent=1 // pred_check_branch
      %133 = sbr.rel (0) target = $region85
    $region84: #{_nli_call.1} parent=1 // pred_region
      %134 = dma.done [#allocation13], 32768
    $region85: #{_nli_call.1} parent=1 // pred_fallthru
      _
    %v135 = vld [vmem:[#allocation3] sm:$0xff]
    %v136 = vld [vmem:[#allocation3 + $0x8] sm:$0xff]
    %v137 = vld [vmem:[#allocation3 + $0x10] sm:$0xff]
    %v138 = vld [vmem:[#allocation3 + $0x18] sm:$0xff]
    %v139 = vld [vmem:[#allocation3 + $0x20] sm:$0xff]
    %v140 = vld [vmem:[#allocation3 + $0x28] sm:$0xff]
    %v141 = vld [vmem:[#allocation3 + $0x30] sm:$0xff]
    %v142 = vld [vmem:[#allocation3 + $0x38] sm:$0xff]
    %v143 = vld [vmem:[#allocation3 + $0x40] sm:$0xff]
    %v144 = vld [vmem:[#allocation3 + $0x48] sm:$0xff]
    %v145 = vld [vmem:[#allocation3 + $0x50] sm:$0xff]
    %v146 = vld [vmem:[#allocation3 + $0x58] sm:$0xff]
    %v147 = vld [vmem:[#allocation3 + $0x60] sm:$0xff]
    %v148 = vld [vmem:[#allocation3 + $0x68] sm:$0xff]
    %v149 = vld [vmem:[#allocation3 + $0x70] sm:$0xff]
    %v150 = vld [vmem:[#allocation3 + $0x78] sm:$0xff]
    %v151 = vld [vmem:[#allocation3 + $0x80] sm:$0xff]
    %v152 = vld [vmem:[#allocation3 + $0x88] sm:$0xff]
    %v153 = vld [vmem:[#allocation3 + $0x90] sm:$0xff]
    %v154 = vld [vmem:[#allocation3 + $0x98] sm:$0xff]
    %v155 = vld [vmem:[#allocation3 + $0xa0] sm:$0xff]
    %v156 = vld [vmem:[#allocation3 + $0xa8] sm:$0xff]
    %v157 = vld [vmem:[#allocation3 + $0xb0] sm:$0xff]
    %v158 = vld [vmem:[#allocation3 + $0xb8] sm:$0xff]
    %v159 = vld [vmem:[#allocation3 + $0xc0] sm:$0xff]
    %v160 = vld [vmem:[#allocation3 + $0xc8] sm:$0xff]
    %v161 = vld [vmem:[#allocation3 + $0xd0] sm:$0xff]
    %v162 = vld [vmem:[#allocation3 + $0xd8] sm:$0xff]
    %v163 = vld [vmem:[#allocation3 + $0xe0] sm:$0xff]
    %v164 = vld [vmem:[#allocation3 + $0xe8] sm:$0xff]
    %v165 = vld [vmem:[#allocation3 + $0xf0] sm:$0xff]
    %v166 = vld [vmem:[#allocation3 + $0xf8] sm:$0xff]
    %v167 = vld [vmem:[#allocation3 + $0x100] sm:$0xff]
    %v168 = vld [vmem:[#allocation3 + $0x108] sm:$0xff]
    %v169 = vld [vmem:[#allocation3 + $0x110] sm:$0xff]
    %v170 = vld [vmem:[#allocation3 + $0x118] sm:$0xff]
    %v171 = vld [vmem:[#allocation3 + $0x120] sm:$0xff]
    %v172 = vld [vmem:[#allocation3 + $0x128] sm:$0xff]
    %v173 = vld [vmem:[#allocation3 + $0x130] sm:$0xff]
    %v174 = vld [vmem:[#allocation3 + $0x138] sm:$0xff]
    %v175 = vld [vmem:[#allocation3 + $0x140] sm:$0xff]
    %v176 = vld [vmem:[#allocation3 + $0x148] sm:$0xff]
    %v177 = vld [vmem:[#allocation3 + $0x150] sm:$0xff]
    %v178 = vld [vmem:[#allocation3 + $0x158] sm:$0xff]
    %v179 = vld [vmem:[#allocation3 + $0x160] sm:$0xff]
    %v180 = vld [vmem:[#allocation3 + $0x168] sm:$0xff]
    %v181 = vld [vmem:[#allocation3 + $0x170] sm:$0xff]
    %v182 = vld [vmem:[#allocation3 + $0x178] sm:$0xff]
    %v183 = vld [vmem:[#allocation3 + $0x180] sm:$0xff]
    %v184 = vld [vmem:[#allocation3 + $0x188] sm:$0xff]
    %v185 = vld [vmem:[#allocation3 + $0x190] sm:$0xff]
    %v186 = vld [vmem:[#allocation3 + $0x198] sm:$0xff]
    %v187 = vld [vmem:[#allocation3 + $0x1a0] sm:$0xff]
    %v188 = vld [vmem:[#allocation3 + $0x1a8] sm:$0xff]
    %v189 = vld [vmem:[#allocation3 + $0x1b0] sm:$0xff]
    %v190 = vld [vmem:[#allocation3 + $0x1b8] sm:$0xff]
    %v191 = vld [vmem:[#allocation3 + $0x1c0] sm:$0xff]
    %v192 = vld [vmem:[#allocation3 + $0x1c8] sm:$0xff]
    %v193 = vld [vmem:[#allocation3 + $0x1d0] sm:$0xff]
    %v194 = vld [vmem:[#allocation3 + $0x1d8] sm:$0xff]
    %v195 = vld [vmem:[#allocation3 + $0x1e0] sm:$0xff]
    %v196 = vld [vmem:[#allocation3 + $0x1e8] sm:$0xff]
    %v197 = vld [vmem:[#allocation3 + $0x1f0] sm:$0xff]
    %v198 = vld [vmem:[#allocation3 + $0x1f8] sm:$0xff]
    %v199 = vld [vmem:[#allocation6] sm:$0xff]
    %v200 = vld [vmem:[#allocation6 + $0x8] sm:$0xff]
    %v201 = vld [vmem:[#allocation6 + $0x10] sm:$0xff]
    %v202 = vld [vmem:[#allocation6 + $0x18] sm:$0xff]
    %v203 = vld [vmem:[#allocation6 + $0x20] sm:$0xff]
    %v204 = vld [vmem:[#allocation6 + $0x28] sm:$0xff]
    %v205 = vld [vmem:[#allocation6 + $0x30] sm:$0xff]
    %v206 = vld [vmem:[#allocation6 + $0x38] sm:$0xff]
    %v207 = vld [vmem:[#allocation6 + $0x40] sm:$0xff]
    %v208 = vld [vmem:[#allocation6 + $0x48] sm:$0xff]
    %v209 = vld [vmem:[#allocation6 + $0x50] sm:$0xff]
    %v210 = vld [vmem:[#allocation6 + $0x58] sm:$0xff]
    %v211 = vld [vmem:[#allocation6 + $0x60] sm:$0xff]
    %v212 = vld [vmem:[#allocation6 + $0x68] sm:$0xff]
    %v213 = vld [vmem:[#allocation6 + $0x70] sm:$0xff]
    %v214 = vld [vmem:[#allocation6 + $0x78] sm:$0xff]
    %v215 = vld [vmem:[#allocation6 + $0x80] sm:$0xff]
    %v216 = vld [vmem:[#allocation6 + $0x88] sm:$0xff]
    %v217 = vld [vmem:[#allocation6 + $0x90] sm:$0xff]
    %v218 = vld [vmem:[#allocation6 + $0x98] sm:$0xff]
    %v219 = vld [vmem:[#allocation6 + $0xa0] sm:$0xff]
    %v220 = vld [vmem:[#allocation6 + $0xa8] sm:$0xff]
    %v221 = vld [vmem:[#allocation6 + $0xb0] sm:$0xff]
    %v222 = vld [vmem:[#allocation6 + $0xb8] sm:$0xff]
    %v223 = vld [vmem:[#allocation6 + $0xc0] sm:$0xff]
    %v224 = vld [vmem:[#allocation6 + $0xc8] sm:$0xff]
    %v225 = vld [vmem:[#allocation6 + $0xd0] sm:$0xff]
    %v226 = vld [vmem:[#allocation6 + $0xd8] sm:$0xff]
    %v227 = vld [vmem:[#allocation6 + $0xe0] sm:$0xff]
    %v228 = vld [vmem:[#allocation6 + $0xe8] sm:$0xff]
    %v229 = vld [vmem:[#allocation6 + $0xf0] sm:$0xff]
    %v230 = vld [vmem:[#allocation6 + $0xf8] sm:$0xff]
    %v231 = vld [vmem:[#allocation6 + $0x100] sm:$0xff]
    %v232 = vld [vmem:[#allocation6 + $0x108] sm:$0xff]
    %v233 = vld [vmem:[#allocation6 + $0x110] sm:$0xff]
    %v234 = vld [vmem:[#allocation6 + $0x118] sm:$0xff]
    %v235 = vld [vmem:[#allocation6 + $0x120] sm:$0xff]
    %v236 = vld [vmem:[#allocation6 + $0x128] sm:$0xff]
    %v237 = vld [vmem:[#allocation6 + $0x130] sm:$0xff]
    %v238 = vld [vmem:[#allocation6 + $0x138] sm:$0xff]
    %v239 = vld [vmem:[#allocation6 + $0x140] sm:$0xff]
    %v240 = vld [vmem:[#allocation6 + $0x148] sm:$0xff]
    %v241 = vld [vmem:[#allocation6 + $0x150] sm:$0xff]
    %v242 = vld [vmem:[#allocation6 + $0x158] sm:$0xff]
    %v243 = vld [vmem:[#allocation6 + $0x160] sm:$0xff]
    %v244 = vld [vmem:[#allocation6 + $0x168] sm:$0xff]
    %v245 = vld [vmem:[#allocation6 + $0x170] sm:$0xff]
    %v246 = vld [vmem:[#allocation6 + $0x178] sm:$0xff]
    %v247 = vld [vmem:[#allocation6 + $0x180] sm:$0xff]
    %v248 = vld [vmem:[#allocation6 + $0x188] sm:$0xff]
    %v249 = vld [vmem:[#allocation6 + $0x190] sm:$0xff]
    %v250 = vld [vmem:[#allocation6 + $0x198] sm:$0xff]
    %v251 = vld [vmem:[#allocation6 + $0x1a0] sm:$0xff]
    %v252 = vld [vmem:[#allocation6 + $0x1a8] sm:$0xff]
    %v253 = vld [vmem:[#allocation6 + $0x1b0] sm:$0xff]
    %v254 = vld [vmem:[#allocation6 + $0x1b8] sm:$0xff]
    %v255 = vld [vmem:[#allocation6 + $0x1c0] sm:$0xff]
    %v256 = vld [vmem:[#allocation6 + $0x1c8] sm:$0xff]
    %v257 = vld [vmem:[#allocation6 + $0x1d0] sm:$0xff]
    %v258 = vld [vmem:[#allocation6 + $0x1d8] sm:$0xff]
    %v259 = vld [vmem:[#allocation6 + $0x1e0] sm:$0xff]
    %v260 = vld [vmem:[#allocation6 + $0x1e8] sm:$0xff]
    %v261 = vld [vmem:[#allocation6 + $0x1f0] sm:$0xff]
    %v262 = vld [vmem:[#allocation6 + $0x1f8] sm:$0xff]
    %v263 = vld [vmem:[#allocation8] sm:$0xff]
    %v264 = vld [vmem:[#allocation8 + $0x8] sm:$0xff]
    %v265 = vld [vmem:[#allocation8 + $0x10] sm:$0xff]
    %v266 = vld [vmem:[#allocation8 + $0x18] sm:$0xff]
    %v267 = vld [vmem:[#allocation8 + $0x20] sm:$0xff]
    %v268 = vld [vmem:[#allocation8 + $0x28] sm:$0xff]
    %v269 = vld [vmem:[#allocation8 + $0x30] sm:$0xff]
    %v270 = vld [vmem:[#allocation8 + $0x38] sm:$0xff]
    %v271 = vld [vmem:[#allocation8 + $0x40] sm:$0xff]
    %v272 = vld [vmem:[#allocation8 + $0x48] sm:$0xff]
    %v273 = vld [vmem:[#allocation8 + $0x50] sm:$0xff]
    %v274 = vld [vmem:[#allocation8 + $0x58] sm:$0xff]
    %v275 = vld [vmem:[#allocation8 + $0x60] sm:$0xff]
    %v276 = vld [vmem:[#allocation8 + $0x68] sm:$0xff]
    %v277 = vld [vmem:[#allocation8 + $0x70] sm:$0xff]
    %v278 = vld [vmem:[#allocation8 + $0x78] sm:$0xff]
    %v279 = vld [vmem:[#allocation8 + $0x80] sm:$0xff]
    %v280 = vld [vmem:[#allocation8 + $0x88] sm:$0xff]
    %v281 = vld [vmem:[#allocation8 + $0x90] sm:$0xff]
    %v282 = vld [vmem:[#allocation8 + $0x98] sm:$0xff]
    %v283 = vld [vmem:[#allocation8 + $0xa0] sm:$0xff]
    %v284 = vld [vmem:[#allocation8 + $0xa8] sm:$0xff]
    %v285 = vld [vmem:[#allocation8 + $0xb0] sm:$0xff]
    %v286 = vld [vmem:[#allocation8 + $0xb8] sm:$0xff]
    %v287 = vld [vmem:[#allocation8 + $0xc0] sm:$0xff]
    %v288 = vld [vmem:[#allocation8 + $0xc8] sm:$0xff]
    %v289 = vld [vmem:[#allocation8 + $0xd0] sm:$0xff]
    %v290 = vld [vmem:[#allocation8 + $0xd8] sm:$0xff]
    %v291 = vld [vmem:[#allocation8 + $0xe0] sm:$0xff]
    %v292 = vld [vmem:[#allocation8 + $0xe8] sm:$0xff]
    %v293 = vld [vmem:[#allocation8 + $0xf0] sm:$0xff]
    %v294 = vld [vmem:[#allocation8 + $0xf8] sm:$0xff]
    %v295 = vld [vmem:[#allocation8 + $0x100] sm:$0xff]
    %v296 = vld [vmem:[#allocation8 + $0x108] sm:$0xff]
    %v297 = vld [vmem:[#allocation8 + $0x110] sm:$0xff]
    %v298 = vld [vmem:[#allocation8 + $0x118] sm:$0xff]
    %v299 = vld [vmem:[#allocation8 + $0x120] sm:$0xff]
    %v300 = vld [vmem:[#allocation8 + $0x128] sm:$0xff]
    %v301 = vld [vmem:[#allocation8 + $0x130] sm:$0xff]
    %v302 = vld [vmem:[#allocation8 + $0x138] sm:$0xff]
    %v303 = vld [vmem:[#allocation8 + $0x140] sm:$0xff]
    %v304 = vld [vmem:[#allocation8 + $0x148] sm:$0xff]
    %v305 = vld [vmem:[#allocation8 + $0x150] sm:$0xff]
    %v306 = vld [vmem:[#allocation8 + $0x158] sm:$0xff]
    %v307 = vld [vmem:[#allocation8 + $0x160] sm:$0xff]
    %v308 = vld [vmem:[#allocation8 + $0x168] sm:$0xff]
    %v309 = vld [vmem:[#allocation8 + $0x170] sm:$0xff]
    %v310 = vld [vmem:[#allocation8 + $0x178] sm:$0xff]
    %v311 = vld [vmem:[#allocation8 + $0x180] sm:$0xff]
    %v312 = vld [vmem:[#allocation8 + $0x188] sm:$0xff]
    %v313 = vld [vmem:[#allocation8 + $0x190] sm:$0xff]
    %v314 = vld [vmem:[#allocation8 + $0x198] sm:$0xff]
    %v315 = vld [vmem:[#allocation8 + $0x1a0] sm:$0xff]
    %v316 = vld [vmem:[#allocation8 + $0x1a8] sm:$0xff]
    %v317 = vld [vmem:[#allocation8 + $0x1b0] sm:$0xff]
    %v318 = vld [vmem:[#allocation8 + $0x1b8] sm:$0xff]
    %v319 = vld [vmem:[#allocation8 + $0x1c0] sm:$0xff]
    %v320 = vld [vmem:[#allocation8 + $0x1c8] sm:$0xff]
    %v321 = vld [vmem:[#allocation8 + $0x1d0] sm:$0xff]
    %v322 = vld [vmem:[#allocation8 + $0x1d8] sm:$0xff]
    %v323 = vld [vmem:[#allocation8 + $0x1e0] sm:$0xff]
    %v324 = vld [vmem:[#allocation8 + $0x1e8] sm:$0xff]
    %v325 = vld [vmem:[#allocation8 + $0x1f0] sm:$0xff]
    %v326 = vld [vmem:[#allocation8 + $0x1f8] sm:$0xff]
    %v327 = vld [vmem:[#allocation8 + $0x200] sm:$0xff]
    %v328 = vld [vmem:[#allocation8 + $0x208] sm:$0xff]
    %v329 = vld [vmem:[#allocation8 + $0x210] sm:$0xff]
    %v330 = vld [vmem:[#allocation8 + $0x218] sm:$0xff]
    %v331 = vld [vmem:[#allocation8 + $0x220] sm:$0xff]
    %v332 = vld [vmem:[#allocation8 + $0x228] sm:$0xff]
    %v333 = vld [vmem:[#allocation8 + $0x230] sm:$0xff]
    %v334 = vld [vmem:[#allocation8 + $0x238] sm:$0xff]
    %v335 = vld [vmem:[#allocation8 + $0x240] sm:$0xff]
    %v336 = vld [vmem:[#allocation8 + $0x248] sm:$0xff]
    %v337 = vld [vmem:[#allocation8 + $0x250] sm:$0xff]
    %v338 = vld [vmem:[#allocation8 + $0x258] sm:$0xff]
    %v339 = vld [vmem:[#allocation8 + $0x260] sm:$0xff]
    %v340 = vld [vmem:[#allocation8 + $0x268] sm:$0xff]
    %v341 = vld [vmem:[#allocation8 + $0x270] sm:$0xff]
    %v342 = vld [vmem:[#allocation8 + $0x278] sm:$0xff]
    %v343 = vld [vmem:[#allocation8 + $0x280] sm:$0xff]
    %v344 = vld [vmem:[#allocation8 + $0x288] sm:$0xff]
    %v345 = vld [vmem:[#allocation8 + $0x290] sm:$0xff]
    %v346 = vld [vmem:[#allocation8 + $0x298] sm:$0xff]
    %v347 = vld [vmem:[#allocation8 + $0x2a0] sm:$0xff]
    %v348 = vld [vmem:[#allocation8 + $0x2a8] sm:$0xff]
    %v349 = vld [vmem:[#allocation8 + $0x2b0] sm:$0xff]
    %v350 = vld [vmem:[#allocation8 + $0x2b8] sm:$0xff]
    %v351 = vld [vmem:[#allocation8 + $0x2c0] sm:$0xff]
    %v352 = vld [vmem:[#allocation8 + $0x2c8] sm:$0xff]
    %v353 = vld [vmem:[#allocation8 + $0x2d0] sm:$0xff]
    %v354 = vld [vmem:[#allocation8 + $0x2d8] sm:$0xff]
    %v355 = vld [vmem:[#allocation8 + $0x2e0] sm:$0xff]
    %v356 = vld [vmem:[#allocation8 + $0x2e8] sm:$0xff]
    %v357 = vld [vmem:[#allocation8 + $0x2f0] sm:$0xff]
    %v358 = vld [vmem:[#allocation8 + $0x2f8] sm:$0xff]
    %v359 = vld [vmem:[#allocation8 + $0x300] sm:$0xff]
    %v360 = vld [vmem:[#allocation8 + $0x308] sm:$0xff]
    %v361 = vld [vmem:[#allocation8 + $0x310] sm:$0xff]
    %v362 = vld [vmem:[#allocation8 + $0x318] sm:$0xff]
    %v363 = vld [vmem:[#allocation8 + $0x320] sm:$0xff]
    %v364 = vld [vmem:[#allocation8 + $0x328] sm:$0xff]
    %v365 = vld [vmem:[#allocation8 + $0x330] sm:$0xff]
    %v366 = vld [vmem:[#allocation8 + $0x338] sm:$0xff]
    %v367 = vld [vmem:[#allocation8 + $0x340] sm:$0xff]
    %v368 = vld [vmem:[#allocation8 + $0x348] sm:$0xff]
    %v369 = vld [vmem:[#allocation8 + $0x350] sm:$0xff]
    %v370 = vld [vmem:[#allocation8 + $0x358] sm:$0xff]
    %v371 = vld [vmem:[#allocation8 + $0x360] sm:$0xff]
    %v372 = vld [vmem:[#allocation8 + $0x368] sm:$0xff]
    %v373 = vld [vmem:[#allocation8 + $0x370] sm:$0xff]
    %v374 = vld [vmem:[#allocation8 + $0x378] sm:$0xff]
    %v375 = vld [vmem:[#allocation8 + $0x380] sm:$0xff]
    %v376 = vld [vmem:[#allocation8 + $0x388] sm:$0xff]
    %v377 = vld [vmem:[#allocation8 + $0x390] sm:$0xff]
    %v378 = vld [vmem:[#allocation8 + $0x398] sm:$0xff]
    %v379 = vld [vmem:[#allocation8 + $0x3a0] sm:$0xff]
    %v380 = vld [vmem:[#allocation8 + $0x3a8] sm:$0xff]
    %v381 = vld [vmem:[#allocation8 + $0x3b0] sm:$0xff]
    %v382 = vld [vmem:[#allocation8 + $0x3b8] sm:$0xff]
    %v383 = vld [vmem:[#allocation8 + $0x3c0] sm:$0xff]
    %v384 = vld [vmem:[#allocation8 + $0x3c8] sm:$0xff]
    %v385 = vld [vmem:[#allocation8 + $0x3d0] sm:$0xff]
    %v386 = vld [vmem:[#allocation8 + $0x3d8] sm:$0xff]
    %v387 = vld [vmem:[#allocation8 + $0x3e0] sm:$0xff]
    %v388 = vld [vmem:[#allocation8 + $0x3e8] sm:$0xff]
    %v389 = vld [vmem:[#allocation8 + $0x3f0] sm:$0xff]
    %v390 = vld [vmem:[#allocation8 + $0x3f8] sm:$0xff]
    %v391 = vld [vmem:[#allocation8 + $0x400] sm:$0xff]
    %v392 = vld [vmem:[#allocation8 + $0x408] sm:$0xff]
    %v393 = vld [vmem:[#allocation8 + $0x410] sm:$0xff]
    %v394 = vld [vmem:[#allocation8 + $0x418] sm:$0xff]
    %v395 = vld [vmem:[#allocation8 + $0x420] sm:$0xff]
    %v396 = vld [vmem:[#allocation8 + $0x428] sm:$0xff]
    %v397 = vld [vmem:[#allocation8 + $0x430] sm:$0xff]
    %v398 = vld [vmem:[#allocation8 + $0x438] sm:$0xff]
    %v399 = vld [vmem:[#allocation8 + $0x440] sm:$0xff]
    %v400 = vld [vmem:[#allocation8 + $0x448] sm:$0xff]
    %v401 = vld [vmem:[#allocation8 + $0x450] sm:$0xff]
    %v402 = vld [vmem:[#allocation8 + $0x458] sm:$0xff]
    %v403 = vld [vmem:[#allocation8 + $0x460] sm:$0xff]
    %v404 = vld [vmem:[#allocation8 + $0x468] sm:$0xff]
    %v405 = vld [vmem:[#allocation8 + $0x470] sm:$0xff]
    %v406 = vld [vmem:[#allocation8 + $0x478] sm:$0xff]
    %v407 = vld [vmem:[#allocation8 + $0x480] sm:$0xff]
    %v408 = vld [vmem:[#allocation8 + $0x488] sm:$0xff]
    %v409 = vld [vmem:[#allocation8 + $0x490] sm:$0xff]
    %v410 = vld [vmem:[#allocation8 + $0x498] sm:$0xff]
    %v411 = vld [vmem:[#allocation8 + $0x4a0] sm:$0xff]
    %v412 = vld [vmem:[#allocation8 + $0x4a8] sm:$0xff]
    %v413 = vld [vmem:[#allocation8 + $0x4b0] sm:$0xff]
    %v414 = vld [vmem:[#allocation8 + $0x4b8] sm:$0xff]
    %v415 = vld [vmem:[#allocation8 + $0x4c0] sm:$0xff]
    %v416 = vld [vmem:[#allocation8 + $0x4c8] sm:$0xff]
    %v417 = vld [vmem:[#allocation8 + $0x4d0] sm:$0xff]
    %v418 = vld [vmem:[#allocation8 + $0x4d8] sm:$0xff]
    %v419 = vld [vmem:[#allocation8 + $0x4e0] sm:$0xff]
    %v420 = vld [vmem:[#allocation8 + $0x4e8] sm:$0xff]
    %v421 = vld [vmem:[#allocation8 + $0x4f0] sm:$0xff]
    %v422 = vld [vmem:[#allocation8 + $0x4f8] sm:$0xff]
    %v423 = vld [vmem:[#allocation8 + $0x500] sm:$0xff]
    %v424 = vld [vmem:[#allocation8 + $0x508] sm:$0xff]
    %v425 = vld [vmem:[#allocation8 + $0x510] sm:$0xff]
    %v426 = vld [vmem:[#allocation8 + $0x518] sm:$0xff]
    %v427 = vld [vmem:[#allocation8 + $0x520] sm:$0xff]
    %v428 = vld [vmem:[#allocation8 + $0x528] sm:$0xff]
    %v429 = vld [vmem:[#allocation8 + $0x530] sm:$0xff]
    %v430 = vld [vmem:[#allocation8 + $0x538] sm:$0xff]
    %v431 = vld [vmem:[#allocation8 + $0x540] sm:$0xff]
    %v432 = vld [vmem:[#allocation8 + $0x548] sm:$0xff]
    %v433 = vld [vmem:[#allocation8 + $0x550] sm:$0xff]
    %v434 = vld [vmem:[#allocation8 + $0x558] sm:$0xff]
    %v435 = vld [vmem:[#allocation8 + $0x560] sm:$0xff]
    %v436 = vld [vmem:[#allocation8 + $0x568] sm:$0xff]
    %v437 = vld [vmem:[#allocation8 + $0x570] sm:$0xff]
    %v438 = vld [vmem:[#allocation8 + $0x578] sm:$0xff]
    %v439 = vld [vmem:[#allocation8 + $0x580] sm:$0xff]
    %v440 = vld [vmem:[#allocation8 + $0x588] sm:$0xff]
    %v441 = vld [vmem:[#allocation8 + $0x590] sm:$0xff]
    %v442 = vld [vmem:[#allocation8 + $0x598] sm:$0xff]
    %v443 = vld [vmem:[#allocation8 + $0x5a0] sm:$0xff]
    %v444 = vld [vmem:[#allocation8 + $0x5a8] sm:$0xff]
    %v445 = vld [vmem:[#allocation8 + $0x5b0] sm:$0xff]
    %v446 = vld [vmem:[#allocation8 + $0x5b8] sm:$0xff]
    %v447 = vld [vmem:[#allocation8 + $0x5c0] sm:$0xff]
    %v448 = vld [vmem:[#allocation8 + $0x5c8] sm:$0xff]
    %v449 = vld [vmem:[#allocation8 + $0x5d0] sm:$0xff]
    %v450 = vld [vmem:[#allocation8 + $0x5d8] sm:$0xff]
    %v451 = vld [vmem:[#allocation8 + $0x5e0] sm:$0xff]
    %v452 = vld [vmem:[#allocation8 + $0x5e8] sm:$0xff]
    %v453 = vld [vmem:[#allocation8 + $0x5f0] sm:$0xff]
    %v454 = vld [vmem:[#allocation8 + $0x5f8] sm:$0xff]
    %v455 = vld [vmem:[#allocation8 + $0x600] sm:$0xff]
    %v456 = vld [vmem:[#allocation8 + $0x608] sm:$0xff]
    %v457 = vld [vmem:[#allocation8 + $0x610] sm:$0xff]
    %v458 = vld [vmem:[#allocation8 + $0x618] sm:$0xff]
    %v459 = vld [vmem:[#allocation8 + $0x620] sm:$0xff]
    %v460 = vld [vmem:[#allocation8 + $0x628] sm:$0xff]
    %v461 = vld [vmem:[#allocation8 + $0x630] sm:$0xff]
    %v462 = vld [vmem:[#allocation8 + $0x638] sm:$0xff]
    %v463 = vld [vmem:[#allocation8 + $0x640] sm:$0xff]
    %v464 = vld [vmem:[#allocation8 + $0x648] sm:$0xff]
    %v465 = vld [vmem:[#allocation8 + $0x650] sm:$0xff]
    %v466 = vld [vmem:[#allocation8 + $0x658] sm:$0xff]
    %v467 = vld [vmem:[#allocation8 + $0x660] sm:$0xff]
    %v468 = vld [vmem:[#allocation8 + $0x668] sm:$0xff]
    %v469 = vld [vmem:[#allocation8 + $0x670] sm:$0xff]
    %v470 = vld [vmem:[#allocation8 + $0x678] sm:$0xff]
    %v471 = vld [vmem:[#allocation8 + $0x680] sm:$0xff]
    %v472 = vld [vmem:[#allocation8 + $0x688] sm:$0xff]
    %v473 = vld [vmem:[#allocation8 + $0x690] sm:$0xff]
    %v474 = vld [vmem:[#allocation8 + $0x698] sm:$0xff]
    %v475 = vld [vmem:[#allocation8 + $0x6a0] sm:$0xff]
    %v476 = vld [vmem:[#allocation8 + $0x6a8] sm:$0xff]
    %v477 = vld [vmem:[#allocation8 + $0x6b0] sm:$0xff]
    %v478 = vld [vmem:[#allocation8 + $0x6b8] sm:$0xff]
    %v479 = vld [vmem:[#allocation8 + $0x6c0] sm:$0xff]
    %v480 = vld [vmem:[#allocation8 + $0x6c8] sm:$0xff]
    %v481 = vld [vmem:[#allocation8 + $0x6d0] sm:$0xff]
    %v482 = vld [vmem:[#allocation8 + $0x6d8] sm:$0xff]
    %v483 = vld [vmem:[#allocation8 + $0x6e0] sm:$0xff]
    %v484 = vld [vmem:[#allocation8 + $0x6e8] sm:$0xff]
    %v485 = vld [vmem:[#allocation8 + $0x6f0] sm:$0xff]
    %v486 = vld [vmem:[#allocation8 + $0x6f8] sm:$0xff]
    %v487 = vld [vmem:[#allocation8 + $0x700] sm:$0xff]
    %v488 = vld [vmem:[#allocation8 + $0x708] sm:$0xff]
    %v489 = vld [vmem:[#allocation8 + $0x710] sm:$0xff]
    %v490 = vld [vmem:[#allocation8 + $0x718] sm:$0xff]
    %v491 = vld [vmem:[#allocation8 + $0x720] sm:$0xff]
    %v492 = vld [vmem:[#allocation8 + $0x728] sm:$0xff]
    %v493 = vld [vmem:[#allocation8 + $0x730] sm:$0xff]
    %v494 = vld [vmem:[#allocation8 + $0x738] sm:$0xff]
    %v495 = vld [vmem:[#allocation8 + $0x740] sm:$0xff]
    %v496 = vld [vmem:[#allocation8 + $0x748] sm:$0xff]
    %v497 = vld [vmem:[#allocation8 + $0x750] sm:$0xff]
    %v498 = vld [vmem:[#allocation8 + $0x758] sm:$0xff]
    %v499 = vld [vmem:[#allocation8 + $0x760] sm:$0xff]
    %v500 = vld [vmem:[#allocation8 + $0x768] sm:$0xff]
    %v501 = vld [vmem:[#allocation8 + $0x770] sm:$0xff]
    %v502 = vld [vmem:[#allocation8 + $0x778] sm:$0xff]
    %v503 = vld [vmem:[#allocation8 + $0x780] sm:$0xff]
    %v504 = vld [vmem:[#allocation8 + $0x788] sm:$0xff]
    %v505 = vld [vmem:[#allocation8 + $0x790] sm:$0xff]
    %v506 = vld [vmem:[#allocation8 + $0x798] sm:$0xff]
    %v507 = vld [vmem:[#allocation8 + $0x7a0] sm:$0xff]
    %v508 = vld [vmem:[#allocation8 + $0x7a8] sm:$0xff]
    %v509 = vld [vmem:[#allocation8 + $0x7b0] sm:$0xff]
    %v510 = vld [vmem:[#allocation8 + $0x7b8] sm:$0xff]
    %v511 = vld [vmem:[#allocation8 + $0x7c0] sm:$0xff]
    %v512 = vld [vmem:[#allocation8 + $0x7c8] sm:$0xff]
    %v513 = vld [vmem:[#allocation8 + $0x7d0] sm:$0xff]
    %v514 = vld [vmem:[#allocation8 + $0x7d8] sm:$0xff]
    %v515 = vld [vmem:[#allocation8 + $0x7e0] sm:$0xff]
    %v516 = vld [vmem:[#allocation8 + $0x7e8] sm:$0xff]
    %v517 = vld [vmem:[#allocation8 + $0x7f0] sm:$0xff]
    %v518 = vld [vmem:[#allocation8 + $0x7f8] sm:$0xff]
    %v519 = vld [vmem:[#allocation9] sm:$0xff]
    %v520 = vld [vmem:[#allocation9 + $0x8] sm:$0xff]
    %v521 = vld [vmem:[#allocation9 + $0x10] sm:$0xff]
    %v522 = vld [vmem:[#allocation9 + $0x18] sm:$0xff]
    %v523 = vld [vmem:[#allocation9 + $0x20] sm:$0xff]
    %v524 = vld [vmem:[#allocation9 + $0x28] sm:$0xff]
    %v525 = vld [vmem:[#allocation9 + $0x30] sm:$0xff]
    %v526 = vld [vmem:[#allocation9 + $0x38] sm:$0xff]
    %v527 = vld [vmem:[#allocation9 + $0x40] sm:$0xff]
    %v528 = vld [vmem:[#allocation9 + $0x48] sm:$0xff]
    %v529 = vld [vmem:[#allocation9 + $0x50] sm:$0xff]
    %v530 = vld [vmem:[#allocation9 + $0x58] sm:$0xff]
    %v531 = vld [vmem:[#allocation9 + $0x60] sm:$0xff]
    %v532 = vld [vmem:[#allocation9 + $0x68] sm:$0xff]
    %v533 = vld [vmem:[#allocation9 + $0x70] sm:$0xff]
    %v534 = vld [vmem:[#allocation9 + $0x78] sm:$0xff]
    %v535 = vld [vmem:[#allocation9 + $0x80] sm:$0xff]
    %v536 = vld [vmem:[#allocation9 + $0x88] sm:$0xff]
    %v537 = vld [vmem:[#allocation9 + $0x90] sm:$0xff]
    %v538 = vld [vmem:[#allocation9 + $0x98] sm:$0xff]
    %v539 = vld [vmem:[#allocation9 + $0xa0] sm:$0xff]
    %v540 = vld [vmem:[#allocation9 + $0xa8] sm:$0xff]
    %v541 = vld [vmem:[#allocation9 + $0xb0] sm:$0xff]
    %v542 = vld [vmem:[#allocation9 + $0xb8] sm:$0xff]
    %v543 = vld [vmem:[#allocation9 + $0xc0] sm:$0xff]
    %v544 = vld [vmem:[#allocation9 + $0xc8] sm:$0xff]
    %v545 = vld [vmem:[#allocation9 + $0xd0] sm:$0xff]
    %v546 = vld [vmem:[#allocation9 + $0xd8] sm:$0xff]
    %v547 = vld [vmem:[#allocation9 + $0xe0] sm:$0xff]
    %v548 = vld [vmem:[#allocation9 + $0xe8] sm:$0xff]
    %v549 = vld [vmem:[#allocation9 + $0xf0] sm:$0xff]
    %v550 = vld [vmem:[#allocation9 + $0xf8] sm:$0xff]
    %v551 = vld [vmem:[#allocation9 + $0x100] sm:$0xff]
    %v552 = vld [vmem:[#allocation9 + $0x108] sm:$0xff]
    %v553 = vld [vmem:[#allocation9 + $0x110] sm:$0xff]
    %v554 = vld [vmem:[#allocation9 + $0x118] sm:$0xff]
    %v555 = vld [vmem:[#allocation9 + $0x120] sm:$0xff]
    %v556 = vld [vmem:[#allocation9 + $0x128] sm:$0xff]
    %v557 = vld [vmem:[#allocation9 + $0x130] sm:$0xff]
    %v558 = vld [vmem:[#allocation9 + $0x138] sm:$0xff]
    %v559 = vld [vmem:[#allocation9 + $0x140] sm:$0xff]
    %v560 = vld [vmem:[#allocation9 + $0x148] sm:$0xff]
    %v561 = vld [vmem:[#allocation9 + $0x150] sm:$0xff]
    %v562 = vld [vmem:[#allocation9 + $0x158] sm:$0xff]
    %v563 = vld [vmem:[#allocation9 + $0x160] sm:$0xff]
    %v564 = vld [vmem:[#allocation9 + $0x168] sm:$0xff]
    %v565 = vld [vmem:[#allocation9 + $0x170] sm:$0xff]
    %v566 = vld [vmem:[#allocation9 + $0x178] sm:$0xff]
    %v567 = vld [vmem:[#allocation9 + $0x180] sm:$0xff]
    %v568 = vld [vmem:[#allocation9 + $0x188] sm:$0xff]
    %v569 = vld [vmem:[#allocation9 + $0x190] sm:$0xff]
    %v570 = vld [vmem:[#allocation9 + $0x198] sm:$0xff]
    %v571 = vld [vmem:[#allocation9 + $0x1a0] sm:$0xff]
    %v572 = vld [vmem:[#allocation9 + $0x1a8] sm:$0xff]
    %v573 = vld [vmem:[#allocation9 + $0x1b0] sm:$0xff]
    %v574 = vld [vmem:[#allocation9 + $0x1b8] sm:$0xff]
    %v575 = vld [vmem:[#allocation9 + $0x1c0] sm:$0xff]
    %v576 = vld [vmem:[#allocation9 + $0x1c8] sm:$0xff]
    %v577 = vld [vmem:[#allocation9 + $0x1d0] sm:$0xff]
    %v578 = vld [vmem:[#allocation9 + $0x1d8] sm:$0xff]
    %v579 = vld [vmem:[#allocation9 + $0x1e0] sm:$0xff]
    %v580 = vld [vmem:[#allocation9 + $0x1e8] sm:$0xff]
    %v581 = vld [vmem:[#allocation9 + $0x1f0] sm:$0xff]
    %v582 = vld [vmem:[#allocation9 + $0x1f8] sm:$0xff]
    %v583 = vld [vmem:[#allocation9 + $0x200] sm:$0xff]
    %v584 = vld [vmem:[#allocation9 + $0x208] sm:$0xff]
    %v585 = vld [vmem:[#allocation9 + $0x210] sm:$0xff]
    %v586 = vld [vmem:[#allocation9 + $0x218] sm:$0xff]
    %v587 = vld [vmem:[#allocation9 + $0x220] sm:$0xff]
    %v588 = vld [vmem:[#allocation9 + $0x228] sm:$0xff]
    %v589 = vld [vmem:[#allocation9 + $0x230] sm:$0xff]
    %v590 = vld [vmem:[#allocation9 + $0x238] sm:$0xff]
    %v591 = vld [vmem:[#allocation9 + $0x240] sm:$0xff]
    %v592 = vld [vmem:[#allocation9 + $0x248] sm:$0xff]
    %v593 = vld [vmem:[#allocation9 + $0x250] sm:$0xff]
    %v594 = vld [vmem:[#allocation9 + $0x258] sm:$0xff]
    %v595 = vld [vmem:[#allocation9 + $0x260] sm:$0xff]
    %v596 = vld [vmem:[#allocation9 + $0x268] sm:$0xff]
    %v597 = vld [vmem:[#allocation9 + $0x270] sm:$0xff]
    %v598 = vld [vmem:[#allocation9 + $0x278] sm:$0xff]
    %v599 = vld [vmem:[#allocation9 + $0x280] sm:$0xff]
    %v600 = vld [vmem:[#allocation9 + $0x288] sm:$0xff]
    %v601 = vld [vmem:[#allocation9 + $0x290] sm:$0xff]
    %v602 = vld [vmem:[#allocation9 + $0x298] sm:$0xff]
    %v603 = vld [vmem:[#allocation9 + $0x2a0] sm:$0xff]
    %v604 = vld [vmem:[#allocation9 + $0x2a8] sm:$0xff]
    %v605 = vld [vmem:[#allocation9 + $0x2b0] sm:$0xff]
    %v606 = vld [vmem:[#allocation9 + $0x2b8] sm:$0xff]
    %v607 = vld [vmem:[#allocation9 + $0x2c0] sm:$0xff]
    %v608 = vld [vmem:[#allocation9 + $0x2c8] sm:$0xff]
    %v609 = vld [vmem:[#allocation9 + $0x2d0] sm:$0xff]
    %v610 = vld [vmem:[#allocation9 + $0x2d8] sm:$0xff]
    %v611 = vld [vmem:[#allocation9 + $0x2e0] sm:$0xff]
    %v612 = vld [vmem:[#allocation9 + $0x2e8] sm:$0xff]
    %v613 = vld [vmem:[#allocation9 + $0x2f0] sm:$0xff]
    %v614 = vld [vmem:[#allocation9 + $0x2f8] sm:$0xff]
    %v615 = vld [vmem:[#allocation9 + $0x300] sm:$0xff]
    %v616 = vld [vmem:[#allocation9 + $0x308] sm:$0xff]
    %v617 = vld [vmem:[#allocation9 + $0x310] sm:$0xff]
    %v618 = vld [vmem:[#allocation9 + $0x318] sm:$0xff]
    %v619 = vld [vmem:[#allocation9 + $0x320] sm:$0xff]
    %v620 = vld [vmem:[#allocation9 + $0x328] sm:$0xff]
    %v621 = vld [vmem:[#allocation9 + $0x330] sm:$0xff]
    %v622 = vld [vmem:[#allocation9 + $0x338] sm:$0xff]
    %v623 = vld [vmem:[#allocation9 + $0x340] sm:$0xff]
    %v624 = vld [vmem:[#allocation9 + $0x348] sm:$0xff]
    %v625 = vld [vmem:[#allocation9 + $0x350] sm:$0xff]
    %v626 = vld [vmem:[#allocation9 + $0x358] sm:$0xff]
    %v627 = vld [vmem:[#allocation9 + $0x360] sm:$0xff]
    %v628 = vld [vmem:[#allocation9 + $0x368] sm:$0xff]
    %v629 = vld [vmem:[#allocation9 + $0x370] sm:$0xff]
    %v630 = vld [vmem:[#allocation9 + $0x378] sm:$0xff]
    %v631 = vld [vmem:[#allocation9 + $0x380] sm:$0xff]
    %v632 = vld [vmem:[#allocation9 + $0x388] sm:$0xff]
    %v633 = vld [vmem:[#allocation9 + $0x390] sm:$0xff]
    %v634 = vld [vmem:[#allocation9 + $0x398] sm:$0xff]
    %v635 = vld [vmem:[#allocation9 + $0x3a0] sm:$0xff]
    %v636 = vld [vmem:[#allocation9 + $0x3a8] sm:$0xff]
    %v637 = vld [vmem:[#allocation9 + $0x3b0] sm:$0xff]
    %v638 = vld [vmem:[#allocation9 + $0x3b8] sm:$0xff]
    %v639 = vld [vmem:[#allocation9 + $0x3c0] sm:$0xff]
    %v640 = vld [vmem:[#allocation9 + $0x3c8] sm:$0xff]
    %v641 = vld [vmem:[#allocation9 + $0x3d0] sm:$0xff]
    %v642 = vld [vmem:[#allocation9 + $0x3d8] sm:$0xff]
    %v643 = vld [vmem:[#allocation9 + $0x3e0] sm:$0xff]
    %v644 = vld [vmem:[#allocation9 + $0x3e8] sm:$0xff]
    %v645 = vld [vmem:[#allocation9 + $0x3f0] sm:$0xff]
    %v646 = vld [vmem:[#allocation9 + $0x3f8] sm:$0xff]
    %v647 = vld [vmem:[#allocation9 + $0x400] sm:$0xff]
    %v648 = vld [vmem:[#allocation9 + $0x408] sm:$0xff]
    %v649 = vld [vmem:[#allocation9 + $0x410] sm:$0xff]
    %v650 = vld [vmem:[#allocation9 + $0x418] sm:$0xff]
    %v651 = vld [vmem:[#allocation9 + $0x420] sm:$0xff]
    %v652 = vld [vmem:[#allocation9 + $0x428] sm:$0xff]
    %v653 = vld [vmem:[#allocation9 + $0x430] sm:$0xff]
    %v654 = vld [vmem:[#allocation9 + $0x438] sm:$0xff]
    %v655 = vld [vmem:[#allocation9 + $0x440] sm:$0xff]
    %v656 = vld [vmem:[#allocation9 + $0x448] sm:$0xff]
    %v657 = vld [vmem:[#allocation9 + $0x450] sm:$0xff]
    %v658 = vld [vmem:[#allocation9 + $0x458] sm:$0xff]
    %v659 = vld [vmem:[#allocation9 + $0x460] sm:$0xff]
    %v660 = vld [vmem:[#allocation9 + $0x468] sm:$0xff]
    %v661 = vld [vmem:[#allocation9 + $0x470] sm:$0xff]
    %v662 = vld [vmem:[#allocation9 + $0x478] sm:$0xff]
    %v663 = vld [vmem:[#allocation9 + $0x480] sm:$0xff]
    %v664 = vld [vmem:[#allocation9 + $0x488] sm:$0xff]
    %v665 = vld [vmem:[#allocation9 + $0x490] sm:$0xff]
    %v666 = vld [vmem:[#allocation9 + $0x498] sm:$0xff]
    %v667 = vld [vmem:[#allocation9 + $0x4a0] sm:$0xff]
    %v668 = vld [vmem:[#allocation9 + $0x4a8] sm:$0xff]
    %v669 = vld [vmem:[#allocation9 + $0x4b0] sm:$0xff]
    %v670 = vld [vmem:[#allocation9 + $0x4b8] sm:$0xff]
    %v671 = vld [vmem:[#allocation9 + $0x4c0] sm:$0xff]
    %v672 = vld [vmem:[#allocation9 + $0x4c8] sm:$0xff]
    %v673 = vld [vmem:[#allocation9 + $0x4d0] sm:$0xff]
    %v674 = vld [vmem:[#allocation9 + $0x4d8] sm:$0xff]
    %v675 = vld [vmem:[#allocation9 + $0x4e0] sm:$0xff]
    %v676 = vld [vmem:[#allocation9 + $0x4e8] sm:$0xff]
    %v677 = vld [vmem:[#allocation9 + $0x4f0] sm:$0xff]
    %v678 = vld [vmem:[#allocation9 + $0x4f8] sm:$0xff]
    %v679 = vld [vmem:[#allocation9 + $0x500] sm:$0xff]
    %v680 = vld [vmem:[#allocation9 + $0x508] sm:$0xff]
    %v681 = vld [vmem:[#allocation9 + $0x510] sm:$0xff]
    %v682 = vld [vmem:[#allocation9 + $0x518] sm:$0xff]
    %v683 = vld [vmem:[#allocation9 + $0x520] sm:$0xff]
    %v684 = vld [vmem:[#allocation9 + $0x528] sm:$0xff]
    %v685 = vld [vmem:[#allocation9 + $0x530] sm:$0xff]
    %v686 = vld [vmem:[#allocation9 + $0x538] sm:$0xff]
    %v687 = vld [vmem:[#allocation9 + $0x540] sm:$0xff]
    %v688 = vld [vmem:[#allocation9 + $0x548] sm:$0xff]
    %v689 = vld [vmem:[#allocation9 + $0x550] sm:$0xff]
    %v690 = vld [vmem:[#allocation9 + $0x558] sm:$0xff]
    %v691 = vld [vmem:[#allocation9 + $0x560] sm:$0xff]
    %v692 = vld [vmem:[#allocation9 + $0x568] sm:$0xff]
    %v693 = vld [vmem:[#allocation9 + $0x570] sm:$0xff]
    %v694 = vld [vmem:[#allocation9 + $0x578] sm:$0xff]
    %v695 = vld [vmem:[#allocation9 + $0x580] sm:$0xff]
    %v696 = vld [vmem:[#allocation9 + $0x588] sm:$0xff]
    %v697 = vld [vmem:[#allocation9 + $0x590] sm:$0xff]
    %v698 = vld [vmem:[#allocation9 + $0x598] sm:$0xff]
    %v699 = vld [vmem:[#allocation9 + $0x5a0] sm:$0xff]
    %v700 = vld [vmem:[#allocation9 + $0x5a8] sm:$0xff]
    %v701 = vld [vmem:[#allocation9 + $0x5b0] sm:$0xff]
    %v702 = vld [vmem:[#allocation9 + $0x5b8] sm:$0xff]
    %v703 = vld [vmem:[#allocation9 + $0x5c0] sm:$0xff]
    %v704 = vld [vmem:[#allocation9 + $0x5c8] sm:$0xff]
    %v705 = vld [vmem:[#allocation9 + $0x5d0] sm:$0xff]
    %v706 = vld [vmem:[#allocation9 + $0x5d8] sm:$0xff]
    %v707 = vld [vmem:[#allocation9 + $0x5e0] sm:$0xff]
    %v708 = vld [vmem:[#allocation9 + $0x5e8] sm:$0xff]
    %v709 = vld [vmem:[#allocation9 + $0x5f0] sm:$0xff]
    %v710 = vld [vmem:[#allocation9 + $0x5f8] sm:$0xff]
    %v711 = vld [vmem:[#allocation9 + $0x600] sm:$0xff]
    %v712 = vld [vmem:[#allocation9 + $0x608] sm:$0xff]
    %v713 = vld [vmem:[#allocation9 + $0x610] sm:$0xff]
    %v714 = vld [vmem:[#allocation9 + $0x618] sm:$0xff]
    %v715 = vld [vmem:[#allocation9 + $0x620] sm:$0xff]
    %v716 = vld [vmem:[#allocation9 + $0x628] sm:$0xff]
    %v717 = vld [vmem:[#allocation9 + $0x630] sm:$0xff]
    %v718 = vld [vmem:[#allocation9 + $0x638] sm:$0xff]
    %v719 = vld [vmem:[#allocation9 + $0x640] sm:$0xff]
    %v720 = vld [vmem:[#allocation9 + $0x648] sm:$0xff]
    %v721 = vld [vmem:[#allocation9 + $0x650] sm:$0xff]
    %v722 = vld [vmem:[#allocation9 + $0x658] sm:$0xff]
    %v723 = vld [vmem:[#allocation9 + $0x660] sm:$0xff]
    %v724 = vld [vmem:[#allocation9 + $0x668] sm:$0xff]
    %v725 = vld [vmem:[#allocation9 + $0x670] sm:$0xff]
    %v726 = vld [vmem:[#allocation9 + $0x678] sm:$0xff]
    %v727 = vld [vmem:[#allocation9 + $0x680] sm:$0xff]
    %v728 = vld [vmem:[#allocation9 + $0x688] sm:$0xff]
    %v729 = vld [vmem:[#allocation9 + $0x690] sm:$0xff]
    %v730 = vld [vmem:[#allocation9 + $0x698] sm:$0xff]
    %v731 = vld [vmem:[#allocation9 + $0x6a0] sm:$0xff]
    %v732 = vld [vmem:[#allocation9 + $0x6a8] sm:$0xff]
    %v733 = vld [vmem:[#allocation9 + $0x6b0] sm:$0xff]
    %v734 = vld [vmem:[#allocation9 + $0x6b8] sm:$0xff]
    %v735 = vld [vmem:[#allocation9 + $0x6c0] sm:$0xff]
    %v736 = vld [vmem:[#allocation9 + $0x6c8] sm:$0xff]
    %v737 = vld [vmem:[#allocation9 + $0x6d0] sm:$0xff]
    %v738 = vld [vmem:[#allocation9 + $0x6d8] sm:$0xff]
    %v739 = vld [vmem:[#allocation9 + $0x6e0] sm:$0xff]
    %v740 = vld [vmem:[#allocation9 + $0x6e8] sm:$0xff]
    %v741 = vld [vmem:[#allocation9 + $0x6f0] sm:$0xff]
    %v742 = vld [vmem:[#allocation9 + $0x6f8] sm:$0xff]
    %v743 = vld [vmem:[#allocation9 + $0x700] sm:$0xff]
    %v744 = vld [vmem:[#allocation9 + $0x708] sm:$0xff]
    %v745 = vld [vmem:[#allocation9 + $0x710] sm:$0xff]
    %v746 = vld [vmem:[#allocation9 + $0x718] sm:$0xff]
    %v747 = vld [vmem:[#allocation9 + $0x720] sm:$0xff]
    %v748 = vld [vmem:[#allocation9 + $0x728] sm:$0xff]
    %v749 = vld [vmem:[#allocation9 + $0x730] sm:$0xff]
    %v750 = vld [vmem:[#allocation9 + $0x738] sm:$0xff]
    %v751 = vld [vmem:[#allocation9 + $0x740] sm:$0xff]
    %v752 = vld [vmem:[#allocation9 + $0x748] sm:$0xff]
    %v753 = vld [vmem:[#allocation9 + $0x750] sm:$0xff]
    %v754 = vld [vmem:[#allocation9 + $0x758] sm:$0xff]
    %v755 = vld [vmem:[#allocation9 + $0x760] sm:$0xff]
    %v756 = vld [vmem:[#allocation9 + $0x768] sm:$0xff]
    %v757 = vld [vmem:[#allocation9 + $0x770] sm:$0xff]
    %v758 = vld [vmem:[#allocation9 + $0x778] sm:$0xff]
    %v759 = vld [vmem:[#allocation9 + $0x780] sm:$0xff]
    %v760 = vld [vmem:[#allocation9 + $0x788] sm:$0xff]
    %v761 = vld [vmem:[#allocation9 + $0x790] sm:$0xff]
    %v762 = vld [vmem:[#allocation9 + $0x798] sm:$0xff]
    %v763 = vld [vmem:[#allocation9 + $0x7a0] sm:$0xff]
    %v764 = vld [vmem:[#allocation9 + $0x7a8] sm:$0xff]
    %v765 = vld [vmem:[#allocation9 + $0x7b0] sm:$0xff]
    %v766 = vld [vmem:[#allocation9 + $0x7b8] sm:$0xff]
    %v767 = vld [vmem:[#allocation9 + $0x7c0] sm:$0xff]
    %v768 = vld [vmem:[#allocation9 + $0x7c8] sm:$0xff]
    %v769 = vld [vmem:[#allocation9 + $0x7d0] sm:$0xff]
    %v770 = vld [vmem:[#allocation9 + $0x7d8] sm:$0xff]
    %v771 = vld [vmem:[#allocation9 + $0x7e0] sm:$0xff]
    %v772 = vld [vmem:[#allocation9 + $0x7e8] sm:$0xff]
    %v773 = vld [vmem:[#allocation9 + $0x7f0] sm:$0xff]
    %v774 = vld [vmem:[#allocation9 + $0x7f8] sm:$0xff]
    %775 = vmatprep.subr.mxu0 %v550
    %776 = vmatpush1.msra.mxu0 %v549
    %777 = vmatprep.subr.mxu0 %v548
    %778 = vmatpush1.msra.mxu0 %v547
    %779 = vmatprep.subr.mxu0 %v546
    %780 = vmatpush1.msra.mxu0 %v545
    %781 = vmatprep.subr.mxu0 %v544
    %782 = vmatpush1.msra.mxu0 %v543
    %783 = vmatprep.subr.mxu0 %v542
    %784 = vmatpush1.msra.mxu0 %v541
    %785 = vmatprep.subr.mxu0 %v540
    %786 = vmatpush1.msra.mxu0 %v539
    %787 = vmatprep.subr.mxu0 %v538
    %788 = vmatpush1.msra.mxu0 %v537
    %789 = vmatprep.subr.mxu0 %v536
    %790 = vmatpush1.msra.mxu0 %v535
    %791 = vmatprep.subr.mxu0 %v534
    %792 = vmatpush1.msra.mxu0 %v533
    %793 = vmatprep.subr.mxu0 %v532
    %794 = vmatpush1.msra.mxu0 %v531
    %795 = vmatprep.subr.mxu0 %v530
    %796 = vmatpush1.msra.mxu0 %v529
    %797 = vmatprep.subr.mxu0 %v528
    %798 = vmatpush1.msra.mxu0 %v527
    %799 = vmatprep.subr.mxu0 %v526
    %800 = vmatpush1.msra.mxu0 %v525
    %801 = vmatprep.subr.mxu0 %v524
    %802 = vmatpush1.msra.mxu0 %v523
    %803 = vmatprep.subr.mxu0 %v522
    %804 = vmatpush1.msra.mxu0 %v521
    %805 = vmatprep.subr.mxu0 %v520
    %806 = vmatpush1.msra.mxu0 %v519
    %807 = vmatprep.subr.mxu0 %v582
    %808 = vmatpush2.msra.mxu0 %v581
    %809 = vmatprep.subr.mxu0 %v580
    %810 = vmatpush2.msra.mxu0 %v579
    %811 = vmatprep.subr.mxu0 %v578
    %812 = vmatpush2.msra.mxu0 %v577
    %813 = vmatprep.subr.mxu0 %v576
    %814 = vmatpush2.msra.mxu0 %v575
    %815 = vmatprep.subr.mxu0 %v574
    %816 = vmatpush2.msra.mxu0 %v573
    %817 = vmatprep.subr.mxu0 %v572
    %818 = vmatpush2.msra.mxu0 %v571
    %819 = vmatprep.subr.mxu0 %v570
    %820 = vmatpush2.msra.mxu0 %v569
    %821 = vmatprep.subr.mxu0 %v568
    %822 = vmatpush2.msra.mxu0 %v567
    %823 = vmatprep.subr.mxu0 %v566
    %824 = vmatpush2.msra.mxu0 %v565
    %825 = vmatprep.subr.mxu0 %v564
    %826 = vmatpush2.msra.mxu0 %v563
    %827 = vmatprep.subr.mxu0 %v562
    %828 = vmatpush2.msra.mxu0 %v561
    %829 = vmatprep.subr.mxu0 %v560
    %830 = vmatpush2.msra.mxu0 %v559
    %831 = vmatprep.subr.mxu0 %v558
    %832 = vmatpush2.msra.mxu0 %v557
    %833 = vmatprep.subr.mxu0 %v556
    %834 = vmatpush2.msra.mxu0 %v555
    %835 = vmatprep.subr.mxu0 %v554
    %836 = vmatpush2.msra.mxu0 %v553
    %837 = vmatprep.subr.mxu0 %v552
    %838 = vmatpush2.msra.mxu0 %v551
    %839 = vmatprep.mubr.f32.mxu0 %v200
    %840 = vmatmul.mubr.f32.gmra.mxu0 %v199
    %v841 = vpop.f32.mrf.mxu0
    %v842 = vadd.f32 0.0, %v841
    %v843 = vpop.f32.mrf.mxu0
    %v844 = vadd.f32 0.0, %v843
    %845 = vmatprep.mubr.f32.mxu0 %v208
    %846 = vmatmul.mubr.f32.gmra.mxu0 %v207
    %v847 = vpop.f32.mrf.mxu0
    %v848 = vadd.f32 0.0, %v847
    %v849 = vpop.f32.mrf.mxu0
    %v850 = vadd.f32 0.0, %v849
    %851 = vmatprep.mubr.f32.mxu0 %v216
    %852 = vmatmul.mubr.f32.gmra.mxu0 %v215
    %v853 = vpop.f32.mrf.mxu0
    %v854 = vadd.f32 0.0, %v853
    %v855 = vpop.f32.mrf.mxu0
    %v856 = vadd.f32 0.0, %v855
    %857 = vmatprep.mubr.f32.mxu0 %v224
    %858 = vmatmul.mubr.f32.gmra.mxu0 %v223
    %v859 = vpop.f32.mrf.mxu0
    %v860 = vadd.f32 0.0, %v859
    %v861 = vpop.f32.mrf.mxu0
    %v862 = vadd.f32 0.0, %v861
    %863 = vmatprep.mubr.f32.mxu0 %v232
    %864 = vmatmul.mubr.f32.gmra.mxu0 %v231
    %v865 = vpop.f32.mrf.mxu0
    %v866 = vadd.f32 0.0, %v865
    %v867 = vpop.f32.mrf.mxu0
    %v868 = vadd.f32 0.0, %v867
    %869 = vmatprep.mubr.f32.mxu0 %v240
    %870 = vmatmul.mubr.f32.gmra.mxu0 %v239
    %v871 = vpop.f32.mrf.mxu0
    %v872 = vadd.f32 0.0, %v871
    %v873 = vpop.f32.mrf.mxu0
    %v874 = vadd.f32 0.0, %v873
    %875 = vmatprep.mubr.f32.mxu0 %v248
    %876 = vmatmul.mubr.f32.gmra.mxu0 %v247
    %v877 = vpop.f32.mrf.mxu0
    %v878 = vadd.f32 0.0, %v877
    %v879 = vpop.f32.mrf.mxu0
    %v880 = vadd.f32 0.0, %v879
    %881 = vmatprep.mubr.f32.mxu0 %v256
    %882 = vmatmul.mubr.f32.gmra.mxu0 %v255
    %v883 = vpop.f32.mrf.mxu0
    %v884 = vadd.f32 0.0, %v883
    %v885 = vpop.f32.mrf.mxu0
    %v886 = vadd.f32 0.0, %v885
    %887 = vdwg.mxu0
    %888 = vmatprep.subr.mxu0 %v614
    %889 = vmatpush1.msra.mxu0 %v613
    %890 = vmatprep.subr.mxu0 %v612
    %891 = vmatpush1.msra.mxu0 %v611
    %892 = vmatprep.subr.mxu0 %v610
    %893 = vmatpush1.msra.mxu0 %v609
    %894 = vmatprep.subr.mxu0 %v608
    %895 = vmatpush1.msra.mxu0 %v607
    %896 = vmatprep.subr.mxu0 %v606
    %897 = vmatpush1.msra.mxu0 %v605
    %898 = vmatprep.subr.mxu0 %v604
    %899 = vmatpush1.msra.mxu0 %v603
    %900 = vmatprep.subr.mxu0 %v602
    %901 = vmatpush1.msra.mxu0 %v601
    %902 = vmatprep.subr.mxu0 %v600
    %903 = vmatpush1.msra.mxu0 %v599
    %904 = vmatprep.subr.mxu0 %v598
    %905 = vmatpush1.msra.mxu0 %v597
    %906 = vmatprep.subr.mxu0 %v596
    %907 = vmatpush1.msra.mxu0 %v595
    %908 = vmatprep.subr.mxu0 %v594
    %909 = vmatpush1.msra.mxu0 %v593
    %910 = vmatprep.subr.mxu0 %v592
    %911 = vmatpush1.msra.mxu0 %v591
    %912 = vmatprep.subr.mxu0 %v590
    %913 = vmatpush1.msra.mxu0 %v589
    %914 = vmatprep.subr.mxu0 %v588
    %915 = vmatpush1.msra.mxu0 %v587
    %916 = vmatprep.subr.mxu0 %v586
    %917 = vmatpush1.msra.mxu0 %v585
    %918 = vmatprep.subr.mxu0 %v584
    %919 = vmatpush1.msra.mxu0 %v583
    %920 = vmatprep.subr.mxu0 %v646
    %921 = vmatpush2.msra.mxu0 %v645
    %922 = vmatprep.subr.mxu0 %v644
    %923 = vmatpush2.msra.mxu0 %v643
    %924 = vmatprep.subr.mxu0 %v642
    %925 = vmatpush2.msra.mxu0 %v641
    %926 = vmatprep.subr.mxu0 %v640
    %927 = vmatpush2.msra.mxu0 %v639
    %928 = vmatprep.subr.mxu0 %v638
    %929 = vmatpush2.msra.mxu0 %v637
    %930 = vmatprep.subr.mxu0 %v636
    %931 = vmatpush2.msra.mxu0 %v635
    %932 = vmatprep.subr.mxu0 %v634
    %933 = vmatpush2.msra.mxu0 %v633
    %934 = vmatprep.subr.mxu0 %v632
    %935 = vmatpush2.msra.mxu0 %v631
    %936 = vmatprep.subr.mxu0 %v630
    %937 = vmatpush2.msra.mxu0 %v629
    %938 = vmatprep.subr.mxu0 %v628
    %939 = vmatpush2.msra.mxu0 %v627
    %940 = vmatprep.subr.mxu0 %v626
    %941 = vmatpush2.msra.mxu0 %v625
    %942 = vmatprep.subr.mxu0 %v624
    %943 = vmatpush2.msra.mxu0 %v623
    %944 = vmatprep.subr.mxu0 %v622
    %945 = vmatpush2.msra.mxu0 %v621
    %946 = vmatprep.subr.mxu0 %v620
    %947 = vmatpush2.msra.mxu0 %v619
    %948 = vmatprep.subr.mxu0 %v618
    %949 = vmatpush2.msra.mxu0 %v617
    %950 = vmatprep.subr.mxu0 %v616
    %951 = vmatpush2.msra.mxu0 %v615
    %952 = vmatprep.mubr.f32.mxu0 %v202
    %953 = vmatmul.mubr.f32.gmra.mxu0 %v201
    %v954 = vpop.f32.mrf.mxu0
    %v955 = vadd.f32 %v842, %v954
    %v956 = vpop.f32.mrf.mxu0
    %v957 = vadd.f32 %v844, %v956
    %958 = vmatprep.mubr.f32.mxu0 %v210
    %959 = vmatmul.mubr.f32.gmra.mxu0 %v209
    %v960 = vpop.f32.mrf.mxu0
    %v961 = vadd.f32 %v848, %v960
    %v962 = vpop.f32.mrf.mxu0
    %v963 = vadd.f32 %v850, %v962
    %964 = vmatprep.mubr.f32.mxu0 %v218
    %965 = vmatmul.mubr.f32.gmra.mxu0 %v217
    %v966 = vpop.f32.mrf.mxu0
    %v967 = vadd.f32 %v854, %v966
    %v968 = vpop.f32.mrf.mxu0
    %v969 = vadd.f32 %v856, %v968
    %970 = vmatprep.mubr.f32.mxu0 %v226
    %971 = vmatmul.mubr.f32.gmra.mxu0 %v225
    %v972 = vpop.f32.mrf.mxu0
    %v973 = vadd.f32 %v860, %v972
    %v974 = vpop.f32.mrf.mxu0
    %v975 = vadd.f32 %v862, %v974
    %976 = vmatprep.mubr.f32.mxu0 %v234
    %977 = vmatmul.mubr.f32.gmra.mxu0 %v233
    %v978 = vpop.f32.mrf.mxu0
    %v979 = vadd.f32 %v866, %v978
    %v980 = vpop.f32.mrf.mxu0
    %v981 = vadd.f32 %v868, %v980
    %982 = vmatprep.mubr.f32.mxu0 %v242
    %983 = vmatmul.mubr.f32.gmra.mxu0 %v241
    %v984 = vpop.f32.mrf.mxu0
    %v985 = vadd.f32 %v872, %v984
    %v986 = vpop.f32.mrf.mxu0
    %v987 = vadd.f32 %v874, %v986
    %988 = vmatprep.mubr.f32.mxu0 %v250
    %989 = vmatmul.mubr.f32.gmra.mxu0 %v249
    %v990 = vpop.f32.mrf.mxu0
    %v991 = vadd.f32 %v878, %v990
    %v992 = vpop.f32.mrf.mxu0
    %v993 = vadd.f32 %v880, %v992
    %994 = vmatprep.mubr.f32.mxu0 %v258
    %995 = vmatmul.mubr.f32.gmra.mxu0 %v257
    %v996 = vpop.f32.mrf.mxu0
    %v997 = vadd.f32 %v884, %v996
    %v998 = vpop.f32.mrf.mxu0
    %v999 = vadd.f32 %v886, %v998
    %1000 = vdwg.mxu0
    %1001 = vmatprep.subr.mxu0 %v678
    %1002 = vmatpush1.msra.mxu0 %v677
    %1003 = vmatprep.subr.mxu0 %v676
    %1004 = vmatpush1.msra.mxu0 %v675
    %1005 = vmatprep.subr.mxu0 %v674
    %1006 = vmatpush1.msra.mxu0 %v673
    %1007 = vmatprep.subr.mxu0 %v672
    %1008 = vmatpush1.msra.mxu0 %v671
    %1009 = vmatprep.subr.mxu0 %v670
    %1010 = vmatpush1.msra.mxu0 %v669
    %1011 = vmatprep.subr.mxu0 %v668
    %1012 = vmatpush1.msra.mxu0 %v667
    %1013 = vmatprep.subr.mxu0 %v666
    %1014 = vmatpush1.msra.mxu0 %v665
    %1015 = vmatprep.subr.mxu0 %v664
    %1016 = vmatpush1.msra.mxu0 %v663
    %1017 = vmatprep.subr.mxu0 %v662
    %1018 = vmatpush1.msra.mxu0 %v661
    %1019 = vmatprep.subr.mxu0 %v660
    %1020 = vmatpush1.msra.mxu0 %v659
    %1021 = vmatprep.subr.mxu0 %v658
    %1022 = vmatpush1.msra.mxu0 %v657
    %1023 = vmatprep.subr.mxu0 %v656
    %1024 = vmatpush1.msra.mxu0 %v655
    %1025 = vmatprep.subr.mxu0 %v654
    %1026 = vmatpush1.msra.mxu0 %v653
    %1027 = vmatprep.subr.mxu0 %v652
    %1028 = vmatpush1.msra.mxu0 %v651
    %1029 = vmatprep.subr.mxu0 %v650
    %1030 = vmatpush1.msra.mxu0 %v649
    %1031 = vmatprep.subr.mxu0 %v648
    %1032 = vmatpush1.msra.mxu0 %v647
    %1033 = vmatprep.subr.mxu0 %v710
    %1034 = vmatpush2.msra.mxu0 %v709
    %1035 = vmatprep.subr.mxu0 %v708
    %1036 = vmatpush2.msra.mxu0 %v707
    %1037 = vmatprep.subr.mxu0 %v706
    %1038 = vmatpush2.msra.mxu0 %v705
    %1039 = vmatprep.subr.mxu0 %v704
    %1040 = vmatpush2.msra.mxu0 %v703
    %1041 = vmatprep.subr.mxu0 %v702
    %1042 = vmatpush2.msra.mxu0 %v701
    %1043 = vmatprep.subr.mxu0 %v700
    %1044 = vmatpush2.msra.mxu0 %v699
    %1045 = vmatprep.subr.mxu0 %v698
    %1046 = vmatpush2.msra.mxu0 %v697
    %1047 = vmatprep.subr.mxu0 %v696
    %1048 = vmatpush2.msra.mxu0 %v695
    %1049 = vmatprep.subr.mxu0 %v694
    %1050 = vmatpush2.msra.mxu0 %v693
    %1051 = vmatprep.subr.mxu0 %v692
    %1052 = vmatpush2.msra.mxu0 %v691
    %1053 = vmatprep.subr.mxu0 %v690
    %1054 = vmatpush2.msra.mxu0 %v689
    %1055 = vmatprep.subr.mxu0 %v688
    %1056 = vmatpush2.msra.mxu0 %v687
    %1057 = vmatprep.subr.mxu0 %v686
    %1058 = vmatpush2.msra.mxu0 %v685
    %1059 = vmatprep.subr.mxu0 %v684
    %1060 = vmatpush2.msra.mxu0 %v683
    %1061 = vmatprep.subr.mxu0 %v682
    %1062 = vmatpush2.msra.mxu0 %v681
    %1063 = vmatprep.subr.mxu0 %v680
    %1064 = vmatpush2.msra.mxu0 %v679
    %1065 = vmatprep.mubr.f32.mxu0 %v204
    %1066 = vmatmul.mubr.f32.gmra.mxu0 %v203
    %v1067 = vpop.f32.mrf.mxu0
    %v1068 = vadd.f32 %v955, %v1067
    %v1069 = vpop.f32.mrf.mxu0
    %v1070 = vadd.f32 %v957, %v1069
    %1071 = vmatprep.mubr.f32.mxu0 %v212
    %1072 = vmatmul.mubr.f32.gmra.mxu0 %v211
    %v1073 = vpop.f32.mrf.mxu0
    %v1074 = vadd.f32 %v961, %v1073
    %v1075 = vpop.f32.mrf.mxu0
    %v1076 = vadd.f32 %v963, %v1075
    %1077 = vmatprep.mubr.f32.mxu0 %v220
    %1078 = vmatmul.mubr.f32.gmra.mxu0 %v219
    %v1079 = vpop.f32.mrf.mxu0
    %v1080 = vadd.f32 %v967, %v1079
    %v1081 = vpop.f32.mrf.mxu0
    %v1082 = vadd.f32 %v969, %v1081
    %1083 = vmatprep.mubr.f32.mxu0 %v228
    %1084 = vmatmul.mubr.f32.gmra.mxu0 %v227
    %v1085 = vpop.f32.mrf.mxu0
    %v1086 = vadd.f32 %v973, %v1085
    %v1087 = vpop.f32.mrf.mxu0
    %v1088 = vadd.f32 %v975, %v1087
    %1089 = vmatprep.mubr.f32.mxu0 %v236
    %1090 = vmatmul.mubr.f32.gmra.mxu0 %v235
    %v1091 = vpop.f32.mrf.mxu0
    %v1092 = vadd.f32 %v979, %v1091
    %v1093 = vpop.f32.mrf.mxu0
    %v1094 = vadd.f32 %v981, %v1093
    %1095 = vmatprep.mubr.f32.mxu0 %v244
    %1096 = vmatmul.mubr.f32.gmra.mxu0 %v243
    %v1097 = vpop.f32.mrf.mxu0
    %v1098 = vadd.f32 %v985, %v1097
    %v1099 = vpop.f32.mrf.mxu0
    %v1100 = vadd.f32 %v987, %v1099
    %1101 = vmatprep.mubr.f32.mxu0 %v252
    %1102 = vmatmul.mubr.f32.gmra.mxu0 %v251
    %v1103 = vpop.f32.mrf.mxu0
    %v1104 = vadd.f32 %v991, %v1103
    %v1105 = vpop.f32.mrf.mxu0
    %v1106 = vadd.f32 %v993, %v1105
    %1107 = vmatprep.mubr.f32.mxu0 %v260
    %1108 = vmatmul.mubr.f32.gmra.mxu0 %v259
    %v1109 = vpop.f32.mrf.mxu0
    %v1110 = vadd.f32 %v997, %v1109
    %v1111 = vpop.f32.mrf.mxu0
    %v1112 = vadd.f32 %v999, %v1111
    %1113 = vdwg.mxu0
    %1114 = vmatprep.subr.mxu0 %v742
    %1115 = vmatpush1.msra.mxu0 %v741
    %1116 = vmatprep.subr.mxu0 %v740
    %1117 = vmatpush1.msra.mxu0 %v739
    %1118 = vmatprep.subr.mxu0 %v738
    %1119 = vmatpush1.msra.mxu0 %v737
    %1120 = vmatprep.subr.mxu0 %v736
    %1121 = vmatpush1.msra.mxu0 %v735
    %1122 = vmatprep.subr.mxu0 %v734
    %1123 = vmatpush1.msra.mxu0 %v733
    %1124 = vmatprep.subr.mxu0 %v732
    %1125 = vmatpush1.msra.mxu0 %v731
    %1126 = vmatprep.subr.mxu0 %v730
    %1127 = vmatpush1.msra.mxu0 %v729
    %1128 = vmatprep.subr.mxu0 %v728
    %1129 = vmatpush1.msra.mxu0 %v727
    %1130 = vmatprep.subr.mxu0 %v726
    %1131 = vmatpush1.msra.mxu0 %v725
    %1132 = vmatprep.subr.mxu0 %v724
    %1133 = vmatpush1.msra.mxu0 %v723
    %1134 = vmatprep.subr.mxu0 %v722
    %1135 = vmatpush1.msra.mxu0 %v721
    %1136 = vmatprep.subr.mxu0 %v720
    %1137 = vmatpush1.msra.mxu0 %v719
    %1138 = vmatprep.subr.mxu0 %v718
    %1139 = vmatpush1.msra.mxu0 %v717
    %1140 = vmatprep.subr.mxu0 %v716
    %1141 = vmatpush1.msra.mxu0 %v715
    %1142 = vmatprep.subr.mxu0 %v714
    %1143 = vmatpush1.msra.mxu0 %v713
    %1144 = vmatprep.subr.mxu0 %v712
    %1145 = vmatpush1.msra.mxu0 %v711
    %1146 = vmatprep.subr.mxu0 %v774
    %1147 = vmatpush2.msra.mxu0 %v773
    %1148 = vmatprep.subr.mxu0 %v772
    %1149 = vmatpush2.msra.mxu0 %v771
    %1150 = vmatprep.subr.mxu0 %v770
    %1151 = vmatpush2.msra.mxu0 %v769
    %1152 = vmatprep.subr.mxu0 %v768
    %1153 = vmatpush2.msra.mxu0 %v767
    %1154 = vmatprep.subr.mxu0 %v766
    %1155 = vmatpush2.msra.mxu0 %v765
    %1156 = vmatprep.subr.mxu0 %v764
    %1157 = vmatpush2.msra.mxu0 %v763
    %1158 = vmatprep.subr.mxu0 %v762
    %1159 = vmatpush2.msra.mxu0 %v761
    %1160 = vmatprep.subr.mxu0 %v760
    %1161 = vmatpush2.msra.mxu0 %v759
    %1162 = vmatprep.subr.mxu0 %v758
    %1163 = vmatpush2.msra.mxu0 %v757
    %1164 = vmatprep.subr.mxu0 %v756
    %1165 = vmatpush2.msra.mxu0 %v755
    %1166 = vmatprep.subr.mxu0 %v754
    %1167 = vmatpush2.msra.mxu0 %v753
    %1168 = vmatprep.subr.mxu0 %v752
    %1169 = vmatpush2.msra.mxu0 %v751
    %1170 = vmatprep.subr.mxu0 %v750
    %1171 = vmatpush2.msra.mxu0 %v749
    %1172 = vmatprep.subr.mxu0 %v748
    %1173 = vmatpush2.msra.mxu0 %v747
    %1174 = vmatprep.subr.mxu0 %v746
    %1175 = vmatpush2.msra.mxu0 %v745
    %1176 = vmatprep.subr.mxu0 %v744
    %1177 = vmatpush2.msra.mxu0 %v743
    %1178 = vmatprep.mubr.f32.mxu0 %v206
    %1179 = vmatmul.mubr.f32.gmra.mxu0 %v205
    %v1180 = vpop.f32.mrf.mxu0
    %v1181 = vadd.f32 %v1068, %v1180
    %v1182 = vpop.f32.mrf.mxu0
    %v1183 = vadd.f32 %v1070, %v1182
    %1184 = vmatprep.mubr.f32.mxu0 %v214
    %1185 = vmatmul.mubr.f32.gmra.mxu0 %v213
    %v1186 = vpop.f32.mrf.mxu0
    %v1187 = vadd.f32 %v1074, %v1186
    %v1188 = vpop.f32.mrf.mxu0
    %v1189 = vadd.f32 %v1076, %v1188
    %1190 = vmatprep.mubr.f32.mxu0 %v222
    %1191 = vmatmul.mubr.f32.gmra.mxu0 %v221
    %v1192 = vpop.f32.mrf.mxu0
    %v1193 = vadd.f32 %v1080, %v1192
    %v1194 = vpop.f32.mrf.mxu0
    %v1195 = vadd.f32 %v1082, %v1194
    %1196 = vmatprep.mubr.f32.mxu0 %v230
    %1197 = vmatmul.mubr.f32.gmra.mxu0 %v229
    %v1198 = vpop.f32.mrf.mxu0
    %v1199 = vadd.f32 %v1086, %v1198
    %v1200 = vpop.f32.mrf.mxu0
    %v1201 = vadd.f32 %v1088, %v1200
    %1202 = vmatprep.mubr.f32.mxu0 %v238
    %1203 = vmatmul.mubr.f32.gmra.mxu0 %v237
    %v1204 = vpop.f32.mrf.mxu0
    %v1205 = vadd.f32 %v1092, %v1204
    %v1206 = vpop.f32.mrf.mxu0
    %v1207 = vadd.f32 %v1094, %v1206
    %1208 = vmatprep.mubr.f32.mxu0 %v246
    %1209 = vmatmul.mubr.f32.gmra.mxu0 %v245
    %v1210 = vpop.f32.mrf.mxu0
    %v1211 = vadd.f32 %v1098, %v1210
    %v1212 = vpop.f32.mrf.mxu0
    %v1213 = vadd.f32 %v1100, %v1212
    %1214 = vmatprep.mubr.f32.mxu0 %v254
    %1215 = vmatmul.mubr.f32.gmra.mxu0 %v253
    %v1216 = vpop.f32.mrf.mxu0
    %v1217 = vadd.f32 %v1104, %v1216
    %v1218 = vpop.f32.mrf.mxu0
    %v1219 = vadd.f32 %v1106, %v1218
    %1220 = vmatprep.mubr.f32.mxu0 %v262
    %1221 = vmatmul.mubr.f32.gmra.mxu0 %v261
    %v1222 = vpop.f32.mrf.mxu0
    %v1223 = vadd.f32 %v1110, %v1222
    %v1224 = vpop.f32.mrf.mxu0
    %v1225 = vadd.f32 %v1112, %v1224
    %1226 = vdwg.mxu0
    %1227 = vmatprep.subr.mxu0 %v294
    %1228 = vmatpush1.msra.mxu0 %v293
    %1229 = vmatprep.subr.mxu0 %v292
    %1230 = vmatpush1.msra.mxu0 %v291
    %1231 = vmatprep.subr.mxu0 %v290
    %1232 = vmatpush1.msra.mxu0 %v289
    %1233 = vmatprep.subr.mxu0 %v288
    %1234 = vmatpush1.msra.mxu0 %v287
    %1235 = vmatprep.subr.mxu0 %v286
    %1236 = vmatpush1.msra.mxu0 %v285
    %1237 = vmatprep.subr.mxu0 %v284
    %1238 = vmatpush1.msra.mxu0 %v283
    %1239 = vmatprep.subr.mxu0 %v282
    %1240 = vmatpush1.msra.mxu0 %v281
    %1241 = vmatprep.subr.mxu0 %v280
    %1242 = vmatpush1.msra.mxu0 %v279
    %1243 = vmatprep.subr.mxu0 %v278
    %1244 = vmatpush1.msra.mxu0 %v277
    %1245 = vmatprep.subr.mxu0 %v276
    %1246 = vmatpush1.msra.mxu0 %v275
    %1247 = vmatprep.subr.mxu0 %v274
    %1248 = vmatpush1.msra.mxu0 %v273
    %1249 = vmatprep.subr.mxu0 %v272
    %1250 = vmatpush1.msra.mxu0 %v271
    %1251 = vmatprep.subr.mxu0 %v270
    %1252 = vmatpush1.msra.mxu0 %v269
    %1253 = vmatprep.subr.mxu0 %v268
    %1254 = vmatpush1.msra.mxu0 %v267
    %1255 = vmatprep.subr.mxu0 %v266
    %1256 = vmatpush1.msra.mxu0 %v265
    %1257 = vmatprep.subr.mxu0 %v264
    %1258 = vmatpush1.msra.mxu0 %v263
    %1259 = vmatprep.subr.mxu0 %v326
    %1260 = vmatpush2.msra.mxu0 %v325
    %1261 = vmatprep.subr.mxu0 %v324
    %1262 = vmatpush2.msra.mxu0 %v323
    %1263 = vmatprep.subr.mxu0 %v322
    %1264 = vmatpush2.msra.mxu0 %v321
    %1265 = vmatprep.subr.mxu0 %v320
    %1266 = vmatpush2.msra.mxu0 %v319
    %1267 = vmatprep.subr.mxu0 %v318
    %1268 = vmatpush2.msra.mxu0 %v317
    %1269 = vmatprep.subr.mxu0 %v316
    %1270 = vmatpush2.msra.mxu0 %v315
    %1271 = vmatprep.subr.mxu0 %v314
    %1272 = vmatpush2.msra.mxu0 %v313
    %1273 = vmatprep.subr.mxu0 %v312
    %1274 = vmatpush2.msra.mxu0 %v311
    %1275 = vmatprep.subr.mxu0 %v310
    %1276 = vmatpush2.msra.mxu0 %v309
    %1277 = vmatprep.subr.mxu0 %v308
    %1278 = vmatpush2.msra.mxu0 %v307
    %1279 = vmatprep.subr.mxu0 %v306
    %1280 = vmatpush2.msra.mxu0 %v305
    %1281 = vmatprep.subr.mxu0 %v304
    %1282 = vmatpush2.msra.mxu0 %v303
    %1283 = vmatprep.subr.mxu0 %v302
    %1284 = vmatpush2.msra.mxu0 %v301
    %1285 = vmatprep.subr.mxu0 %v300
    %1286 = vmatpush2.msra.mxu0 %v299
    %1287 = vmatprep.subr.mxu0 %v298
    %1288 = vmatpush2.msra.mxu0 %v297
    %1289 = vmatprep.subr.mxu0 %v296
    %1290 = vmatpush2.msra.mxu0 %v295
    %1291 = vmatprep.mubr.f32.mxu0 %v136
    %1292 = vmatmul.mubr.f32.gmra.mxu0 %v135
    %v1293 = vpop.f32.mrf.mxu0
    %v1294 = vadd.f32 %v1181, %v1293
    %v1295 = vpop.f32.mrf.mxu0
    %v1296 = vadd.f32 %v1183, %v1295
    %1297 = vmatprep.mubr.f32.mxu0 %v144
    %1298 = vmatmul.mubr.f32.gmra.mxu0 %v143
    %v1299 = vpop.f32.mrf.mxu0
    %v1300 = vadd.f32 %v1187, %v1299
    %v1301 = vpop.f32.mrf.mxu0
    %v1302 = vadd.f32 %v1189, %v1301
    %1303 = vmatprep.mubr.f32.mxu0 %v152
    %1304 = vmatmul.mubr.f32.gmra.mxu0 %v151
    %v1305 = vpop.f32.mrf.mxu0
    %v1306 = vadd.f32 %v1193, %v1305
    %v1307 = vpop.f32.mrf.mxu0
    %v1308 = vadd.f32 %v1195, %v1307
    %1309 = vmatprep.mubr.f32.mxu0 %v160
    %1310 = vmatmul.mubr.f32.gmra.mxu0 %v159
    %v1311 = vpop.f32.mrf.mxu0
    %v1312 = vadd.f32 %v1199, %v1311
    %v1313 = vpop.f32.mrf.mxu0
    %v1314 = vadd.f32 %v1201, %v1313
    %1315 = vmatprep.mubr.f32.mxu0 %v168
    %1316 = vmatmul.mubr.f32.gmra.mxu0 %v167
    %v1317 = vpop.f32.mrf.mxu0
    %v1318 = vadd.f32 %v1205, %v1317
    %v1319 = vpop.f32.mrf.mxu0
    %v1320 = vadd.f32 %v1207, %v1319
    %1321 = vmatprep.mubr.f32.mxu0 %v176
    %1322 = vmatmul.mubr.f32.gmra.mxu0 %v175
    %v1323 = vpop.f32.mrf.mxu0
    %v1324 = vadd.f32 %v1211, %v1323
    %v1325 = vpop.f32.mrf.mxu0
    %v1326 = vadd.f32 %v1213, %v1325
    %1327 = vmatprep.mubr.f32.mxu0 %v184
    %1328 = vmatmul.mubr.f32.gmra.mxu0 %v183
    %v1329 = vpop.f32.mrf.mxu0
    %v1330 = vadd.f32 %v1217, %v1329
    %v1331 = vpop.f32.mrf.mxu0
    %v1332 = vadd.f32 %v1219, %v1331
    %1333 = vmatprep.mubr.f32.mxu0 %v192
    %1334 = vmatmul.mubr.f32.gmra.mxu0 %v191
    %v1335 = vpop.f32.mrf.mxu0
    %v1336 = vadd.f32 %v1223, %v1335
    %v1337 = vpop.f32.mrf.mxu0
    %v1338 = vadd.f32 %v1225, %v1337
    %1339 = vdwg.mxu0
    %1340 = vmatprep.subr.mxu0 %v358
    %1341 = vmatpush1.msra.mxu0 %v357
    %1342 = vmatprep.subr.mxu0 %v356
    %1343 = vmatpush1.msra.mxu0 %v355
    %1344 = vmatprep.subr.mxu0 %v354
    %1345 = vmatpush1.msra.mxu0 %v353
    %1346 = vmatprep.subr.mxu0 %v352
    %1347 = vmatpush1.msra.mxu0 %v351
    %1348 = vmatprep.subr.mxu0 %v350
    %1349 = vmatpush1.msra.mxu0 %v349
    %1350 = vmatprep.subr.mxu0 %v348
    %1351 = vmatpush1.msra.mxu0 %v347
    %1352 = vmatprep.subr.mxu0 %v346
    %1353 = vmatpush1.msra.mxu0 %v345
    %1354 = vmatprep.subr.mxu0 %v344
    %1355 = vmatpush1.msra.mxu0 %v343
    %1356 = vmatprep.subr.mxu0 %v342
    %1357 = vmatpush1.msra.mxu0 %v341
    %1358 = vmatprep.subr.mxu0 %v340
    %1359 = vmatpush1.msra.mxu0 %v339
    %1360 = vmatprep.subr.mxu0 %v338
    %1361 = vmatpush1.msra.mxu0 %v337
    %1362 = vmatprep.subr.mxu0 %v336
    %1363 = vmatpush1.msra.mxu0 %v335
    %1364 = vmatprep.subr.mxu0 %v334
    %1365 = vmatpush1.msra.mxu0 %v333
    %1366 = vmatprep.subr.mxu0 %v332
    %1367 = vmatpush1.msra.mxu0 %v331
    %1368 = vmatprep.subr.mxu0 %v330
    %1369 = vmatpush1.msra.mxu0 %v329
    %1370 = vmatprep.subr.mxu0 %v328
    %1371 = vmatpush1.msra.mxu0 %v327
    %1372 = vmatprep.subr.mxu0 %v390
    %1373 = vmatpush2.msra.mxu0 %v389
    %1374 = vmatprep.subr.mxu0 %v388
    %1375 = vmatpush2.msra.mxu0 %v387
    %1376 = vmatprep.subr.mxu0 %v386
    %1377 = vmatpush2.msra.mxu0 %v385
    %1378 = vmatprep.subr.mxu0 %v384
    %1379 = vmatpush2.msra.mxu0 %v383
    %1380 = vmatprep.subr.mxu0 %v382
    %1381 = vmatpush2.msra.mxu0 %v381
    %1382 = vmatprep.subr.mxu0 %v380
    %1383 = vmatpush2.msra.mxu0 %v379
    %1384 = vmatprep.subr.mxu0 %v378
    %1385 = vmatpush2.msra.mxu0 %v377
    %1386 = vmatprep.subr.mxu0 %v376
    %1387 = vmatpush2.msra.mxu0 %v375
    %1388 = vmatprep.subr.mxu0 %v374
    %1389 = vmatpush2.msra.mxu0 %v373
    %1390 = vmatprep.subr.mxu0 %v372
    %1391 = vmatpush2.msra.mxu0 %v371
    %1392 = vmatprep.subr.mxu0 %v370
    %1393 = vmatpush2.msra.mxu0 %v369
    %1394 = vmatprep.subr.mxu0 %v368
    %1395 = vmatpush2.msra.mxu0 %v367
    %1396 = vmatprep.subr.mxu0 %v366
    %1397 = vmatpush2.msra.mxu0 %v365
    %1398 = vmatprep.subr.mxu0 %v364
    %1399 = vmatpush2.msra.mxu0 %v363
    %1400 = vmatprep.subr.mxu0 %v362
    %1401 = vmatpush2.msra.mxu0 %v361
    %1402 = vmatprep.subr.mxu0 %v360
    %1403 = vmatpush2.msra.mxu0 %v359
    %1404 = vmatprep.mubr.f32.mxu0 %v138
    %1405 = vmatmul.mubr.f32.gmra.mxu0 %v137
    %v1406 = vpop.f32.mrf.mxu0
    %v1407 = vadd.f32 %v1294, %v1406
    %v1408 = vpop.f32.mrf.mxu0
    %v1409 = vadd.f32 %v1296, %v1408
    %1410 = vmatprep.mubr.f32.mxu0 %v146
    %1411 = vmatmul.mubr.f32.gmra.mxu0 %v145
    %v1412 = vpop.f32.mrf.mxu0
    %v1413 = vadd.f32 %v1300, %v1412
    %v1414 = vpop.f32.mrf.mxu0
    %v1415 = vadd.f32 %v1302, %v1414
    %1416 = vmatprep.mubr.f32.mxu0 %v154
    %1417 = vmatmul.mubr.f32.gmra.mxu0 %v153
    %v1418 = vpop.f32.mrf.mxu0
    %v1419 = vadd.f32 %v1306, %v1418
    %v1420 = vpop.f32.mrf.mxu0
    %v1421 = vadd.f32 %v1308, %v1420
    %1422 = vmatprep.mubr.f32.mxu0 %v162
    %1423 = vmatmul.mubr.f32.gmra.mxu0 %v161
    %v1424 = vpop.f32.mrf.mxu0
    %v1425 = vadd.f32 %v1312, %v1424
    %v1426 = vpop.f32.mrf.mxu0
    %v1427 = vadd.f32 %v1314, %v1426
    %1428 = vmatprep.mubr.f32.mxu0 %v170
    %1429 = vmatmul.mubr.f32.gmra.mxu0 %v169
    %v1430 = vpop.f32.mrf.mxu0
    %v1431 = vadd.f32 %v1318, %v1430
    %v1432 = vpop.f32.mrf.mxu0
    %v1433 = vadd.f32 %v1320, %v1432
    %1434 = vmatprep.mubr.f32.mxu0 %v178
    %1435 = vmatmul.mubr.f32.gmra.mxu0 %v177
    %v1436 = vpop.f32.mrf.mxu0
    %v1437 = vadd.f32 %v1324, %v1436
    %v1438 = vpop.f32.mrf.mxu0
    %v1439 = vadd.f32 %v1326, %v1438
    %1440 = vmatprep.mubr.f32.mxu0 %v186
    %1441 = vmatmul.mubr.f32.gmra.mxu0 %v185
    %v1442 = vpop.f32.mrf.mxu0
    %v1443 = vadd.f32 %v1330, %v1442
    %v1444 = vpop.f32.mrf.mxu0
    %v1445 = vadd.f32 %v1332, %v1444
    %1446 = vmatprep.mubr.f32.mxu0 %v194
    %1447 = vmatmul.mubr.f32.gmra.mxu0 %v193
    %v1448 = vpop.f32.mrf.mxu0
    %v1449 = vadd.f32 %v1336, %v1448
    %v1450 = vpop.f32.mrf.mxu0
    %v1451 = vadd.f32 %v1338, %v1450
    %1452 = vdwg.mxu0
    %1453 = vmatprep.subr.mxu0 %v422
    %1454 = vmatpush1.msra.mxu0 %v421
    %1455 = vmatprep.subr.mxu0 %v420
    %1456 = vmatpush1.msra.mxu0 %v419
    %1457 = vmatprep.subr.mxu0 %v418
    %1458 = vmatpush1.msra.mxu0 %v417
    %1459 = vmatprep.subr.mxu0 %v416
    %1460 = vmatpush1.msra.mxu0 %v415
    %1461 = vmatprep.subr.mxu0 %v414
    %1462 = vmatpush1.msra.mxu0 %v413
    %1463 = vmatprep.subr.mxu0 %v412
    %1464 = vmatpush1.msra.mxu0 %v411
    %1465 = vmatprep.subr.mxu0 %v410
    %1466 = vmatpush1.msra.mxu0 %v409
    %1467 = vmatprep.subr.mxu0 %v408
    %1468 = vmatpush1.msra.mxu0 %v407
    %1469 = vmatprep.subr.mxu0 %v406
    %1470 = vmatpush1.msra.mxu0 %v405
    %1471 = vmatprep.subr.mxu0 %v404
    %1472 = vmatpush1.msra.mxu0 %v403
    %1473 = vmatprep.subr.mxu0 %v402
    %1474 = vmatpush1.msra.mxu0 %v401
    %1475 = vmatprep.subr.mxu0 %v400
    %1476 = vmatpush1.msra.mxu0 %v399
    %1477 = vmatprep.subr.mxu0 %v398
    %1478 = vmatpush1.msra.mxu0 %v397
    %1479 = vmatprep.subr.mxu0 %v396
    %1480 = vmatpush1.msra.mxu0 %v395
    %1481 = vmatprep.subr.mxu0 %v394
    %1482 = vmatpush1.msra.mxu0 %v393
    %1483 = vmatprep.subr.mxu0 %v392
    %1484 = vmatpush1.msra.mxu0 %v391
    %1485 = vmatprep.subr.mxu0 %v454
    %1486 = vmatpush2.msra.mxu0 %v453
    %1487 = vmatprep.subr.mxu0 %v452
    %1488 = vmatpush2.msra.mxu0 %v451
    %1489 = vmatprep.subr.mxu0 %v450
    %1490 = vmatpush2.msra.mxu0 %v449
    %1491 = vmatprep.subr.mxu0 %v448
    %1492 = vmatpush2.msra.mxu0 %v447
    %1493 = vmatprep.subr.mxu0 %v446
    %1494 = vmatpush2.msra.mxu0 %v445
    %1495 = vmatprep.subr.mxu0 %v444
    %1496 = vmatpush2.msra.mxu0 %v443
    %1497 = vmatprep.subr.mxu0 %v442
    %1498 = vmatpush2.msra.mxu0 %v441
    %1499 = vmatprep.subr.mxu0 %v440
    %1500 = vmatpush2.msra.mxu0 %v439
    %1501 = vmatprep.subr.mxu0 %v438
    %1502 = vmatpush2.msra.mxu0 %v437
    %1503 = vmatprep.subr.mxu0 %v436
    %1504 = vmatpush2.msra.mxu0 %v435
    %1505 = vmatprep.subr.mxu0 %v434
    %1506 = vmatpush2.msra.mxu0 %v433
    %1507 = vmatprep.subr.mxu0 %v432
    %1508 = vmatpush2.msra.mxu0 %v431
    %1509 = vmatprep.subr.mxu0 %v430
    %1510 = vmatpush2.msra.mxu0 %v429
    %1511 = vmatprep.subr.mxu0 %v428
    %1512 = vmatpush2.msra.mxu0 %v427
    %1513 = vmatprep.subr.mxu0 %v426
    %1514 = vmatpush2.msra.mxu0 %v425
    %1515 = vmatprep.subr.mxu0 %v424
    %1516 = vmatpush2.msra.mxu0 %v423
    %1517 = vmatprep.mubr.f32.mxu0 %v140
    %1518 = vmatmul.mubr.f32.gmra.mxu0 %v139
    %v1519 = vpop.f32.mrf.mxu0
    %v1520 = vadd.f32 %v1407, %v1519
    %v1521 = vpop.f32.mrf.mxu0
    %v1522 = vadd.f32 %v1409, %v1521
    %1523 = vmatprep.mubr.f32.mxu0 %v148
    %1524 = vmatmul.mubr.f32.gmra.mxu0 %v147
    %v1525 = vpop.f32.mrf.mxu0
    %v1526 = vadd.f32 %v1413, %v1525
    %v1527 = vpop.f32.mrf.mxu0
    %v1528 = vadd.f32 %v1415, %v1527
    %1529 = vmatprep.mubr.f32.mxu0 %v156
    %1530 = vmatmul.mubr.f32.gmra.mxu0 %v155
    %v1531 = vpop.f32.mrf.mxu0
    %v1532 = vadd.f32 %v1419, %v1531
    %v1533 = vpop.f32.mrf.mxu0
    %v1534 = vadd.f32 %v1421, %v1533
    %1535 = vmatprep.mubr.f32.mxu0 %v164
    %1536 = vmatmul.mubr.f32.gmra.mxu0 %v163
    %v1537 = vpop.f32.mrf.mxu0
    %v1538 = vadd.f32 %v1425, %v1537
    %v1539 = vpop.f32.mrf.mxu0
    %v1540 = vadd.f32 %v1427, %v1539
    %1541 = vmatprep.mubr.f32.mxu0 %v172
    %1542 = vmatmul.mubr.f32.gmra.mxu0 %v171
    %v1543 = vpop.f32.mrf.mxu0
    %v1544 = vadd.f32 %v1431, %v1543
    %v1545 = vpop.f32.mrf.mxu0
    %v1546 = vadd.f32 %v1433, %v1545
    %1547 = vmatprep.mubr.f32.mxu0 %v180
    %1548 = vmatmul.mubr.f32.gmra.mxu0 %v179
    %v1549 = vpop.f32.mrf.mxu0
    %v1550 = vadd.f32 %v1437, %v1549
    %v1551 = vpop.f32.mrf.mxu0
    %v1552 = vadd.f32 %v1439, %v1551
    %1553 = vmatprep.mubr.f32.mxu0 %v188
    %1554 = vmatmul.mubr.f32.gmra.mxu0 %v187
    %v1555 = vpop.f32.mrf.mxu0
    %v1556 = vadd.f32 %v1443, %v1555
    %v1557 = vpop.f32.mrf.mxu0
    %v1558 = vadd.f32 %v1445, %v1557
    %1559 = vmatprep.mubr.f32.mxu0 %v196
    %1560 = vmatmul.mubr.f32.gmra.mxu0 %v195
    %v1561 = vpop.f32.mrf.mxu0
    %v1562 = vadd.f32 %v1449, %v1561
    %v1563 = vpop.f32.mrf.mxu0
    %v1564 = vadd.f32 %v1451, %v1563
    %1565 = vdwg.mxu0
    %1566 = vmatprep.subr.mxu0 %v486
    %1567 = vmatpush1.msra.mxu0 %v485
    %1568 = vmatprep.subr.mxu0 %v484
    %1569 = vmatpush1.msra.mxu0 %v483
    %1570 = vmatprep.subr.mxu0 %v482
    %1571 = vmatpush1.msra.mxu0 %v481
    %1572 = vmatprep.subr.mxu0 %v480
    %1573 = vmatpush1.msra.mxu0 %v479
    %1574 = vmatprep.subr.mxu0 %v478
    %1575 = vmatpush1.msra.mxu0 %v477
    %1576 = vmatprep.subr.mxu0 %v476
    %1577 = vmatpush1.msra.mxu0 %v475
    %1578 = vmatprep.subr.mxu0 %v474
    %1579 = vmatpush1.msra.mxu0 %v473
    %1580 = vmatprep.subr.mxu0 %v472
    %1581 = vmatpush1.msra.mxu0 %v471
    %1582 = vmatprep.subr.mxu0 %v470
    %1583 = vmatpush1.msra.mxu0 %v469
    %1584 = vmatprep.subr.mxu0 %v468
    %1585 = vmatpush1.msra.mxu0 %v467
    %1586 = vmatprep.subr.mxu0 %v466
    %1587 = vmatpush1.msra.mxu0 %v465
    %1588 = vmatprep.subr.mxu0 %v464
    %1589 = vmatpush1.msra.mxu0 %v463
    %1590 = vmatprep.subr.mxu0 %v462
    %1591 = vmatpush1.msra.mxu0 %v461
    %1592 = vmatprep.subr.mxu0 %v460
    %1593 = vmatpush1.msra.mxu0 %v459
    %1594 = vmatprep.subr.mxu0 %v458
    %1595 = vmatpush1.msra.mxu0 %v457
    %1596 = vmatprep.subr.mxu0 %v456
    %1597 = vmatpush1.msra.mxu0 %v455
    %1598 = vmatprep.subr.mxu0 %v518
    %1599 = vmatpush2.msra.mxu0 %v517
    %1600 = vmatprep.subr.mxu0 %v516
    %1601 = vmatpush2.msra.mxu0 %v515
    %1602 = vmatprep.subr.mxu0 %v514
    %1603 = vmatpush2.msra.mxu0 %v513
    %1604 = vmatprep.subr.mxu0 %v512
    %1605 = vmatpush2.msra.mxu0 %v511
    %1606 = vmatprep.subr.mxu0 %v510
    %1607 = vmatpush2.msra.mxu0 %v509
    %1608 = vmatprep.subr.mxu0 %v508
    %1609 = vmatpush2.msra.mxu0 %v507
    %1610 = vmatprep.subr.mxu0 %v506
    %1611 = vmatpush2.msra.mxu0 %v505
    %1612 = vmatprep.subr.mxu0 %v504
    %1613 = vmatpush2.msra.mxu0 %v503
    %1614 = vmatprep.subr.mxu0 %v502
    %1615 = vmatpush2.msra.mxu0 %v501
    %1616 = vmatprep.subr.mxu0 %v500
    %1617 = vmatpush2.msra.mxu0 %v499
    %1618 = vmatprep.subr.mxu0 %v498
    %1619 = vmatpush2.msra.mxu0 %v497
    %1620 = vmatprep.subr.mxu0 %v496
    %1621 = vmatpush2.msra.mxu0 %v495
    %1622 = vmatprep.subr.mxu0 %v494
    %1623 = vmatpush2.msra.mxu0 %v493
    %1624 = vmatprep.subr.mxu0 %v492
    %1625 = vmatpush2.msra.mxu0 %v491
    %1626 = vmatprep.subr.mxu0 %v490
    %1627 = vmatpush2.msra.mxu0 %v489
    %1628 = vmatprep.subr.mxu0 %v488
    %1629 = vmatpush2.msra.mxu0 %v487
    %1630 = vmatprep.mubr.f32.mxu0 %v142
    %1631 = vmatmul.mubr.f32.gmra.mxu0 %v141
    %v1632 = vpop.f32.mrf.mxu0
    %v1633 = vadd.f32 %v1520, %v1632
    %v1634 = vpop.f32.mrf.mxu0
    %v1635 = vadd.f32 %v1522, %v1634
    %1636 = vmatprep.mubr.f32.mxu0 %v150
    %1637 = vmatmul.mubr.f32.gmra.mxu0 %v149
    %v1638 = vpop.f32.mrf.mxu0
    %v1639 = vadd.f32 %v1526, %v1638
    %v1640 = vpop.f32.mrf.mxu0
    %v1641 = vadd.f32 %v1528, %v1640
    %1642 = vmatprep.mubr.f32.mxu0 %v158
    %1643 = vmatmul.mubr.f32.gmra.mxu0 %v157
    %v1644 = vpop.f32.mrf.mxu0
    %v1645 = vadd.f32 %v1532, %v1644
    %v1646 = vpop.f32.mrf.mxu0
    %v1647 = vadd.f32 %v1534, %v1646
    %1648 = vmatprep.mubr.f32.mxu0 %v166
    %1649 = vmatmul.mubr.f32.gmra.mxu0 %v165
    %v1650 = vpop.f32.mrf.mxu0
    %v1651 = vadd.f32 %v1538, %v1650
    %v1652 = vpop.f32.mrf.mxu0
    %v1653 = vadd.f32 %v1540, %v1652
    %1654 = vmatprep.mubr.f32.mxu0 %v174
    %1655 = vmatmul.mubr.f32.gmra.mxu0 %v173
    %v1656 = vpop.f32.mrf.mxu0
    %v1657 = vadd.f32 %v1544, %v1656
    %v1658 = vpop.f32.mrf.mxu0
    %v1659 = vadd.f32 %v1546, %v1658
    %1660 = vmatprep.mubr.f32.mxu0 %v182
    %1661 = vmatmul.mubr.f32.gmra.mxu0 %v181
    %v1662 = vpop.f32.mrf.mxu0
    %v1663 = vadd.f32 %v1550, %v1662
    %v1664 = vpop.f32.mrf.mxu0
    %v1665 = vadd.f32 %v1552, %v1664
    %1666 = vmatprep.mubr.f32.mxu0 %v190
    %1667 = vmatmul.mubr.f32.gmra.mxu0 %v189
    %v1668 = vpop.f32.mrf.mxu0
    %v1669 = vadd.f32 %v1556, %v1668
    %v1670 = vpop.f32.mrf.mxu0
    %v1671 = vadd.f32 %v1558, %v1670
    %1672 = vmatprep.mubr.f32.mxu0 %v198
    %1673 = vmatmul.mubr.f32.gmra.mxu0 %v197
    %v1674 = vpop.f32.mrf.mxu0
    %v1675 = vadd.f32 %v1562, %v1674
    %v1676 = vpop.f32.mrf.mxu0
    %v1677 = vadd.f32 %v1564, %v1676
    %1678 = vdwg.mxu0
    %v1679 = vsub.f32 %v135, %v199
    %v1680 = vsub.f32 %v136, %v200
    %v1681 = vsub.f32 %v137, %v201
    %v1682 = vsub.f32 %v138, %v202
    %v1683 = vsub.f32 %v139, %v203
    %v1684 = vsub.f32 %v140, %v204
    %v1685 = vsub.f32 %v141, %v205
    %v1686 = vsub.f32 %v142, %v206
    %v1687 = vsub.f32 %v143, %v207
    %v1688 = vsub.f32 %v144, %v208
    %v1689 = vsub.f32 %v145, %v209
    %v1690 = vsub.f32 %v146, %v210
    %v1691 = vsub.f32 %v147, %v211
    %v1692 = vsub.f32 %v148, %v212
    %v1693 = vsub.f32 %v149, %v213
    %v1694 = vsub.f32 %v150, %v214
    %v1695 = vsub.f32 %v151, %v215
    %v1696 = vsub.f32 %v152, %v216
    %v1697 = vsub.f32 %v153, %v217
    %v1698 = vsub.f32 %v154, %v218
    %v1699 = vsub.f32 %v155, %v219
    %v1700 = vsub.f32 %v156, %v220
    %v1701 = vsub.f32 %v157, %v221
    %v1702 = vsub.f32 %v158, %v222
    %v1703 = vsub.f32 %v159, %v223
    %v1704 = vsub.f32 %v160, %v224
    %v1705 = vsub.f32 %v161, %v225
    %v1706 = vsub.f32 %v162, %v226
    %v1707 = vsub.f32 %v163, %v227
    %v1708 = vsub.f32 %v164, %v228
    %v1709 = vsub.f32 %v165, %v229
    %v1710 = vsub.f32 %v166, %v230
    %v1711 = vsub.f32 %v167, %v231
    %v1712 = vsub.f32 %v168, %v232
    %v1713 = vsub.f32 %v169, %v233
    %v1714 = vsub.f32 %v170, %v234
    %v1715 = vsub.f32 %v171, %v235
    %v1716 = vsub.f32 %v172, %v236
    %v1717 = vsub.f32 %v173, %v237
    %v1718 = vsub.f32 %v174, %v238
    %v1719 = vsub.f32 %v175, %v239
    %v1720 = vsub.f32 %v176, %v240
    %v1721 = vsub.f32 %v177, %v241
    %v1722 = vsub.f32 %v178, %v242
    %v1723 = vsub.f32 %v179, %v243
    %v1724 = vsub.f32 %v180, %v244
    %v1725 = vsub.f32 %v181, %v245
    %v1726 = vsub.f32 %v182, %v246
    %v1727 = vsub.f32 %v183, %v247
    %v1728 = vsub.f32 %v184, %v248
    %v1729 = vsub.f32 %v185, %v249
    %v1730 = vsub.f32 %v186, %v250
    %v1731 = vsub.f32 %v187, %v251
    %v1732 = vsub.f32 %v188, %v252
    %v1733 = vsub.f32 %v189, %v253
    %v1734 = vsub.f32 %v190, %v254
    %v1735 = vsub.f32 %v191, %v255
    %v1736 = vsub.f32 %v192, %v256
    %v1737 = vsub.f32 %v193, %v257
    %v1738 = vsub.f32 %v194, %v258
    %v1739 = vsub.f32 %v195, %v259
    %v1740 = vsub.f32 %v196, %v260
    %v1741 = vsub.f32 %v197, %v261
    %v1742 = vsub.f32 %v198, %v262
    %v1743 = vand.u32 2147483647, %v1679
    %v1744 = vand.u32 2147483647, %v1680
    %v1745 = vand.u32 2147483647, %v1681
    %v1746 = vand.u32 2147483647, %v1682
    %v1747 = vand.u32 2147483647, %v1683
    %v1748 = vand.u32 2147483647, %v1684
    %v1749 = vand.u32 2147483647, %v1685
    %v1750 = vand.u32 2147483647, %v1686
    %v1751 = vand.u32 2147483647, %v1687
    %v1752 = vand.u32 2147483647, %v1688
    %v1753 = vand.u32 2147483647, %v1689
    %v1754 = vand.u32 2147483647, %v1690
    %v1755 = vand.u32 2147483647, %v1691
    %v1756 = vand.u32 2147483647, %v1692
    %v1757 = vand.u32 2147483647, %v1693
    %v1758 = vand.u32 2147483647, %v1694
    %v1759 = vand.u32 2147483647, %v1695
    %v1760 = vand.u32 2147483647, %v1696
    %v1761 = vand.u32 2147483647, %v1697
    %v1762 = vand.u32 2147483647, %v1698
    %v1763 = vand.u32 2147483647, %v1699
    %v1764 = vand.u32 2147483647, %v1700
    %v1765 = vand.u32 2147483647, %v1701
    %v1766 = vand.u32 2147483647, %v1702
    %v1767 = vand.u32 2147483647, %v1703
    %v1768 = vand.u32 2147483647, %v1704
    %v1769 = vand.u32 2147483647, %v1705
    %v1770 = vand.u32 2147483647, %v1706
    %v1771 = vand.u32 2147483647, %v1707
    %v1772 = vand.u32 2147483647, %v1708
    %v1773 = vand.u32 2147483647, %v1709
    %v1774 = vand.u32 2147483647, %v1710
    %v1775 = vand.u32 2147483647, %v1711
    %v1776 = vand.u32 2147483647, %v1712
    %v1777 = vand.u32 2147483647, %v1713
    %v1778 = vand.u32 2147483647, %v1714
    %v1779 = vand.u32 2147483647, %v1715
    %v1780 = vand.u32 2147483647, %v1716
    %v1781 = vand.u32 2147483647, %v1717
    %v1782 = vand.u32 2147483647, %v1718
    %v1783 = vand.u32 2147483647, %v1719
    %v1784 = vand.u32 2147483647, %v1720
    %v1785 = vand.u32 2147483647, %v1721
    %v1786 = vand.u32 2147483647, %v1722
    %v1787 = vand.u32 2147483647, %v1723
    %v1788 = vand.u32 2147483647, %v1724
    %v1789 = vand.u32 2147483647, %v1725
    %v1790 = vand.u32 2147483647, %v1726
    %v1791 = vand.u32 2147483647, %v1727
    %v1792 = vand.u32 2147483647, %v1728
    %v1793 = vand.u32 2147483647, %v1729
    %v1794 = vand.u32 2147483647, %v1730
    %v1795 = vand.u32 2147483647, %v1731
    %v1796 = vand.u32 2147483647, %v1732
    %v1797 = vand.u32 2147483647, %v1733
    %v1798 = vand.u32 2147483647, %v1734
    %v1799 = vand.u32 2147483647, %v1735
    %v1800 = vand.u32 2147483647, %v1736
    %v1801 = vand.u32 2147483647, %v1737
    %v1802 = vand.u32 2147483647, %v1738
    %v1803 = vand.u32 2147483647, %v1739
    %v1804 = vand.u32 2147483647, %v1740
    %v1805 = vand.u32 2147483647, %v1741
    %v1806 = vand.u32 2147483647, %v1742
    %v1807 = vld [vmem:[#allocation11] sm:$0xff]
    %v1808 = vld [vmem:[#allocation11 + $0x8] sm:$0xff]
    %v1809 = vld [vmem:[#allocation11 + $0x10] sm:$0xff]
    %v1810 = vld [vmem:[#allocation11 + $0x18] sm:$0xff]
    %v1811 = vld [vmem:[#allocation11 + $0x20] sm:$0xff]
    %v1812 = vld [vmem:[#allocation11 + $0x28] sm:$0xff]
    %v1813 = vld [vmem:[#allocation11 + $0x30] sm:$0xff]
    %v1814 = vld [vmem:[#allocation11 + $0x38] sm:$0xff]
    %v1815 = vld [vmem:[#allocation11 + $0x40] sm:$0xff]
    %v1816 = vld [vmem:[#allocation11 + $0x48] sm:$0xff]
    %v1817 = vld [vmem:[#allocation11 + $0x50] sm:$0xff]
    %v1818 = vld [vmem:[#allocation11 + $0x58] sm:$0xff]
    %v1819 = vld [vmem:[#allocation11 + $0x60] sm:$0xff]
    %v1820 = vld [vmem:[#allocation11 + $0x68] sm:$0xff]
    %v1821 = vld [vmem:[#allocation11 + $0x70] sm:$0xff]
    %v1822 = vld [vmem:[#allocation11 + $0x78] sm:$0xff]
    %v1823 = vld [vmem:[#allocation11 + $0x80] sm:$0xff]
    %v1824 = vld [vmem:[#allocation11 + $0x88] sm:$0xff]
    %v1825 = vld [vmem:[#allocation11 + $0x90] sm:$0xff]
    %v1826 = vld [vmem:[#allocation11 + $0x98] sm:$0xff]
    %v1827 = vld [vmem:[#allocation11 + $0xa0] sm:$0xff]
    %v1828 = vld [vmem:[#allocation11 + $0xa8] sm:$0xff]
    %v1829 = vld [vmem:[#allocation11 + $0xb0] sm:$0xff]
    %v1830 = vld [vmem:[#allocation11 + $0xb8] sm:$0xff]
    %v1831 = vld [vmem:[#allocation11 + $0xc0] sm:$0xff]
    %v1832 = vld [vmem:[#allocation11 + $0xc8] sm:$0xff]
    %v1833 = vld [vmem:[#allocation11 + $0xd0] sm:$0xff]
    %v1834 = vld [vmem:[#allocation11 + $0xd8] sm:$0xff]
    %v1835 = vld [vmem:[#allocation11 + $0xe0] sm:$0xff]
    %v1836 = vld [vmem:[#allocation11 + $0xe8] sm:$0xff]
    %v1837 = vld [vmem:[#allocation11 + $0xf0] sm:$0xff]
    %v1838 = vld [vmem:[#allocation11 + $0xf8] sm:$0xff]
    %v1839 = vld [vmem:[#allocation11 + $0x100] sm:$0xff]
    %v1840 = vld [vmem:[#allocation11 + $0x108] sm:$0xff]
    %v1841 = vld [vmem:[#allocation11 + $0x110] sm:$0xff]
    %v1842 = vld [vmem:[#allocation11 + $0x118] sm:$0xff]
    %v1843 = vld [vmem:[#allocation11 + $0x120] sm:$0xff]
    %v1844 = vld [vmem:[#allocation11 + $0x128] sm:$0xff]
    %v1845 = vld [vmem:[#allocation11 + $0x130] sm:$0xff]
    %v1846 = vld [vmem:[#allocation11 + $0x138] sm:$0xff]
    %v1847 = vld [vmem:[#allocation11 + $0x140] sm:$0xff]
    %v1848 = vld [vmem:[#allocation11 + $0x148] sm:$0xff]
    %v1849 = vld [vmem:[#allocation11 + $0x150] sm:$0xff]
    %v1850 = vld [vmem:[#allocation11 + $0x158] sm:$0xff]
    %v1851 = vld [vmem:[#allocation11 + $0x160] sm:$0xff]
    %v1852 = vld [vmem:[#allocation11 + $0x168] sm:$0xff]
    %v1853 = vld [vmem:[#allocation11 + $0x170] sm:$0xff]
    %v1854 = vld [vmem:[#allocation11 + $0x178] sm:$0xff]
    %v1855 = vld [vmem:[#allocation11 + $0x180] sm:$0xff]
    %v1856 = vld [vmem:[#allocation11 + $0x188] sm:$0xff]
    %v1857 = vld [vmem:[#allocation11 + $0x190] sm:$0xff]
    %v1858 = vld [vmem:[#allocation11 + $0x198] sm:$0xff]
    %v1859 = vld [vmem:[#allocation11 + $0x1a0] sm:$0xff]
    %v1860 = vld [vmem:[#allocation11 + $0x1a8] sm:$0xff]
    %v1861 = vld [vmem:[#allocation11 + $0x1b0] sm:$0xff]
    %v1862 = vld [vmem:[#allocation11 + $0x1b8] sm:$0xff]
    %v1863 = vld [vmem:[#allocation11 + $0x1c0] sm:$0xff]
    %v1864 = vld [vmem:[#allocation11 + $0x1c8] sm:$0xff]
    %v1865 = vld [vmem:[#allocation11 + $0x1d0] sm:$0xff]
    %v1866 = vld [vmem:[#allocation11 + $0x1d8] sm:$0xff]
    %v1867 = vld [vmem:[#allocation11 + $0x1e0] sm:$0xff]
    %v1868 = vld [vmem:[#allocation11 + $0x1e8] sm:$0xff]
    %v1869 = vld [vmem:[#allocation11 + $0x1f0] sm:$0xff]
    %v1870 = vld [vmem:[#allocation11 + $0x1f8] sm:$0xff]
    %v1871 = vld [vmem:[#allocation11 + $0x200] sm:$0xff]
    %v1872 = vld [vmem:[#allocation11 + $0x208] sm:$0xff]
    %v1873 = vld [vmem:[#allocation11 + $0x210] sm:$0xff]
    %v1874 = vld [vmem:[#allocation11 + $0x218] sm:$0xff]
    %v1875 = vld [vmem:[#allocation11 + $0x220] sm:$0xff]
    %v1876 = vld [vmem:[#allocation11 + $0x228] sm:$0xff]
    %v1877 = vld [vmem:[#allocation11 + $0x230] sm:$0xff]
    %v1878 = vld [vmem:[#allocation11 + $0x238] sm:$0xff]
    %v1879 = vld [vmem:[#allocation11 + $0x240] sm:$0xff]
    %v1880 = vld [vmem:[#allocation11 + $0x248] sm:$0xff]
    %v1881 = vld [vmem:[#allocation11 + $0x250] sm:$0xff]
    %v1882 = vld [vmem:[#allocation11 + $0x258] sm:$0xff]
    %v1883 = vld [vmem:[#allocation11 + $0x260] sm:$0xff]
    %v1884 = vld [vmem:[#allocation11 + $0x268] sm:$0xff]
    %v1885 = vld [vmem:[#allocation11 + $0x270] sm:$0xff]
    %v1886 = vld [vmem:[#allocation11 + $0x278] sm:$0xff]
    %v1887 = vld [vmem:[#allocation11 + $0x280] sm:$0xff]
    %v1888 = vld [vmem:[#allocation11 + $0x288] sm:$0xff]
    %v1889 = vld [vmem:[#allocation11 + $0x290] sm:$0xff]
    %v1890 = vld [vmem:[#allocation11 + $0x298] sm:$0xff]
    %v1891 = vld [vmem:[#allocation11 + $0x2a0] sm:$0xff]
    %v1892 = vld [vmem:[#allocation11 + $0x2a8] sm:$0xff]
    %v1893 = vld [vmem:[#allocation11 + $0x2b0] sm:$0xff]
    %v1894 = vld [vmem:[#allocation11 + $0x2b8] sm:$0xff]
    %v1895 = vld [vmem:[#allocation11 + $0x2c0] sm:$0xff]
    %v1896 = vld [vmem:[#allocation11 + $0x2c8] sm:$0xff]
    %v1897 = vld [vmem:[#allocation11 + $0x2d0] sm:$0xff]
    %v1898 = vld [vmem:[#allocation11 + $0x2d8] sm:$0xff]
    %v1899 = vld [vmem:[#allocation11 + $0x2e0] sm:$0xff]
    %v1900 = vld [vmem:[#allocation11 + $0x2e8] sm:$0xff]
    %v1901 = vld [vmem:[#allocation11 + $0x2f0] sm:$0xff]
    %v1902 = vld [vmem:[#allocation11 + $0x2f8] sm:$0xff]
    %v1903 = vld [vmem:[#allocation11 + $0x300] sm:$0xff]
    %v1904 = vld [vmem:[#allocation11 + $0x308] sm:$0xff]
    %v1905 = vld [vmem:[#allocation11 + $0x310] sm:$0xff]
    %v1906 = vld [vmem:[#allocation11 + $0x318] sm:$0xff]
    %v1907 = vld [vmem:[#allocation11 + $0x320] sm:$0xff]
    %v1908 = vld [vmem:[#allocation11 + $0x328] sm:$0xff]
    %v1909 = vld [vmem:[#allocation11 + $0x330] sm:$0xff]
    %v1910 = vld [vmem:[#allocation11 + $0x338] sm:$0xff]
    %v1911 = vld [vmem:[#allocation11 + $0x340] sm:$0xff]
    %v1912 = vld [vmem:[#allocation11 + $0x348] sm:$0xff]
    %v1913 = vld [vmem:[#allocation11 + $0x350] sm:$0xff]
    %v1914 = vld [vmem:[#allocation11 + $0x358] sm:$0xff]
    %v1915 = vld [vmem:[#allocation11 + $0x360] sm:$0xff]
    %v1916 = vld [vmem:[#allocation11 + $0x368] sm:$0xff]
    %v1917 = vld [vmem:[#allocation11 + $0x370] sm:$0xff]
    %v1918 = vld [vmem:[#allocation11 + $0x378] sm:$0xff]
    %v1919 = vld [vmem:[#allocation11 + $0x380] sm:$0xff]
    %v1920 = vld [vmem:[#allocation11 + $0x388] sm:$0xff]
    %v1921 = vld [vmem:[#allocation11 + $0x390] sm:$0xff]
    %v1922 = vld [vmem:[#allocation11 + $0x398] sm:$0xff]
    %v1923 = vld [vmem:[#allocation11 + $0x3a0] sm:$0xff]
    %v1924 = vld [vmem:[#allocation11 + $0x3a8] sm:$0xff]
    %v1925 = vld [vmem:[#allocation11 + $0x3b0] sm:$0xff]
    %v1926 = vld [vmem:[#allocation11 + $0x3b8] sm:$0xff]
    %v1927 = vld [vmem:[#allocation11 + $0x3c0] sm:$0xff]
    %v1928 = vld [vmem:[#allocation11 + $0x3c8] sm:$0xff]
    %v1929 = vld [vmem:[#allocation11 + $0x3d0] sm:$0xff]
    %v1930 = vld [vmem:[#allocation11 + $0x3d8] sm:$0xff]
    %v1931 = vld [vmem:[#allocation11 + $0x3e0] sm:$0xff]
    %v1932 = vld [vmem:[#allocation11 + $0x3e8] sm:$0xff]
    %v1933 = vld [vmem:[#allocation11 + $0x3f0] sm:$0xff]
    %v1934 = vld [vmem:[#allocation11 + $0x3f8] sm:$0xff]
    %v1935 = vld [vmem:[#allocation11 + $0x400] sm:$0xff]
    %v1936 = vld [vmem:[#allocation11 + $0x408] sm:$0xff]
    %v1937 = vld [vmem:[#allocation11 + $0x410] sm:$0xff]
    %v1938 = vld [vmem:[#allocation11 + $0x418] sm:$0xff]
    %v1939 = vld [vmem:[#allocation11 + $0x420] sm:$0xff]
    %v1940 = vld [vmem:[#allocation11 + $0x428] sm:$0xff]
    %v1941 = vld [vmem:[#allocation11 + $0x430] sm:$0xff]
    %v1942 = vld [vmem:[#allocation11 + $0x438] sm:$0xff]
    %v1943 = vld [vmem:[#allocation11 + $0x440] sm:$0xff]
    %v1944 = vld [vmem:[#allocation11 + $0x448] sm:$0xff]
    %v1945 = vld [vmem:[#allocation11 + $0x450] sm:$0xff]
    %v1946 = vld [vmem:[#allocation11 + $0x458] sm:$0xff]
    %v1947 = vld [vmem:[#allocation11 + $0x460] sm:$0xff]
    %v1948 = vld [vmem:[#allocation11 + $0x468] sm:$0xff]
    %v1949 = vld [vmem:[#allocation11 + $0x470] sm:$0xff]
    %v1950 = vld [vmem:[#allocation11 + $0x478] sm:$0xff]
    %v1951 = vld [vmem:[#allocation11 + $0x480] sm:$0xff]
    %v1952 = vld [vmem:[#allocation11 + $0x488] sm:$0xff]
    %v1953 = vld [vmem:[#allocation11 + $0x490] sm:$0xff]
    %v1954 = vld [vmem:[#allocation11 + $0x498] sm:$0xff]
    %v1955 = vld [vmem:[#allocation11 + $0x4a0] sm:$0xff]
    %v1956 = vld [vmem:[#allocation11 + $0x4a8] sm:$0xff]
    %v1957 = vld [vmem:[#allocation11 + $0x4b0] sm:$0xff]
    %v1958 = vld [vmem:[#allocation11 + $0x4b8] sm:$0xff]
    %v1959 = vld [vmem:[#allocation11 + $0x4c0] sm:$0xff]
    %v1960 = vld [vmem:[#allocation11 + $0x4c8] sm:$0xff]
    %v1961 = vld [vmem:[#allocation11 + $0x4d0] sm:$0xff]
    %v1962 = vld [vmem:[#allocation11 + $0x4d8] sm:$0xff]
    %v1963 = vld [vmem:[#allocation11 + $0x4e0] sm:$0xff]
    %v1964 = vld [vmem:[#allocation11 + $0x4e8] sm:$0xff]
    %v1965 = vld [vmem:[#allocation11 + $0x4f0] sm:$0xff]
    %v1966 = vld [vmem:[#allocation11 + $0x4f8] sm:$0xff]
    %v1967 = vld [vmem:[#allocation11 + $0x500] sm:$0xff]
    %v1968 = vld [vmem:[#allocation11 + $0x508] sm:$0xff]
    %v1969 = vld [vmem:[#allocation11 + $0x510] sm:$0xff]
    %v1970 = vld [vmem:[#allocation11 + $0x518] sm:$0xff]
    %v1971 = vld [vmem:[#allocation11 + $0x520] sm:$0xff]
    %v1972 = vld [vmem:[#allocation11 + $0x528] sm:$0xff]
    %v1973 = vld [vmem:[#allocation11 + $0x530] sm:$0xff]
    %v1974 = vld [vmem:[#allocation11 + $0x538] sm:$0xff]
    %v1975 = vld [vmem:[#allocation11 + $0x540] sm:$0xff]
    %v1976 = vld [vmem:[#allocation11 + $0x548] sm:$0xff]
    %v1977 = vld [vmem:[#allocation11 + $0x550] sm:$0xff]
    %v1978 = vld [vmem:[#allocation11 + $0x558] sm:$0xff]
    %v1979 = vld [vmem:[#allocation11 + $0x560] sm:$0xff]
    %v1980 = vld [vmem:[#allocation11 + $0x568] sm:$0xff]
    %v1981 = vld [vmem:[#allocation11 + $0x570] sm:$0xff]
    %v1982 = vld [vmem:[#allocation11 + $0x578] sm:$0xff]
    %v1983 = vld [vmem:[#allocation11 + $0x580] sm:$0xff]
    %v1984 = vld [vmem:[#allocation11 + $0x588] sm:$0xff]
    %v1985 = vld [vmem:[#allocation11 + $0x590] sm:$0xff]
    %v1986 = vld [vmem:[#allocation11 + $0x598] sm:$0xff]
    %v1987 = vld [vmem:[#allocation11 + $0x5a0] sm:$0xff]
    %v1988 = vld [vmem:[#allocation11 + $0x5a8] sm:$0xff]
    %v1989 = vld [vmem:[#allocation11 + $0x5b0] sm:$0xff]
    %v1990 = vld [vmem:[#allocation11 + $0x5b8] sm:$0xff]
    %v1991 = vld [vmem:[#allocation11 + $0x5c0] sm:$0xff]
    %v1992 = vld [vmem:[#allocation11 + $0x5c8] sm:$0xff]
    %v1993 = vld [vmem:[#allocation11 + $0x5d0] sm:$0xff]
    %v1994 = vld [vmem:[#allocation11 + $0x5d8] sm:$0xff]
    %v1995 = vld [vmem:[#allocation11 + $0x5e0] sm:$0xff]
    %v1996 = vld [vmem:[#allocation11 + $0x5e8] sm:$0xff]
    %v1997 = vld [vmem:[#allocation11 + $0x5f0] sm:$0xff]
    %v1998 = vld [vmem:[#allocation11 + $0x5f8] sm:$0xff]
    %v1999 = vld [vmem:[#allocation11 + $0x600] sm:$0xff]
    %v2000 = vld [vmem:[#allocation11 + $0x608] sm:$0xff]
    %v2001 = vld [vmem:[#allocation11 + $0x610] sm:$0xff]
    %v2002 = vld [vmem:[#allocation11 + $0x618] sm:$0xff]
    %v2003 = vld [vmem:[#allocation11 + $0x620] sm:$0xff]
    %v2004 = vld [vmem:[#allocation11 + $0x628] sm:$0xff]
    %v2005 = vld [vmem:[#allocation11 + $0x630] sm:$0xff]
    %v2006 = vld [vmem:[#allocation11 + $0x638] sm:$0xff]
    %v2007 = vld [vmem:[#allocation11 + $0x640] sm:$0xff]
    %v2008 = vld [vmem:[#allocation11 + $0x648] sm:$0xff]
    %v2009 = vld [vmem:[#allocation11 + $0x650] sm:$0xff]
    %v2010 = vld [vmem:[#allocation11 + $0x658] sm:$0xff]
    %v2011 = vld [vmem:[#allocation11 + $0x660] sm:$0xff]
    %v2012 = vld [vmem:[#allocation11 + $0x668] sm:$0xff]
    %v2013 = vld [vmem:[#allocation11 + $0x670] sm:$0xff]
    %v2014 = vld [vmem:[#allocation11 + $0x678] sm:$0xff]
    %v2015 = vld [vmem:[#allocation11 + $0x680] sm:$0xff]
    %v2016 = vld [vmem:[#allocation11 + $0x688] sm:$0xff]
    %v2017 = vld [vmem:[#allocation11 + $0x690] sm:$0xff]
    %v2018 = vld [vmem:[#allocation11 + $0x698] sm:$0xff]
    %v2019 = vld [vmem:[#allocation11 + $0x6a0] sm:$0xff]
    %v2020 = vld [vmem:[#allocation11 + $0x6a8] sm:$0xff]
    %v2021 = vld [vmem:[#allocation11 + $0x6b0] sm:$0xff]
    %v2022 = vld [vmem:[#allocation11 + $0x6b8] sm:$0xff]
    %v2023 = vld [vmem:[#allocation11 + $0x6c0] sm:$0xff]
    %v2024 = vld [vmem:[#allocation11 + $0x6c8] sm:$0xff]
    %v2025 = vld [vmem:[#allocation11 + $0x6d0] sm:$0xff]
    %v2026 = vld [vmem:[#allocation11 + $0x6d8] sm:$0xff]
    %v2027 = vld [vmem:[#allocation11 + $0x6e0] sm:$0xff]
    %v2028 = vld [vmem:[#allocation11 + $0x6e8] sm:$0xff]
    %v2029 = vld [vmem:[#allocation11 + $0x6f0] sm:$0xff]
    %v2030 = vld [vmem:[#allocation11 + $0x6f8] sm:$0xff]
    %v2031 = vld [vmem:[#allocation11 + $0x700] sm:$0xff]
    %v2032 = vld [vmem:[#allocation11 + $0x708] sm:$0xff]
    %v2033 = vld [vmem:[#allocation11 + $0x710] sm:$0xff]
    %v2034 = vld [vmem:[#allocation11 + $0x718] sm:$0xff]
    %v2035 = vld [vmem:[#allocation11 + $0x720] sm:$0xff]
    %v2036 = vld [vmem:[#allocation11 + $0x728] sm:$0xff]
    %v2037 = vld [vmem:[#allocation11 + $0x730] sm:$0xff]
    %v2038 = vld [vmem:[#allocation11 + $0x738] sm:$0xff]
    %v2039 = vld [vmem:[#allocation11 + $0x740] sm:$0xff]
    %v2040 = vld [vmem:[#allocation11 + $0x748] sm:$0xff]
    %v2041 = vld [vmem:[#allocation11 + $0x750] sm:$0xff]
    %v2042 = vld [vmem:[#allocation11 + $0x758] sm:$0xff]
    %v2043 = vld [vmem:[#allocation11 + $0x760] sm:$0xff]
    %v2044 = vld [vmem:[#allocation11 + $0x768] sm:$0xff]
    %v2045 = vld [vmem:[#allocation11 + $0x770] sm:$0xff]
    %v2046 = vld [vmem:[#allocation11 + $0x778] sm:$0xff]
    %v2047 = vld [vmem:[#allocation11 + $0x780] sm:$0xff]
    %v2048 = vld [vmem:[#allocation11 + $0x788] sm:$0xff]
    %v2049 = vld [vmem:[#allocation11 + $0x790] sm:$0xff]
    %v2050 = vld [vmem:[#allocation11 + $0x798] sm:$0xff]
    %v2051 = vld [vmem:[#allocation11 + $0x7a0] sm:$0xff]
    %v2052 = vld [vmem:[#allocation11 + $0x7a8] sm:$0xff]
    %v2053 = vld [vmem:[#allocation11 + $0x7b0] sm:$0xff]
    %v2054 = vld [vmem:[#allocation11 + $0x7b8] sm:$0xff]
    %v2055 = vld [vmem:[#allocation11 + $0x7c0] sm:$0xff]
    %v2056 = vld [vmem:[#allocation11 + $0x7c8] sm:$0xff]
    %v2057 = vld [vmem:[#allocation11 + $0x7d0] sm:$0xff]
    %v2058 = vld [vmem:[#allocation11 + $0x7d8] sm:$0xff]
    %v2059 = vld [vmem:[#allocation11 + $0x7e0] sm:$0xff]
    %v2060 = vld [vmem:[#allocation11 + $0x7e8] sm:$0xff]
    %v2061 = vld [vmem:[#allocation11 + $0x7f0] sm:$0xff]
    %v2062 = vld [vmem:[#allocation11 + $0x7f8] sm:$0xff]
    %2063 = vmatprep.subr.mxu0 %v1838
    %2064 = vmatpush1.msra.mxu0 %v1837
    %2065 = vmatprep.subr.mxu0 %v1836
    %2066 = vmatpush1.msra.mxu0 %v1835
    %2067 = vmatprep.subr.mxu0 %v1834
    %2068 = vmatpush1.msra.mxu0 %v1833
    %2069 = vmatprep.subr.mxu0 %v1832
    %2070 = vmatpush1.msra.mxu0 %v1831
    %2071 = vmatprep.subr.mxu0 %v1830
    %2072 = vmatpush1.msra.mxu0 %v1829
    %2073 = vmatprep.subr.mxu0 %v1828
    %2074 = vmatpush1.msra.mxu0 %v1827
    %2075 = vmatprep.subr.mxu0 %v1826
    %2076 = vmatpush1.msra.mxu0 %v1825
    %2077 = vmatprep.subr.mxu0 %v1824
    %2078 = vmatpush1.msra.mxu0 %v1823
    %2079 = vmatprep.subr.mxu0 %v1822
    %2080 = vmatpush1.msra.mxu0 %v1821
    %2081 = vmatprep.subr.mxu0 %v1820
    %2082 = vmatpush1.msra.mxu0 %v1819
    %2083 = vmatprep.subr.mxu0 %v1818
    %2084 = vmatpush1.msra.mxu0 %v1817
    %2085 = vmatprep.subr.mxu0 %v1816
    %2086 = vmatpush1.msra.mxu0 %v1815
    %2087 = vmatprep.subr.mxu0 %v1814
    %2088 = vmatpush1.msra.mxu0 %v1813
    %2089 = vmatprep.subr.mxu0 %v1812
    %2090 = vmatpush1.msra.mxu0 %v1811
    %2091 = vmatprep.subr.mxu0 %v1810
    %2092 = vmatpush1.msra.mxu0 %v1809
    %2093 = vmatprep.subr.mxu0 %v1808
    %2094 = vmatpush1.msra.mxu0 %v1807
    %2095 = vmatprep.subr.mxu0 %v1870
    %2096 = vmatpush2.msra.mxu0 %v1869
    %2097 = vmatprep.subr.mxu0 %v1868
    %2098 = vmatpush2.msra.mxu0 %v1867
    %2099 = vmatprep.subr.mxu0 %v1866
    %2100 = vmatpush2.msra.mxu0 %v1865
    %2101 = vmatprep.subr.mxu0 %v1864
    %2102 = vmatpush2.msra.mxu0 %v1863
    %2103 = vmatprep.subr.mxu0 %v1862
    %2104 = vmatpush2.msra.mxu0 %v1861
    %2105 = vmatprep.subr.mxu0 %v1860
    %2106 = vmatpush2.msra.mxu0 %v1859
    %2107 = vmatprep.subr.mxu0 %v1858
    %2108 = vmatpush2.msra.mxu0 %v1857
    %2109 = vmatprep.subr.mxu0 %v1856
    %2110 = vmatpush2.msra.mxu0 %v1855
    %2111 = vmatprep.subr.mxu0 %v1854
    %2112 = vmatpush2.msra.mxu0 %v1853
    %2113 = vmatprep.subr.mxu0 %v1852
    %2114 = vmatpush2.msra.mxu0 %v1851
    %2115 = vmatprep.subr.mxu0 %v1850
    %2116 = vmatpush2.msra.mxu0 %v1849
    %2117 = vmatprep.subr.mxu0 %v1848
    %2118 = vmatpush2.msra.mxu0 %v1847
    %2119 = vmatprep.subr.mxu0 %v1846
    %2120 = vmatpush2.msra.mxu0 %v1845
    %2121 = vmatprep.subr.mxu0 %v1844
    %2122 = vmatpush2.msra.mxu0 %v1843
    %2123 = vmatprep.subr.mxu0 %v1842
    %2124 = vmatpush2.msra.mxu0 %v1841
    %2125 = vmatprep.subr.mxu0 %v1840
    %2126 = vmatpush2.msra.mxu0 %v1839
    %2127 = vmatprep.mubr.f32.mxu0 %v1744
    %2128 = vmatmul.mubr.f32.gmra.mxu0 %v1743
    %v2129 = vpop.f32.mrf.mxu0
    %v2130 = vadd.f32 0.0, %v2129
    %v2131 = vpop.f32.mrf.mxu0
    %v2132 = vadd.f32 0.0, %v2131
    %2133 = vmatprep.mubr.f32.mxu0 %v1752
    %2134 = vmatmul.mubr.f32.gmra.mxu0 %v1751
    %v2135 = vpop.f32.mrf.mxu0
    %v2136 = vadd.f32 0.0, %v2135
    %v2137 = vpop.f32.mrf.mxu0
    %v2138 = vadd.f32 0.0, %v2137
    %2139 = vmatprep.mubr.f32.mxu0 %v1760
    %2140 = vmatmul.mubr.f32.gmra.mxu0 %v1759
    %v2141 = vpop.f32.mrf.mxu0
    %v2142 = vadd.f32 0.0, %v2141
    %v2143 = vpop.f32.mrf.mxu0
    %v2144 = vadd.f32 0.0, %v2143
    %2145 = vmatprep.mubr.f32.mxu0 %v1768
    %2146 = vmatmul.mubr.f32.gmra.mxu0 %v1767
    %v2147 = vpop.f32.mrf.mxu0
    %v2148 = vadd.f32 0.0, %v2147
    %v2149 = vpop.f32.mrf.mxu0
    %v2150 = vadd.f32 0.0, %v2149
    %2151 = vmatprep.mubr.f32.mxu0 %v1776
    %2152 = vmatmul.mubr.f32.gmra.mxu0 %v1775
    %v2153 = vpop.f32.mrf.mxu0
    %v2154 = vadd.f32 0.0, %v2153
    %v2155 = vpop.f32.mrf.mxu0
    %v2156 = vadd.f32 0.0, %v2155
    %2157 = vmatprep.mubr.f32.mxu0 %v1784
    %2158 = vmatmul.mubr.f32.gmra.mxu0 %v1783
    %v2159 = vpop.f32.mrf.mxu0
    %v2160 = vadd.f32 0.0, %v2159
    %v2161 = vpop.f32.mrf.mxu0
    %v2162 = vadd.f32 0.0, %v2161
    %2163 = vmatprep.mubr.f32.mxu0 %v1792
    %2164 = vmatmul.mubr.f32.gmra.mxu0 %v1791
    %v2165 = vpop.f32.mrf.mxu0
    %v2166 = vadd.f32 0.0, %v2165
    %v2167 = vpop.f32.mrf.mxu0
    %v2168 = vadd.f32 0.0, %v2167
    %2169 = vmatprep.mubr.f32.mxu0 %v1800
    %2170 = vmatmul.mubr.f32.gmra.mxu0 %v1799
    %v2171 = vpop.f32.mrf.mxu0
    %v2172 = vadd.f32 0.0, %v2171
    %v2173 = vpop.f32.mrf.mxu0
    %v2174 = vadd.f32 0.0, %v2173
    %2175 = vdwg.mxu0
    %2176 = vmatprep.subr.mxu0 %v1902
    %2177 = vmatpush1.msra.mxu0 %v1901
    %2178 = vmatprep.subr.mxu0 %v1900
    %2179 = vmatpush1.msra.mxu0 %v1899
    %2180 = vmatprep.subr.mxu0 %v1898
    %2181 = vmatpush1.msra.mxu0 %v1897
    %2182 = vmatprep.subr.mxu0 %v1896
    %2183 = vmatpush1.msra.mxu0 %v1895
    %2184 = vmatprep.subr.mxu0 %v1894
    %2185 = vmatpush1.msra.mxu0 %v1893
    %2186 = vmatprep.subr.mxu0 %v1892
    %2187 = vmatpush1.msra.mxu0 %v1891
    %2188 = vmatprep.subr.mxu0 %v1890
    %2189 = vmatpush1.msra.mxu0 %v1889
    %2190 = vmatprep.subr.mxu0 %v1888
    %2191 = vmatpush1.msra.mxu0 %v1887
    %2192 = vmatprep.subr.mxu0 %v1886
    %2193 = vmatpush1.msra.mxu0 %v1885
    %2194 = vmatprep.subr.mxu0 %v1884
    %2195 = vmatpush1.msra.mxu0 %v1883
    %2196 = vmatprep.subr.mxu0 %v1882
    %2197 = vmatpush1.msra.mxu0 %v1881
    %2198 = vmatprep.subr.mxu0 %v1880
    %2199 = vmatpush1.msra.mxu0 %v1879
    %2200 = vmatprep.subr.mxu0 %v1878
    %2201 = vmatpush1.msra.mxu0 %v1877
    %2202 = vmatprep.subr.mxu0 %v1876
    %2203 = vmatpush1.msra.mxu0 %v1875
    %2204 = vmatprep.subr.mxu0 %v1874
    %2205 = vmatpush1.msra.mxu0 %v1873
    %2206 = vmatprep.subr.mxu0 %v1872
    %2207 = vmatpush1.msra.mxu0 %v1871
    %2208 = vmatprep.subr.mxu0 %v1934
    %2209 = vmatpush2.msra.mxu0 %v1933
    %2210 = vmatprep.subr.mxu0 %v1932
    %2211 = vmatpush2.msra.mxu0 %v1931
    %2212 = vmatprep.subr.mxu0 %v1930
    %2213 = vmatpush2.msra.mxu0 %v1929
    %2214 = vmatprep.subr.mxu0 %v1928
    %2215 = vmatpush2.msra.mxu0 %v1927
    %2216 = vmatprep.subr.mxu0 %v1926
    %2217 = vmatpush2.msra.mxu0 %v1925
    %2218 = vmatprep.subr.mxu0 %v1924
    %2219 = vmatpush2.msra.mxu0 %v1923
    %2220 = vmatprep.subr.mxu0 %v1922
    %2221 = vmatpush2.msra.mxu0 %v1921
    %2222 = vmatprep.subr.mxu0 %v1920
    %2223 = vmatpush2.msra.mxu0 %v1919
    %2224 = vmatprep.subr.mxu0 %v1918
    %2225 = vmatpush2.msra.mxu0 %v1917
    %2226 = vmatprep.subr.mxu0 %v1916
    %2227 = vmatpush2.msra.mxu0 %v1915
    %2228 = vmatprep.subr.mxu0 %v1914
    %2229 = vmatpush2.msra.mxu0 %v1913
    %2230 = vmatprep.subr.mxu0 %v1912
    %2231 = vmatpush2.msra.mxu0 %v1911
    %2232 = vmatprep.subr.mxu0 %v1910
    %2233 = vmatpush2.msra.mxu0 %v1909
    %2234 = vmatprep.subr.mxu0 %v1908
    %2235 = vmatpush2.msra.mxu0 %v1907
    %2236 = vmatprep.subr.mxu0 %v1906
    %2237 = vmatpush2.msra.mxu0 %v1905
    %2238 = vmatprep.subr.mxu0 %v1904
    %2239 = vmatpush2.msra.mxu0 %v1903
    %2240 = vmatprep.mubr.f32.mxu0 %v1746
    %2241 = vmatmul.mubr.f32.gmra.mxu0 %v1745
    %v2242 = vpop.f32.mrf.mxu0
    %v2243 = vadd.f32 %v2130, %v2242
    %v2244 = vpop.f32.mrf.mxu0
    %v2245 = vadd.f32 %v2132, %v2244
    %2246 = vmatprep.mubr.f32.mxu0 %v1754
    %2247 = vmatmul.mubr.f32.gmra.mxu0 %v1753
    %v2248 = vpop.f32.mrf.mxu0
    %v2249 = vadd.f32 %v2136, %v2248
    %v2250 = vpop.f32.mrf.mxu0
    %v2251 = vadd.f32 %v2138, %v2250
    %2252 = vmatprep.mubr.f32.mxu0 %v1762
    %2253 = vmatmul.mubr.f32.gmra.mxu0 %v1761
    %v2254 = vpop.f32.mrf.mxu0
    %v2255 = vadd.f32 %v2142, %v2254
    %v2256 = vpop.f32.mrf.mxu0
    %v2257 = vadd.f32 %v2144, %v2256
    %2258 = vmatprep.mubr.f32.mxu0 %v1770
    %2259 = vmatmul.mubr.f32.gmra.mxu0 %v1769
    %v2260 = vpop.f32.mrf.mxu0
    %v2261 = vadd.f32 %v2148, %v2260
    %v2262 = vpop.f32.mrf.mxu0
    %v2263 = vadd.f32 %v2150, %v2262
    %2264 = vmatprep.mubr.f32.mxu0 %v1778
    %2265 = vmatmul.mubr.f32.gmra.mxu0 %v1777
    %v2266 = vpop.f32.mrf.mxu0
    %v2267 = vadd.f32 %v2154, %v2266
    %v2268 = vpop.f32.mrf.mxu0
    %v2269 = vadd.f32 %v2156, %v2268
    %2270 = vmatprep.mubr.f32.mxu0 %v1786
    %2271 = vmatmul.mubr.f32.gmra.mxu0 %v1785
    %v2272 = vpop.f32.mrf.mxu0
    %v2273 = vadd.f32 %v2160, %v2272
    %v2274 = vpop.f32.mrf.mxu0
    %v2275 = vadd.f32 %v2162, %v2274
    %2276 = vmatprep.mubr.f32.mxu0 %v1794
    %2277 = vmatmul.mubr.f32.gmra.mxu0 %v1793
    %v2278 = vpop.f32.mrf.mxu0
    %v2279 = vadd.f32 %v2166, %v2278
    %v2280 = vpop.f32.mrf.mxu0
    %v2281 = vadd.f32 %v2168, %v2280
    %2282 = vmatprep.mubr.f32.mxu0 %v1802
    %2283 = vmatmul.mubr.f32.gmra.mxu0 %v1801
    %v2284 = vpop.f32.mrf.mxu0
    %v2285 = vadd.f32 %v2172, %v2284
    %v2286 = vpop.f32.mrf.mxu0
    %v2287 = vadd.f32 %v2174, %v2286
    %2288 = vdwg.mxu0
    %2289 = vmatprep.subr.mxu0 %v1966
    %2290 = vmatpush1.msra.mxu0 %v1965
    %2291 = vmatprep.subr.mxu0 %v1964
    %2292 = vmatpush1.msra.mxu0 %v1963
    %2293 = vmatprep.subr.mxu0 %v1962
    %2294 = vmatpush1.msra.mxu0 %v1961
    %2295 = vmatprep.subr.mxu0 %v1960
    %2296 = vmatpush1.msra.mxu0 %v1959
    %2297 = vmatprep.subr.mxu0 %v1958
    %2298 = vmatpush1.msra.mxu0 %v1957
    %2299 = vmatprep.subr.mxu0 %v1956
    %2300 = vmatpush1.msra.mxu0 %v1955
    %2301 = vmatprep.subr.mxu0 %v1954
    %2302 = vmatpush1.msra.mxu0 %v1953
    %2303 = vmatprep.subr.mxu0 %v1952
    %2304 = vmatpush1.msra.mxu0 %v1951
    %2305 = vmatprep.subr.mxu0 %v1950
    %2306 = vmatpush1.msra.mxu0 %v1949
    %2307 = vmatprep.subr.mxu0 %v1948
    %2308 = vmatpush1.msra.mxu0 %v1947
    %2309 = vmatprep.subr.mxu0 %v1946
    %2310 = vmatpush1.msra.mxu0 %v1945
    %2311 = vmatprep.subr.mxu0 %v1944
    %2312 = vmatpush1.msra.mxu0 %v1943
    %2313 = vmatprep.subr.mxu0 %v1942
    %2314 = vmatpush1.msra.mxu0 %v1941
    %2315 = vmatprep.subr.mxu0 %v1940
    %2316 = vmatpush1.msra.mxu0 %v1939
    %2317 = vmatprep.subr.mxu0 %v1938
    %2318 = vmatpush1.msra.mxu0 %v1937
    %2319 = vmatprep.subr.mxu0 %v1936
    %2320 = vmatpush1.msra.mxu0 %v1935
    %2321 = vmatprep.subr.mxu0 %v1998
    %2322 = vmatpush2.msra.mxu0 %v1997
    %2323 = vmatprep.subr.mxu0 %v1996
    %2324 = vmatpush2.msra.mxu0 %v1995
    %2325 = vmatprep.subr.mxu0 %v1994
    %2326 = vmatpush2.msra.mxu0 %v1993
    %2327 = vmatprep.subr.mxu0 %v1992
    %2328 = vmatpush2.msra.mxu0 %v1991
    %2329 = vmatprep.subr.mxu0 %v1990
    %2330 = vmatpush2.msra.mxu0 %v1989
    %2331 = vmatprep.subr.mxu0 %v1988
    %2332 = vmatpush2.msra.mxu0 %v1987
    %2333 = vmatprep.subr.mxu0 %v1986
    %2334 = vmatpush2.msra.mxu0 %v1985
    %2335 = vmatprep.subr.mxu0 %v1984
    %2336 = vmatpush2.msra.mxu0 %v1983
    %2337 = vmatprep.subr.mxu0 %v1982
    %2338 = vmatpush2.msra.mxu0 %v1981
    %2339 = vmatprep.subr.mxu0 %v1980
    %2340 = vmatpush2.msra.mxu0 %v1979
    %2341 = vmatprep.subr.mxu0 %v1978
    %2342 = vmatpush2.msra.mxu0 %v1977
    %2343 = vmatprep.subr.mxu0 %v1976
    %2344 = vmatpush2.msra.mxu0 %v1975
    %2345 = vmatprep.subr.mxu0 %v1974
    %2346 = vmatpush2.msra.mxu0 %v1973
    %2347 = vmatprep.subr.mxu0 %v1972
    %2348 = vmatpush2.msra.mxu0 %v1971
    %2349 = vmatprep.subr.mxu0 %v1970
    %2350 = vmatpush2.msra.mxu0 %v1969
    %2351 = vmatprep.subr.mxu0 %v1968
    %2352 = vmatpush2.msra.mxu0 %v1967
    %2353 = vmatprep.mubr.f32.mxu0 %v1748
    %2354 = vmatmul.mubr.f32.gmra.mxu0 %v1747
    %v2355 = vpop.f32.mrf.mxu0
    %v2356 = vadd.f32 %v2243, %v2355
    %v2357 = vpop.f32.mrf.mxu0
    %v2358 = vadd.f32 %v2245, %v2357
    %2359 = vmatprep.mubr.f32.mxu0 %v1756
    %2360 = vmatmul.mubr.f32.gmra.mxu0 %v1755
    %v2361 = vpop.f32.mrf.mxu0
    %v2362 = vadd.f32 %v2249, %v2361
    %v2363 = vpop.f32.mrf.mxu0
    %v2364 = vadd.f32 %v2251, %v2363
    %2365 = vmatprep.mubr.f32.mxu0 %v1764
    %2366 = vmatmul.mubr.f32.gmra.mxu0 %v1763
    %v2367 = vpop.f32.mrf.mxu0
    %v2368 = vadd.f32 %v2255, %v2367
    %v2369 = vpop.f32.mrf.mxu0
    %v2370 = vadd.f32 %v2257, %v2369
    %2371 = vmatprep.mubr.f32.mxu0 %v1772
    %2372 = vmatmul.mubr.f32.gmra.mxu0 %v1771
    %v2373 = vpop.f32.mrf.mxu0
    %v2374 = vadd.f32 %v2261, %v2373
    %v2375 = vpop.f32.mrf.mxu0
    %v2376 = vadd.f32 %v2263, %v2375
    %2377 = vmatprep.mubr.f32.mxu0 %v1780
    %2378 = vmatmul.mubr.f32.gmra.mxu0 %v1779
    %v2379 = vpop.f32.mrf.mxu0
    %v2380 = vadd.f32 %v2267, %v2379
    %v2381 = vpop.f32.mrf.mxu0
    %v2382 = vadd.f32 %v2269, %v2381
    %2383 = vmatprep.mubr.f32.mxu0 %v1788
    %2384 = vmatmul.mubr.f32.gmra.mxu0 %v1787
    %v2385 = vpop.f32.mrf.mxu0
    %v2386 = vadd.f32 %v2273, %v2385
    %v2387 = vpop.f32.mrf.mxu0
    %v2388 = vadd.f32 %v2275, %v2387
    %2389 = vmatprep.mubr.f32.mxu0 %v1796
    %2390 = vmatmul.mubr.f32.gmra.mxu0 %v1795
    %v2391 = vpop.f32.mrf.mxu0
    %v2392 = vadd.f32 %v2279, %v2391
    %v2393 = vpop.f32.mrf.mxu0
    %v2394 = vadd.f32 %v2281, %v2393
    %2395 = vmatprep.mubr.f32.mxu0 %v1804
    %2396 = vmatmul.mubr.f32.gmra.mxu0 %v1803
    %v2397 = vpop.f32.mrf.mxu0
    %v2398 = vadd.f32 %v2285, %v2397
    %v2399 = vpop.f32.mrf.mxu0
    %v2400 = vadd.f32 %v2287, %v2399
    %2401 = vdwg.mxu0
    %2402 = vmatprep.subr.mxu0 %v2030
    %2403 = vmatpush1.msra.mxu0 %v2029
    %2404 = vmatprep.subr.mxu0 %v2028
    %2405 = vmatpush1.msra.mxu0 %v2027
    %2406 = vmatprep.subr.mxu0 %v2026
    %2407 = vmatpush1.msra.mxu0 %v2025
    %2408 = vmatprep.subr.mxu0 %v2024
    %2409 = vmatpush1.msra.mxu0 %v2023
    %2410 = vmatprep.subr.mxu0 %v2022
    %2411 = vmatpush1.msra.mxu0 %v2021
    %2412 = vmatprep.subr.mxu0 %v2020
    %2413 = vmatpush1.msra.mxu0 %v2019
    %2414 = vmatprep.subr.mxu0 %v2018
    %2415 = vmatpush1.msra.mxu0 %v2017
    %2416 = vmatprep.subr.mxu0 %v2016
    %2417 = vmatpush1.msra.mxu0 %v2015
    %2418 = vmatprep.subr.mxu0 %v2014
    %2419 = vmatpush1.msra.mxu0 %v2013
    %2420 = vmatprep.subr.mxu0 %v2012
    %2421 = vmatpush1.msra.mxu0 %v2011
    %2422 = vmatprep.subr.mxu0 %v2010
    %2423 = vmatpush1.msra.mxu0 %v2009
    %2424 = vmatprep.subr.mxu0 %v2008
    %2425 = vmatpush1.msra.mxu0 %v2007
    %2426 = vmatprep.subr.mxu0 %v2006
    %2427 = vmatpush1.msra.mxu0 %v2005
    %2428 = vmatprep.subr.mxu0 %v2004
    %2429 = vmatpush1.msra.mxu0 %v2003
    %2430 = vmatprep.subr.mxu0 %v2002
    %2431 = vmatpush1.msra.mxu0 %v2001
    %2432 = vmatprep.subr.mxu0 %v2000
    %2433 = vmatpush1.msra.mxu0 %v1999
    %2434 = vmatprep.subr.mxu0 %v2062
    %2435 = vmatpush2.msra.mxu0 %v2061
    %2436 = vmatprep.subr.mxu0 %v2060
    %2437 = vmatpush2.msra.mxu0 %v2059
    %2438 = vmatprep.subr.mxu0 %v2058
    %2439 = vmatpush2.msra.mxu0 %v2057
    %2440 = vmatprep.subr.mxu0 %v2056
    %2441 = vmatpush2.msra.mxu0 %v2055
    %2442 = vmatprep.subr.mxu0 %v2054
    %2443 = vmatpush2.msra.mxu0 %v2053
    %2444 = vmatprep.subr.mxu0 %v2052
    %2445 = vmatpush2.msra.mxu0 %v2051
    %2446 = vmatprep.subr.mxu0 %v2050
    %2447 = vmatpush2.msra.mxu0 %v2049
    %2448 = vmatprep.subr.mxu0 %v2048
    %2449 = vmatpush2.msra.mxu0 %v2047
    %2450 = vmatprep.subr.mxu0 %v2046
    %2451 = vmatpush2.msra.mxu0 %v2045
    %2452 = vmatprep.subr.mxu0 %v2044
    %2453 = vmatpush2.msra.mxu0 %v2043
    %2454 = vmatprep.subr.mxu0 %v2042
    %2455 = vmatpush2.msra.mxu0 %v2041
    %2456 = vmatprep.subr.mxu0 %v2040
    %2457 = vmatpush2.msra.mxu0 %v2039
    %2458 = vmatprep.subr.mxu0 %v2038
    %2459 = vmatpush2.msra.mxu0 %v2037
    %2460 = vmatprep.subr.mxu0 %v2036
    %2461 = vmatpush2.msra.mxu0 %v2035
    %2462 = vmatprep.subr.mxu0 %v2034
    %2463 = vmatpush2.msra.mxu0 %v2033
    %2464 = vmatprep.subr.mxu0 %v2032
    %2465 = vmatpush2.msra.mxu0 %v2031
    %2466 = vmatprep.mubr.f32.mxu0 %v1750
    %2467 = vmatmul.mubr.f32.gmra.mxu0 %v1749
    %v2468 = vpop.f32.mrf.mxu0
    %v2469 = vadd.f32 %v2356, %v2468
    %v2470 = vpop.f32.mrf.mxu0
    %v2471 = vadd.f32 %v2358, %v2470
    %2472 = vmatprep.mubr.f32.mxu0 %v1758
    %2473 = vmatmul.mubr.f32.gmra.mxu0 %v1757
    %v2474 = vpop.f32.mrf.mxu0
    %v2475 = vadd.f32 %v2362, %v2474
    %v2476 = vpop.f32.mrf.mxu0
    %v2477 = vadd.f32 %v2364, %v2476
    %2478 = vmatprep.mubr.f32.mxu0 %v1766
    %2479 = vmatmul.mubr.f32.gmra.mxu0 %v1765
    %v2480 = vpop.f32.mrf.mxu0
    %v2481 = vadd.f32 %v2368, %v2480
    %v2482 = vpop.f32.mrf.mxu0
    %v2483 = vadd.f32 %v2370, %v2482
    %2484 = vmatprep.mubr.f32.mxu0 %v1774
    %2485 = vmatmul.mubr.f32.gmra.mxu0 %v1773
    %v2486 = vpop.f32.mrf.mxu0
    %v2487 = vadd.f32 %v2374, %v2486
    %v2488 = vpop.f32.mrf.mxu0
    %v2489 = vadd.f32 %v2376, %v2488
    %2490 = vmatprep.mubr.f32.mxu0 %v1782
    %2491 = vmatmul.mubr.f32.gmra.mxu0 %v1781
    %v2492 = vpop.f32.mrf.mxu0
    %v2493 = vadd.f32 %v2380, %v2492
    %v2494 = vpop.f32.mrf.mxu0
    %v2495 = vadd.f32 %v2382, %v2494
    %2496 = vmatprep.mubr.f32.mxu0 %v1790
    %2497 = vmatmul.mubr.f32.gmra.mxu0 %v1789
    %v2498 = vpop.f32.mrf.mxu0
    %v2499 = vadd.f32 %v2386, %v2498
    %v2500 = vpop.f32.mrf.mxu0
    %v2501 = vadd.f32 %v2388, %v2500
    %2502 = vmatprep.mubr.f32.mxu0 %v1798
    %2503 = vmatmul.mubr.f32.gmra.mxu0 %v1797
    %v2504 = vpop.f32.mrf.mxu0
    %v2505 = vadd.f32 %v2392, %v2504
    %v2506 = vpop.f32.mrf.mxu0
    %v2507 = vadd.f32 %v2394, %v2506
    %2508 = vmatprep.mubr.f32.mxu0 %v1806
    %2509 = vmatmul.mubr.f32.gmra.mxu0 %v1805
    %v2510 = vpop.f32.mrf.mxu0
    %v2511 = vadd.f32 %v2398, %v2510
    %v2512 = vpop.f32.mrf.mxu0
    %v2513 = vadd.f32 %v2400, %v2512
    %2514 = vdwg.mxu0
    %v2515 = vadd.f32 %v1633, %v2469
    %v2516 = vadd.f32 %v1635, %v2471
    %v2517 = vadd.f32 %v1639, %v2475
    %v2518 = vadd.f32 %v1641, %v2477
    %v2519 = vadd.f32 %v1645, %v2481
    %v2520 = vadd.f32 %v1647, %v2483
    %v2521 = vadd.f32 %v1651, %v2487
    %v2522 = vadd.f32 %v1653, %v2489
    %v2523 = vadd.f32 %v1657, %v2493
    %v2524 = vadd.f32 %v1659, %v2495
    %v2525 = vadd.f32 %v1663, %v2499
    %v2526 = vadd.f32 %v1665, %v2501
    %v2527 = vadd.f32 %v1669, %v2505
    %v2528 = vadd.f32 %v1671, %v2507
    %v2529 = vadd.f32 %v1675, %v2511
    %v2530 = vadd.f32 %v1677, %v2513
    %v2531 = vmul.f32 %v135, %v199
    %v2532 = vmul.f32 %v136, %v200
    %v2533 = vmul.f32 %v137, %v201
    %v2534 = vmul.f32 %v138, %v202
    %v2535 = vmul.f32 %v139, %v203
    %v2536 = vmul.f32 %v140, %v204
    %v2537 = vmul.f32 %v141, %v205
    %v2538 = vmul.f32 %v142, %v206
    %v2539 = vmul.f32 %v143, %v207
    %v2540 = vmul.f32 %v144, %v208
    %v2541 = vmul.f32 %v145, %v209
    %v2542 = vmul.f32 %v146, %v210
    %v2543 = vmul.f32 %v147, %v211
    %v2544 = vmul.f32 %v148, %v212
    %v2545 = vmul.f32 %v149, %v213
    %v2546 = vmul.f32 %v150, %v214
    %v2547 = vmul.f32 %v151, %v215
    %v2548 = vmul.f32 %v152, %v216
    %v2549 = vmul.f32 %v153, %v217
    %v2550 = vmul.f32 %v154, %v218
    %v2551 = vmul.f32 %v155, %v219
    %v2552 = vmul.f32 %v156, %v220
    %v2553 = vmul.f32 %v157, %v221
    %v2554 = vmul.f32 %v158, %v222
    %v2555 = vmul.f32 %v159, %v223
    %v2556 = vmul.f32 %v160, %v224
    %v2557 = vmul.f32 %v161, %v225
    %v2558 = vmul.f32 %v162, %v226
    %v2559 = vmul.f32 %v163, %v227
    %v2560 = vmul.f32 %v164, %v228
    %v2561 = vmul.f32 %v165, %v229
    %v2562 = vmul.f32 %v166, %v230
    %v2563 = vmul.f32 %v167, %v231
    %v2564 = vmul.f32 %v168, %v232
    %v2565 = vmul.f32 %v169, %v233
    %v2566 = vmul.f32 %v170, %v234
    %v2567 = vmul.f32 %v171, %v235
    %v2568 = vmul.f32 %v172, %v236
    %v2569 = vmul.f32 %v173, %v237
    %v2570 = vmul.f32 %v174, %v238
    %v2571 = vmul.f32 %v175, %v239
    %v2572 = vmul.f32 %v176, %v240
    %v2573 = vmul.f32 %v177, %v241
    %v2574 = vmul.f32 %v178, %v242
    %v2575 = vmul.f32 %v179, %v243
    %v2576 = vmul.f32 %v180, %v244
    %v2577 = vmul.f32 %v181, %v245
    %v2578 = vmul.f32 %v182, %v246
    %v2579 = vmul.f32 %v183, %v247
    %v2580 = vmul.f32 %v184, %v248
    %v2581 = vmul.f32 %v185, %v249
    %v2582 = vmul.f32 %v186, %v250
    %v2583 = vmul.f32 %v187, %v251
    %v2584 = vmul.f32 %v188, %v252
    %v2585 = vmul.f32 %v189, %v253
    %v2586 = vmul.f32 %v190, %v254
    %v2587 = vmul.f32 %v191, %v255
    %v2588 = vmul.f32 %v192, %v256
    %v2589 = vmul.f32 %v193, %v257
    %v2590 = vmul.f32 %v194, %v258
    %v2591 = vmul.f32 %v195, %v259
    %v2592 = vmul.f32 %v196, %v260
    %v2593 = vmul.f32 %v197, %v261
    %v2594 = vmul.f32 %v198, %v262
    %v2595 = vld [vmem:[#allocation12] sm:$0xff]
    %v2596 = vld [vmem:[#allocation12 + $0x8] sm:$0xff]
    %v2597 = vld [vmem:[#allocation12 + $0x10] sm:$0xff]
    %v2598 = vld [vmem:[#allocation12 + $0x18] sm:$0xff]
    %v2599 = vld [vmem:[#allocation12 + $0x20] sm:$0xff]
    %v2600 = vld [vmem:[#allocation12 + $0x28] sm:$0xff]
    %v2601 = vld [vmem:[#allocation12 + $0x30] sm:$0xff]
    %v2602 = vld [vmem:[#allocation12 + $0x38] sm:$0xff]
    %v2603 = vld [vmem:[#allocation12 + $0x40] sm:$0xff]
    %v2604 = vld [vmem:[#allocation12 + $0x48] sm:$0xff]
    %v2605 = vld [vmem:[#allocation12 + $0x50] sm:$0xff]
    %v2606 = vld [vmem:[#allocation12 + $0x58] sm:$0xff]
    %v2607 = vld [vmem:[#allocation12 + $0x60] sm:$0xff]
    %v2608 = vld [vmem:[#allocation12 + $0x68] sm:$0xff]
    %v2609 = vld [vmem:[#allocation12 + $0x70] sm:$0xff]
    %v2610 = vld [vmem:[#allocation12 + $0x78] sm:$0xff]
    %v2611 = vld [vmem:[#allocation12 + $0x80] sm:$0xff]
    %v2612 = vld [vmem:[#allocation12 + $0x88] sm:$0xff]
    %v2613 = vld [vmem:[#allocation12 + $0x90] sm:$0xff]
    %v2614 = vld [vmem:[#allocation12 + $0x98] sm:$0xff]
    %v2615 = vld [vmem:[#allocation12 + $0xa0] sm:$0xff]
    %v2616 = vld [vmem:[#allocation12 + $0xa8] sm:$0xff]
    %v2617 = vld [vmem:[#allocation12 + $0xb0] sm:$0xff]
    %v2618 = vld [vmem:[#allocation12 + $0xb8] sm:$0xff]
    %v2619 = vld [vmem:[#allocation12 + $0xc0] sm:$0xff]
    %v2620 = vld [vmem:[#allocation12 + $0xc8] sm:$0xff]
    %v2621 = vld [vmem:[#allocation12 + $0xd0] sm:$0xff]
    %v2622 = vld [vmem:[#allocation12 + $0xd8] sm:$0xff]
    %v2623 = vld [vmem:[#allocation12 + $0xe0] sm:$0xff]
    %v2624 = vld [vmem:[#allocation12 + $0xe8] sm:$0xff]
    %v2625 = vld [vmem:[#allocation12 + $0xf0] sm:$0xff]
    %v2626 = vld [vmem:[#allocation12 + $0xf8] sm:$0xff]
    %v2627 = vld [vmem:[#allocation12 + $0x100] sm:$0xff]
    %v2628 = vld [vmem:[#allocation12 + $0x108] sm:$0xff]
    %v2629 = vld [vmem:[#allocation12 + $0x110] sm:$0xff]
    %v2630 = vld [vmem:[#allocation12 + $0x118] sm:$0xff]
    %v2631 = vld [vmem:[#allocation12 + $0x120] sm:$0xff]
    %v2632 = vld [vmem:[#allocation12 + $0x128] sm:$0xff]
    %v2633 = vld [vmem:[#allocation12 + $0x130] sm:$0xff]
    %v2634 = vld [vmem:[#allocation12 + $0x138] sm:$0xff]
    %v2635 = vld [vmem:[#allocation12 + $0x140] sm:$0xff]
    %v2636 = vld [vmem:[#allocation12 + $0x148] sm:$0xff]
    %v2637 = vld [vmem:[#allocation12 + $0x150] sm:$0xff]
    %v2638 = vld [vmem:[#allocation12 + $0x158] sm:$0xff]
    %v2639 = vld [vmem:[#allocation12 + $0x160] sm:$0xff]
    %v2640 = vld [vmem:[#allocation12 + $0x168] sm:$0xff]
    %v2641 = vld [vmem:[#allocation12 + $0x170] sm:$0xff]
    %v2642 = vld [vmem:[#allocation12 + $0x178] sm:$0xff]
    %v2643 = vld [vmem:[#allocation12 + $0x180] sm:$0xff]
    %v2644 = vld [vmem:[#allocation12 + $0x188] sm:$0xff]
    %v2645 = vld [vmem:[#allocation12 + $0x190] sm:$0xff]
    %v2646 = vld [vmem:[#allocation12 + $0x198] sm:$0xff]
    %v2647 = vld [vmem:[#allocation12 + $0x1a0] sm:$0xff]
    %v2648 = vld [vmem:[#allocation12 + $0x1a8] sm:$0xff]
    %v2649 = vld [vmem:[#allocation12 + $0x1b0] sm:$0xff]
    %v2650 = vld [vmem:[#allocation12 + $0x1b8] sm:$0xff]
    %v2651 = vld [vmem:[#allocation12 + $0x1c0] sm:$0xff]
    %v2652 = vld [vmem:[#allocation12 + $0x1c8] sm:$0xff]
    %v2653 = vld [vmem:[#allocation12 + $0x1d0] sm:$0xff]
    %v2654 = vld [vmem:[#allocation12 + $0x1d8] sm:$0xff]
    %v2655 = vld [vmem:[#allocation12 + $0x1e0] sm:$0xff]
    %v2656 = vld [vmem:[#allocation12 + $0x1e8] sm:$0xff]
    %v2657 = vld [vmem:[#allocation12 + $0x1f0] sm:$0xff]
    %v2658 = vld [vmem:[#allocation12 + $0x1f8] sm:$0xff]
    %v2659 = vld [vmem:[#allocation12 + $0x200] sm:$0xff]
    %v2660 = vld [vmem:[#allocation12 + $0x208] sm:$0xff]
    %v2661 = vld [vmem:[#allocation12 + $0x210] sm:$0xff]
    %v2662 = vld [vmem:[#allocation12 + $0x218] sm:$0xff]
    %v2663 = vld [vmem:[#allocation12 + $0x220] sm:$0xff]
    %v2664 = vld [vmem:[#allocation12 + $0x228] sm:$0xff]
    %v2665 = vld [vmem:[#allocation12 + $0x230] sm:$0xff]
    %v2666 = vld [vmem:[#allocation12 + $0x238] sm:$0xff]
    %v2667 = vld [vmem:[#allocation12 + $0x240] sm:$0xff]
    %v2668 = vld [vmem:[#allocation12 + $0x248] sm:$0xff]
    %v2669 = vld [vmem:[#allocation12 + $0x250] sm:$0xff]
    %v2670 = vld [vmem:[#allocation12 + $0x258] sm:$0xff]
    %v2671 = vld [vmem:[#allocation12 + $0x260] sm:$0xff]
    %v2672 = vld [vmem:[#allocation12 + $0x268] sm:$0xff]
    %v2673 = vld [vmem:[#allocation12 + $0x270] sm:$0xff]
    %v2674 = vld [vmem:[#allocation12 + $0x278] sm:$0xff]
    %v2675 = vld [vmem:[#allocation12 + $0x280] sm:$0xff]
    %v2676 = vld [vmem:[#allocation12 + $0x288] sm:$0xff]
    %v2677 = vld [vmem:[#allocation12 + $0x290] sm:$0xff]
    %v2678 = vld [vmem:[#allocation12 + $0x298] sm:$0xff]
    %v2679 = vld [vmem:[#allocation12 + $0x2a0] sm:$0xff]
    %v2680 = vld [vmem:[#allocation12 + $0x2a8] sm:$0xff]
    %v2681 = vld [vmem:[#allocation12 + $0x2b0] sm:$0xff]
    %v2682 = vld [vmem:[#allocation12 + $0x2b8] sm:$0xff]
    %v2683 = vld [vmem:[#allocation12 + $0x2c0] sm:$0xff]
    %v2684 = vld [vmem:[#allocation12 + $0x2c8] sm:$0xff]
    %v2685 = vld [vmem:[#allocation12 + $0x2d0] sm:$0xff]
    %v2686 = vld [vmem:[#allocation12 + $0x2d8] sm:$0xff]
    %v2687 = vld [vmem:[#allocation12 + $0x2e0] sm:$0xff]
    %v2688 = vld [vmem:[#allocation12 + $0x2e8] sm:$0xff]
    %v2689 = vld [vmem:[#allocation12 + $0x2f0] sm:$0xff]
    %v2690 = vld [vmem:[#allocation12 + $0x2f8] sm:$0xff]
    %v2691 = vld [vmem:[#allocation12 + $0x300] sm:$0xff]
    %v2692 = vld [vmem:[#allocation12 + $0x308] sm:$0xff]
    %v2693 = vld [vmem:[#allocation12 + $0x310] sm:$0xff]
    %v2694 = vld [vmem:[#allocation12 + $0x318] sm:$0xff]
    %v2695 = vld [vmem:[#allocation12 + $0x320] sm:$0xff]
    %v2696 = vld [vmem:[#allocation12 + $0x328] sm:$0xff]
    %v2697 = vld [vmem:[#allocation12 + $0x330] sm:$0xff]
    %v2698 = vld [vmem:[#allocation12 + $0x338] sm:$0xff]
    %v2699 = vld [vmem:[#allocation12 + $0x340] sm:$0xff]
    %v2700 = vld [vmem:[#allocation12 + $0x348] sm:$0xff]
    %v2701 = vld [vmem:[#allocation12 + $0x350] sm:$0xff]
    %v2702 = vld [vmem:[#allocation12 + $0x358] sm:$0xff]
    %v2703 = vld [vmem:[#allocation12 + $0x360] sm:$0xff]
    %v2704 = vld [vmem:[#allocation12 + $0x368] sm:$0xff]
    %v2705 = vld [vmem:[#allocation12 + $0x370] sm:$0xff]
    %v2706 = vld [vmem:[#allocation12 + $0x378] sm:$0xff]
    %v2707 = vld [vmem:[#allocation12 + $0x380] sm:$0xff]
    %v2708 = vld [vmem:[#allocation12 + $0x388] sm:$0xff]
    %v2709 = vld [vmem:[#allocation12 + $0x390] sm:$0xff]
    %v2710 = vld [vmem:[#allocation12 + $0x398] sm:$0xff]
    %v2711 = vld [vmem:[#allocation12 + $0x3a0] sm:$0xff]
    %v2712 = vld [vmem:[#allocation12 + $0x3a8] sm:$0xff]
    %v2713 = vld [vmem:[#allocation12 + $0x3b0] sm:$0xff]
    %v2714 = vld [vmem:[#allocation12 + $0x3b8] sm:$0xff]
    %v2715 = vld [vmem:[#allocation12 + $0x3c0] sm:$0xff]
    %v2716 = vld [vmem:[#allocation12 + $0x3c8] sm:$0xff]
    %v2717 = vld [vmem:[#allocation12 + $0x3d0] sm:$0xff]
    %v2718 = vld [vmem:[#allocation12 + $0x3d8] sm:$0xff]
    %v2719 = vld [vmem:[#allocation12 + $0x3e0] sm:$0xff]
    %v2720 = vld [vmem:[#allocation12 + $0x3e8] sm:$0xff]
    %v2721 = vld [vmem:[#allocation12 + $0x3f0] sm:$0xff]
    %v2722 = vld [vmem:[#allocation12 + $0x3f8] sm:$0xff]
    %v2723 = vld [vmem:[#allocation12 + $0x400] sm:$0xff]
    %v2724 = vld [vmem:[#allocation12 + $0x408] sm:$0xff]
    %v2725 = vld [vmem:[#allocation12 + $0x410] sm:$0xff]
    %v2726 = vld [vmem:[#allocation12 + $0x418] sm:$0xff]
    %v2727 = vld [vmem:[#allocation12 + $0x420] sm:$0xff]
    %v2728 = vld [vmem:[#allocation12 + $0x428] sm:$0xff]
    %v2729 = vld [vmem:[#allocation12 + $0x430] sm:$0xff]
    %v2730 = vld [vmem:[#allocation12 + $0x438] sm:$0xff]
    %v2731 = vld [vmem:[#allocation12 + $0x440] sm:$0xff]
    %v2732 = vld [vmem:[#allocation12 + $0x448] sm:$0xff]
    %v2733 = vld [vmem:[#allocation12 + $0x450] sm:$0xff]
    %v2734 = vld [vmem:[#allocation12 + $0x458] sm:$0xff]
    %v2735 = vld [vmem:[#allocation12 + $0x460] sm:$0xff]
    %v2736 = vld [vmem:[#allocation12 + $0x468] sm:$0xff]
    %v2737 = vld [vmem:[#allocation12 + $0x470] sm:$0xff]
    %v2738 = vld [vmem:[#allocation12 + $0x478] sm:$0xff]
    %v2739 = vld [vmem:[#allocation12 + $0x480] sm:$0xff]
    %v2740 = vld [vmem:[#allocation12 + $0x488] sm:$0xff]
    %v2741 = vld [vmem:[#allocation12 + $0x490] sm:$0xff]
    %v2742 = vld [vmem:[#allocation12 + $0x498] sm:$0xff]
    %v2743 = vld [vmem:[#allocation12 + $0x4a0] sm:$0xff]
    %v2744 = vld [vmem:[#allocation12 + $0x4a8] sm:$0xff]
    %v2745 = vld [vmem:[#allocation12 + $0x4b0] sm:$0xff]
    %v2746 = vld [vmem:[#allocation12 + $0x4b8] sm:$0xff]
    %v2747 = vld [vmem:[#allocation12 + $0x4c0] sm:$0xff]
    %v2748 = vld [vmem:[#allocation12 + $0x4c8] sm:$0xff]
    %v2749 = vld [vmem:[#allocation12 + $0x4d0] sm:$0xff]
    %v2750 = vld [vmem:[#allocation12 + $0x4d8] sm:$0xff]
    %v2751 = vld [vmem:[#allocation12 + $0x4e0] sm:$0xff]
    %v2752 = vld [vmem:[#allocation12 + $0x4e8] sm:$0xff]
    %v2753 = vld [vmem:[#allocation12 + $0x4f0] sm:$0xff]
    %v2754 = vld [vmem:[#allocation12 + $0x4f8] sm:$0xff]
    %v2755 = vld [vmem:[#allocation12 + $0x500] sm:$0xff]
    %v2756 = vld [vmem:[#allocation12 + $0x508] sm:$0xff]
    %v2757 = vld [vmem:[#allocation12 + $0x510] sm:$0xff]
    %v2758 = vld [vmem:[#allocation12 + $0x518] sm:$0xff]
    %v2759 = vld [vmem:[#allocation12 + $0x520] sm:$0xff]
    %v2760 = vld [vmem:[#allocation12 + $0x528] sm:$0xff]
    %v2761 = vld [vmem:[#allocation12 + $0x530] sm:$0xff]
    %v2762 = vld [vmem:[#allocation12 + $0x538] sm:$0xff]
    %v2763 = vld [vmem:[#allocation12 + $0x540] sm:$0xff]
    %v2764 = vld [vmem:[#allocation12 + $0x548] sm:$0xff]
    %v2765 = vld [vmem:[#allocation12 + $0x550] sm:$0xff]
    %v2766 = vld [vmem:[#allocation12 + $0x558] sm:$0xff]
    %v2767 = vld [vmem:[#allocation12 + $0x560] sm:$0xff]
    %v2768 = vld [vmem:[#allocation12 + $0x568] sm:$0xff]
    %v2769 = vld [vmem:[#allocation12 + $0x570] sm:$0xff]
    %v2770 = vld [vmem:[#allocation12 + $0x578] sm:$0xff]
    %v2771 = vld [vmem:[#allocation12 + $0x580] sm:$0xff]
    %v2772 = vld [vmem:[#allocation12 + $0x588] sm:$0xff]
    %v2773 = vld [vmem:[#allocation12 + $0x590] sm:$0xff]
    %v2774 = vld [vmem:[#allocation12 + $0x598] sm:$0xff]
    %v2775 = vld [vmem:[#allocation12 + $0x5a0] sm:$0xff]
    %v2776 = vld [vmem:[#allocation12 + $0x5a8] sm:$0xff]
    %v2777 = vld [vmem:[#allocation12 + $0x5b0] sm:$0xff]
    %v2778 = vld [vmem:[#allocation12 + $0x5b8] sm:$0xff]
    %v2779 = vld [vmem:[#allocation12 + $0x5c0] sm:$0xff]
    %v2780 = vld [vmem:[#allocation12 + $0x5c8] sm:$0xff]
    %v2781 = vld [vmem:[#allocation12 + $0x5d0] sm:$0xff]
    %v2782 = vld [vmem:[#allocation12 + $0x5d8] sm:$0xff]
    %v2783 = vld [vmem:[#allocation12 + $0x5e0] sm:$0xff]
    %v2784 = vld [vmem:[#allocation12 + $0x5e8] sm:$0xff]
    %v2785 = vld [vmem:[#allocation12 + $0x5f0] sm:$0xff]
    %v2786 = vld [vmem:[#allocation12 + $0x5f8] sm:$0xff]
    %v2787 = vld [vmem:[#allocation12 + $0x600] sm:$0xff]
    %v2788 = vld [vmem:[#allocation12 + $0x608] sm:$0xff]
    %v2789 = vld [vmem:[#allocation12 + $0x610] sm:$0xff]
    %v2790 = vld [vmem:[#allocation12 + $0x618] sm:$0xff]
    %v2791 = vld [vmem:[#allocation12 + $0x620] sm:$0xff]
    %v2792 = vld [vmem:[#allocation12 + $0x628] sm:$0xff]
    %v2793 = vld [vmem:[#allocation12 + $0x630] sm:$0xff]
    %v2794 = vld [vmem:[#allocation12 + $0x638] sm:$0xff]
    %v2795 = vld [vmem:[#allocation12 + $0x640] sm:$0xff]
    %v2796 = vld [vmem:[#allocation12 + $0x648] sm:$0xff]
    %v2797 = vld [vmem:[#allocation12 + $0x650] sm:$0xff]
    %v2798 = vld [vmem:[#allocation12 + $0x658] sm:$0xff]
    %v2799 = vld [vmem:[#allocation12 + $0x660] sm:$0xff]
    %v2800 = vld [vmem:[#allocation12 + $0x668] sm:$0xff]
    %v2801 = vld [vmem:[#allocation12 + $0x670] sm:$0xff]
    %v2802 = vld [vmem:[#allocation12 + $0x678] sm:$0xff]
    %v2803 = vld [vmem:[#allocation12 + $0x680] sm:$0xff]
    %v2804 = vld [vmem:[#allocation12 + $0x688] sm:$0xff]
    %v2805 = vld [vmem:[#allocation12 + $0x690] sm:$0xff]
    %v2806 = vld [vmem:[#allocation12 + $0x698] sm:$0xff]
    %v2807 = vld [vmem:[#allocation12 + $0x6a0] sm:$0xff]
    %v2808 = vld [vmem:[#allocation12 + $0x6a8] sm:$0xff]
    %v2809 = vld [vmem:[#allocation12 + $0x6b0] sm:$0xff]
    %v2810 = vld [vmem:[#allocation12 + $0x6b8] sm:$0xff]
    %v2811 = vld [vmem:[#allocation12 + $0x6c0] sm:$0xff]
    %v2812 = vld [vmem:[#allocation12 + $0x6c8] sm:$0xff]
    %v2813 = vld [vmem:[#allocation12 + $0x6d0] sm:$0xff]
    %v2814 = vld [vmem:[#allocation12 + $0x6d8] sm:$0xff]
    %v2815 = vld [vmem:[#allocation12 + $0x6e0] sm:$0xff]
    %v2816 = vld [vmem:[#allocation12 + $0x6e8] sm:$0xff]
    %v2817 = vld [vmem:[#allocation12 + $0x6f0] sm:$0xff]
    %v2818 = vld [vmem:[#allocation12 + $0x6f8] sm:$0xff]
    %v2819 = vld [vmem:[#allocation12 + $0x700] sm:$0xff]
    %v2820 = vld [vmem:[#allocation12 + $0x708] sm:$0xff]
    %v2821 = vld [vmem:[#allocation12 + $0x710] sm:$0xff]
    %v2822 = vld [vmem:[#allocation12 + $0x718] sm:$0xff]
    %v2823 = vld [vmem:[#allocation12 + $0x720] sm:$0xff]
    %v2824 = vld [vmem:[#allocation12 + $0x728] sm:$0xff]
    %v2825 = vld [vmem:[#allocation12 + $0x730] sm:$0xff]
    %v2826 = vld [vmem:[#allocation12 + $0x738] sm:$0xff]
    %v2827 = vld [vmem:[#allocation12 + $0x740] sm:$0xff]
    %v2828 = vld [vmem:[#allocation12 + $0x748] sm:$0xff]
    %v2829 = vld [vmem:[#allocation12 + $0x750] sm:$0xff]
    %v2830 = vld [vmem:[#allocation12 + $0x758] sm:$0xff]
    %v2831 = vld [vmem:[#allocation12 + $0x760] sm:$0xff]
    %v2832 = vld [vmem:[#allocation12 + $0x768] sm:$0xff]
    %v2833 = vld [vmem:[#allocation12 + $0x770] sm:$0xff]
    %v2834 = vld [vmem:[#allocation12 + $0x778] sm:$0xff]
    %v2835 = vld [vmem:[#allocation12 + $0x780] sm:$0xff]
    %v2836 = vld [vmem:[#allocation12 + $0x788] sm:$0xff]
    %v2837 = vld [vmem:[#allocation12 + $0x790] sm:$0xff]
    %v2838 = vld [vmem:[#allocation12 + $0x798] sm:$0xff]
    %v2839 = vld [vmem:[#allocation12 + $0x7a0] sm:$0xff]
    %v2840 = vld [vmem:[#allocation12 + $0x7a8] sm:$0xff]
    %v2841 = vld [vmem:[#allocation12 + $0x7b0] sm:$0xff]
    %v2842 = vld [vmem:[#allocation12 + $0x7b8] sm:$0xff]
    %v2843 = vld [vmem:[#allocation12 + $0x7c0] sm:$0xff]
    %v2844 = vld [vmem:[#allocation12 + $0x7c8] sm:$0xff]
    %v2845 = vld [vmem:[#allocation12 + $0x7d0] sm:$0xff]
    %v2846 = vld [vmem:[#allocation12 + $0x7d8] sm:$0xff]
    %v2847 = vld [vmem:[#allocation12 + $0x7e0] sm:$0xff]
    %v2848 = vld [vmem:[#allocation12 + $0x7e8] sm:$0xff]
    %v2849 = vld [vmem:[#allocation12 + $0x7f0] sm:$0xff]
    %v2850 = vld [vmem:[#allocation12 + $0x7f8] sm:$0xff]
    %2851 = vmatprep.subr.mxu0 %v2626
    %2852 = vmatpush1.msra.mxu0 %v2625
    %2853 = vmatprep.subr.mxu0 %v2624
    %2854 = vmatpush1.msra.mxu0 %v2623
    %2855 = vmatprep.subr.mxu0 %v2622
    %2856 = vmatpush1.msra.mxu0 %v2621
    %2857 = vmatprep.subr.mxu0 %v2620
    %2858 = vmatpush1.msra.mxu0 %v2619
    %2859 = vmatprep.subr.mxu0 %v2618
    %2860 = vmatpush1.msra.mxu0 %v2617
    %2861 = vmatprep.subr.mxu0 %v2616
    %2862 = vmatpush1.msra.mxu0 %v2615
    %2863 = vmatprep.subr.mxu0 %v2614
    %2864 = vmatpush1.msra.mxu0 %v2613
    %2865 = vmatprep.subr.mxu0 %v2612
    %2866 = vmatpush1.msra.mxu0 %v2611
    %2867 = vmatprep.subr.mxu0 %v2610
    %2868 = vmatpush1.msra.mxu0 %v2609
    %2869 = vmatprep.subr.mxu0 %v2608
    %2870 = vmatpush1.msra.mxu0 %v2607
    %2871 = vmatprep.subr.mxu0 %v2606
    %2872 = vmatpush1.msra.mxu0 %v2605
    %2873 = vmatprep.subr.mxu0 %v2604
    %2874 = vmatpush1.msra.mxu0 %v2603
    %2875 = vmatprep.subr.mxu0 %v2602
    %2876 = vmatpush1.msra.mxu0 %v2601
    %2877 = vmatprep.subr.mxu0 %v2600
    %2878 = vmatpush1.msra.mxu0 %v2599
    %2879 = vmatprep.subr.mxu0 %v2598
    %2880 = vmatpush1.msra.mxu0 %v2597
    %2881 = vmatprep.subr.mxu0 %v2596
    %2882 = vmatpush1.msra.mxu0 %v2595
    %2883 = vmatprep.subr.mxu0 %v2658
    %2884 = vmatpush2.msra.mxu0 %v2657
    %2885 = vmatprep.subr.mxu0 %v2656
    %2886 = vmatpush2.msra.mxu0 %v2655
    %2887 = vmatprep.subr.mxu0 %v2654
    %2888 = vmatpush2.msra.mxu0 %v2653
    %2889 = vmatprep.subr.mxu0 %v2652
    %2890 = vmatpush2.msra.mxu0 %v2651
    %2891 = vmatprep.subr.mxu0 %v2650
    %2892 = vmatpush2.msra.mxu0 %v2649
    %2893 = vmatprep.subr.mxu0 %v2648
    %2894 = vmatpush2.msra.mxu0 %v2647
    %2895 = vmatprep.subr.mxu0 %v2646
    %2896 = vmatpush2.msra.mxu0 %v2645
    %2897 = vmatprep.subr.mxu0 %v2644
    %2898 = vmatpush2.msra.mxu0 %v2643
    %2899 = vmatprep.subr.mxu0 %v2642
    %2900 = vmatpush2.msra.mxu0 %v2641
    %2901 = vmatprep.subr.mxu0 %v2640
    %2902 = vmatpush2.msra.mxu0 %v2639
    %2903 = vmatprep.subr.mxu0 %v2638
    %2904 = vmatpush2.msra.mxu0 %v2637
    %2905 = vmatprep.subr.mxu0 %v2636
    %2906 = vmatpush2.msra.mxu0 %v2635
    %2907 = vmatprep.subr.mxu0 %v2634
    %2908 = vmatpush2.msra.mxu0 %v2633
    %2909 = vmatprep.subr.mxu0 %v2632
    %2910 = vmatpush2.msra.mxu0 %v2631
    %2911 = vmatprep.subr.mxu0 %v2630
    %2912 = vmatpush2.msra.mxu0 %v2629
    %2913 = vmatprep.subr.mxu0 %v2628
    %2914 = vmatpush2.msra.mxu0 %v2627
    %2915 = vmatprep.mubr.f32.mxu0 %v2532
    %2916 = vmatmul.mubr.f32.gmra.mxu0 %v2531
    %v2917 = vpop.f32.mrf.mxu0
    %v2918 = vadd.f32 0.0, %v2917
    %v2919 = vpop.f32.mrf.mxu0
    %v2920 = vadd.f32 0.0, %v2919
    %2921 = vmatprep.mubr.f32.mxu0 %v2540
    %2922 = vmatmul.mubr.f32.gmra.mxu0 %v2539
    %v2923 = vpop.f32.mrf.mxu0
    %v2924 = vadd.f32 0.0, %v2923
    %v2925 = vpop.f32.mrf.mxu0
    %v2926 = vadd.f32 0.0, %v2925
    %2927 = vmatprep.mubr.f32.mxu0 %v2548
    %2928 = vmatmul.mubr.f32.gmra.mxu0 %v2547
    %v2929 = vpop.f32.mrf.mxu0
    %v2930 = vadd.f32 0.0, %v2929
    %v2931 = vpop.f32.mrf.mxu0
    %v2932 = vadd.f32 0.0, %v2931
    %2933 = vmatprep.mubr.f32.mxu0 %v2556
    %2934 = vmatmul.mubr.f32.gmra.mxu0 %v2555
    %v2935 = vpop.f32.mrf.mxu0
    %v2936 = vadd.f32 0.0, %v2935
    %v2937 = vpop.f32.mrf.mxu0
    %v2938 = vadd.f32 0.0, %v2937
    %2939 = vmatprep.mubr.f32.mxu0 %v2564
    %2940 = vmatmul.mubr.f32.gmra.mxu0 %v2563
    %v2941 = vpop.f32.mrf.mxu0
    %v2942 = vadd.f32 0.0, %v2941
    %v2943 = vpop.f32.mrf.mxu0
    %v2944 = vadd.f32 0.0, %v2943
    %2945 = vmatprep.mubr.f32.mxu0 %v2572
    %2946 = vmatmul.mubr.f32.gmra.mxu0 %v2571
    %v2947 = vpop.f32.mrf.mxu0
    %v2948 = vadd.f32 0.0, %v2947
    %v2949 = vpop.f32.mrf.mxu0
    %v2950 = vadd.f32 0.0, %v2949
    %2951 = vmatprep.mubr.f32.mxu0 %v2580
    %2952 = vmatmul.mubr.f32.gmra.mxu0 %v2579
    %v2953 = vpop.f32.mrf.mxu0
    %v2954 = vadd.f32 0.0, %v2953
    %v2955 = vpop.f32.mrf.mxu0
    %v2956 = vadd.f32 0.0, %v2955
    %2957 = vmatprep.mubr.f32.mxu0 %v2588
    %2958 = vmatmul.mubr.f32.gmra.mxu0 %v2587
    %v2959 = vpop.f32.mrf.mxu0
    %v2960 = vadd.f32 0.0, %v2959
    %v2961 = vpop.f32.mrf.mxu0
    %v2962 = vadd.f32 0.0, %v2961
    %2963 = vdwg.mxu0
    %2964 = vmatprep.subr.mxu0 %v2690
    %2965 = vmatpush1.msra.mxu0 %v2689
    %2966 = vmatprep.subr.mxu0 %v2688
    %2967 = vmatpush1.msra.mxu0 %v2687
    %2968 = vmatprep.subr.mxu0 %v2686
    %2969 = vmatpush1.msra.mxu0 %v2685
    %2970 = vmatprep.subr.mxu0 %v2684
    %2971 = vmatpush1.msra.mxu0 %v2683
    %2972 = vmatprep.subr.mxu0 %v2682
    %2973 = vmatpush1.msra.mxu0 %v2681
    %2974 = vmatprep.subr.mxu0 %v2680
    %2975 = vmatpush1.msra.mxu0 %v2679
    %2976 = vmatprep.subr.mxu0 %v2678
    %2977 = vmatpush1.msra.mxu0 %v2677
    %2978 = vmatprep.subr.mxu0 %v2676
    %2979 = vmatpush1.msra.mxu0 %v2675
    %2980 = vmatprep.subr.mxu0 %v2674
    %2981 = vmatpush1.msra.mxu0 %v2673
    %2982 = vmatprep.subr.mxu0 %v2672
    %2983 = vmatpush1.msra.mxu0 %v2671
    %2984 = vmatprep.subr.mxu0 %v2670
    %2985 = vmatpush1.msra.mxu0 %v2669
    %2986 = vmatprep.subr.mxu0 %v2668
    %2987 = vmatpush1.msra.mxu0 %v2667
    %2988 = vmatprep.subr.mxu0 %v2666
    %2989 = vmatpush1.msra.mxu0 %v2665
    %2990 = vmatprep.subr.mxu0 %v2664
    %2991 = vmatpush1.msra.mxu0 %v2663
    %2992 = vmatprep.subr.mxu0 %v2662
    %2993 = vmatpush1.msra.mxu0 %v2661
    %2994 = vmatprep.subr.mxu0 %v2660
    %2995 = vmatpush1.msra.mxu0 %v2659
    %2996 = vmatprep.subr.mxu0 %v2722
    %2997 = vmatpush2.msra.mxu0 %v2721
    %2998 = vmatprep.subr.mxu0 %v2720
    %2999 = vmatpush2.msra.mxu0 %v2719
    %3000 = vmatprep.subr.mxu0 %v2718
    %3001 = vmatpush2.msra.mxu0 %v2717
    %3002 = vmatprep.subr.mxu0 %v2716
    %3003 = vmatpush2.msra.mxu0 %v2715
    %3004 = vmatprep.subr.mxu0 %v2714
    %3005 = vmatpush2.msra.mxu0 %v2713
    %3006 = vmatprep.subr.mxu0 %v2712
    %3007 = vmatpush2.msra.mxu0 %v2711
    %3008 = vmatprep.subr.mxu0 %v2710
    %3009 = vmatpush2.msra.mxu0 %v2709
    %3010 = vmatprep.subr.mxu0 %v2708
    %3011 = vmatpush2.msra.mxu0 %v2707
    %3012 = vmatprep.subr.mxu0 %v2706
    %3013 = vmatpush2.msra.mxu0 %v2705
    %3014 = vmatprep.subr.mxu0 %v2704
    %3015 = vmatpush2.msra.mxu0 %v2703
    %3016 = vmatprep.subr.mxu0 %v2702
    %3017 = vmatpush2.msra.mxu0 %v2701
    %3018 = vmatprep.subr.mxu0 %v2700
    %3019 = vmatpush2.msra.mxu0 %v2699
    %3020 = vmatprep.subr.mxu0 %v2698
    %3021 = vmatpush2.msra.mxu0 %v2697
    %3022 = vmatprep.subr.mxu0 %v2696
    %3023 = vmatpush2.msra.mxu0 %v2695
    %3024 = vmatprep.subr.mxu0 %v2694
    %3025 = vmatpush2.msra.mxu0 %v2693
    %3026 = vmatprep.subr.mxu0 %v2692
    %3027 = vmatpush2.msra.mxu0 %v2691
    %3028 = vmatprep.mubr.f32.mxu0 %v2534
    %3029 = vmatmul.mubr.f32.gmra.mxu0 %v2533
    %v3030 = vpop.f32.mrf.mxu0
    %v3031 = vadd.f32 %v2918, %v3030
    %v3032 = vpop.f32.mrf.mxu0
    %v3033 = vadd.f32 %v2920, %v3032
    %3034 = vmatprep.mubr.f32.mxu0 %v2542
    %3035 = vmatmul.mubr.f32.gmra.mxu0 %v2541
    %v3036 = vpop.f32.mrf.mxu0
    %v3037 = vadd.f32 %v2924, %v3036
    %v3038 = vpop.f32.mrf.mxu0
    %v3039 = vadd.f32 %v2926, %v3038
    %3040 = vmatprep.mubr.f32.mxu0 %v2550
    %3041 = vmatmul.mubr.f32.gmra.mxu0 %v2549
    %v3042 = vpop.f32.mrf.mxu0
    %v3043 = vadd.f32 %v2930, %v3042
    %v3044 = vpop.f32.mrf.mxu0
    %v3045 = vadd.f32 %v2932, %v3044
    %3046 = vmatprep.mubr.f32.mxu0 %v2558
    %3047 = vmatmul.mubr.f32.gmra.mxu0 %v2557
    %v3048 = vpop.f32.mrf.mxu0
    %v3049 = vadd.f32 %v2936, %v3048
    %v3050 = vpop.f32.mrf.mxu0
    %v3051 = vadd.f32 %v2938, %v3050
    %3052 = vmatprep.mubr.f32.mxu0 %v2566
    %3053 = vmatmul.mubr.f32.gmra.mxu0 %v2565
    %v3054 = vpop.f32.mrf.mxu0
    %v3055 = vadd.f32 %v2942, %v3054
    %v3056 = vpop.f32.mrf.mxu0
    %v3057 = vadd.f32 %v2944, %v3056
    %3058 = vmatprep.mubr.f32.mxu0 %v2574
    %3059 = vmatmul.mubr.f32.gmra.mxu0 %v2573
    %v3060 = vpop.f32.mrf.mxu0
    %v3061 = vadd.f32 %v2948, %v3060
    %v3062 = vpop.f32.mrf.mxu0
    %v3063 = vadd.f32 %v2950, %v3062
    %3064 = vmatprep.mubr.f32.mxu0 %v2582
    %3065 = vmatmul.mubr.f32.gmra.mxu0 %v2581
    %v3066 = vpop.f32.mrf.mxu0
    %v3067 = vadd.f32 %v2954, %v3066
    %v3068 = vpop.f32.mrf.mxu0
    %v3069 = vadd.f32 %v2956, %v3068
    %3070 = vmatprep.mubr.f32.mxu0 %v2590
    %3071 = vmatmul.mubr.f32.gmra.mxu0 %v2589
    %v3072 = vpop.f32.mrf.mxu0
    %v3073 = vadd.f32 %v2960, %v3072
    %v3074 = vpop.f32.mrf.mxu0
    %v3075 = vadd.f32 %v2962, %v3074
    %3076 = vdwg.mxu0
    %3077 = vmatprep.subr.mxu0 %v2754
    %3078 = vmatpush1.msra.mxu0 %v2753
    %3079 = vmatprep.subr.mxu0 %v2752
    %3080 = vmatpush1.msra.mxu0 %v2751
    %3081 = vmatprep.subr.mxu0 %v2750
    %3082 = vmatpush1.msra.mxu0 %v2749
    %3083 = vmatprep.subr.mxu0 %v2748
    %3084 = vmatpush1.msra.mxu0 %v2747
    %3085 = vmatprep.subr.mxu0 %v2746
    %3086 = vmatpush1.msra.mxu0 %v2745
    %3087 = vmatprep.subr.mxu0 %v2744
    %3088 = vmatpush1.msra.mxu0 %v2743
    %3089 = vmatprep.subr.mxu0 %v2742
    %3090 = vmatpush1.msra.mxu0 %v2741
    %3091 = vmatprep.subr.mxu0 %v2740
    %3092 = vmatpush1.msra.mxu0 %v2739
    %3093 = vmatprep.subr.mxu0 %v2738
    %3094 = vmatpush1.msra.mxu0 %v2737
    %3095 = vmatprep.subr.mxu0 %v2736
    %3096 = vmatpush1.msra.mxu0 %v2735
    %3097 = vmatprep.subr.mxu0 %v2734
    %3098 = vmatpush1.msra.mxu0 %v2733
    %3099 = vmatprep.subr.mxu0 %v2732
    %3100 = vmatpush1.msra.mxu0 %v2731
    %3101 = vmatprep.subr.mxu0 %v2730
    %3102 = vmatpush1.msra.mxu0 %v2729
    %3103 = vmatprep.subr.mxu0 %v2728
    %3104 = vmatpush1.msra.mxu0 %v2727
    %3105 = vmatprep.subr.mxu0 %v2726
    %3106 = vmatpush1.msra.mxu0 %v2725
    %3107 = vmatprep.subr.mxu0 %v2724
    %3108 = vmatpush1.msra.mxu0 %v2723
    %3109 = vmatprep.subr.mxu0 %v2786
    %3110 = vmatpush2.msra.mxu0 %v2785
    %3111 = vmatprep.subr.mxu0 %v2784
    %3112 = vmatpush2.msra.mxu0 %v2783
    %3113 = vmatprep.subr.mxu0 %v2782
    %3114 = vmatpush2.msra.mxu0 %v2781
    %3115 = vmatprep.subr.mxu0 %v2780
    %3116 = vmatpush2.msra.mxu0 %v2779
    %3117 = vmatprep.subr.mxu0 %v2778
    %3118 = vmatpush2.msra.mxu0 %v2777
    %3119 = vmatprep.subr.mxu0 %v2776
    %3120 = vmatpush2.msra.mxu0 %v2775
    %3121 = vmatprep.subr.mxu0 %v2774
    %3122 = vmatpush2.msra.mxu0 %v2773
    %3123 = vmatprep.subr.mxu0 %v2772
    %3124 = vmatpush2.msra.mxu0 %v2771
    %3125 = vmatprep.subr.mxu0 %v2770
    %3126 = vmatpush2.msra.mxu0 %v2769
    %3127 = vmatprep.subr.mxu0 %v2768
    %3128 = vmatpush2.msra.mxu0 %v2767
    %3129 = vmatprep.subr.mxu0 %v2766
    %3130 = vmatpush2.msra.mxu0 %v2765
    %3131 = vmatprep.subr.mxu0 %v2764
    %3132 = vmatpush2.msra.mxu0 %v2763
    %3133 = vmatprep.subr.mxu0 %v2762
    %3134 = vmatpush2.msra.mxu0 %v2761
    %3135 = vmatprep.subr.mxu0 %v2760
    %3136 = vmatpush2.msra.mxu0 %v2759
    %3137 = vmatprep.subr.mxu0 %v2758
    %3138 = vmatpush2.msra.mxu0 %v2757
    %3139 = vmatprep.subr.mxu0 %v2756
    %3140 = vmatpush2.msra.mxu0 %v2755
    %3141 = vmatprep.mubr.f32.mxu0 %v2536
    %3142 = vmatmul.mubr.f32.gmra.mxu0 %v2535
    %v3143 = vpop.f32.mrf.mxu0
    %v3144 = vadd.f32 %v3031, %v3143
    %v3145 = vpop.f32.mrf.mxu0
    %v3146 = vadd.f32 %v3033, %v3145
    %3147 = vmatprep.mubr.f32.mxu0 %v2544
    %3148 = vmatmul.mubr.f32.gmra.mxu0 %v2543
    %v3149 = vpop.f32.mrf.mxu0
    %v3150 = vadd.f32 %v3037, %v3149
    %v3151 = vpop.f32.mrf.mxu0
    %v3152 = vadd.f32 %v3039, %v3151
    %3153 = vmatprep.mubr.f32.mxu0 %v2552
    %3154 = vmatmul.mubr.f32.gmra.mxu0 %v2551
    %v3155 = vpop.f32.mrf.mxu0
    %v3156 = vadd.f32 %v3043, %v3155
    %v3157 = vpop.f32.mrf.mxu0
    %v3158 = vadd.f32 %v3045, %v3157
    %3159 = vmatprep.mubr.f32.mxu0 %v2560
    %3160 = vmatmul.mubr.f32.gmra.mxu0 %v2559
    %v3161 = vpop.f32.mrf.mxu0
    %v3162 = vadd.f32 %v3049, %v3161
    %v3163 = vpop.f32.mrf.mxu0
    %v3164 = vadd.f32 %v3051, %v3163
    %3165 = vmatprep.mubr.f32.mxu0 %v2568
    %3166 = vmatmul.mubr.f32.gmra.mxu0 %v2567
    %v3167 = vpop.f32.mrf.mxu0
    %v3168 = vadd.f32 %v3055, %v3167
    %v3169 = vpop.f32.mrf.mxu0
    %v3170 = vadd.f32 %v3057, %v3169
    %3171 = vmatprep.mubr.f32.mxu0 %v2576
    %3172 = vmatmul.mubr.f32.gmra.mxu0 %v2575
    %v3173 = vpop.f32.mrf.mxu0
    %v3174 = vadd.f32 %v3061, %v3173
    %v3175 = vpop.f32.mrf.mxu0
    %v3176 = vadd.f32 %v3063, %v3175
    %3177 = vmatprep.mubr.f32.mxu0 %v2584
    %3178 = vmatmul.mubr.f32.gmra.mxu0 %v2583
    %v3179 = vpop.f32.mrf.mxu0
    %v3180 = vadd.f32 %v3067, %v3179
    %v3181 = vpop.f32.mrf.mxu0
    %v3182 = vadd.f32 %v3069, %v3181
    %3183 = vmatprep.mubr.f32.mxu0 %v2592
    %3184 = vmatmul.mubr.f32.gmra.mxu0 %v2591
    %v3185 = vpop.f32.mrf.mxu0
    %v3186 = vadd.f32 %v3073, %v3185
    %v3187 = vpop.f32.mrf.mxu0
    %v3188 = vadd.f32 %v3075, %v3187
    %3189 = vdwg.mxu0
    %3190 = vmatprep.subr.mxu0 %v2818
    %3191 = vmatpush1.msra.mxu0 %v2817
    %3192 = vmatprep.subr.mxu0 %v2816
    %3193 = vmatpush1.msra.mxu0 %v2815
    %3194 = vmatprep.subr.mxu0 %v2814
    %3195 = vmatpush1.msra.mxu0 %v2813
    %3196 = vmatprep.subr.mxu0 %v2812
    %3197 = vmatpush1.msra.mxu0 %v2811
    %3198 = vmatprep.subr.mxu0 %v2810
    %3199 = vmatpush1.msra.mxu0 %v2809
    %3200 = vmatprep.subr.mxu0 %v2808
    %3201 = vmatpush1.msra.mxu0 %v2807
    %3202 = vmatprep.subr.mxu0 %v2806
    %3203 = vmatpush1.msra.mxu0 %v2805
    %3204 = vmatprep.subr.mxu0 %v2804
    %3205 = vmatpush1.msra.mxu0 %v2803
    %3206 = vmatprep.subr.mxu0 %v2802
    %3207 = vmatpush1.msra.mxu0 %v2801
    %3208 = vmatprep.subr.mxu0 %v2800
    %3209 = vmatpush1.msra.mxu0 %v2799
    %3210 = vmatprep.subr.mxu0 %v2798
    %3211 = vmatpush1.msra.mxu0 %v2797
    %3212 = vmatprep.subr.mxu0 %v2796
    %3213 = vmatpush1.msra.mxu0 %v2795
    %3214 = vmatprep.subr.mxu0 %v2794
    %3215 = vmatpush1.msra.mxu0 %v2793
    %3216 = vmatprep.subr.mxu0 %v2792
    %3217 = vmatpush1.msra.mxu0 %v2791
    %3218 = vmatprep.subr.mxu0 %v2790
    %3219 = vmatpush1.msra.mxu0 %v2789
    %3220 = vmatprep.subr.mxu0 %v2788
    %3221 = vmatpush1.msra.mxu0 %v2787
    %3222 = vmatprep.subr.mxu0 %v2850
    %3223 = vmatpush2.msra.mxu0 %v2849
    %3224 = vmatprep.subr.mxu0 %v2848
    %3225 = vmatpush2.msra.mxu0 %v2847
    %3226 = vmatprep.subr.mxu0 %v2846
    %3227 = vmatpush2.msra.mxu0 %v2845
    %3228 = vmatprep.subr.mxu0 %v2844
    %3229 = vmatpush2.msra.mxu0 %v2843
    %3230 = vmatprep.subr.mxu0 %v2842
    %3231 = vmatpush2.msra.mxu0 %v2841
    %3232 = vmatprep.subr.mxu0 %v2840
    %3233 = vmatpush2.msra.mxu0 %v2839
    %3234 = vmatprep.subr.mxu0 %v2838
    %3235 = vmatpush2.msra.mxu0 %v2837
    %3236 = vmatprep.subr.mxu0 %v2836
    %3237 = vmatpush2.msra.mxu0 %v2835
    %3238 = vmatprep.subr.mxu0 %v2834
    %3239 = vmatpush2.msra.mxu0 %v2833
    %3240 = vmatprep.subr.mxu0 %v2832
    %3241 = vmatpush2.msra.mxu0 %v2831
    %3242 = vmatprep.subr.mxu0 %v2830
    %3243 = vmatpush2.msra.mxu0 %v2829
    %3244 = vmatprep.subr.mxu0 %v2828
    %3245 = vmatpush2.msra.mxu0 %v2827
    %3246 = vmatprep.subr.mxu0 %v2826
    %3247 = vmatpush2.msra.mxu0 %v2825
    %3248 = vmatprep.subr.mxu0 %v2824
    %3249 = vmatpush2.msra.mxu0 %v2823
    %3250 = vmatprep.subr.mxu0 %v2822
    %3251 = vmatpush2.msra.mxu0 %v2821
    %3252 = vmatprep.subr.mxu0 %v2820
    %3253 = vmatpush2.msra.mxu0 %v2819
    %3254 = vmatprep.mubr.f32.mxu0 %v2538
    %3255 = vmatmul.mubr.f32.gmra.mxu0 %v2537
    %v3256 = vpop.f32.mrf.mxu0
    %v3257 = vadd.f32 %v3144, %v3256
    %v3258 = vpop.f32.mrf.mxu0
    %v3259 = vadd.f32 %v3146, %v3258
    %3260 = vmatprep.mubr.f32.mxu0 %v2546
    %3261 = vmatmul.mubr.f32.gmra.mxu0 %v2545
    %v3262 = vpop.f32.mrf.mxu0
    %v3263 = vadd.f32 %v3150, %v3262
    %v3264 = vpop.f32.mrf.mxu0
    %v3265 = vadd.f32 %v3152, %v3264
    %3266 = vmatprep.mubr.f32.mxu0 %v2554
    %3267 = vmatmul.mubr.f32.gmra.mxu0 %v2553
    %v3268 = vpop.f32.mrf.mxu0
    %v3269 = vadd.f32 %v3156, %v3268
    %v3270 = vpop.f32.mrf.mxu0
    %v3271 = vadd.f32 %v3158, %v3270
    %3272 = vmatprep.mubr.f32.mxu0 %v2562
    %3273 = vmatmul.mubr.f32.gmra.mxu0 %v2561
    %v3274 = vpop.f32.mrf.mxu0
    %v3275 = vadd.f32 %v3162, %v3274
    %v3276 = vpop.f32.mrf.mxu0
    %v3277 = vadd.f32 %v3164, %v3276
    %3278 = vmatprep.mubr.f32.mxu0 %v2570
    %3279 = vmatmul.mubr.f32.gmra.mxu0 %v2569
    %v3280 = vpop.f32.mrf.mxu0
    %v3281 = vadd.f32 %v3168, %v3280
    %v3282 = vpop.f32.mrf.mxu0
    %v3283 = vadd.f32 %v3170, %v3282
    %3284 = vmatprep.mubr.f32.mxu0 %v2578
    %3285 = vmatmul.mubr.f32.gmra.mxu0 %v2577
    %v3286 = vpop.f32.mrf.mxu0
    %v3287 = vadd.f32 %v3174, %v3286
    %v3288 = vpop.f32.mrf.mxu0
    %v3289 = vadd.f32 %v3176, %v3288
    %3290 = vmatprep.mubr.f32.mxu0 %v2586
    %3291 = vmatmul.mubr.f32.gmra.mxu0 %v2585
    %v3292 = vpop.f32.mrf.mxu0
    %v3293 = vadd.f32 %v3180, %v3292
    %v3294 = vpop.f32.mrf.mxu0
    %v3295 = vadd.f32 %v3182, %v3294
    %3296 = vmatprep.mubr.f32.mxu0 %v2594
    %3297 = vmatmul.mubr.f32.gmra.mxu0 %v2593
    %v3298 = vpop.f32.mrf.mxu0
    %v3299 = vadd.f32 %v3186, %v3298
    %v3300 = vpop.f32.mrf.mxu0
    %v3301 = vadd.f32 %v3188, %v3300
    %3302 = vdwg.mxu0
    %v3303 = vadd.f32 %v2515, %v3257
    %v3304 = vadd.f32 %v2516, %v3259
    %v3305 = vadd.f32 %v2517, %v3263
    %v3306 = vadd.f32 %v2518, %v3265
    %v3307 = vadd.f32 %v2519, %v3269
    %v3308 = vadd.f32 %v2520, %v3271
    %v3309 = vadd.f32 %v2521, %v3275
    %v3310 = vadd.f32 %v2522, %v3277
    %v3311 = vadd.f32 %v2523, %v3281
    %v3312 = vadd.f32 %v2524, %v3283
    %v3313 = vadd.f32 %v2525, %v3287
    %v3314 = vadd.f32 %v2526, %v3289
    %v3315 = vadd.f32 %v2527, %v3293
    %v3316 = vadd.f32 %v2528, %v3295
    %v3317 = vadd.f32 %v2529, %v3299
    %v3318 = vadd.f32 %v2530, %v3301
    %v3319 = vld [vmem:[%s6] sm:$0x3]
    %v3321 = vlaneseq
    %v3322 = vshrl.u32 %v3321, 7
    %v3323 = vsub.s32 0, %v3322
    %v3324 = vrot.slane %v3319, %v3323
    %v3325 = vlaneseq
    %v3326 = vshrl.u32 %v3325, 7
    %v3327 = vsub.s32 1, %v3326
    %v3328 = vrot.slane %v3319, %v3327
    %v3331 = vadd.f32 %v3303, %v3324
    %v3332 = vadd.f32 %v3304, %v3328
    %v3333 = vadd.f32 %v3305, %v3324
    %v3334 = vadd.f32 %v3306, %v3328
    %v3335 = vadd.f32 %v3307, %v3324
    %v3336 = vadd.f32 %v3308, %v3328
    %v3337 = vadd.f32 %v3309, %v3324
    %v3338 = vadd.f32 %v3310, %v3328
    %v3339 = vadd.f32 %v3311, %v3324
    %v3340 = vadd.f32 %v3312, %v3328
    %v3341 = vadd.f32 %v3313, %v3324
    %v3342 = vadd.f32 %v3314, %v3328
    %v3343 = vadd.f32 %v3315, %v3324
    %v3344 = vadd.f32 %v3316, %v3328
    %v3345 = vadd.f32 %v3317, %v3324
    %v3346 = vadd.f32 %v3318, %v3328
    %v3347 = vtanh.pop %v3331
    %v3348 = vtanh.pop %v3332
    %v3349 = vtanh.pop %v3333
    %v3350 = vtanh.pop %v3334
    %v3351 = vtanh.pop %v3335
    %v3352 = vtanh.pop %v3336
    %v3353 = vtanh.pop %v3337
    %v3354 = vtanh.pop %v3338
    %v3355 = vtanh.pop %v3339
    %v3356 = vtanh.pop %v3340
    %v3357 = vtanh.pop %v3341
    %v3358 = vtanh.pop %v3342
    %v3359 = vtanh.pop %v3343
    %v3360 = vtanh.pop %v3344
    %v3361 = vtanh.pop %v3345
    %v3362 = vtanh.pop %v3346
    %v3363 = vld [vmem:[%s7] sm:$0xff]
    %v3364 = vld [vmem:[%s7 + $0x8] sm:$0xff]
    %v3365 = vld [vmem:[%s7 + $0x10] sm:$0xff]
    %v3366 = vld [vmem:[%s7 + $0x18] sm:$0xff]
    %v3367 = vld [vmem:[%s7 + $0x20] sm:$0xff]
    %v3368 = vld [vmem:[%s7 + $0x28] sm:$0xff]
    %v3369 = vld [vmem:[%s7 + $0x30] sm:$0xff]
    %v3370 = vld [vmem:[%s7 + $0x38] sm:$0xff]
    %v3371 = vld [vmem:[%s7 + $0x40] sm:$0xff]
    %v3372 = vld [vmem:[%s7 + $0x48] sm:$0xff]
    %v3373 = vld [vmem:[%s7 + $0x50] sm:$0xff]
    %v3374 = vld [vmem:[%s7 + $0x58] sm:$0xff]
    %v3375 = vld [vmem:[%s7 + $0x60] sm:$0xff]
    %v3376 = vld [vmem:[%s7 + $0x68] sm:$0xff]
    %v3377 = vld [vmem:[%s7 + $0x70] sm:$0xff]
    %v3378 = vld [vmem:[%s7 + $0x78] sm:$0xff]
    %v3379 = vld [vmem:[%s7 + $0x80] sm:$0xff]
    %v3380 = vld [vmem:[%s7 + $0x88] sm:$0xff]
    %v3381 = vld [vmem:[%s7 + $0x90] sm:$0xff]
    %v3382 = vld [vmem:[%s7 + $0x98] sm:$0xff]
    %v3383 = vld [vmem:[%s7 + $0xa0] sm:$0xff]
    %v3384 = vld [vmem:[%s7 + $0xa8] sm:$0xff]
    %v3385 = vld [vmem:[%s7 + $0xb0] sm:$0xff]
    %v3386 = vld [vmem:[%s7 + $0xb8] sm:$0xff]
    %v3387 = vld [vmem:[%s7 + $0xc0] sm:$0xff]
    %v3388 = vld [vmem:[%s7 + $0xc8] sm:$0xff]
    %v3389 = vld [vmem:[%s7 + $0xd0] sm:$0xff]
    %v3390 = vld [vmem:[%s7 + $0xd8] sm:$0xff]
    %v3391 = vld [vmem:[%s7 + $0xe0] sm:$0xff]
    %v3392 = vld [vmem:[%s7 + $0xe8] sm:$0xff]
    %v3393 = vld [vmem:[%s7 + $0xf0] sm:$0xff]
    %v3394 = vld [vmem:[%s7 + $0xf8] sm:$0xff]
    %v3395 = vld [vmem:[%s8] sm:$0x1]
    %v3397 = vlaneseq
    %v3398 = vshrl.u32 %v3397, 7
    %v3399 = vsub.s32 0, %v3398
    %v3400 = vrot.slane %v3395, %v3399
    %3402 = vmatprep.subr.mxu0 0.0
    %3403 = vmatpush1.msra.mxu0 %v3378
    %3404 = vmatprep.subr.mxu0 0.0
    %3405 = vmatpush1.msra.mxu0 %v3377
    %3406 = vmatprep.subr.mxu0 0.0
    %3407 = vmatpush1.msra.mxu0 %v3376
    %3408 = vmatprep.subr.mxu0 0.0
    %3409 = vmatpush1.msra.mxu0 %v3375
    %3410 = vmatprep.subr.mxu0 0.0
    %3411 = vmatpush1.msra.mxu0 %v3374
    %3412 = vmatprep.subr.mxu0 0.0
    %3413 = vmatpush1.msra.mxu0 %v3373
    %3414 = vmatprep.subr.mxu0 0.0
    %3415 = vmatpush1.msra.mxu0 %v3372
    %3416 = vmatprep.subr.mxu0 0.0
    %3417 = vmatpush1.msra.mxu0 %v3371
    %3418 = vmatprep.subr.mxu0 0.0
    %3419 = vmatpush1.msra.mxu0 %v3370
    %3420 = vmatprep.subr.mxu0 0.0
    %3421 = vmatpush1.msra.mxu0 %v3369
    %3422 = vmatprep.subr.mxu0 0.0
    %3423 = vmatpush1.msra.mxu0 %v3368
    %3424 = vmatprep.subr.mxu0 0.0
    %3425 = vmatpush1.msra.mxu0 %v3367
    %3426 = vmatprep.subr.mxu0 0.0
    %3427 = vmatpush1.msra.mxu0 %v3366
    %3428 = vmatprep.subr.mxu0 0.0
    %3429 = vmatpush1.msra.mxu0 %v3365
    %3430 = vmatprep.subr.mxu0 0.0
    %3431 = vmatpush1.msra.mxu0 %v3364
    %3432 = vmatprep.subr.mxu0 0.0
    %3433 = vmatpush1.msra.mxu0 %v3363
    %3434 = vmatprep.subr.mxu0 0.0
    %3435 = vmatpush2.msra.mxu0 %v3394
    %3436 = vmatprep.subr.mxu0 0.0
    %3437 = vmatpush2.msra.mxu0 %v3393
    %3438 = vmatprep.subr.mxu0 0.0
    %3439 = vmatpush2.msra.mxu0 %v3392
    %3440 = vmatprep.subr.mxu0 0.0
    %3441 = vmatpush2.msra.mxu0 %v3391
    %3442 = vmatprep.subr.mxu0 0.0
    %3443 = vmatpush2.msra.mxu0 %v3390
    %3444 = vmatprep.subr.mxu0 0.0
    %3445 = vmatpush2.msra.mxu0 %v3389
    %3446 = vmatprep.subr.mxu0 0.0
    %3447 = vmatpush2.msra.mxu0 %v3388
    %3448 = vmatprep.subr.mxu0 0.0
    %3449 = vmatpush2.msra.mxu0 %v3387
    %3450 = vmatprep.subr.mxu0 0.0
    %3451 = vmatpush2.msra.mxu0 %v3386
    %3452 = vmatprep.subr.mxu0 0.0
    %3453 = vmatpush2.msra.mxu0 %v3385
    %3454 = vmatprep.subr.mxu0 0.0
    %3455 = vmatpush2.msra.mxu0 %v3384
    %3456 = vmatprep.subr.mxu0 0.0
    %3457 = vmatpush2.msra.mxu0 %v3383
    %3458 = vmatprep.subr.mxu0 0.0
    %3459 = vmatpush2.msra.mxu0 %v3382
    %3460 = vmatprep.subr.mxu0 0.0
    %3461 = vmatpush2.msra.mxu0 %v3381
    %3462 = vmatprep.subr.mxu0 0.0
    %3463 = vmatpush2.msra.mxu0 %v3380
    %3464 = vmatprep.subr.mxu0 0.0
    %3465 = vmatpush2.msra.mxu0 %v3379
    %3466 = vmatprep.mubr.f32.mxu0 %v3348
    %3467 = vmatmul.mubr.f32.gmra.mxu0 %v3347
    %v3468 = vpop.f32.mrf.mxu0
    %v3469 = vadd.f32 %v3400, %v3468
    %v3470 = vpop.f32.mrf.mxu0
    %3471 = vmatprep.mubr.f32.mxu0 %v3350
    %3472 = vmatmul.mubr.f32.gmra.mxu0 %v3349
    %v3473 = vpop.f32.mrf.mxu0
    %v3474 = vadd.f32 %v3400, %v3473
    %v3475 = vpop.f32.mrf.mxu0
    %3476 = vmatprep.mubr.f32.mxu0 %v3352
    %3477 = vmatmul.mubr.f32.gmra.mxu0 %v3351
    %v3478 = vpop.f32.mrf.mxu0
    %v3479 = vadd.f32 %v3400, %v3478
    %v3480 = vpop.f32.mrf.mxu0
    %3481 = vmatprep.mubr.f32.mxu0 %v3354
    %3482 = vmatmul.mubr.f32.gmra.mxu0 %v3353
    %v3483 = vpop.f32.mrf.mxu0
    %v3484 = vadd.f32 %v3400, %v3483
    %v3485 = vpop.f32.mrf.mxu0
    %3486 = vmatprep.mubr.f32.mxu0 %v3356
    %3487 = vmatmul.mubr.f32.gmra.mxu0 %v3355
    %v3488 = vpop.f32.mrf.mxu0
    %v3489 = vadd.f32 %v3400, %v3488
    %v3490 = vpop.f32.mrf.mxu0
    %3491 = vmatprep.mubr.f32.mxu0 %v3358
    %3492 = vmatmul.mubr.f32.gmra.mxu0 %v3357
    %v3493 = vpop.f32.mrf.mxu0
    %v3494 = vadd.f32 %v3400, %v3493
    %v3495 = vpop.f32.mrf.mxu0
    %3496 = vmatprep.mubr.f32.mxu0 %v3360
    %3497 = vmatmul.mubr.f32.gmra.mxu0 %v3359
    %v3498 = vpop.f32.mrf.mxu0
    %v3499 = vadd.f32 %v3400, %v3498
    %v3500 = vpop.f32.mrf.mxu0
    %3501 = vmatprep.mubr.f32.mxu0 %v3362
    %3502 = vmatmul.mubr.f32.gmra.mxu0 %v3361
    %v3503 = vpop.f32.mrf.mxu0
    %v3504 = vadd.f32 %v3400, %v3503
    %v3505 = vpop.f32.mrf.mxu0
    %3506 = vdwg.mxu0
    %v3507 = vtanh.pop %v3469
    %v3508 = vtanh.pop %v3474
    %v3509 = vtanh.pop %v3479
    %v3510 = vtanh.pop %v3484
    %v3511 = vtanh.pop %v3489
    %v3512 = vtanh.pop %v3494
    %v3513 = vtanh.pop %v3499
    %v3514 = vtanh.pop %v3504
    %v3515 = vld [vmem:[%s9] sm:$0xff]
    %v3516 = vld [vmem:[%s9 + $0x8] sm:$0xff]
    %v3517 = vld [vmem:[%s9 + $0x10] sm:$0xff]
    %v3518 = vld [vmem:[%s9 + $0x18] sm:$0xff]
    %v3519 = vld [vmem:[%s9 + $0x20] sm:$0xff]
    %v3520 = vld [vmem:[%s9 + $0x28] sm:$0xff]
    %v3521 = vld [vmem:[%s9 + $0x30] sm:$0xff]
    %v3522 = vld [vmem:[%s9 + $0x38] sm:$0xff]
    %v3523 = vld [vmem:[%s10] sm:$0x1]
    %v3525 = vlaneseq
    %v3526 = vshrl.u32 %v3525, 7
    %v3527 = vsub.s32 0, %v3526
    %v3528 = vrot.slane %v3523, %v3527
    %vm3530 = vcmask 523264
    %v3532 = vsel %vm3530, %v3507, 0
    %v3535 = vsel %vm3530, %v3508, 0
    %v3538 = vsel %vm3530, %v3509, 0
    %v3541 = vsel %vm3530, %v3510, 0
    %v3544 = vsel %vm3530, %v3511, 0
    %v3547 = vsel %vm3530, %v3512, 0
    %v3550 = vsel %vm3530, %v3513, 0
    %v3553 = vsel %vm3530, %v3514, 0
    %3555 = vmatprep.subr.mxu0 0.0
    %3556 = vmatpush1.msra.mxu0 0.0
    %3557 = vmatprep.subr.mxu0 0.0
    %3558 = vmatpush1.msra.mxu0 0.0
    %3559 = vmatprep.subr.mxu0 0.0
    %3560 = vmatpush1.msra.mxu0 0.0
    %3561 = vmatprep.subr.mxu0 0.0
    %3562 = vmatpush1.msra.mxu0 0.0
    %3563 = vmatprep.subr.mxu0 0.0
    %3564 = vmatpush1.msra.mxu0 0.0
    %3565 = vmatprep.subr.mxu0 0.0
    %3566 = vmatpush1.msra.mxu0 0.0
    %3567 = vmatprep.subr.mxu0 0.0
    %3568 = vmatpush1.msra.mxu0 0.0
    %3569 = vmatprep.subr.mxu0 0.0
    %3570 = vmatpush1.msra.mxu0 0.0
    %3571 = vmatprep.subr.mxu0 0.0
    %3572 = vmatpush1.msra.mxu0 %v3522
    %3573 = vmatprep.subr.mxu0 0.0
    %3574 = vmatpush1.msra.mxu0 %v3521
    %3575 = vmatprep.subr.mxu0 0.0
    %3576 = vmatpush1.msra.mxu0 %v3520
    %3577 = vmatprep.subr.mxu0 0.0
    %3578 = vmatpush1.msra.mxu0 %v3519
    %3579 = vmatprep.subr.mxu0 0.0
    %3580 = vmatpush1.msra.mxu0 %v3518
    %3581 = vmatprep.subr.mxu0 0.0
    %3582 = vmatpush1.msra.mxu0 %v3517
    %3583 = vmatprep.subr.mxu0 0.0
    %3584 = vmatpush1.msra.mxu0 %v3516
    %3585 = vmatprep.subr.mxu0 0.0
    %3586 = vmatpush1.msra.mxu0 %v3515
    %3587 = vmatprep.subr.mxu0 0.0
    %3588 = vmatpush2.msra.mxu0 0.0
    %3589 = vmatprep.subr.mxu0 0.0
    %3590 = vmatpush2.msra.mxu0 0.0
    %3591 = vmatprep.subr.mxu0 0.0
    %3592 = vmatpush2.msra.mxu0 0.0
    %3593 = vmatprep.subr.mxu0 0.0
    %3594 = vmatpush2.msra.mxu0 0.0
    %3595 = vmatprep.subr.mxu0 0.0
    %3596 = vmatpush2.msra.mxu0 0.0
    %3597 = vmatprep.subr.mxu0 0.0
    %3598 = vmatpush2.msra.mxu0 0.0
    %3599 = vmatprep.subr.mxu0 0.0
    %3600 = vmatpush2.msra.mxu0 0.0
    %3601 = vmatprep.subr.mxu0 0.0
    %3602 = vmatpush2.msra.mxu0 0.0
    %3603 = vmatprep.subr.mxu0 0.0
    %3604 = vmatpush2.msra.mxu0 0.0
    %3605 = vmatprep.subr.mxu0 0.0
    %3606 = vmatpush2.msra.mxu0 0.0
    %3607 = vmatprep.subr.mxu0 0.0
    %3608 = vmatpush2.msra.mxu0 0.0
    %3609 = vmatprep.subr.mxu0 0.0
    %3610 = vmatpush2.msra.mxu0 0.0
    %3611 = vmatprep.subr.mxu0 0.0
    %3612 = vmatpush2.msra.mxu0 0.0
    %3613 = vmatprep.subr.mxu0 0.0
    %3614 = vmatpush2.msra.mxu0 0.0
    %3615 = vmatprep.subr.mxu0 0.0
    %3616 = vmatpush2.msra.mxu0 0.0
    %3617 = vmatprep.subr.mxu0 0.0
    %3618 = vmatpush2.msra.mxu0 0.0
    %3619 = vmatprep.mubr.f32.mxu0 0.0
    %3620 = vmatmul.mubr.f32.gmra.mxu0 %v3532
    %v3621 = vpop.f32.mrf.mxu0
    %v3622 = vadd.f32 %v3528, %v3621
    %v3623 = vpop.f32.mrf.mxu0
    %3624 = vmatprep.mubr.f32.mxu0 0.0
    %3625 = vmatmul.mubr.f32.gmra.mxu0 %v3535
    %v3626 = vpop.f32.mrf.mxu0
    %v3627 = vadd.f32 %v3528, %v3626
    %v3628 = vpop.f32.mrf.mxu0
    %3629 = vmatprep.mubr.f32.mxu0 0.0
    %3630 = vmatmul.mubr.f32.gmra.mxu0 %v3538
    %v3631 = vpop.f32.mrf.mxu0
    %v3632 = vadd.f32 %v3528, %v3631
    %v3633 = vpop.f32.mrf.mxu0
    %3634 = vmatprep.mubr.f32.mxu0 0.0
    %3635 = vmatmul.mubr.f32.gmra.mxu0 %v3541
    %v3636 = vpop.f32.mrf.mxu0
    %v3637 = vadd.f32 %v3528, %v3636
    %v3638 = vpop.f32.mrf.mxu0
    %3639 = vmatprep.mubr.f32.mxu0 0.0
    %3640 = vmatmul.mubr.f32.gmra.mxu0 %v3544
    %v3641 = vpop.f32.mrf.mxu0
    %v3642 = vadd.f32 %v3528, %v3641
    %v3643 = vpop.f32.mrf.mxu0
    %3644 = vmatprep.mubr.f32.mxu0 0.0
    %3645 = vmatmul.mubr.f32.gmra.mxu0 %v3547
    %v3646 = vpop.f32.mrf.mxu0
    %v3647 = vadd.f32 %v3528, %v3646
    %v3648 = vpop.f32.mrf.mxu0
    %3649 = vmatprep.mubr.f32.mxu0 0.0
    %3650 = vmatmul.mubr.f32.gmra.mxu0 %v3550
    %v3651 = vpop.f32.mrf.mxu0
    %v3652 = vadd.f32 %v3528, %v3651
    %v3653 = vpop.f32.mrf.mxu0
    %3654 = vmatprep.mubr.f32.mxu0 0.0
    %3655 = vmatmul.mubr.f32.gmra.mxu0 %v3553
    %v3656 = vpop.f32.mrf.mxu0
    %v3657 = vadd.f32 %v3528, %v3656
    %v3658 = vpop.f32.mrf.mxu0
    %3659 = vdwg.mxu0
    %v3660 = vtanh.pop %v3622
    %v3661 = vtanh.pop %v3627
    %v3662 = vtanh.pop %v3632
    %v3663 = vtanh.pop %v3637
    %v3664 = vtanh.pop %v3642
    %v3665 = vtanh.pop %v3647
    %v3666 = vtanh.pop %v3652
    %v3667 = vtanh.pop %v3657
    %v3668 = vld [vmem:[%s11] sm:$0xff]
    %v3669 = vld [vmem:[%s11 + $0x8] sm:$0xff]
    %v3670 = vld [vmem:[%s12] sm:$0x1]
    %v3672 = vlaneseq
    %v3673 = vshrl.u32 %v3672, 7
    %v3674 = vsub.s32 0, %v3673
    %v3675 = vrot.slane %v3670, %v3674
    %vm3677 = vcmask 130048
    %v3679 = vsel %vm3677, %v3660, 0
    %v3682 = vsel %vm3677, %v3661, 0
    %v3685 = vsel %vm3677, %v3662, 0
    %v3688 = vsel %vm3677, %v3663, 0
    %v3691 = vsel %vm3677, %v3664, 0
    %v3694 = vsel %vm3677, %v3665, 0
    %v3697 = vsel %vm3677, %v3666, 0
    %v3700 = vsel %vm3677, %v3667, 0
    %3702 = vmatprep.subr.mxu0 0.0
    %3703 = vmatpush1.msra.mxu0 0.0
    %3704 = vmatprep.subr.mxu0 0.0
    %3705 = vmatpush1.msra.mxu0 0.0
    %3706 = vmatprep.subr.mxu0 0.0
    %3707 = vmatpush1.msra.mxu0 0.0
    %3708 = vmatprep.subr.mxu0 0.0
    %3709 = vmatpush1.msra.mxu0 0.0
    %3710 = vmatprep.subr.mxu0 0.0
    %3711 = vmatpush1.msra.mxu0 0.0
    %3712 = vmatprep.subr.mxu0 0.0
    %3713 = vmatpush1.msra.mxu0 0.0
    %3714 = vmatprep.subr.mxu0 0.0
    %3715 = vmatpush1.msra.mxu0 0.0
    %3716 = vmatprep.subr.mxu0 0.0
    %3717 = vmatpush1.msra.mxu0 0.0
    %3718 = vmatprep.subr.mxu0 0.0
    %3719 = vmatpush1.msra.mxu0 0.0
    %3720 = vmatprep.subr.mxu0 0.0
    %3721 = vmatpush1.msra.mxu0 0.0
    %3722 = vmatprep.subr.mxu0 0.0
    %3723 = vmatpush1.msra.mxu0 0.0
    %3724 = vmatprep.subr.mxu0 0.0
    %3725 = vmatpush1.msra.mxu0 0.0
    %3726 = vmatprep.subr.mxu0 0.0
    %3727 = vmatpush1.msra.mxu0 0.0
    %3728 = vmatprep.subr.mxu0 0.0
    %3729 = vmatpush1.msra.mxu0 0.0
    %3730 = vmatprep.subr.mxu0 0.0
    %3731 = vmatpush1.msra.mxu0 %v3669
    %3732 = vmatprep.subr.mxu0 0.0
    %3733 = vmatpush1.msra.mxu0 %v3668
    %3734 = vmatprep.subr.mxu0 0.0
    %3735 = vmatpush2.msra.mxu0 0.0
    %3736 = vmatprep.subr.mxu0 0.0
    %3737 = vmatpush2.msra.mxu0 0.0
    %3738 = vmatprep.subr.mxu0 0.0
    %3739 = vmatpush2.msra.mxu0 0.0
    %3740 = vmatprep.subr.mxu0 0.0
    %3741 = vmatpush2.msra.mxu0 0.0
    %3742 = vmatprep.subr.mxu0 0.0
    %3743 = vmatpush2.msra.mxu0 0.0
    %3744 = vmatprep.subr.mxu0 0.0
    %3745 = vmatpush2.msra.mxu0 0.0
    %3746 = vmatprep.subr.mxu0 0.0
    %3747 = vmatpush2.msra.mxu0 0.0
    %3748 = vmatprep.subr.mxu0 0.0
    %3749 = vmatpush2.msra.mxu0 0.0
    %3750 = vmatprep.subr.mxu0 0.0
    %3751 = vmatpush2.msra.mxu0 0.0
    %3752 = vmatprep.subr.mxu0 0.0
    %3753 = vmatpush2.msra.mxu0 0.0
    %3754 = vmatprep.subr.mxu0 0.0
    %3755 = vmatpush2.msra.mxu0 0.0
    %3756 = vmatprep.subr.mxu0 0.0
    %3757 = vmatpush2.msra.mxu0 0.0
    %3758 = vmatprep.subr.mxu0 0.0
    %3759 = vmatpush2.msra.mxu0 0.0
    %3760 = vmatprep.subr.mxu0 0.0
    %3761 = vmatpush2.msra.mxu0 0.0
    %3762 = vmatprep.subr.mxu0 0.0
    %3763 = vmatpush2.msra.mxu0 0.0
    %3764 = vmatprep.subr.mxu0 0.0
    %3765 = vmatpush2.msra.mxu0 0.0
    %3766 = vmatprep.mubr.f32.mxu0 0.0
    %3767 = vmatmul.mubr.f32.gmra.mxu0 %v3679
    %v3768 = vpop.f32.mrf.mxu0
    %v3769 = vadd.f32 %v3675, %v3768
    %v3770 = vpop.f32.mrf.mxu0
    %3771 = vmatprep.mubr.f32.mxu0 0.0
    %3772 = vmatmul.mubr.f32.gmra.mxu0 %v3682
    %v3773 = vpop.f32.mrf.mxu0
    %v3774 = vadd.f32 %v3675, %v3773
    %v3775 = vpop.f32.mrf.mxu0
    %3776 = vmatprep.mubr.f32.mxu0 0.0
    %3777 = vmatmul.mubr.f32.gmra.mxu0 %v3685
    %v3778 = vpop.f32.mrf.mxu0
    %v3779 = vadd.f32 %v3675, %v3778
    %v3780 = vpop.f32.mrf.mxu0
    %3781 = vmatprep.mubr.f32.mxu0 0.0
    %3782 = vmatmul.mubr.f32.gmra.mxu0 %v3688
    %v3783 = vpop.f32.mrf.mxu0
    %v3784 = vadd.f32 %v3675, %v3783
    %v3785 = vpop.f32.mrf.mxu0
    %3786 = vmatprep.mubr.f32.mxu0 0.0
    %3787 = vmatmul.mubr.f32.gmra.mxu0 %v3691
    %v3788 = vpop.f32.mrf.mxu0
    %v3789 = vadd.f32 %v3675, %v3788
    %v3790 = vpop.f32.mrf.mxu0
    %3791 = vmatprep.mubr.f32.mxu0 0.0
    %3792 = vmatmul.mubr.f32.gmra.mxu0 %v3694
    %v3793 = vpop.f32.mrf.mxu0
    %v3794 = vadd.f32 %v3675, %v3793
    %v3795 = vpop.f32.mrf.mxu0
    %3796 = vmatprep.mubr.f32.mxu0 0.0
    %3797 = vmatmul.mubr.f32.gmra.mxu0 %v3697
    %v3798 = vpop.f32.mrf.mxu0
    %v3799 = vadd.f32 %v3675, %v3798
    %v3800 = vpop.f32.mrf.mxu0
    %3801 = vmatprep.mubr.f32.mxu0 0.0
    %3802 = vmatmul.mubr.f32.gmra.mxu0 %v3700
    %v3803 = vpop.f32.mrf.mxu0
    %v3804 = vadd.f32 %v3675, %v3803
    %v3805 = vpop.f32.mrf.mxu0
    %3806 = vdwg.mxu0
    %v3807 = vtanh.pop %v3769
    %v3808 = vtanh.pop %v3774
    %v3809 = vtanh.pop %v3779
    %v3810 = vtanh.pop %v3784
    %v3811 = vtanh.pop %v3789
    %v3812 = vtanh.pop %v3794
    %v3813 = vtanh.pop %v3799
    %v3814 = vtanh.pop %v3804
    %v3815 = vld [vmem:[%s13] sm:$0x1]
    %v3816 = vld [vmem:[#allocation2] sm:$0x1]
    %3818 = vset.pattern.permute.xlu0 0
    %3819 = vperm.xlu0 %3818, %v3816
    %v3820 = vpop.permute.xlu0 %3819
    %v3822 = vlaneseq
    %v3823 = vshrl.u32 %v3822, 7
    %v3824 = vsub.s32 0, %v3823
    %v3825 = vrot.slane %v3820, %v3824
    %vm3826 = vcmask 64512
    %v3828 = vsel %vm3826, %v3815, 0
    %v3831 = vsel %vm3826, %v3807, 0
    %v3834 = vsel %vm3826, %v3808, 0
    %v3837 = vsel %vm3826, %v3809, 0
    %v3840 = vsel %vm3826, %v3810, 0
    %v3843 = vsel %vm3826, %v3811, 0
    %v3846 = vsel %vm3826, %v3812, 0
    %v3849 = vsel %vm3826, %v3813, 0
    %v3852 = vsel %vm3826, %v3814, 0
    %3854 = vmatprep.subr.mxu0 0.0
    %3855 = vmatpush1.xpose.msra.mxu0 0.0
    %3856 = vmatprep.subr.mxu0 0.0
    %3857 = vmatpush1.xpose.msra.mxu0 0.0
    %3858 = vmatprep.subr.mxu0 0.0
    %3859 = vmatpush1.xpose.msra.mxu0 0.0
    %3860 = vmatprep.subr.mxu0 0.0
    %3861 = vmatpush1.xpose.msra.mxu0 0.0
    %3862 = vmatprep.subr.mxu0 0.0
    %3863 = vmatpush1.xpose.msra.mxu0 0.0
    %3864 = vmatprep.subr.mxu0 0.0
    %3865 = vmatpush1.xpose.msra.mxu0 0.0
    %3866 = vmatprep.subr.mxu0 0.0
    %3867 = vmatpush1.xpose.msra.mxu0 0.0
    %3868 = vmatprep.subr.mxu0 0.0
    %3869 = vmatpush1.xpose.msra.mxu0 0.0
    %3870 = vmatprep.subr.mxu0 0.0
    %3871 = vmatpush1.xpose.msra.mxu0 %v3852
    %3872 = vmatprep.subr.mxu0 0.0
    %3873 = vmatpush1.xpose.msra.mxu0 %v3849
    %3874 = vmatprep.subr.mxu0 0.0
    %3875 = vmatpush1.xpose.msra.mxu0 %v3846
    %3876 = vmatprep.subr.mxu0 0.0
    %3877 = vmatpush1.xpose.msra.mxu0 %v3843
    %3878 = vmatprep.subr.mxu0 0.0
    %3879 = vmatpush1.xpose.msra.mxu0 %v3840
    %3880 = vmatprep.subr.mxu0 0.0
    %3881 = vmatpush1.xpose.msra.mxu0 %v3837
    %3882 = vmatprep.subr.mxu0 0.0
    %3883 = vmatpush1.xpose.msra.mxu0 %v3834
    %3884 = vmatprep.subr.mxu0 0.0
    %3885 = vmatpush1.xpose.msra.mxu0 %v3831
    %3886 = vmatprep.subr.mxu0 0.0
    %3887 = vmatpush2.xpose.msra.mxu0 0.0
    %3888 = vmatprep.subr.mxu0 0.0
    %3889 = vmatpush2.xpose.msra.mxu0 0.0
    %3890 = vmatprep.subr.mxu0 0.0
    %3891 = vmatpush2.xpose.msra.mxu0 0.0
    %3892 = vmatprep.subr.mxu0 0.0
    %3893 = vmatpush2.xpose.msra.mxu0 0.0
    %3894 = vmatprep.subr.mxu0 0.0
    %3895 = vmatpush2.xpose.msra.mxu0 0.0
    %3896 = vmatprep.subr.mxu0 0.0
    %3897 = vmatpush2.xpose.msra.mxu0 0.0
    %3898 = vmatprep.subr.mxu0 0.0
    %3899 = vmatpush2.xpose.msra.mxu0 0.0
    %3900 = vmatprep.subr.mxu0 0.0
    %3901 = vmatpush2.xpose.msra.mxu0 0.0
    %3902 = vmatprep.subr.mxu0 0.0
    %3903 = vmatpush2.xpose.msra.mxu0 0.0
    %3904 = vmatprep.subr.mxu0 0.0
    %3905 = vmatpush2.xpose.msra.mxu0 0.0
    %3906 = vmatprep.subr.mxu0 0.0
    %3907 = vmatpush2.xpose.msra.mxu0 0.0
    %3908 = vmatprep.subr.mxu0 0.0
    %3909 = vmatpush2.xpose.msra.mxu0 0.0
    %3910 = vmatprep.subr.mxu0 0.0
    %3911 = vmatpush2.xpose.msra.mxu0 0.0
    %3912 = vmatprep.subr.mxu0 0.0
    %3913 = vmatpush2.xpose.msra.mxu0 0.0
    %3914 = vmatprep.subr.mxu0 0.0
    %3915 = vmatpush2.xpose.msra.mxu0 0.0
    %3916 = vmatprep.subr.mxu0 0.0
    %3917 = vmatpush2.xpose.msra.mxu0 0.0
    %3918 = vmatprep.mubr.f32.mxu0 0.0
    %3919 = vmatmul.mubr.f32.gmra.mxu0 %v3828
    %v3920 = vpop.f32.mrf.mxu0
    %v3921 = vadd.f32 %v3825, %v3920
    %v3922 = vpop.f32.mrf.mxu0
    %3923 = vdwg.mxu0
    %vm3924 = vcmask 516096
    %3925 = vst.msk [vmem:[#allocation14] sm:$0x1] %vm3924, %v3921
    // Predicated region
    $region86: #{_nli_call.1} parent=1 // pred_check
      _
    $region87: #{_nli_call.1} parent=1 // pred_check_branch
      %3927 = sbr.rel (0) target = $region89
    $region88: #{_nli_call.1} parent=1 // pred_region
      %s3929 = ssub.s32 16, 16
      %3930 = vsyncadd [#allocation5], %s3929
      %s3932 = sshll.u32 [#allocation14], 4
      %s3933 = int_to_ptr.vmem [resolvable:$true] %s3932
      %3935 = dma.vmem_to_hbm [thread:$0]  %s3933, 16, %s15, [#allocation5]
    $region89: #{_nli_call.1} parent=1 // pred_fallthru
      _
    // Predicated region
    $region90: #{_nli_call.1} parent=1 // pred_check
      _
    $region91: #{_nli_call.1} parent=1 // pred_check_branch
      %3937 = sbr.rel (0) target = $region93
    $region92: #{_nli_call.1} parent=1 // pred_region
      %3938 = dma.done [#allocation5], 16
    $region93: #{_nli_call.1} parent=1 // pred_fallthru
      _
    %3939 = vsyncpa [#allocation4], 1
    %3940 = vsyncpa [#allocation7], 1
    %3941 = vsyncpa [#allocation10], 1
    %3942 = vsyncpa [#allocation13], 1
    %3943 = vsyncpa [#allocation5], 1

</llo_original>
